<compile_context>
chip_gen: v6e
topology: v6e:2x2x1
jax: 0.10.0
libtpu: 0.0.40
codegen_flags: <defaults>
</compile_context>

<pallas_src>
import functools
import numpy as np

import jax
import jax.numpy as jnp
from jax import lax
from jax.experimental import pallas as pl
from jax.experimental.pallas import tpu as pltpu

EPS = 1e-6  # nn.LayerNorm(d_model, eps=1e-6) in pypots


# --------------------------------------------------------------------------
# Fused forward kernel (one grid point == one batch tile of TB elements)
# --------------------------------------------------------------------------

def _fused_forward_kernel(*refs, n_enc_layers, n_dec_layers, H, dk, dv, scale,
                          TB, S, Sp):
    o_ref = refs[-1]
    it = iter(refs[:-1])
    x_ref = next(it)                       # (TB, S, 2F) block for this tile

    def nxt():
        return next(it)[...]               # read a whole-array weight block

    def mm(a, w):
        # bf16 MXU inputs (w is pre-cast to bf16), f32 accumulate.
        return jnp.dot(a.astype(jnp.bfloat16), w,
                       preferred_element_type=jnp.float32)

    def layer_norm(y, g, b):               # f32 elementwise
        mean = jnp.mean(y, axis=-1, keepdims=True)
        var = jnp.mean((y - mean) ** 2, axis=-1, keepdims=True)
        return (y - mean) * lax.rsqrt(var + EPS) * g + b

    def attention(q_flat, kv_flat, w_o, Sq, Skv):
        # q_flat : (TB*Sq, H*dk)   [Q columns]
        # kv_flat: (TB*Skv, H*(dk+dv))  [K columns | V columns]
        # All heads in one body; batched over the TB tile so batches don't mix.
        ctxs = []
        for h in range(H):
            q = q_flat[:, h * dk:(h + 1) * dk].reshape(TB, Sq, dk)
            k = kv_flat[:, h * dk:(h + 1) * dk].reshape(TB, Skv, dk)
            v = kv_flat[:, H * dk + h * dv: H * dk + (h + 1) * dv].reshape(TB, Skv, dv)
            s = jnp.einsum('bqd,bkd->bqk',
                           q.astype(jnp.bfloat16), k.astype(jnp.bfloat16),
                           preferred_element_type=jnp.float32) * scale
            s = s - jnp.max(s, axis=-1, keepdims=True)
            e = jnp.exp(s)
            p = e * pl.reciprocal(jnp.sum(e, axis=-1, keepdims=True), approx=True)
            ctxs.append(jnp.einsum('bqk,bkd->bqd',
                                   p.astype(jnp.bfloat16), v.astype(jnp.bfloat16),
                                   preferred_element_type=jnp.float32))
        ctx = jnp.concatenate(ctxs, axis=-1).reshape(TB * Sq, H * dv)
        return mm(ctx, w_o)                                         # (TB*Sq, D)

    def pos_ffn(x, w1, b1, w2, b2, g, b):
        hdn = jnp.maximum(mm(x, w1) + b1, 0.0)
        y = mm(hdn, w2) + b2 + x            # residual
        return layer_norm(y, g, b)

    enc_emb_w = nxt()                       # (2F, D) bf16
    enc_emb_b = nxt()                       # (1, D)  f32
    enc_pos_t = nxt()                       # (TB*S, D) f32, pre-tiled
    dec_init_t = nxt()                      # (TB*Sp, D) f32, pre-tiled

    # ---- encoder SAITS embedding + positional encoding (dropout = id) ----
    x_flat = x_ref[...].reshape(TB * S, x_ref.shape[-1])             # (TB*S, 2F)
    enc = mm(x_flat, enc_emb_w) + enc_emb_b + enc_pos_t              # (TB*S, D)

    # ---- encoder layers (unrolled) ----
    for _ in range(n_enc_layers):
        w_qkv = nxt(); w_o = nxt(); g1 = nxt(); b1 = nxt()
        fw1 = nxt(); fb1 = nxt(); fw2 = nxt(); fb2 = nxt(); fg = nxt(); fb = nxt()
        qkv = mm(enc, w_qkv)                                         # (TB*S, H*(2dk+dv))
        a = attention(qkv[:, :H * dk], qkv[:, H * dk:], w_o, S, S)
        y = layer_norm(a + enc, g1, b1)
        enc = pos_ffn(y, fw1, fb1, fw2, fb2, fg, fb)

    # ---- decoder layers (unrolled; self-attn, cross-attn, FFN; no masks) ----
    dec = dec_init_t                                                 # (TB*Sp, D)
    for _ in range(n_dec_layers):
        s_qkv = nxt(); s_wo = nxt(); g1 = nxt(); b1 = nxt()
        c_wq = nxt(); c_wkv = nxt(); c_wo = nxt(); g2 = nxt(); b2 = nxt()
        fw1 = nxt(); fb1 = nxt(); fw2 = nxt(); fb2 = nxt(); fg = nxt(); fb = nxt()
        qkv = mm(dec, s_qkv)
        a = attention(qkv[:, :H * dk], qkv[:, H * dk:], s_wo, Sp, Sp)
        y = layer_norm(a + dec, g1, b1)
        c = attention(mm(y, c_wq), mm(enc, c_wkv), c_wo, Sp, S)
        y2 = layer_norm(c + y, g2, b2)
        dec = pos_ffn(y2, fw1, fb1, fw2, fb2, fg, fb)

    # ---- output projection ----
    out_w = nxt(); out_b = nxt()
    out = mm(dec, out_w) + out_b                                     # (TB*Sp, Fp)
    o_ref[...] = out.reshape(o_ref.shape).astype(o_ref.dtype)


# --------------------------------------------------------------------------
# Parameters (deterministic synthetic init)
# --------------------------------------------------------------------------

def sinusoid_table(n_positions, d_hid):
    pos = np.arange(n_positions, dtype=np.float64)[:, None]
    i = np.arange(d_hid)[None, :]
    angle = pos / np.power(10000.0, 2.0 * (i // 2) / d_hid)
    table = np.where(i % 2 == 0, np.sin(angle), np.cos(angle))
    return jnp.asarray(table, dtype=jnp.float32)


def _dense(keys, in_dim, out_dim):
    w = jax.random.normal(next(keys), (in_dim, out_dim), jnp.float32) / np.sqrt(in_dim)
    b = jnp.zeros((out_dim,), jnp.float32)
    return w, b


def _mha_packed(keys, D, H, dk, dv):
    wq = jax.random.normal(next(keys), (D, H * dk), jnp.float32) / np.sqrt(D)
    wk = jax.random.normal(next(keys), (D, H * dk), jnp.float32) / np.sqrt(D)
    wv = jax.random.normal(next(keys), (D, H * dv), jnp.float32) / np.sqrt(D)
    wo = jax.random.normal(next(keys), (H * dv, D), jnp.float32) / np.sqrt(H * dv)
    return wq, wk, wv, wo


def init_params(key, cfg):
    F, Fp = cfg["n_features"], cfg["n_pred_features"]
    D, H, dk, dv, dff = cfg["d_model"], cfg["n_heads"], cfg["d_k"], cfg["d_v"], cfg["d_ffn"]
    keys = iter(jax.random.split(key, 256))

    p = {}
    p["enc_emb_w"], p["enc_emb_b"] = _dense(keys, 2 * F, D)
    p["dec_emb_w"], p["dec_emb_b"] = _dense(keys, 2 * Fp, D)
    p["enc_pos"] = sinusoid_table(cfg["n_steps"], D)
    p["dec_pos"] = sinusoid_table(cfg["n_pred_steps"], D)

    def ffn_block():
        w1, b1 = _dense(keys, D, dff)
        w2, b2 = _dense(keys, dff, D)
        return dict(ffn_w1=w1, ffn_b1=b1, ffn_w2=w2, ffn_b2=b2,
                    ffn_ln_g=jnp.ones((D,), jnp.float32),
                    ffn_ln_b=jnp.zeros((D,), jnp.float32))

    p["enc_layers"] = []
    for _ in range(cfg["n_encoder_layers"]):
        wq, wk, wv, wo = _mha_packed(keys, D, H, dk, dv)
        lp = dict(w_qkv=jnp.concatenate([wq, wk, wv], axis=1), w_o=wo,
                  ln_g=jnp.ones((D,), jnp.float32), ln_b=jnp.zeros((D,), jnp.float32))
        lp.update(ffn_block())
        p["enc_layers"].append(lp)

    p["dec_layers"] = []
    for _ in range(cfg["n_decoder_layers"]):
        swq, swk, swv, swo = _mha_packed(keys, D, H, dk, dv)
        cwq, cwk, cwv, cwo = _mha_packed(keys, D, H, dk, dv)
        lp = dict(slf_qkv=jnp.concatenate([swq, swk, swv], axis=1), slf_wo=swo,
                  ln1_g=jnp.ones((D,), jnp.float32), ln1_b=jnp.zeros((D,), jnp.float32),
                  crs_wq=cwq, crs_wkv=jnp.concatenate([cwk, cwv], axis=1), crs_wo=cwo,
                  ln2_g=jnp.ones((D,), jnp.float32), ln2_b=jnp.zeros((D,), jnp.float32))
        lp.update(ffn_block())
        p["dec_layers"].append(lp)

    p["out_w"], p["out_b"] = _dense(keys, D, Fp)
    return p


# --------------------------------------------------------------------------
# Wrapper: single fused pallas_call over batch tiles
# --------------------------------------------------------------------------

def transformer_forecast(params, X, missing_mask, cfg, batch_tile=None):
    """Inference-mode forward of pypots `_Transformer`. Returns forecasting_data."""
    B = X.shape[0]
    S, F = cfg["n_steps"], cfg["n_features"]
    Sp, Fp = cfg["n_pred_steps"], cfg["n_pred_features"]
    D, H, dk, dv = cfg["d_model"], cfg["n_heads"], cfg["d_k"], cfg["d_v"]

    TB = batch_tile if batch_tile is not None else min(B, 8)
    n_tiles = pl.cdiv(B, TB)
    Bpad = n_tiles * TB

    # encoder embedding input: cat(X, mask)
    x_cat = jnp.concatenate([X, missing_mask], axis=-1)             # (B, S, 2F)
    if Bpad != B:
        x_cat = jnp.pad(x_cat, ((0, Bpad - B), (0, 0), (0, 0)))

    # decoder SAITS embedding is constant under inference inputs
    # (X_pred = zeros, mask = ones): Linear(cat(0,1)) = b + sum(mask-half rows of W)
    dec_row = params["dec_emb_b"] + jnp.sum(params["dec_emb_w"][Fp:, :], axis=0)
    dec_init = dec_row[None, :] + params["dec_pos"][:Sp]             # (Sp, D)
    dec_init_t = jnp.tile(dec_init, (TB, 1)).astype(jnp.float32)     # (TB*Sp, D)
    enc_pos_t = jnp.tile(params["enc_pos"][:S], (TB, 1)).astype(jnp.float32)  # (TB*S, D)

    bf16 = lambda a: a.astype(jnp.bfloat16)                 # MXU inputs
    row = lambda a: a.reshape(1, -1).astype(jnp.float32)    # biases / gammas (f32)

    flat = [bf16(params["enc_emb_w"]), row(params["enc_emb_b"]),
            enc_pos_t, dec_init_t]
    for lp in params["enc_layers"]:
        flat += [bf16(lp["w_qkv"]), bf16(lp["w_o"]), row(lp["ln_g"]), row(lp["ln_b"]),
                 bf16(lp["ffn_w1"]), row(lp["ffn_b1"]), bf16(lp["ffn_w2"]), row(lp["ffn_b2"]),
                 row(lp["ffn_ln_g"]), row(lp["ffn_ln_b"])]
    for lp in params["dec_layers"]:
        flat += [bf16(lp["slf_qkv"]), bf16(lp["slf_wo"]), row(lp["ln1_g"]), row(lp["ln1_b"]),
                 bf16(lp["crs_wq"]), bf16(lp["crs_wkv"]), bf16(lp["crs_wo"]),
                 row(lp["ln2_g"]), row(lp["ln2_b"]),
                 bf16(lp["ffn_w1"]), row(lp["ffn_b1"]), bf16(lp["ffn_w2"]), row(lp["ffn_b2"]),
                 row(lp["ffn_ln_g"]), row(lp["ffn_ln_b"])]
    flat += [bf16(params["out_w"]), row(params["out_b"])]

    def whole(a):
        nd = a.ndim
        return pl.BlockSpec(a.shape, lambda b, _n=nd: (0,) * _n)

    in_specs = ([pl.BlockSpec((TB, S, 2 * F), lambda b: (b, 0, 0))]
                + [whole(a) for a in flat])
    out_specs = pl.BlockSpec((TB, Sp, Fp), lambda b: (b, 0, 0))

    kernel = functools.partial(
        _fused_forward_kernel,
        n_enc_layers=len(params["enc_layers"]),
        n_dec_layers=len(params["dec_layers"]),
        H=H, dk=dk, dv=dv, scale=1.0 / float(np.sqrt(dk)),
        TB=TB, S=S, Sp=Sp)

    out = pl.pallas_call(
        kernel,
        out_shape=jax.ShapeDtypeStruct((Bpad, Sp, Fp), jnp.float32),
        grid_spec=pltpu.PrefetchScalarGridSpec(
            num_scalar_prefetch=0,
            grid=(n_tiles,),                            # batch-tile parallel (megacore)
            in_specs=in_specs,
            out_specs=out_specs,
        ),
        compiler_params=pltpu.CompilerParams(dimension_semantics=("parallel",)),
    )(x_cat, *flat)
    return out[:B]
    # TODO(synk): training-mode loss branch (MSE on X_pred) not implemented (eval path only).


# --------------------------------------------------------------------------
# Main
# --------------------------------------------------------------------------

if __name__ == "__main__":
    cfg = dict(
        n_steps=8, n_features=4, n_pred_steps=4, n_pred_features=4,
        n_encoder_layers=2, n_decoder_layers=2,
        d_model=32, n_heads=2, d_k=16, d_v=16, d_ffn=64,
    )
    B = 2

    key = jax.random.PRNGKey(0)
    k_params, k_x, k_mask = jax.random.split(key, 3)

    params = init_params(k_params, cfg)
    X = jax.random.normal(k_x, (B, cfg["n_steps"], cfg["n_features"]), jnp.float32)
    missing_mask = (jax.random.uniform(k_mask, (B, cfg["n_steps"], cfg["n_features"]))
                    > 0.3).astype(jnp.float32)
    X = X * missing_mask  # masked observations, as pypots feeds them

    forecasting_data = transformer_forecast(params, X, missing_mask, cfg)
    jax.block_until_ready(forecasting_data)

    assert forecasting_data.shape == (B, cfg["n_pred_steps"], cfg["n_pred_features"])
    assert bool(jnp.all(jnp.isfinite(forecasting_data)))
    print("KERNEL_OK")
</pallas_src>

<mosaic_0001>
module attributes {stable_mosaic.version = 11 : i64} {
  func.func @_fused_forward_kernel(%arg0: i32, %arg1: memref<2x8x8xf32, #tpu.memory_space<vmem>>, %arg2: memref<8x32xbf16, #tpu.memory_space<vmem>>, %arg3: memref<1x32xf32, #tpu.memory_space<vmem>>, %arg4: memref<16x32xf32, #tpu.memory_space<vmem>>, %arg5: memref<8x32xf32, #tpu.memory_space<vmem>>, %arg6: memref<32x96xbf16, #tpu.memory_space<vmem>>, %arg7: memref<32x32xbf16, #tpu.memory_space<vmem>>, %arg8: memref<1x32xf32, #tpu.memory_space<vmem>>, %arg9: memref<1x32xf32, #tpu.memory_space<vmem>>, %arg10: memref<32x64xbf16, #tpu.memory_space<vmem>>, %arg11: memref<1x64xf32, #tpu.memory_space<vmem>>, %arg12: memref<64x32xbf16, #tpu.memory_space<vmem>>, %arg13: memref<1x32xf32, #tpu.memory_space<vmem>>, %arg14: memref<1x32xf32, #tpu.memory_space<vmem>>, %arg15: memref<1x32xf32, #tpu.memory_space<vmem>>, %arg16: memref<32x96xbf16, #tpu.memory_space<vmem>>, %arg17: memref<32x32xbf16, #tpu.memory_space<vmem>>, %arg18: memref<1x32xf32, #tpu.memory_space<vmem>>, %arg19: memref<1x32xf32, #tpu.memory_space<vmem>>, %arg20: memref<32x64xbf16, #tpu.memory_space<vmem>>, %arg21: memref<1x64xf32, #tpu.memory_space<vmem>>, %arg22: memref<64x32xbf16, #tpu.memory_space<vmem>>, %arg23: memref<1x32xf32, #tpu.memory_space<vmem>>, %arg24: memref<1x32xf32, #tpu.memory_space<vmem>>, %arg25: memref<1x32xf32, #tpu.memory_space<vmem>>, %arg26: memref<32x96xbf16, #tpu.memory_space<vmem>>, %arg27: memref<32x32xbf16, #tpu.memory_space<vmem>>, %arg28: memref<1x32xf32, #tpu.memory_space<vmem>>, %arg29: memref<1x32xf32, #tpu.memory_space<vmem>>, %arg30: memref<32x32xbf16, #tpu.memory_space<vmem>>, %arg31: memref<32x64xbf16, #tpu.memory_space<vmem>>, %arg32: memref<32x32xbf16, #tpu.memory_space<vmem>>, %arg33: memref<1x32xf32, #tpu.memory_space<vmem>>, %arg34: memref<1x32xf32, #tpu.memory_space<vmem>>, %arg35: memref<32x64xbf16, #tpu.memory_space<vmem>>, %arg36: memref<1x64xf32, #tpu.memory_space<vmem>>, %arg37: memref<64x32xbf16, #tpu.memory_space<vmem>>, %arg38: memref<1x32xf32, #tpu.memory_space<vmem>>, %arg39: memref<1x32xf32, #tpu.memory_space<vmem>>, %arg40: memref<1x32xf32, #tpu.memory_space<vmem>>, %arg41: memref<32x96xbf16, #tpu.memory_space<vmem>>, %arg42: memref<32x32xbf16, #tpu.memory_space<vmem>>, %arg43: memref<1x32xf32, #tpu.memory_space<vmem>>, %arg44: memref<1x32xf32, #tpu.memory_space<vmem>>, %arg45: memref<32x32xbf16, #tpu.memory_space<vmem>>, %arg46: memref<32x64xbf16, #tpu.memory_space<vmem>>, %arg47: memref<32x32xbf16, #tpu.memory_space<vmem>>, %arg48: memref<1x32xf32, #tpu.memory_space<vmem>>, %arg49: memref<1x32xf32, #tpu.memory_space<vmem>>, %arg50: memref<32x64xbf16, #tpu.memory_space<vmem>>, %arg51: memref<1x64xf32, #tpu.memory_space<vmem>>, %arg52: memref<64x32xbf16, #tpu.memory_space<vmem>>, %arg53: memref<1x32xf32, #tpu.memory_space<vmem>>, %arg54: memref<1x32xf32, #tpu.memory_space<vmem>>, %arg55: memref<1x32xf32, #tpu.memory_space<vmem>>, %arg56: memref<32x4xbf16, #tpu.memory_space<vmem>>, %arg57: memref<1x4xf32, #tpu.memory_space<vmem>>, %arg58: memref<2x4x4xf32, #tpu.memory_space<vmem>>) attributes {dimension_semantics = [#tpu.dimension_semantics<parallel>], iteration_bounds = array<i64: 1>, scalar_prefetch = 0 : i64, scratch_operands = 0 : i64, tpu.core_type = #tpu.core_type<tc>, window_params = [{transform_indices = @transform_0, window_bounds = array<i64: 2, 8, 8>}, {pipeline_mode = #tpu.pipeline_mode<synchronous>, transform_indices = @transform_1, window_bounds = array<i64: 8, 32>}, {pipeline_mode = #tpu.pipeline_mode<synchronous>, transform_indices = @transform_2, window_bounds = array<i64: 1, 32>}, {pipeline_mode = #tpu.pipeline_mode<synchronous>, transform_indices = @transform_3, window_bounds = array<i64: 16, 32>}, {pipeline_mode = #tpu.pipeline_mode<synchronous>, transform_indices = @transform_4, window_bounds = array<i64: 8, 32>}, {pipeline_mode = #tpu.pipeline_mode<synchronous>, transform_indices = @transform_5, window_bounds = array<i64: 32, 96>}, {pipeline_mode = #tpu.pipeline_mode<synchronous>, transform_indices = @transform_6, window_bounds = array<i64: 32, 32>}, {pipeline_mode = #tpu.pipeline_mode<synchronous>, transform_indices = @transform_7, window_bounds = array<i64: 1, 32>}, {pipeline_mode = #tpu.pipeline_mode<synchronous>, transform_indices = @transform_8, window_bounds = array<i64: 1, 32>}, {pipeline_mode = #tpu.pipeline_mode<synchronous>, transform_indices = @transform_9, window_bounds = array<i64: 32, 64>}, {pipeline_mode = #tpu.pipeline_mode<synchronous>, transform_indices = @transform_10, window_bounds = array<i64: 1, 64>}, {pipeline_mode = #tpu.pipeline_mode<synchronous>, transform_indices = @transform_11, window_bounds = array<i64: 64, 32>}, {pipeline_mode = #tpu.pipeline_mode<synchronous>, transform_indices = @transform_12, window_bounds = array<i64: 1, 32>}, {pipeline_mode = #tpu.pipeline_mode<synchronous>, transform_indices = @transform_13, window_bounds = array<i64: 1, 32>}, {pipeline_mode = #tpu.pipeline_mode<synchronous>, transform_indices = @transform_14, window_bounds = array<i64: 1, 32>}, {pipeline_mode = #tpu.pipeline_mode<synchronous>, transform_indices = @transform_15, window_bounds = array<i64: 32, 96>}, {pipeline_mode = #tpu.pipeline_mode<synchronous>, transform_indices = @transform_16, window_bounds = array<i64: 32, 32>}, {pipeline_mode = #tpu.pipeline_mode<synchronous>, transform_indices = @transform_17, window_bounds = array<i64: 1, 32>}, {pipeline_mode = #tpu.pipeline_mode<synchronous>, transform_indices = @transform_18, window_bounds = array<i64: 1, 32>}, {pipeline_mode = #tpu.pipeline_mode<synchronous>, transform_indices = @transform_19, window_bounds = array<i64: 32, 64>}, {pipeline_mode = #tpu.pipeline_mode<synchronous>, transform_indices = @transform_20, window_bounds = array<i64: 1, 64>}, {pipeline_mode = #tpu.pipeline_mode<synchronous>, transform_indices = @transform_21, window_bounds = array<i64: 64, 32>}, {pipeline_mode = #tpu.pipeline_mode<synchronous>, transform_indices = @transform_22, window_bounds = array<i64: 1, 32>}, {pipeline_mode = #tpu.pipeline_mode<synchronous>, transform_indices = @transform_23, window_bounds = array<i64: 1, 32>}, {pipeline_mode = #tpu.pipeline_mode<synchronous>, transform_indices = @transform_24, window_bounds = array<i64: 1, 32>}, {pipeline_mode = #tpu.pipeline_mode<synchronous>, transform_indices = @transform_25, window_bounds = array<i64: 32, 96>}, {pipeline_mode = #tpu.pipeline_mode<synchronous>, transform_indices = @transform_26, window_bounds = array<i64: 32, 32>}, {pipeline_mode = #tpu.pipeline_mode<synchronous>, transform_indices = @transform_27, window_bounds = array<i64: 1, 32>}, {pipeline_mode = #tpu.pipeline_mode<synchronous>, transform_indices = @transform_28, window_bounds = array<i64: 1, 32>}, {pipeline_mode = #tpu.pipeline_mode<synchronous>, transform_indices = @transform_29, window_bounds = array<i64: 32, 32>}, {pipeline_mode = #tpu.pipeline_mode<synchronous>, transform_indices = @transform_30, window_bounds = array<i64: 32, 64>}, {pipeline_mode = #tpu.pipeline_mode<synchronous>, transform_indices = @transform_31, window_bounds = array<i64: 32, 32>}, {pipeline_mode = #tpu.pipeline_mode<synchronous>, transform_indices = @transform_32, window_bounds = array<i64: 1, 32>}, {pipeline_mode = #tpu.pipeline_mode<synchronous>, transform_indices = @transform_33, window_bounds = array<i64: 1, 32>}, {pipeline_mode = #tpu.pipeline_mode<synchronous>, transform_indices = @transform_34, window_bounds = array<i64: 32, 64>}, {pipeline_mode = #tpu.pipeline_mode<synchronous>, transform_indices = @transform_35, window_bounds = array<i64: 1, 64>}, {pipeline_mode = #tpu.pipeline_mode<synchronous>, transform_indices = @transform_36, window_bounds = array<i64: 64, 32>}, {pipeline_mode = #tpu.pipeline_mode<synchronous>, transform_indices = @transform_37, window_bounds = array<i64: 1, 32>}, {pipeline_mode = #tpu.pipeline_mode<synchronous>, transform_indices = @transform_38, window_bounds = array<i64: 1, 32>}, {pipeline_mode = #tpu.pipeline_mode<synchronous>, transform_indices = @transform_39, window_bounds = array<i64: 1, 32>}, {pipeline_mode = #tpu.pipeline_mode<synchronous>, transform_indices = @transform_40, window_bounds = array<i64: 32, 96>}, {pipeline_mode = #tpu.pipeline_mode<synchronous>, transform_indices = @transform_41, window_bounds = array<i64: 32, 32>}, {pipeline_mode = #tpu.pipeline_mode<synchronous>, transform_indices = @transform_42, window_bounds = array<i64: 1, 32>}, {pipeline_mode = #tpu.pipeline_mode<synchronous>, transform_indices = @transform_43, window_bounds = array<i64: 1, 32>}, {pipeline_mode = #tpu.pipeline_mode<synchronous>, transform_indices = @transform_44, window_bounds = array<i64: 32, 32>}, {pipeline_mode = #tpu.pipeline_mode<synchronous>, transform_indices = @transform_45, window_bounds = array<i64: 32, 64>}, {pipeline_mode = #tpu.pipeline_mode<synchronous>, transform_indices = @transform_46, window_bounds = array<i64: 32, 32>}, {pipeline_mode = #tpu.pipeline_mode<synchronous>, transform_indices = @transform_47, window_bounds = array<i64: 1, 32>}, {pipeline_mode = #tpu.pipeline_mode<synchronous>, transform_indices = @transform_48, window_bounds = array<i64: 1, 32>}, {pipeline_mode = #tpu.pipeline_mode<synchronous>, transform_indices = @transform_49, window_bounds = array<i64: 32, 64>}, {pipeline_mode = #tpu.pipeline_mode<synchronous>, transform_indices = @transform_50, window_bounds = array<i64: 1, 64>}, {pipeline_mode = #tpu.pipeline_mode<synchronous>, transform_indices = @transform_51, window_bounds = array<i64: 64, 32>}, {pipeline_mode = #tpu.pipeline_mode<synchronous>, transform_indices = @transform_52, window_bounds = array<i64: 1, 32>}, {pipeline_mode = #tpu.pipeline_mode<synchronous>, transform_indices = @transform_53, window_bounds = array<i64: 1, 32>}, {pipeline_mode = #tpu.pipeline_mode<synchronous>, transform_indices = @transform_54, window_bounds = array<i64: 1, 32>}, {pipeline_mode = #tpu.pipeline_mode<synchronous>, transform_indices = @transform_55, window_bounds = array<i64: 32, 4>}, {pipeline_mode = #tpu.pipeline_mode<synchronous>, transform_indices = @transform_56, window_bounds = array<i64: 1, 4>}, {transform_indices = @transform_57, window_bounds = array<i64: 2, 4, 4>}]} {
    %c0 = arith.constant 0 : index
    %c0_0 = arith.constant 0 : index
    %0 = vector.load %arg2[%c0, %c0_0] : memref<8x32xbf16, #tpu.memory_space<vmem>>, vector<8x32xbf16>
    %c0_1 = arith.constant 0 : index
    %c0_2 = arith.constant 0 : index
    %1 = vector.load %arg3[%c0_1, %c0_2] : memref<1x32xf32, #tpu.memory_space<vmem>>, vector<1x32xf32>
    %c0_3 = arith.constant 0 : index
    %c0_4 = arith.constant 0 : index
    %2 = vector.load %arg4[%c0_3, %c0_4] : memref<16x32xf32, #tpu.memory_space<vmem>>, vector<16x32xf32>
    %c0_5 = arith.constant 0 : index
    %c0_6 = arith.constant 0 : index
    %3 = vector.load %arg5[%c0_5, %c0_6] : memref<8x32xf32, #tpu.memory_space<vmem>>, vector<8x32xf32>
    %c0_7 = arith.constant 0 : index
    %c0_8 = arith.constant 0 : index
    %c0_9 = arith.constant 0 : index
    %4 = vector.load %arg1[%c0_7, %c0_8, %c0_9] : memref<2x8x8xf32, #tpu.memory_space<vmem>>, vector<2x8x8xf32>
    %5 = vector.shape_cast %4 : vector<2x8x8xf32> to vector<16x8xf32>
    %6 = arith.truncf %5 : vector<16x8xf32> to vector<16x8xbf16>
    %cst = arith.constant dense<0.000000e+00> : vector<16x32xf32>
    %7 = tpu.matmul %6, %0, %cst {dimension_numbers = #tpu.dot_dimension_numbers<[1], [0], [0], [1], [0, 0, 1, 1], [], []>} : vector<16x8xbf16>, vector<8x32xbf16>, vector<16x32xf32> -> vector<16x32xf32>
    %8 = vector.broadcast %1 : vector<1x32xf32> to vector<16x32xf32>
    %9 = arith.addf %7, %8 : vector<16x32xf32>
    %10 = arith.addf %9, %2 : vector<16x32xf32>
    %c0_10 = arith.constant 0 : index
    %c0_11 = arith.constant 0 : index
    %11 = vector.load %arg6[%c0_10, %c0_11] : memref<32x96xbf16, #tpu.memory_space<vmem>>, vector<32x96xbf16>
    %c0_12 = arith.constant 0 : index
    %c0_13 = arith.constant 0 : index
    %12 = vector.load %arg7[%c0_12, %c0_13] : memref<32x32xbf16, #tpu.memory_space<vmem>>, vector<32x32xbf16>
    %c0_14 = arith.constant 0 : index
    %c0_15 = arith.constant 0 : index
    %13 = vector.load %arg8[%c0_14, %c0_15] : memref<1x32xf32, #tpu.memory_space<vmem>>, vector<1x32xf32>
    %c0_16 = arith.constant 0 : index
    %c0_17 = arith.constant 0 : index
    %14 = vector.load %arg9[%c0_16, %c0_17] : memref<1x32xf32, #tpu.memory_space<vmem>>, vector<1x32xf32>
    %c0_18 = arith.constant 0 : index
    %c0_19 = arith.constant 0 : index
    %15 = vector.load %arg10[%c0_18, %c0_19] : memref<32x64xbf16, #tpu.memory_space<vmem>>, vector<32x64xbf16>
    %c0_20 = arith.constant 0 : index
    %c0_21 = arith.constant 0 : index
    %16 = vector.load %arg11[%c0_20, %c0_21] : memref<1x64xf32, #tpu.memory_space<vmem>>, vector<1x64xf32>
    %c0_22 = arith.constant 0 : index
    %c0_23 = arith.constant 0 : index
    %17 = vector.load %arg12[%c0_22, %c0_23] : memref<64x32xbf16, #tpu.memory_space<vmem>>, vector<64x32xbf16>
    %c0_24 = arith.constant 0 : index
    %c0_25 = arith.constant 0 : index
    %18 = vector.load %arg13[%c0_24, %c0_25] : memref<1x32xf32, #tpu.memory_space<vmem>>, vector<1x32xf32>
    %c0_26 = arith.constant 0 : index
    %c0_27 = arith.constant 0 : index
    %19 = vector.load %arg14[%c0_26, %c0_27] : memref<1x32xf32, #tpu.memory_space<vmem>>, vector<1x32xf32>
    %c0_28 = arith.constant 0 : index
    %c0_29 = arith.constant 0 : index
    %20 = vector.load %arg15[%c0_28, %c0_29] : memref<1x32xf32, #tpu.memory_space<vmem>>, vector<1x32xf32>
    %21 = arith.truncf %10 : vector<16x32xf32> to vector<16x32xbf16>
    %cst_30 = arith.constant dense<0.000000e+00> : vector<16x96xf32>
    %22 = tpu.matmul %21, %11, %cst_30 {dimension_numbers = #tpu.dot_dimension_numbers<[1], [0], [0], [1], [0, 0, 1, 1], [], []>} : vector<16x32xbf16>, vector<32x96xbf16>, vector<16x96xf32> -> vector<16x96xf32>
    %23 = vector.extract_strided_slice %22 {offsets = [0, 0], sizes = [16, 32], strides = [1, 1]} : vector<16x96xf32> to vector<16x32xf32>
    %24 = vector.extract_strided_slice %22 {offsets = [0, 32], sizes = [16, 64], strides = [1, 1]} : vector<16x96xf32> to vector<16x64xf32>
    %25 = vector.extract_strided_slice %23 {offsets = [0, 0], sizes = [16, 16], strides = [1, 1]} : vector<16x32xf32> to vector<16x16xf32>
    %26 = vector.shape_cast %25 : vector<16x16xf32> to vector<2x8x16xf32>
    %27 = vector.extract_strided_slice %24 {offsets = [0, 0], sizes = [16, 16], strides = [1, 1]} : vector<16x64xf32> to vector<16x16xf32>
    %28 = vector.shape_cast %27 : vector<16x16xf32> to vector<2x8x16xf32>
    %29 = vector.extract_strided_slice %24 {offsets = [0, 32], sizes = [16, 16], strides = [1, 1]} : vector<16x64xf32> to vector<16x16xf32>
    %30 = vector.shape_cast %29 : vector<16x16xf32> to vector<2x8x16xf32>
    %31 = arith.truncf %26 : vector<2x8x16xf32> to vector<2x8x16xbf16>
    %32 = arith.truncf %28 : vector<2x8x16xf32> to vector<2x8x16xbf16>
    "tpu.trace_start"() <{level = 10 : i32, message = "bqd,bkd->bqk"}> : () -> ()
    %cst_31 = arith.constant dense<0.000000e+00> : vector<2x8x8xf32>
    %33 = tpu.matmul %31, %32, %cst_31 {dimension_numbers = #tpu.dot_dimension_numbers<[2], [2], [1], [1], [0, 0, 0, 1, 1, 1], [0], [0]>} : vector<2x8x16xbf16>, vector<2x8x16xbf16>, vector<2x8x8xf32> -> vector<2x8x8xf32>
    "tpu.trace_stop"() : () -> ()
    %cst_32 = arith.constant 2.500000e-01 : f32
    %34 = vector.broadcast %cst_32 : f32 to vector<2x8x8xf32>
    %35 = arith.mulf %33, %34 : vector<2x8x8xf32>
    %cst_33 = arith.constant dense<0xFF800000> : vector<2x8xf32>
    %36 = vector.multi_reduction <maximumf>, %35, %cst_33 [2] : vector<2x8x8xf32> to vector<2x8xf32>
    %37 = vector.shape_cast %36 : vector<2x8xf32> to vector<2x8x1xf32>
    %38 = vector.broadcast %37 : vector<2x8x1xf32> to vector<2x8x8xf32>
    %39 = arith.subf %35, %38 : vector<2x8x8xf32>
    %40 = math.exp %39 : vector<2x8x8xf32>
    %cst_34 = arith.constant dense<0.000000e+00> : vector<2x8xf32>
    %41 = vector.multi_reduction <add>, %40, %cst_34 [2] : vector<2x8x8xf32> to vector<2x8xf32>
    %42 = vector.shape_cast %41 : vector<2x8xf32> to vector<2x8x1xf32>
    %43 = tpu.reciprocal %42 {approx = true} : vector<2x8x1xf32> -> vector<2x8x1xf32>
    %44 = vector.broadcast %43 : vector<2x8x1xf32> to vector<2x8x8xf32>
    %45 = arith.mulf %40, %44 : vector<2x8x8xf32>
    %46 = arith.truncf %45 : vector<2x8x8xf32> to vector<2x8x8xbf16>
    %47 = arith.truncf %30 : vector<2x8x16xf32> to vector<2x8x16xbf16>
    "tpu.trace_start"() <{level = 10 : i32, message = "bqk,bkd->bqd"}> : () -> ()
    %cst_35 = arith.constant dense<0.000000e+00> : vector<2x8x16xf32>
    %48 = tpu.matmul %46, %47, %cst_35 {dimension_numbers = #tpu.dot_dimension_numbers<[2], [1], [1], [2], [0, 0, 0, 1, 1, 2], [0], [0]>} : vector<2x8x8xbf16>, vector<2x8x16xbf16>, vector<2x8x16xf32> -> vector<2x8x16xf32>
    "tpu.trace_stop"() : () -> ()
    %49 = vector.extract_strided_slice %23 {offsets = [0, 16], sizes = [16, 16], strides = [1, 1]} : vector<16x32xf32> to vector<16x16xf32>
    %50 = vector.shape_cast %49 : vector<16x16xf32> to vector<2x8x16xf32>
    %51 = vector.extract_strided_slice %24 {offsets = [0, 16], sizes = [16, 16], strides = [1, 1]} : vector<16x64xf32> to vector<16x16xf32>
    %52 = vector.shape_cast %51 : vector<16x16xf32> to vector<2x8x16xf32>
    %53 = vector.extract_strided_slice %24 {offsets = [0, 48], sizes = [16, 16], strides = [1, 1]} : vector<16x64xf32> to vector<16x16xf32>
    %54 = vector.shape_cast %53 : vector<16x16xf32> to vector<2x8x16xf32>
    %55 = arith.truncf %50 : vector<2x8x16xf32> to vector<2x8x16xbf16>
    %56 = arith.truncf %52 : vector<2x8x16xf32> to vector<2x8x16xbf16>
    "tpu.trace_start"() <{level = 10 : i32, message = "bqd,bkd->bqk"}> : () -> ()
    %cst_36 = arith.constant dense<0.000000e+00> : vector<2x8x8xf32>
    %57 = tpu.matmul %55, %56, %cst_36 {dimension_numbers = #tpu.dot_dimension_numbers<[2], [2], [1], [1], [0, 0, 0, 1, 1, 1], [0], [0]>} : vector<2x8x16xbf16>, vector<2x8x16xbf16>, vector<2x8x8xf32> -> vector<2x8x8xf32>
    "tpu.trace_stop"() : () -> ()
    %cst_37 = arith.constant 2.500000e-01 : f32
    %58 = vector.broadcast %cst_37 : f32 to vector<2x8x8xf32>
    %59 = arith.mulf %57, %58 : vector<2x8x8xf32>
    %cst_38 = arith.constant dense<0xFF800000> : vector<2x8xf32>
    %60 = vector.multi_reduction <maximumf>, %59, %cst_38 [2] : vector<2x8x8xf32> to vector<2x8xf32>
    %61 = vector.shape_cast %60 : vector<2x8xf32> to vector<2x8x1xf32>
    %62 = vector.broadcast %61 : vector<2x8x1xf32> to vector<2x8x8xf32>
    %63 = arith.subf %59, %62 : vector<2x8x8xf32>
    %64 = math.exp %63 : vector<2x8x8xf32>
    %cst_39 = arith.constant dense<0.000000e+00> : vector<2x8xf32>
    %65 = vector.multi_reduction <add>, %64, %cst_39 [2] : vector<2x8x8xf32> to vector<2x8xf32>
    %66 = vector.shape_cast %65 : vector<2x8xf32> to vector<2x8x1xf32>
    %67 = tpu.reciprocal %66 {approx = true} : vector<2x8x1xf32> -> vector<2x8x1xf32>
    %68 = vector.broadcast %67 : vector<2x8x1xf32> to vector<2x8x8xf32>
    %69 = arith.mulf %64, %68 : vector<2x8x8xf32>
    %70 = arith.truncf %69 : vector<2x8x8xf32> to vector<2x8x8xbf16>
    %71 = arith.truncf %54 : vector<2x8x16xf32> to vector<2x8x16xbf16>
    "tpu.trace_start"() <{level = 10 : i32, message = "bqk,bkd->bqd"}> : () -> ()
    %cst_40 = arith.constant dense<0.000000e+00> : vector<2x8x16xf32>
    %72 = tpu.matmul %70, %71, %cst_40 {dimension_numbers = #tpu.dot_dimension_numbers<[2], [1], [1], [2], [0, 0, 0, 1, 1, 2], [0], [0]>} : vector<2x8x8xbf16>, vector<2x8x16xbf16>, vector<2x8x16xf32> -> vector<2x8x16xf32>
    "tpu.trace_stop"() : () -> ()
    %73 = tpu.concatenate %48, %72 in 2 : vector<2x8x16xf32>, vector<2x8x16xf32> -> vector<2x8x32xf32>
    %74 = vector.shape_cast %73 : vector<2x8x32xf32> to vector<16x32xf32>
    %75 = arith.truncf %74 : vector<16x32xf32> to vector<16x32xbf16>
    %cst_41 = arith.constant dense<0.000000e+00> : vector<16x32xf32>
    %76 = tpu.matmul %75, %12, %cst_41 {dimension_numbers = #tpu.dot_dimension_numbers<[1], [0], [0], [1], [0, 0, 1, 1], [], []>} : vector<16x32xbf16>, vector<32x32xbf16>, vector<16x32xf32> -> vector<16x32xf32>
    %77 = arith.addf %76, %10 : vector<16x32xf32>
    %cst_42 = arith.constant dense<0.000000e+00> : vector<16xf32>
    %78 = vector.multi_reduction <add>, %77, %cst_42 [1] : vector<16x32xf32> to vector<16xf32>
    %79 = vector.shape_cast %78 : vector<16xf32> to vector<16x1xf32>
    %cst_43 = arith.constant 3.200000e+01 : f32
    %80 = vector.broadcast %cst_43 : f32 to vector<16x1xf32>
    %81 = arith.divf %79, %80 : vector<16x1xf32>
    %82 = vector.broadcast %81 : vector<16x1xf32> to vector<16x32xf32>
    %83 = arith.subf %77, %82 : vector<16x32xf32>
    %84 = arith.mulf %83, %83 : vector<16x32xf32>
    %cst_44 = arith.constant dense<0.000000e+00> : vector<16xf32>
    %85 = vector.multi_reduction <add>, %84, %cst_44 [1] : vector<16x32xf32> to vector<16xf32>
    %86 = vector.shape_cast %85 : vector<16xf32> to vector<16x1xf32>
    %cst_45 = arith.constant 3.200000e+01 : f32
    %87 = vector.broadcast %cst_45 : f32 to vector<16x1xf32>
    %88 = arith.divf %86, %87 : vector<16x1xf32>
    %89 = vector.broadcast %81 : vector<16x1xf32> to vector<16x32xf32>
    %90 = arith.subf %77, %89 : vector<16x32xf32>
    %cst_46 = arith.constant 9.99999997E-7 : f32
    %91 = vector.broadcast %cst_46 : f32 to vector<16x1xf32>
    %92 = arith.addf %88, %91 : vector<16x1xf32>
    %93 = math.rsqrt %92 : vector<16x1xf32>
    %94 = vector.broadcast %93 : vector<16x1xf32> to vector<16x32xf32>
    %95 = arith.mulf %90, %94 : vector<16x32xf32>
    %96 = vector.broadcast %13 : vector<1x32xf32> to vector<16x32xf32>
    %97 = arith.mulf %95, %96 : vector<16x32xf32>
    %98 = vector.broadcast %14 : vector<1x32xf32> to vector<16x32xf32>
    %99 = arith.addf %97, %98 : vector<16x32xf32>
    %100 = arith.truncf %99 : vector<16x32xf32> to vector<16x32xbf16>
    %cst_47 = arith.constant dense<0.000000e+00> : vector<16x64xf32>
    %101 = tpu.matmul %100, %15, %cst_47 {dimension_numbers = #tpu.dot_dimension_numbers<[1], [0], [0], [1], [0, 0, 1, 1], [], []>} : vector<16x32xbf16>, vector<32x64xbf16>, vector<16x64xf32> -> vector<16x64xf32>
    %102 = vector.broadcast %16 : vector<1x64xf32> to vector<16x64xf32>
    %103 = arith.addf %101, %102 : vector<16x64xf32>
    %cst_48 = arith.constant 0.000000e+00 : f32
    %104 = vector.broadcast %cst_48 : f32 to vector<16x64xf32>
    %105 = arith.maximumf %103, %104 : vector<16x64xf32>
    %106 = arith.truncf %105 : vector<16x64xf32> to vector<16x64xbf16>
    %cst_49 = arith.constant dense<0.000000e+00> : vector<16x32xf32>
    %107 = tpu.matmul %106, %17, %cst_49 {dimension_numbers = #tpu.dot_dimension_numbers<[1], [0], [0], [1], [0, 0, 1, 1], [], []>} : vector<16x64xbf16>, vector<64x32xbf16>, vector<16x32xf32> -> vector<16x32xf32>
    %108 = vector.broadcast %18 : vector<1x32xf32> to vector<16x32xf32>
    %109 = arith.addf %107, %108 : vector<16x32xf32>
    %110 = arith.addf %109, %99 : vector<16x32xf32>
    %cst_50 = arith.constant dense<0.000000e+00> : vector<16xf32>
    %111 = vector.multi_reduction <add>, %110, %cst_50 [1] : vector<16x32xf32> to vector<16xf32>
    %112 = vector.shape_cast %111 : vector<16xf32> to vector<16x1xf32>
    %cst_51 = arith.constant 3.200000e+01 : f32
    %113 = vector.broadcast %cst_51 : f32 to vector<16x1xf32>
    %114 = arith.divf %112, %113 : vector<16x1xf32>
    %115 = vector.broadcast %114 : vector<16x1xf32> to vector<16x32xf32>
    %116 = arith.subf %110, %115 : vector<16x32xf32>
    %117 = arith.mulf %116, %116 : vector<16x32xf32>
    %cst_52 = arith.constant dense<0.000000e+00> : vector<16xf32>
    %118 = vector.multi_reduction <add>, %117, %cst_52 [1] : vector<16x32xf32> to vector<16xf32>
    %119 = vector.shape_cast %118 : vector<16xf32> to vector<16x1xf32>
    %cst_53 = arith.constant 3.200000e+01 : f32
    %120 = vector.broadcast %cst_53 : f32 to vector<16x1xf32>
    %121 = arith.divf %119, %120 : vector<16x1xf32>
    %122 = vector.broadcast %114 : vector<16x1xf32> to vector<16x32xf32>
    %123 = arith.subf %110, %122 : vector<16x32xf32>
    %cst_54 = arith.constant 9.99999997E-7 : f32
    %124 = vector.broadcast %cst_54 : f32 to vector<16x1xf32>
    %125 = arith.addf %121, %124 : vector<16x1xf32>
    %126 = math.rsqrt %125 : vector<16x1xf32>
    %127 = vector.broadcast %126 : vector<16x1xf32> to vector<16x32xf32>
    %128 = arith.mulf %123, %127 : vector<16x32xf32>
    %129 = vector.broadcast %19 : vector<1x32xf32> to vector<16x32xf32>
    %130 = arith.mulf %128, %129 : vector<16x32xf32>
    %131 = vector.broadcast %20 : vector<1x32xf32> to vector<16x32xf32>
    %132 = arith.addf %130, %131 : vector<16x32xf32>
    %c0_55 = arith.constant 0 : index
    %c0_56 = arith.constant 0 : index
    %133 = vector.load %arg16[%c0_55, %c0_56] : memref<32x96xbf16, #tpu.memory_space<vmem>>, vector<32x96xbf16>
    %c0_57 = arith.constant 0 : index
    %c0_58 = arith.constant 0 : index
    %134 = vector.load %arg17[%c0_57, %c0_58] : memref<32x32xbf16, #tpu.memory_space<vmem>>, vector<32x32xbf16>
    %c0_59 = arith.constant 0 : index
    %c0_60 = arith.constant 0 : index
    %135 = vector.load %arg18[%c0_59, %c0_60] : memref<1x32xf32, #tpu.memory_space<vmem>>, vector<1x32xf32>
    %c0_61 = arith.constant 0 : index
    %c0_62 = arith.constant 0 : index
    %136 = vector.load %arg19[%c0_61, %c0_62] : memref<1x32xf32, #tpu.memory_space<vmem>>, vector<1x32xf32>
    %c0_63 = arith.constant 0 : index
    %c0_64 = arith.constant 0 : index
    %137 = vector.load %arg20[%c0_63, %c0_64] : memref<32x64xbf16, #tpu.memory_space<vmem>>, vector<32x64xbf16>
    %c0_65 = arith.constant 0 : index
    %c0_66 = arith.constant 0 : index
    %138 = vector.load %arg21[%c0_65, %c0_66] : memref<1x64xf32, #tpu.memory_space<vmem>>, vector<1x64xf32>
    %c0_67 = arith.constant 0 : index
    %c0_68 = arith.constant 0 : index
    %139 = vector.load %arg22[%c0_67, %c0_68] : memref<64x32xbf16, #tpu.memory_space<vmem>>, vector<64x32xbf16>
    %c0_69 = arith.constant 0 : index
    %c0_70 = arith.constant 0 : index
    %140 = vector.load %arg23[%c0_69, %c0_70] : memref<1x32xf32, #tpu.memory_space<vmem>>, vector<1x32xf32>
    %c0_71 = arith.constant 0 : index
    %c0_72 = arith.constant 0 : index
    %141 = vector.load %arg24[%c0_71, %c0_72] : memref<1x32xf32, #tpu.memory_space<vmem>>, vector<1x32xf32>
    %c0_73 = arith.constant 0 : index
    %c0_74 = arith.constant 0 : index
    %142 = vector.load %arg25[%c0_73, %c0_74] : memref<1x32xf32, #tpu.memory_space<vmem>>, vector<1x32xf32>
    %143 = arith.truncf %132 : vector<16x32xf32> to vector<16x32xbf16>
    %cst_75 = arith.constant dense<0.000000e+00> : vector<16x96xf32>
    %144 = tpu.matmul %143, %133, %cst_75 {dimension_numbers = #tpu.dot_dimension_numbers<[1], [0], [0], [1], [0, 0, 1, 1], [], []>} : vector<16x32xbf16>, vector<32x96xbf16>, vector<16x96xf32> -> vector<16x96xf32>
    %145 = vector.extract_strided_slice %144 {offsets = [0, 0], sizes = [16, 32], strides = [1, 1]} : vector<16x96xf32> to vector<16x32xf32>
    %146 = vector.extract_strided_slice %144 {offsets = [0, 32], sizes = [16, 64], strides = [1, 1]} : vector<16x96xf32> to vector<16x64xf32>
    %147 = vector.extract_strided_slice %145 {offsets = [0, 0], sizes = [16, 16], strides = [1, 1]} : vector<16x32xf32> to vector<16x16xf32>
    %148 = vector.shape_cast %147 : vector<16x16xf32> to vector<2x8x16xf32>
    %149 = vector.extract_strided_slice %146 {offsets = [0, 0], sizes = [16, 16], strides = [1, 1]} : vector<16x64xf32> to vector<16x16xf32>
    %150 = vector.shape_cast %149 : vector<16x16xf32> to vector<2x8x16xf32>
    %151 = vector.extract_strided_slice %146 {offsets = [0, 32], sizes = [16, 16], strides = [1, 1]} : vector<16x64xf32> to vector<16x16xf32>
    %152 = vector.shape_cast %151 : vector<16x16xf32> to vector<2x8x16xf32>
    %153 = arith.truncf %148 : vector<2x8x16xf32> to vector<2x8x16xbf16>
    %154 = arith.truncf %150 : vector<2x8x16xf32> to vector<2x8x16xbf16>
    "tpu.trace_start"() <{level = 10 : i32, message = "bqd,bkd->bqk"}> : () -> ()
    %cst_76 = arith.constant dense<0.000000e+00> : vector<2x8x8xf32>
    %155 = tpu.matmul %153, %154, %cst_76 {dimension_numbers = #tpu.dot_dimension_numbers<[2], [2], [1], [1], [0, 0, 0, 1, 1, 1], [0], [0]>} : vector<2x8x16xbf16>, vector<2x8x16xbf16>, vector<2x8x8xf32> -> vector<2x8x8xf32>
    "tpu.trace_stop"() : () -> ()
    %cst_77 = arith.constant 2.500000e-01 : f32
    %156 = vector.broadcast %cst_77 : f32 to vector<2x8x8xf32>
    %157 = arith.mulf %155, %156 : vector<2x8x8xf32>
    %cst_78 = arith.constant dense<0xFF800000> : vector<2x8xf32>
    %158 = vector.multi_reduction <maximumf>, %157, %cst_78 [2] : vector<2x8x8xf32> to vector<2x8xf32>
    %159 = vector.shape_cast %158 : vector<2x8xf32> to vector<2x8x1xf32>
    %160 = vector.broadcast %159 : vector<2x8x1xf32> to vector<2x8x8xf32>
    %161 = arith.subf %157, %160 : vector<2x8x8xf32>
    %162 = math.exp %161 : vector<2x8x8xf32>
    %cst_79 = arith.constant dense<0.000000e+00> : vector<2x8xf32>
    %163 = vector.multi_reduction <add>, %162, %cst_79 [2] : vector<2x8x8xf32> to vector<2x8xf32>
    %164 = vector.shape_cast %163 : vector<2x8xf32> to vector<2x8x1xf32>
    %165 = tpu.reciprocal %164 {approx = true} : vector<2x8x1xf32> -> vector<2x8x1xf32>
    %166 = vector.broadcast %165 : vector<2x8x1xf32> to vector<2x8x8xf32>
    %167 = arith.mulf %162, %166 : vector<2x8x8xf32>
    %168 = arith.truncf %167 : vector<2x8x8xf32> to vector<2x8x8xbf16>
    %169 = arith.truncf %152 : vector<2x8x16xf32> to vector<2x8x16xbf16>
    "tpu.trace_start"() <{level = 10 : i32, message = "bqk,bkd->bqd"}> : () -> ()
    %cst_80 = arith.constant dense<0.000000e+00> : vector<2x8x16xf32>
    %170 = tpu.matmul %168, %169, %cst_80 {dimension_numbers = #tpu.dot_dimension_numbers<[2], [1], [1], [2], [0, 0, 0, 1, 1, 2], [0], [0]>} : vector<2x8x8xbf16>, vector<2x8x16xbf16>, vector<2x8x16xf32> -> vector<2x8x16xf32>
    "tpu.trace_stop"() : () -> ()
    %171 = vector.extract_strided_slice %145 {offsets = [0, 16], sizes = [16, 16], strides = [1, 1]} : vector<16x32xf32> to vector<16x16xf32>
    %172 = vector.shape_cast %171 : vector<16x16xf32> to vector<2x8x16xf32>
    %173 = vector.extract_strided_slice %146 {offsets = [0, 16], sizes = [16, 16], strides = [1, 1]} : vector<16x64xf32> to vector<16x16xf32>
    %174 = vector.shape_cast %173 : vector<16x16xf32> to vector<2x8x16xf32>
    %175 = vector.extract_strided_slice %146 {offsets = [0, 48], sizes = [16, 16], strides = [1, 1]} : vector<16x64xf32> to vector<16x16xf32>
    %176 = vector.shape_cast %175 : vector<16x16xf32> to vector<2x8x16xf32>
    %177 = arith.truncf %172 : vector<2x8x16xf32> to vector<2x8x16xbf16>
    %178 = arith.truncf %174 : vector<2x8x16xf32> to vector<2x8x16xbf16>
    "tpu.trace_start"() <{level = 10 : i32, message = "bqd,bkd->bqk"}> : () -> ()
    %cst_81 = arith.constant dense<0.000000e+00> : vector<2x8x8xf32>
    %179 = tpu.matmul %177, %178, %cst_81 {dimension_numbers = #tpu.dot_dimension_numbers<[2], [2], [1], [1], [0, 0, 0, 1, 1, 1], [0], [0]>} : vector<2x8x16xbf16>, vector<2x8x16xbf16>, vector<2x8x8xf32> -> vector<2x8x8xf32>
    "tpu.trace_stop"() : () -> ()
    %cst_82 = arith.constant 2.500000e-01 : f32
    %180 = vector.broadcast %cst_82 : f32 to vector<2x8x8xf32>
    %181 = arith.mulf %179, %180 : vector<2x8x8xf32>
    %cst_83 = arith.constant dense<0xFF800000> : vector<2x8xf32>
    %182 = vector.multi_reduction <maximumf>, %181, %cst_83 [2] : vector<2x8x8xf32> to vector<2x8xf32>
    %183 = vector.shape_cast %182 : vector<2x8xf32> to vector<2x8x1xf32>
    %184 = vector.broadcast %183 : vector<2x8x1xf32> to vector<2x8x8xf32>
    %185 = arith.subf %181, %184 : vector<2x8x8xf32>
    %186 = math.exp %185 : vector<2x8x8xf32>
    %cst_84 = arith.constant dense<0.000000e+00> : vector<2x8xf32>
    %187 = vector.multi_reduction <add>, %186, %cst_84 [2] : vector<2x8x8xf32> to vector<2x8xf32>
    %188 = vector.shape_cast %187 : vector<2x8xf32> to vector<2x8x1xf32>
    %189 = tpu.reciprocal %188 {approx = true} : vector<2x8x1xf32> -> vector<2x8x1xf32>
    %190 = vector.broadcast %189 : vector<2x8x1xf32> to vector<2x8x8xf32>
    %191 = arith.mulf %186, %190 : vector<2x8x8xf32>
    %192 = arith.truncf %191 : vector<2x8x8xf32> to vector<2x8x8xbf16>
    %193 = arith.truncf %176 : vector<2x8x16xf32> to vector<2x8x16xbf16>
    "tpu.trace_start"() <{level = 10 : i32, message = "bqk,bkd->bqd"}> : () -> ()
    %cst_85 = arith.constant dense<0.000000e+00> : vector<2x8x16xf32>
    %194 = tpu.matmul %192, %193, %cst_85 {dimension_numbers = #tpu.dot_dimension_numbers<[2], [1], [1], [2], [0, 0, 0, 1, 1, 2], [0], [0]>} : vector<2x8x8xbf16>, vector<2x8x16xbf16>, vector<2x8x16xf32> -> vector<2x8x16xf32>
    "tpu.trace_stop"() : () -> ()
    %195 = tpu.concatenate %170, %194 in 2 : vector<2x8x16xf32>, vector<2x8x16xf32> -> vector<2x8x32xf32>
    %196 = vector.shape_cast %195 : vector<2x8x32xf32> to vector<16x32xf32>
    %197 = arith.truncf %196 : vector<16x32xf32> to vector<16x32xbf16>
    %cst_86 = arith.constant dense<0.000000e+00> : vector<16x32xf32>
    %198 = tpu.matmul %197, %134, %cst_86 {dimension_numbers = #tpu.dot_dimension_numbers<[1], [0], [0], [1], [0, 0, 1, 1], [], []>} : vector<16x32xbf16>, vector<32x32xbf16>, vector<16x32xf32> -> vector<16x32xf32>
    %199 = arith.addf %198, %132 : vector<16x32xf32>
    %cst_87 = arith.constant dense<0.000000e+00> : vector<16xf32>
    %200 = vector.multi_reduction <add>, %199, %cst_87 [1] : vector<16x32xf32> to vector<16xf32>
    %201 = vector.shape_cast %200 : vector<16xf32> to vector<16x1xf32>
    %cst_88 = arith.constant 3.200000e+01 : f32
    %202 = vector.broadcast %cst_88 : f32 to vector<16x1xf32>
    %203 = arith.divf %201, %202 : vector<16x1xf32>
    %204 = vector.broadcast %203 : vector<16x1xf32> to vector<16x32xf32>
    %205 = arith.subf %199, %204 : vector<16x32xf32>
    %206 = arith.mulf %205, %205 : vector<16x32xf32>
    %cst_89 = arith.constant dense<0.000000e+00> : vector<16xf32>
    %207 = vector.multi_reduction <add>, %206, %cst_89 [1] : vector<16x32xf32> to vector<16xf32>
    %208 = vector.shape_cast %207 : vector<16xf32> to vector<16x1xf32>
    %cst_90 = arith.constant 3.200000e+01 : f32
    %209 = vector.broadcast %cst_90 : f32 to vector<16x1xf32>
    %210 = arith.divf %208, %209 : vector<16x1xf32>
    %211 = vector.broadcast %203 : vector<16x1xf32> to vector<16x32xf32>
    %212 = arith.subf %199, %211 : vector<16x32xf32>
    %cst_91 = arith.constant 9.99999997E-7 : f32
    %213 = vector.broadcast %cst_91 : f32 to vector<16x1xf32>
    %214 = arith.addf %210, %213 : vector<16x1xf32>
    %215 = math.rsqrt %214 : vector<16x1xf32>
    %216 = vector.broadcast %215 : vector<16x1xf32> to vector<16x32xf32>
    %217 = arith.mulf %212, %216 : vector<16x32xf32>
    %218 = vector.broadcast %135 : vector<1x32xf32> to vector<16x32xf32>
    %219 = arith.mulf %217, %218 : vector<16x32xf32>
    %220 = vector.broadcast %136 : vector<1x32xf32> to vector<16x32xf32>
    %221 = arith.addf %219, %220 : vector<16x32xf32>
    %222 = arith.truncf %221 : vector<16x32xf32> to vector<16x32xbf16>
    %cst_92 = arith.constant dense<0.000000e+00> : vector<16x64xf32>
    %223 = tpu.matmul %222, %137, %cst_92 {dimension_numbers = #tpu.dot_dimension_numbers<[1], [0], [0], [1], [0, 0, 1, 1], [], []>} : vector<16x32xbf16>, vector<32x64xbf16>, vector<16x64xf32> -> vector<16x64xf32>
    %224 = vector.broadcast %138 : vector<1x64xf32> to vector<16x64xf32>
    %225 = arith.addf %223, %224 : vector<16x64xf32>
    %cst_93 = arith.constant 0.000000e+00 : f32
    %226 = vector.broadcast %cst_93 : f32 to vector<16x64xf32>
    %227 = arith.maximumf %225, %226 : vector<16x64xf32>
    %228 = arith.truncf %227 : vector<16x64xf32> to vector<16x64xbf16>
    %cst_94 = arith.constant dense<0.000000e+00> : vector<16x32xf32>
    %229 = tpu.matmul %228, %139, %cst_94 {dimension_numbers = #tpu.dot_dimension_numbers<[1], [0], [0], [1], [0, 0, 1, 1], [], []>} : vector<16x64xbf16>, vector<64x32xbf16>, vector<16x32xf32> -> vector<16x32xf32>
    %230 = vector.broadcast %140 : vector<1x32xf32> to vector<16x32xf32>
    %231 = arith.addf %229, %230 : vector<16x32xf32>
    %232 = arith.addf %231, %221 : vector<16x32xf32>
    %cst_95 = arith.constant dense<0.000000e+00> : vector<16xf32>
    %233 = vector.multi_reduction <add>, %232, %cst_95 [1] : vector<16x32xf32> to vector<16xf32>
    %234 = vector.shape_cast %233 : vector<16xf32> to vector<16x1xf32>
    %cst_96 = arith.constant 3.200000e+01 : f32
    %235 = vector.broadcast %cst_96 : f32 to vector<16x1xf32>
    %236 = arith.divf %234, %235 : vector<16x1xf32>
    %237 = vector.broadcast %236 : vector<16x1xf32> to vector<16x32xf32>
    %238 = arith.subf %232, %237 : vector<16x32xf32>
    %239 = arith.mulf %238, %238 : vector<16x32xf32>
    %cst_97 = arith.constant dense<0.000000e+00> : vector<16xf32>
    %240 = vector.multi_reduction <add>, %239, %cst_97 [1] : vector<16x32xf32> to vector<16xf32>
    %241 = vector.shape_cast %240 : vector<16xf32> to vector<16x1xf32>
    %cst_98 = arith.constant 3.200000e+01 : f32
    %242 = vector.broadcast %cst_98 : f32 to vector<16x1xf32>
    %243 = arith.divf %241, %242 : vector<16x1xf32>
    %244 = vector.broadcast %236 : vector<16x1xf32> to vector<16x32xf32>
    %245 = arith.subf %232, %244 : vector<16x32xf32>
    %cst_99 = arith.constant 9.99999997E-7 : f32
    %246 = vector.broadcast %cst_99 : f32 to vector<16x1xf32>
    %247 = arith.addf %243, %246 : vector<16x1xf32>
    %248 = math.rsqrt %247 : vector<16x1xf32>
    %249 = vector.broadcast %248 : vector<16x1xf32> to vector<16x32xf32>
    %250 = arith.mulf %245, %249 : vector<16x32xf32>
    %251 = vector.broadcast %141 : vector<1x32xf32> to vector<16x32xf32>
    %252 = arith.mulf %250, %251 : vector<16x32xf32>
    %253 = vector.broadcast %142 : vector<1x32xf32> to vector<16x32xf32>
    %254 = arith.addf %252, %253 : vector<16x32xf32>
    %c0_100 = arith.constant 0 : index
    %c0_101 = arith.constant 0 : index
    %255 = vector.load %arg26[%c0_100, %c0_101] : memref<32x96xbf16, #tpu.memory_space<vmem>>, vector<32x96xbf16>
    %c0_102 = arith.constant 0 : index
    %c0_103 = arith.constant 0 : index
    %256 = vector.load %arg27[%c0_102, %c0_103] : memref<32x32xbf16, #tpu.memory_space<vmem>>, vector<32x32xbf16>
    %c0_104 = arith.constant 0 : index
    %c0_105 = arith.constant 0 : index
    %257 = vector.load %arg28[%c0_104, %c0_105] : memref<1x32xf32, #tpu.memory_space<vmem>>, vector<1x32xf32>
    %c0_106 = arith.constant 0 : index
    %c0_107 = arith.constant 0 : index
    %258 = vector.load %arg29[%c0_106, %c0_107] : memref<1x32xf32, #tpu.memory_space<vmem>>, vector<1x32xf32>
    %c0_108 = arith.constant 0 : index
    %c0_109 = arith.constant 0 : index
    %259 = vector.load %arg30[%c0_108, %c0_109] : memref<32x32xbf16, #tpu.memory_space<vmem>>, vector<32x32xbf16>
    %c0_110 = arith.constant 0 : index
    %c0_111 = arith.constant 0 : index
    %260 = vector.load %arg31[%c0_110, %c0_111] : memref<32x64xbf16, #tpu.memory_space<vmem>>, vector<32x64xbf16>
    %c0_112 = arith.constant 0 : index
    %c0_113 = arith.constant 0 : index
    %261 = vector.load %arg32[%c0_112, %c0_113] : memref<32x32xbf16, #tpu.memory_space<vmem>>, vector<32x32xbf16>
    %c0_114 = arith.constant 0 : index
    %c0_115 = arith.constant 0 : index
    %262 = vector.load %arg33[%c0_114, %c0_115] : memref<1x32xf32, #tpu.memory_space<vmem>>, vector<1x32xf32>
    %c0_116 = arith.constant 0 : index
    %c0_117 = arith.constant 0 : index
    %263 = vector.load %arg34[%c0_116, %c0_117] : memref<1x32xf32, #tpu.memory_space<vmem>>, vector<1x32xf32>
    %c0_118 = arith.constant 0 : index
    %c0_119 = arith.constant 0 : index
    %264 = vector.load %arg35[%c0_118, %c0_119] : memref<32x64xbf16, #tpu.memory_space<vmem>>, vector<32x64xbf16>
    %c0_120 = arith.constant 0 : index
    %c0_121 = arith.constant 0 : index
    %265 = vector.load %arg36[%c0_120, %c0_121] : memref<1x64xf32, #tpu.memory_space<vmem>>, vector<1x64xf32>
    %c0_122 = arith.constant 0 : index
    %c0_123 = arith.constant 0 : index
    %266 = vector.load %arg37[%c0_122, %c0_123] : memref<64x32xbf16, #tpu.memory_space<vmem>>, vector<64x32xbf16>
    %c0_124 = arith.constant 0 : index
    %c0_125 = arith.constant 0 : index
    %267 = vector.load %arg38[%c0_124, %c0_125] : memref<1x32xf32, #tpu.memory_space<vmem>>, vector<1x32xf32>
    %c0_126 = arith.constant 0 : index
    %c0_127 = arith.constant 0 : index
    %268 = vector.load %arg39[%c0_126, %c0_127] : memref<1x32xf32, #tpu.memory_space<vmem>>, vector<1x32xf32>
    %c0_128 = arith.constant 0 : index
    %c0_129 = arith.constant 0 : index
    %269 = vector.load %arg40[%c0_128, %c0_129] : memref<1x32xf32, #tpu.memory_space<vmem>>, vector<1x32xf32>
    %270 = arith.truncf %3 : vector<8x32xf32> to vector<8x32xbf16>
    %cst_130 = arith.constant dense<0.000000e+00> : vector<8x96xf32>
    %271 = tpu.matmul %270, %255, %cst_130 {dimension_numbers = #tpu.dot_dimension_numbers<[1], [0], [0], [1], [0, 0, 1, 1], [], []>} : vector<8x32xbf16>, vector<32x96xbf16>, vector<8x96xf32> -> vector<8x96xf32>
    %272 = vector.extract_strided_slice %271 {offsets = [0, 0], sizes = [8, 32], strides = [1, 1]} : vector<8x96xf32> to vector<8x32xf32>
    %273 = vector.extract_strided_slice %271 {offsets = [0, 32], sizes = [8, 64], strides = [1, 1]} : vector<8x96xf32> to vector<8x64xf32>
    %274 = vector.extract_strided_slice %272 {offsets = [0, 0], sizes = [8, 16], strides = [1, 1]} : vector<8x32xf32> to vector<8x16xf32>
    %275 = vector.shape_cast %274 : vector<8x16xf32> to vector<2x4x16xf32>
    %276 = vector.extract_strided_slice %273 {offsets = [0, 0], sizes = [8, 16], strides = [1, 1]} : vector<8x64xf32> to vector<8x16xf32>
    %277 = vector.shape_cast %276 : vector<8x16xf32> to vector<2x4x16xf32>
    %278 = vector.extract_strided_slice %273 {offsets = [0, 32], sizes = [8, 16], strides = [1, 1]} : vector<8x64xf32> to vector<8x16xf32>
    %279 = vector.shape_cast %278 : vector<8x16xf32> to vector<2x4x16xf32>
    %280 = arith.truncf %275 : vector<2x4x16xf32> to vector<2x4x16xbf16>
    %281 = arith.truncf %277 : vector<2x4x16xf32> to vector<2x4x16xbf16>
    "tpu.trace_start"() <{level = 10 : i32, message = "bqd,bkd->bqk"}> : () -> ()
    %cst_131 = arith.constant dense<0.000000e+00> : vector<2x4x4xf32>
    %282 = tpu.matmul %280, %281, %cst_131 {dimension_numbers = #tpu.dot_dimension_numbers<[2], [2], [1], [1], [0, 0, 0, 1, 1, 1], [0], [0]>} : vector<2x4x16xbf16>, vector<2x4x16xbf16>, vector<2x4x4xf32> -> vector<2x4x4xf32>
    "tpu.trace_stop"() : () -> ()
    %cst_132 = arith.constant 2.500000e-01 : f32
    %283 = vector.broadcast %cst_132 : f32 to vector<2x4x4xf32>
    %284 = arith.mulf %282, %283 : vector<2x4x4xf32>
    %cst_133 = arith.constant dense<0xFF800000> : vector<2x4xf32>
    %285 = vector.multi_reduction <maximumf>, %284, %cst_133 [2] : vector<2x4x4xf32> to vector<2x4xf32>
    %286 = vector.shape_cast %285 : vector<2x4xf32> to vector<2x4x1xf32>
    %287 = vector.broadcast %286 : vector<2x4x1xf32> to vector<2x4x4xf32>
    %288 = arith.subf %284, %287 : vector<2x4x4xf32>
    %289 = math.exp %288 : vector<2x4x4xf32>
    %cst_134 = arith.constant dense<0.000000e+00> : vector<2x4xf32>
    %290 = vector.multi_reduction <add>, %289, %cst_134 [2] : vector<2x4x4xf32> to vector<2x4xf32>
    %291 = vector.shape_cast %290 : vector<2x4xf32> to vector<2x4x1xf32>
    %292 = tpu.reciprocal %291 {approx = true} : vector<2x4x1xf32> -> vector<2x4x1xf32>
    %293 = vector.broadcast %292 : vector<2x4x1xf32> to vector<2x4x4xf32>
    %294 = arith.mulf %289, %293 : vector<2x4x4xf32>
    %295 = arith.truncf %294 : vector<2x4x4xf32> to vector<2x4x4xbf16>
    %296 = arith.truncf %279 : vector<2x4x16xf32> to vector<2x4x16xbf16>
    "tpu.trace_start"() <{level = 10 : i32, message = "bqk,bkd->bqd"}> : () -> ()
    %cst_135 = arith.constant dense<0.000000e+00> : vector<2x4x16xf32>
    %297 = tpu.matmul %295, %296, %cst_135 {dimension_numbers = #tpu.dot_dimension_numbers<[2], [1], [1], [2], [0, 0, 0, 1, 1, 2], [0], [0]>} : vector<2x4x4xbf16>, vector<2x4x16xbf16>, vector<2x4x16xf32> -> vector<2x4x16xf32>
    "tpu.trace_stop"() : () -> ()
    %298 = vector.extract_strided_slice %272 {offsets = [0, 16], sizes = [8, 16], strides = [1, 1]} : vector<8x32xf32> to vector<8x16xf32>
    %299 = vector.shape_cast %298 : vector<8x16xf32> to vector<2x4x16xf32>
    %300 = vector.extract_strided_slice %273 {offsets = [0, 16], sizes = [8, 16], strides = [1, 1]} : vector<8x64xf32> to vector<8x16xf32>
    %301 = vector.shape_cast %300 : vector<8x16xf32> to vector<2x4x16xf32>
    %302 = vector.extract_strided_slice %273 {offsets = [0, 48], sizes = [8, 16], strides = [1, 1]} : vector<8x64xf32> to vector<8x16xf32>
    %303 = vector.shape_cast %302 : vector<8x16xf32> to vector<2x4x16xf32>
    %304 = arith.truncf %299 : vector<2x4x16xf32> to vector<2x4x16xbf16>
    %305 = arith.truncf %301 : vector<2x4x16xf32> to vector<2x4x16xbf16>
    "tpu.trace_start"() <{level = 10 : i32, message = "bqd,bkd->bqk"}> : () -> ()
    %cst_136 = arith.constant dense<0.000000e+00> : vector<2x4x4xf32>
    %306 = tpu.matmul %304, %305, %cst_136 {dimension_numbers = #tpu.dot_dimension_numbers<[2], [2], [1], [1], [0, 0, 0, 1, 1, 1], [0], [0]>} : vector<2x4x16xbf16>, vector<2x4x16xbf16>, vector<2x4x4xf32> -> vector<2x4x4xf32>
    "tpu.trace_stop"() : () -> ()
    %cst_137 = arith.constant 2.500000e-01 : f32
    %307 = vector.broadcast %cst_137 : f32 to vector<2x4x4xf32>
    %308 = arith.mulf %306, %307 : vector<2x4x4xf32>
    %cst_138 = arith.constant dense<0xFF800000> : vector<2x4xf32>
    %309 = vector.multi_reduction <maximumf>, %308, %cst_138 [2] : vector<2x4x4xf32> to vector<2x4xf32>
    %310 = vector.shape_cast %309 : vector<2x4xf32> to vector<2x4x1xf32>
    %311 = vector.broadcast %310 : vector<2x4x1xf32> to vector<2x4x4xf32>
    %312 = arith.subf %308, %311 : vector<2x4x4xf32>
    %313 = math.exp %312 : vector<2x4x4xf32>
    %cst_139 = arith.constant dense<0.000000e+00> : vector<2x4xf32>
    %314 = vector.multi_reduction <add>, %313, %cst_139 [2] : vector<2x4x4xf32> to vector<2x4xf32>
    %315 = vector.shape_cast %314 : vector<2x4xf32> to vector<2x4x1xf32>
    %316 = tpu.reciprocal %315 {approx = true} : vector<2x4x1xf32> -> vector<2x4x1xf32>
    %317 = vector.broadcast %316 : vector<2x4x1xf32> to vector<2x4x4xf32>
    %318 = arith.mulf %313, %317 : vector<2x4x4xf32>
    %319 = arith.truncf %318 : vector<2x4x4xf32> to vector<2x4x4xbf16>
    %320 = arith.truncf %303 : vector<2x4x16xf32> to vector<2x4x16xbf16>
    "tpu.trace_start"() <{level = 10 : i32, message = "bqk,bkd->bqd"}> : () -> ()
    %cst_140 = arith.constant dense<0.000000e+00> : vector<2x4x16xf32>
    %321 = tpu.matmul %319, %320, %cst_140 {dimension_numbers = #tpu.dot_dimension_numbers<[2], [1], [1], [2], [0, 0, 0, 1, 1, 2], [0], [0]>} : vector<2x4x4xbf16>, vector<2x4x16xbf16>, vector<2x4x16xf32> -> vector<2x4x16xf32>
    "tpu.trace_stop"() : () -> ()
    %322 = tpu.concatenate %297, %321 in 2 : vector<2x4x16xf32>, vector<2x4x16xf32> -> vector<2x4x32xf32>
    %323 = vector.shape_cast %322 : vector<2x4x32xf32> to vector<8x32xf32>
    %324 = arith.truncf %323 : vector<8x32xf32> to vector<8x32xbf16>
    %cst_141 = arith.constant dense<0.000000e+00> : vector<8x32xf32>
    %325 = tpu.matmul %324, %256, %cst_141 {dimension_numbers = #tpu.dot_dimension_numbers<[1], [0], [0], [1], [0, 0, 1, 1], [], []>} : vector<8x32xbf16>, vector<32x32xbf16>, vector<8x32xf32> -> vector<8x32xf32>
    %326 = arith.addf %325, %3 : vector<8x32xf32>
    %cst_142 = arith.constant dense<0.000000e+00> : vector<8xf32>
    %327 = vector.multi_reduction <add>, %326, %cst_142 [1] : vector<8x32xf32> to vector<8xf32>
    %328 = vector.shape_cast %327 : vector<8xf32> to vector<8x1xf32>
    %cst_143 = arith.constant 3.200000e+01 : f32
    %329 = vector.broadcast %cst_143 : f32 to vector<8x1xf32>
    %330 = arith.divf %328, %329 : vector<8x1xf32>
    %331 = vector.broadcast %330 : vector<8x1xf32> to vector<8x32xf32>
    %332 = arith.subf %326, %331 : vector<8x32xf32>
    %333 = arith.mulf %332, %332 : vector<8x32xf32>
    %cst_144 = arith.constant dense<0.000000e+00> : vector<8xf32>
    %334 = vector.multi_reduction <add>, %333, %cst_144 [1] : vector<8x32xf32> to vector<8xf32>
    %335 = vector.shape_cast %334 : vector<8xf32> to vector<8x1xf32>
    %cst_145 = arith.constant 3.200000e+01 : f32
    %336 = vector.broadcast %cst_145 : f32 to vector<8x1xf32>
    %337 = arith.divf %335, %336 : vector<8x1xf32>
    %338 = vector.broadcast %330 : vector<8x1xf32> to vector<8x32xf32>
    %339 = arith.subf %326, %338 : vector<8x32xf32>
    %cst_146 = arith.constant 9.99999997E-7 : f32
    %340 = vector.broadcast %cst_146 : f32 to vector<8x1xf32>
    %341 = arith.addf %337, %340 : vector<8x1xf32>
    %342 = math.rsqrt %341 : vector<8x1xf32>
    %343 = vector.broadcast %342 : vector<8x1xf32> to vector<8x32xf32>
    %344 = arith.mulf %339, %343 : vector<8x32xf32>
    %345 = vector.broadcast %257 : vector<1x32xf32> to vector<8x32xf32>
    %346 = arith.mulf %344, %345 : vector<8x32xf32>
    %347 = vector.broadcast %258 : vector<1x32xf32> to vector<8x32xf32>
    %348 = arith.addf %346, %347 : vector<8x32xf32>
    %349 = arith.truncf %348 : vector<8x32xf32> to vector<8x32xbf16>
    %cst_147 = arith.constant dense<0.000000e+00> : vector<8x32xf32>
    %350 = tpu.matmul %349, %259, %cst_147 {dimension_numbers = #tpu.dot_dimension_numbers<[1], [0], [0], [1], [0, 0, 1, 1], [], []>} : vector<8x32xbf16>, vector<32x32xbf16>, vector<8x32xf32> -> vector<8x32xf32>
    %351 = arith.truncf %254 : vector<16x32xf32> to vector<16x32xbf16>
    %cst_148 = arith.constant dense<0.000000e+00> : vector<16x64xf32>
    %352 = tpu.matmul %351, %260, %cst_148 {dimension_numbers = #tpu.dot_dimension_numbers<[1], [0], [0], [1], [0, 0, 1, 1], [], []>} : vector<16x32xbf16>, vector<32x64xbf16>, vector<16x64xf32> -> vector<16x64xf32>
    %353 = vector.extract_strided_slice %350 {offsets = [0, 0], sizes = [8, 16], strides = [1, 1]} : vector<8x32xf32> to vector<8x16xf32>
    %354 = vector.shape_cast %353 : vector<8x16xf32> to vector<2x4x16xf32>
    %355 = vector.extract_strided_slice %352 {offsets = [0, 0], sizes = [16, 16], strides = [1, 1]} : vector<16x64xf32> to vector<16x16xf32>
    %356 = vector.shape_cast %355 : vector<16x16xf32> to vector<2x8x16xf32>
    %357 = vector.extract_strided_slice %352 {offsets = [0, 32], sizes = [16, 16], strides = [1, 1]} : vector<16x64xf32> to vector<16x16xf32>
    %358 = vector.shape_cast %357 : vector<16x16xf32> to vector<2x8x16xf32>
    %359 = arith.truncf %354 : vector<2x4x16xf32> to vector<2x4x16xbf16>
    %360 = arith.truncf %356 : vector<2x8x16xf32> to vector<2x8x16xbf16>
    "tpu.trace_start"() <{level = 10 : i32, message = "bqd,bkd->bqk"}> : () -> ()
    %cst_149 = arith.constant dense<0.000000e+00> : vector<2x4x8xf32>
    %361 = tpu.matmul %359, %360, %cst_149 {dimension_numbers = #tpu.dot_dimension_numbers<[2], [2], [1], [1], [0, 0, 0, 1, 1, 1], [0], [0]>} : vector<2x4x16xbf16>, vector<2x8x16xbf16>, vector<2x4x8xf32> -> vector<2x4x8xf32>
    "tpu.trace_stop"() : () -> ()
    %cst_150 = arith.constant 2.500000e-01 : f32
    %362 = vector.broadcast %cst_150 : f32 to vector<2x4x8xf32>
    %363 = arith.mulf %361, %362 : vector<2x4x8xf32>
    %cst_151 = arith.constant dense<0xFF800000> : vector<2x4xf32>
    %364 = vector.multi_reduction <maximumf>, %363, %cst_151 [2] : vector<2x4x8xf32> to vector<2x4xf32>
    %365 = vector.shape_cast %364 : vector<2x4xf32> to vector<2x4x1xf32>
    %366 = vector.broadcast %365 : vector<2x4x1xf32> to vector<2x4x8xf32>
    %367 = arith.subf %363, %366 : vector<2x4x8xf32>
    %368 = math.exp %367 : vector<2x4x8xf32>
    %cst_152 = arith.constant dense<0.000000e+00> : vector<2x4xf32>
    %369 = vector.multi_reduction <add>, %368, %cst_152 [2] : vector<2x4x8xf32> to vector<2x4xf32>
    %370 = vector.shape_cast %369 : vector<2x4xf32> to vector<2x4x1xf32>
    %371 = tpu.reciprocal %370 {approx = true} : vector<2x4x1xf32> -> vector<2x4x1xf32>
    %372 = vector.broadcast %371 : vector<2x4x1xf32> to vector<2x4x8xf32>
    %373 = arith.mulf %368, %372 : vector<2x4x8xf32>
    %374 = arith.truncf %373 : vector<2x4x8xf32> to vector<2x4x8xbf16>
    %375 = arith.truncf %358 : vector<2x8x16xf32> to vector<2x8x16xbf16>
    "tpu.trace_start"() <{level = 10 : i32, message = "bqk,bkd->bqd"}> : () -> ()
    %cst_153 = arith.constant dense<0.000000e+00> : vector<2x4x16xf32>
    %376 = tpu.matmul %374, %375, %cst_153 {dimension_numbers = #tpu.dot_dimension_numbers<[2], [1], [1], [2], [0, 0, 0, 1, 1, 2], [0], [0]>} : vector<2x4x8xbf16>, vector<2x8x16xbf16>, vector<2x4x16xf32> -> vector<2x4x16xf32>
    "tpu.trace_stop"() : () -> ()
    %377 = vector.extract_strided_slice %350 {offsets = [0, 16], sizes = [8, 16], strides = [1, 1]} : vector<8x32xf32> to vector<8x16xf32>
    %378 = vector.shape_cast %377 : vector<8x16xf32> to vector<2x4x16xf32>
    %379 = vector.extract_strided_slice %352 {offsets = [0, 16], sizes = [16, 16], strides = [1, 1]} : vector<16x64xf32> to vector<16x16xf32>
    %380 = vector.shape_cast %379 : vector<16x16xf32> to vector<2x8x16xf32>
    %381 = vector.extract_strided_slice %352 {offsets = [0, 48], sizes = [16, 16], strides = [1, 1]} : vector<16x64xf32> to vector<16x16xf32>
    %382 = vector.shape_cast %381 : vector<16x16xf32> to vector<2x8x16xf32>
    %383 = arith.truncf %378 : vector<2x4x16xf32> to vector<2x4x16xbf16>
    %384 = arith.truncf %380 : vector<2x8x16xf32> to vector<2x8x16xbf16>
    "tpu.trace_start"() <{level = 10 : i32, message = "bqd,bkd->bqk"}> : () -> ()
    %cst_154 = arith.constant dense<0.000000e+00> : vector<2x4x8xf32>
    %385 = tpu.matmul %383, %384, %cst_154 {dimension_numbers = #tpu.dot_dimension_numbers<[2], [2], [1], [1], [0, 0, 0, 1, 1, 1], [0], [0]>} : vector<2x4x16xbf16>, vector<2x8x16xbf16>, vector<2x4x8xf32> -> vector<2x4x8xf32>
    "tpu.trace_stop"() : () -> ()
    %cst_155 = arith.constant 2.500000e-01 : f32
    %386 = vector.broadcast %cst_155 : f32 to vector<2x4x8xf32>
    %387 = arith.mulf %385, %386 : vector<2x4x8xf32>
    %cst_156 = arith.constant dense<0xFF800000> : vector<2x4xf32>
    %388 = vector.multi_reduction <maximumf>, %387, %cst_156 [2] : vector<2x4x8xf32> to vector<2x4xf32>
    %389 = vector.shape_cast %388 : vector<2x4xf32> to vector<2x4x1xf32>
    %390 = vector.broadcast %389 : vector<2x4x1xf32> to vector<2x4x8xf32>
    %391 = arith.subf %387, %390 : vector<2x4x8xf32>
    %392 = math.exp %391 : vector<2x4x8xf32>
    %cst_157 = arith.constant dense<0.000000e+00> : vector<2x4xf32>
    %393 = vector.multi_reduction <add>, %392, %cst_157 [2] : vector<2x4x8xf32> to vector<2x4xf32>
    %394 = vector.shape_cast %393 : vector<2x4xf32> to vector<2x4x1xf32>
    %395 = tpu.reciprocal %394 {approx = true} : vector<2x4x1xf32> -> vector<2x4x1xf32>
    %396 = vector.broadcast %395 : vector<2x4x1xf32> to vector<2x4x8xf32>
    %397 = arith.mulf %392, %396 : vector<2x4x8xf32>
    %398 = arith.truncf %397 : vector<2x4x8xf32> to vector<2x4x8xbf16>
    %399 = arith.truncf %382 : vector<2x8x16xf32> to vector<2x8x16xbf16>
    "tpu.trace_start"() <{level = 10 : i32, message = "bqk,bkd->bqd"}> : () -> ()
    %cst_158 = arith.constant dense<0.000000e+00> : vector<2x4x16xf32>
    %400 = tpu.matmul %398, %399, %cst_158 {dimension_numbers = #tpu.dot_dimension_numbers<[2], [1], [1], [2], [0, 0, 0, 1, 1, 2], [0], [0]>} : vector<2x4x8xbf16>, vector<2x8x16xbf16>, vector<2x4x16xf32> -> vector<2x4x16xf32>
    "tpu.trace_stop"() : () -> ()
    %401 = tpu.concatenate %376, %400 in 2 : vector<2x4x16xf32>, vector<2x4x16xf32> -> vector<2x4x32xf32>
    %402 = vector.shape_cast %401 : vector<2x4x32xf32> to vector<8x32xf32>
    %403 = arith.truncf %402 : vector<8x32xf32> to vector<8x32xbf16>
    %cst_159 = arith.constant dense<0.000000e+00> : vector<8x32xf32>
    %404 = tpu.matmul %403, %261, %cst_159 {dimension_numbers = #tpu.dot_dimension_numbers<[1], [0], [0], [1], [0, 0, 1, 1], [], []>} : vector<8x32xbf16>, vector<32x32xbf16>, vector<8x32xf32> -> vector<8x32xf32>
    %405 = arith.addf %404, %348 : vector<8x32xf32>
    %cst_160 = arith.constant dense<0.000000e+00> : vector<8xf32>
    %406 = vector.multi_reduction <add>, %405, %cst_160 [1] : vector<8x32xf32> to vector<8xf32>
    %407 = vector.shape_cast %406 : vector<8xf32> to vector<8x1xf32>
    %cst_161 = arith.constant 3.200000e+01 : f32
    %408 = vector.broadcast %cst_161 : f32 to vector<8x1xf32>
    %409 = arith.divf %407, %408 : vector<8x1xf32>
    %410 = vector.broadcast %409 : vector<8x1xf32> to vector<8x32xf32>
    %411 = arith.subf %405, %410 : vector<8x32xf32>
    %412 = arith.mulf %411, %411 : vector<8x32xf32>
    %cst_162 = arith.constant dense<0.000000e+00> : vector<8xf32>
    %413 = vector.multi_reduction <add>, %412, %cst_162 [1] : vector<8x32xf32> to vector<8xf32>
    %414 = vector.shape_cast %413 : vector<8xf32> to vector<8x1xf32>
    %cst_163 = arith.constant 3.200000e+01 : f32
    %415 = vector.broadcast %cst_163 : f32 to vector<8x1xf32>
    %416 = arith.divf %414, %415 : vector<8x1xf32>
    %417 = vector.broadcast %409 : vector<8x1xf32> to vector<8x32xf32>
    %418 = arith.subf %405, %417 : vector<8x32xf32>
    %cst_164 = arith.constant 9.99999997E-7 : f32
    %419 = vector.broadcast %cst_164 : f32 to vector<8x1xf32>
    %420 = arith.addf %416, %419 : vector<8x1xf32>
    %421 = math.rsqrt %420 : vector<8x1xf32>
    %422 = vector.broadcast %421 : vector<8x1xf32> to vector<8x32xf32>
    %423 = arith.mulf %418, %422 : vector<8x32xf32>
    %424 = vector.broadcast %262 : vector<1x32xf32> to vector<8x32xf32>
    %425 = arith.mulf %423, %424 : vector<8x32xf32>
    %426 = vector.broadcast %263 : vector<1x32xf32> to vector<8x32xf32>
    %427 = arith.addf %425, %426 : vector<8x32xf32>
    %428 = arith.truncf %427 : vector<8x32xf32> to vector<8x32xbf16>
    %cst_165 = arith.constant dense<0.000000e+00> : vector<8x64xf32>
    %429 = tpu.matmul %428, %264, %cst_165 {dimension_numbers = #tpu.dot_dimension_numbers<[1], [0], [0], [1], [0, 0, 1, 1], [], []>} : vector<8x32xbf16>, vector<32x64xbf16>, vector<8x64xf32> -> vector<8x64xf32>
    %430 = vector.broadcast %265 : vector<1x64xf32> to vector<8x64xf32>
    %431 = arith.addf %429, %430 : vector<8x64xf32>
    %cst_166 = arith.constant 0.000000e+00 : f32
    %432 = vector.broadcast %cst_166 : f32 to vector<8x64xf32>
    %433 = arith.maximumf %431, %432 : vector<8x64xf32>
    %434 = arith.truncf %433 : vector<8x64xf32> to vector<8x64xbf16>
    %cst_167 = arith.constant dense<0.000000e+00> : vector<8x32xf32>
    %435 = tpu.matmul %434, %266, %cst_167 {dimension_numbers = #tpu.dot_dimension_numbers<[1], [0], [0], [1], [0, 0, 1, 1], [], []>} : vector<8x64xbf16>, vector<64x32xbf16>, vector<8x32xf32> -> vector<8x32xf32>
    %436 = vector.broadcast %267 : vector<1x32xf32> to vector<8x32xf32>
    %437 = arith.addf %435, %436 : vector<8x32xf32>
    %438 = arith.addf %437, %427 : vector<8x32xf32>
    %cst_168 = arith.constant dense<0.000000e+00> : vector<8xf32>
    %439 = vector.multi_reduction <add>, %438, %cst_168 [1] : vector<8x32xf32> to vector<8xf32>
    %440 = vector.shape_cast %439 : vector<8xf32> to vector<8x1xf32>
    %cst_169 = arith.constant 3.200000e+01 : f32
    %441 = vector.broadcast %cst_169 : f32 to vector<8x1xf32>
    %442 = arith.divf %440, %441 : vector<8x1xf32>
    %443 = vector.broadcast %442 : vector<8x1xf32> to vector<8x32xf32>
    %444 = arith.subf %438, %443 : vector<8x32xf32>
    %445 = arith.mulf %444, %444 : vector<8x32xf32>
    %cst_170 = arith.constant dense<0.000000e+00> : vector<8xf32>
    %446 = vector.multi_reduction <add>, %445, %cst_170 [1] : vector<8x32xf32> to vector<8xf32>
    %447 = vector.shape_cast %446 : vector<8xf32> to vector<8x1xf32>
    %cst_171 = arith.constant 3.200000e+01 : f32
    %448 = vector.broadcast %cst_171 : f32 to vector<8x1xf32>
    %449 = arith.divf %447, %448 : vector<8x1xf32>
    %450 = vector.broadcast %442 : vector<8x1xf32> to vector<8x32xf32>
    %451 = arith.subf %438, %450 : vector<8x32xf32>
    %cst_172 = arith.constant 9.99999997E-7 : f32
    %452 = vector.broadcast %cst_172 : f32 to vector<8x1xf32>
    %453 = arith.addf %449, %452 : vector<8x1xf32>
    %454 = math.rsqrt %453 : vector<8x1xf32>
    %455 = vector.broadcast %454 : vector<8x1xf32> to vector<8x32xf32>
    %456 = arith.mulf %451, %455 : vector<8x32xf32>
    %457 = vector.broadcast %268 : vector<1x32xf32> to vector<8x32xf32>
    %458 = arith.mulf %456, %457 : vector<8x32xf32>
    %459 = vector.broadcast %269 : vector<1x32xf32> to vector<8x32xf32>
    %460 = arith.addf %458, %459 : vector<8x32xf32>
    %c0_173 = arith.constant 0 : index
    %c0_174 = arith.constant 0 : index
    %461 = vector.load %arg41[%c0_173, %c0_174] : memref<32x96xbf16, #tpu.memory_space<vmem>>, vector<32x96xbf16>
    %c0_175 = arith.constant 0 : index
    %c0_176 = arith.constant 0 : index
    %462 = vector.load %arg42[%c0_175, %c0_176] : memref<32x32xbf16, #tpu.memory_space<vmem>>, vector<32x32xbf16>
    %c0_177 = arith.constant 0 : index
    %c0_178 = arith.constant 0 : index
    %463 = vector.load %arg43[%c0_177, %c0_178] : memref<1x32xf32, #tpu.memory_space<vmem>>, vector<1x32xf32>
    %c0_179 = arith.constant 0 : index
    %c0_180 = arith.constant 0 : index
    %464 = vector.load %arg44[%c0_179, %c0_180] : memref<1x32xf32, #tpu.memory_space<vmem>>, vector<1x32xf32>
    %c0_181 = arith.constant 0 : index
    %c0_182 = arith.constant 0 : index
    %465 = vector.load %arg45[%c0_181, %c0_182] : memref<32x32xbf16, #tpu.memory_space<vmem>>, vector<32x32xbf16>
    %c0_183 = arith.constant 0 : index
    %c0_184 = arith.constant 0 : index
    %466 = vector.load %arg46[%c0_183, %c0_184] : memref<32x64xbf16, #tpu.memory_space<vmem>>, vector<32x64xbf16>
    %c0_185 = arith.constant 0 : index
    %c0_186 = arith.constant 0 : index
    %467 = vector.load %arg47[%c0_185, %c0_186] : memref<32x32xbf16, #tpu.memory_space<vmem>>, vector<32x32xbf16>
    %c0_187 = arith.constant 0 : index
    %c0_188 = arith.constant 0 : index
    %468 = vector.load %arg48[%c0_187, %c0_188] : memref<1x32xf32, #tpu.memory_space<vmem>>, vector<1x32xf32>
    %c0_189 = arith.constant 0 : index
    %c0_190 = arith.constant 0 : index
    %469 = vector.load %arg49[%c0_189, %c0_190] : memref<1x32xf32, #tpu.memory_space<vmem>>, vector<1x32xf32>
    %c0_191 = arith.constant 0 : index
    %c0_192 = arith.constant 0 : index
    %470 = vector.load %arg50[%c0_191, %c0_192] : memref<32x64xbf16, #tpu.memory_space<vmem>>, vector<32x64xbf16>
    %c0_193 = arith.constant 0 : index
    %c0_194 = arith.constant 0 : index
    %471 = vector.load %arg51[%c0_193, %c0_194] : memref<1x64xf32, #tpu.memory_space<vmem>>, vector<1x64xf32>
    %c0_195 = arith.constant 0 : index
    %c0_196 = arith.constant 0 : index
    %472 = vector.load %arg52[%c0_195, %c0_196] : memref<64x32xbf16, #tpu.memory_space<vmem>>, vector<64x32xbf16>
    %c0_197 = arith.constant 0 : index
    %c0_198 = arith.constant 0 : index
    %473 = vector.load %arg53[%c0_197, %c0_198] : memref<1x32xf32, #tpu.memory_space<vmem>>, vector<1x32xf32>
    %c0_199 = arith.constant 0 : index
    %c0_200 = arith.constant 0 : index
    %474 = vector.load %arg54[%c0_199, %c0_200] : memref<1x32xf32, #tpu.memory_space<vmem>>, vector<1x32xf32>
    %c0_201 = arith.constant 0 : index
    %c0_202 = arith.constant 0 : index
    %475 = vector.load %arg55[%c0_201, %c0_202] : memref<1x32xf32, #tpu.memory_space<vmem>>, vector<1x32xf32>
    %476 = arith.truncf %460 : vector<8x32xf32> to vector<8x32xbf16>
    %cst_203 = arith.constant dense<0.000000e+00> : vector<8x96xf32>
    %477 = tpu.matmul %476, %461, %cst_203 {dimension_numbers = #tpu.dot_dimension_numbers<[1], [0], [0], [1], [0, 0, 1, 1], [], []>} : vector<8x32xbf16>, vector<32x96xbf16>, vector<8x96xf32> -> vector<8x96xf32>
    %478 = vector.extract_strided_slice %477 {offsets = [0, 0], sizes = [8, 32], strides = [1, 1]} : vector<8x96xf32> to vector<8x32xf32>
    %479 = vector.extract_strided_slice %477 {offsets = [0, 32], sizes = [8, 64], strides = [1, 1]} : vector<8x96xf32> to vector<8x64xf32>
    %480 = vector.extract_strided_slice %478 {offsets = [0, 0], sizes = [8, 16], strides = [1, 1]} : vector<8x32xf32> to vector<8x16xf32>
    %481 = vector.shape_cast %480 : vector<8x16xf32> to vector<2x4x16xf32>
    %482 = vector.extract_strided_slice %479 {offsets = [0, 0], sizes = [8, 16], strides = [1, 1]} : vector<8x64xf32> to vector<8x16xf32>
    %483 = vector.shape_cast %482 : vector<8x16xf32> to vector<2x4x16xf32>
    %484 = vector.extract_strided_slice %479 {offsets = [0, 32], sizes = [8, 16], strides = [1, 1]} : vector<8x64xf32> to vector<8x16xf32>
    %485 = vector.shape_cast %484 : vector<8x16xf32> to vector<2x4x16xf32>
    %486 = arith.truncf %481 : vector<2x4x16xf32> to vector<2x4x16xbf16>
    %487 = arith.truncf %483 : vector<2x4x16xf32> to vector<2x4x16xbf16>
    "tpu.trace_start"() <{level = 10 : i32, message = "bqd,bkd->bqk"}> : () -> ()
    %cst_204 = arith.constant dense<0.000000e+00> : vector<2x4x4xf32>
    %488 = tpu.matmul %486, %487, %cst_204 {dimension_numbers = #tpu.dot_dimension_numbers<[2], [2], [1], [1], [0, 0, 0, 1, 1, 1], [0], [0]>} : vector<2x4x16xbf16>, vector<2x4x16xbf16>, vector<2x4x4xf32> -> vector<2x4x4xf32>
    "tpu.trace_stop"() : () -> ()
    %cst_205 = arith.constant 2.500000e-01 : f32
    %489 = vector.broadcast %cst_205 : f32 to vector<2x4x4xf32>
    %490 = arith.mulf %488, %489 : vector<2x4x4xf32>
    %cst_206 = arith.constant dense<0xFF800000> : vector<2x4xf32>
    %491 = vector.multi_reduction <maximumf>, %490, %cst_206 [2] : vector<2x4x4xf32> to vector<2x4xf32>
    %492 = vector.shape_cast %491 : vector<2x4xf32> to vector<2x4x1xf32>
    %493 = vector.broadcast %492 : vector<2x4x1xf32> to vector<2x4x4xf32>
    %494 = arith.subf %490, %493 : vector<2x4x4xf32>
    %495 = math.exp %494 : vector<2x4x4xf32>
    %cst_207 = arith.constant dense<0.000000e+00> : vector<2x4xf32>
    %496 = vector.multi_reduction <add>, %495, %cst_207 [2] : vector<2x4x4xf32> to vector<2x4xf32>
    %497 = vector.shape_cast %496 : vector<2x4xf32> to vector<2x4x1xf32>
    %498 = tpu.reciprocal %497 {approx = true} : vector<2x4x1xf32> -> vector<2x4x1xf32>
    %499 = vector.broadcast %498 : vector<2x4x1xf32> to vector<2x4x4xf32>
    %500 = arith.mulf %495, %499 : vector<2x4x4xf32>
    %501 = arith.truncf %500 : vector<2x4x4xf32> to vector<2x4x4xbf16>
    %502 = arith.truncf %485 : vector<2x4x16xf32> to vector<2x4x16xbf16>
    "tpu.trace_start"() <{level = 10 : i32, message = "bqk,bkd->bqd"}> : () -> ()
    %cst_208 = arith.constant dense<0.000000e+00> : vector<2x4x16xf32>
    %503 = tpu.matmul %501, %502, %cst_208 {dimension_numbers = #tpu.dot_dimension_numbers<[2], [1], [1], [2], [0, 0, 0, 1, 1, 2], [0], [0]>} : vector<2x4x4xbf16>, vector<2x4x16xbf16>, vector<2x4x16xf32> -> vector<2x4x16xf32>
    "tpu.trace_stop"() : () -> ()
    %504 = vector.extract_strided_slice %478 {offsets = [0, 16], sizes = [8, 16], strides = [1, 1]} : vector<8x32xf32> to vector<8x16xf32>
    %505 = vector.shape_cast %504 : vector<8x16xf32> to vector<2x4x16xf32>
    %506 = vector.extract_strided_slice %479 {offsets = [0, 16], sizes = [8, 16], strides = [1, 1]} : vector<8x64xf32> to vector<8x16xf32>
    %507 = vector.shape_cast %506 : vector<8x16xf32> to vector<2x4x16xf32>
    %508 = vector.extract_strided_slice %479 {offsets = [0, 48], sizes = [8, 16], strides = [1, 1]} : vector<8x64xf32> to vector<8x16xf32>
    %509 = vector.shape_cast %508 : vector<8x16xf32> to vector<2x4x16xf32>
    %510 = arith.truncf %505 : vector<2x4x16xf32> to vector<2x4x16xbf16>
    %511 = arith.truncf %507 : vector<2x4x16xf32> to vector<2x4x16xbf16>
    "tpu.trace_start"() <{level = 10 : i32, message = "bqd,bkd->bqk"}> : () -> ()
    %cst_209 = arith.constant dense<0.000000e+00> : vector<2x4x4xf32>
    %512 = tpu.matmul %510, %511, %cst_209 {dimension_numbers = #tpu.dot_dimension_numbers<[2], [2], [1], [1], [0, 0, 0, 1, 1, 1], [0], [0]>} : vector<2x4x16xbf16>, vector<2x4x16xbf16>, vector<2x4x4xf32> -> vector<2x4x4xf32>
    "tpu.trace_stop"() : () -> ()
    %cst_210 = arith.constant 2.500000e-01 : f32
    %513 = vector.broadcast %cst_210 : f32 to vector<2x4x4xf32>
    %514 = arith.mulf %512, %513 : vector<2x4x4xf32>
    %cst_211 = arith.constant dense<0xFF800000> : vector<2x4xf32>
    %515 = vector.multi_reduction <maximumf>, %514, %cst_211 [2] : vector<2x4x4xf32> to vector<2x4xf32>
    %516 = vector.shape_cast %515 : vector<2x4xf32> to vector<2x4x1xf32>
    %517 = vector.broadcast %516 : vector<2x4x1xf32> to vector<2x4x4xf32>
    %518 = arith.subf %514, %517 : vector<2x4x4xf32>
    %519 = math.exp %518 : vector<2x4x4xf32>
    %cst_212 = arith.constant dense<0.000000e+00> : vector<2x4xf32>
    %520 = vector.multi_reduction <add>, %519, %cst_212 [2] : vector<2x4x4xf32> to vector<2x4xf32>
    %521 = vector.shape_cast %520 : vector<2x4xf32> to vector<2x4x1xf32>
    %522 = tpu.reciprocal %521 {approx = true} : vector<2x4x1xf32> -> vector<2x4x1xf32>
    %523 = vector.broadcast %522 : vector<2x4x1xf32> to vector<2x4x4xf32>
    %524 = arith.mulf %519, %523 : vector<2x4x4xf32>
    %525 = arith.truncf %524 : vector<2x4x4xf32> to vector<2x4x4xbf16>
    %526 = arith.truncf %509 : vector<2x4x16xf32> to vector<2x4x16xbf16>
    "tpu.trace_start"() <{level = 10 : i32, message = "bqk,bkd->bqd"}> : () -> ()
    %cst_213 = arith.constant dense<0.000000e+00> : vector<2x4x16xf32>
    %527 = tpu.matmul %525, %526, %cst_213 {dimension_numbers = #tpu.dot_dimension_numbers<[2], [1], [1], [2], [0, 0, 0, 1, 1, 2], [0], [0]>} : vector<2x4x4xbf16>, vector<2x4x16xbf16>, vector<2x4x16xf32> -> vector<2x4x16xf32>
    "tpu.trace_stop"() : () -> ()
    %528 = tpu.concatenate %503, %527 in 2 : vector<2x4x16xf32>, vector<2x4x16xf32> -> vector<2x4x32xf32>
    %529 = vector.shape_cast %528 : vector<2x4x32xf32> to vector<8x32xf32>
    %530 = arith.truncf %529 : vector<8x32xf32> to vector<8x32xbf16>
    %cst_214 = arith.constant dense<0.000000e+00> : vector<8x32xf32>
    %531 = tpu.matmul %530, %462, %cst_214 {dimension_numbers = #tpu.dot_dimension_numbers<[1], [0], [0], [1], [0, 0, 1, 1], [], []>} : vector<8x32xbf16>, vector<32x32xbf16>, vector<8x32xf32> -> vector<8x32xf32>
    %532 = arith.addf %531, %460 : vector<8x32xf32>
    %cst_215 = arith.constant dense<0.000000e+00> : vector<8xf32>
    %533 = vector.multi_reduction <add>, %532, %cst_215 [1] : vector<8x32xf32> to vector<8xf32>
    %534 = vector.shape_cast %533 : vector<8xf32> to vector<8x1xf32>
    %cst_216 = arith.constant 3.200000e+01 : f32
    %535 = vector.broadcast %cst_216 : f32 to vector<8x1xf32>
    %536 = arith.divf %534, %535 : vector<8x1xf32>
    %537 = vector.broadcast %536 : vector<8x1xf32> to vector<8x32xf32>
    %538 = arith.subf %532, %537 : vector<8x32xf32>
    %539 = arith.mulf %538, %538 : vector<8x32xf32>
    %cst_217 = arith.constant dense<0.000000e+00> : vector<8xf32>
    %540 = vector.multi_reduction <add>, %539, %cst_217 [1] : vector<8x32xf32> to vector<8xf32>
    %541 = vector.shape_cast %540 : vector<8xf32> to vector<8x1xf32>
    %cst_218 = arith.constant 3.200000e+01 : f32
    %542 = vector.broadcast %cst_218 : f32 to vector<8x1xf32>
    %543 = arith.divf %541, %542 : vector<8x1xf32>
    %544 = vector.broadcast %536 : vector<8x1xf32> to vector<8x32xf32>
    %545 = arith.subf %532, %544 : vector<8x32xf32>
    %cst_219 = arith.constant 9.99999997E-7 : f32
    %546 = vector.broadcast %cst_219 : f32 to vector<8x1xf32>
    %547 = arith.addf %543, %546 : vector<8x1xf32>
    %548 = math.rsqrt %547 : vector<8x1xf32>
    %549 = vector.broadcast %548 : vector<8x1xf32> to vector<8x32xf32>
    %550 = arith.mulf %545, %549 : vector<8x32xf32>
    %551 = vector.broadcast %463 : vector<1x32xf32> to vector<8x32xf32>
    %552 = arith.mulf %550, %551 : vector<8x32xf32>
    %553 = vector.broadcast %464 : vector<1x32xf32> to vector<8x32xf32>
    %554 = arith.addf %552, %553 : vector<8x32xf32>
    %555 = arith.truncf %554 : vector<8x32xf32> to vector<8x32xbf16>
    %cst_220 = arith.constant dense<0.000000e+00> : vector<8x32xf32>
    %556 = tpu.matmul %555, %465, %cst_220 {dimension_numbers = #tpu.dot_dimension_numbers<[1], [0], [0], [1], [0, 0, 1, 1], [], []>} : vector<8x32xbf16>, vector<32x32xbf16>, vector<8x32xf32> -> vector<8x32xf32>
    %557 = arith.truncf %254 : vector<16x32xf32> to vector<16x32xbf16>
    %cst_221 = arith.constant dense<0.000000e+00> : vector<16x64xf32>
    %558 = tpu.matmul %557, %466, %cst_221 {dimension_numbers = #tpu.dot_dimension_numbers<[1], [0], [0], [1], [0, 0, 1, 1], [], []>} : vector<16x32xbf16>, vector<32x64xbf16>, vector<16x64xf32> -> vector<16x64xf32>
    %559 = vector.extract_strided_slice %556 {offsets = [0, 0], sizes = [8, 16], strides = [1, 1]} : vector<8x32xf32> to vector<8x16xf32>
    %560 = vector.shape_cast %559 : vector<8x16xf32> to vector<2x4x16xf32>
    %561 = vector.extract_strided_slice %558 {offsets = [0, 0], sizes = [16, 16], strides = [1, 1]} : vector<16x64xf32> to vector<16x16xf32>
    %562 = vector.shape_cast %561 : vector<16x16xf32> to vector<2x8x16xf32>
    %563 = vector.extract_strided_slice %558 {offsets = [0, 32], sizes = [16, 16], strides = [1, 1]} : vector<16x64xf32> to vector<16x16xf32>
    %564 = vector.shape_cast %563 : vector<16x16xf32> to vector<2x8x16xf32>
    %565 = arith.truncf %560 : vector<2x4x16xf32> to vector<2x4x16xbf16>
    %566 = arith.truncf %562 : vector<2x8x16xf32> to vector<2x8x16xbf16>
    "tpu.trace_start"() <{level = 10 : i32, message = "bqd,bkd->bqk"}> : () -> ()
    %cst_222 = arith.constant dense<0.000000e+00> : vector<2x4x8xf32>
    %567 = tpu.matmul %565, %566, %cst_222 {dimension_numbers = #tpu.dot_dimension_numbers<[2], [2], [1], [1], [0, 0, 0, 1, 1, 1], [0], [0]>} : vector<2x4x16xbf16>, vector<2x8x16xbf16>, vector<2x4x8xf32> -> vector<2x4x8xf32>
    "tpu.trace_stop"() : () -> ()
    %cst_223 = arith.constant 2.500000e-01 : f32
    %568 = vector.broadcast %cst_223 : f32 to vector<2x4x8xf32>
    %569 = arith.mulf %567, %568 : vector<2x4x8xf32>
    %cst_224 = arith.constant dense<0xFF800000> : vector<2x4xf32>
    %570 = vector.multi_reduction <maximumf>, %569, %cst_224 [2] : vector<2x4x8xf32> to vector<2x4xf32>
    %571 = vector.shape_cast %570 : vector<2x4xf32> to vector<2x4x1xf32>
    %572 = vector.broadcast %571 : vector<2x4x1xf32> to vector<2x4x8xf32>
    %573 = arith.subf %569, %572 : vector<2x4x8xf32>
    %574 = math.exp %573 : vector<2x4x8xf32>
    %cst_225 = arith.constant dense<0.000000e+00> : vector<2x4xf32>
    %575 = vector.multi_reduction <add>, %574, %cst_225 [2] : vector<2x4x8xf32> to vector<2x4xf32>
    %576 = vector.shape_cast %575 : vector<2x4xf32> to vector<2x4x1xf32>
    %577 = tpu.reciprocal %576 {approx = true} : vector<2x4x1xf32> -> vector<2x4x1xf32>
    %578 = vector.broadcast %577 : vector<2x4x1xf32> to vector<2x4x8xf32>
    %579 = arith.mulf %574, %578 : vector<2x4x8xf32>
    %580 = arith.truncf %579 : vector<2x4x8xf32> to vector<2x4x8xbf16>
    %581 = arith.truncf %564 : vector<2x8x16xf32> to vector<2x8x16xbf16>
    "tpu.trace_start"() <{level = 10 : i32, message = "bqk,bkd->bqd"}> : () -> ()
    %cst_226 = arith.constant dense<0.000000e+00> : vector<2x4x16xf32>
    %582 = tpu.matmul %580, %581, %cst_226 {dimension_numbers = #tpu.dot_dimension_numbers<[2], [1], [1], [2], [0, 0, 0, 1, 1, 2], [0], [0]>} : vector<2x4x8xbf16>, vector<2x8x16xbf16>, vector<2x4x16xf32> -> vector<2x4x16xf32>
    "tpu.trace_stop"() : () -> ()
    %583 = vector.extract_strided_slice %556 {offsets = [0, 16], sizes = [8, 16], strides = [1, 1]} : vector<8x32xf32> to vector<8x16xf32>
    %584 = vector.shape_cast %583 : vector<8x16xf32> to vector<2x4x16xf32>
    %585 = vector.extract_strided_slice %558 {offsets = [0, 16], sizes = [16, 16], strides = [1, 1]} : vector<16x64xf32> to vector<16x16xf32>
    %586 = vector.shape_cast %585 : vector<16x16xf32> to vector<2x8x16xf32>
    %587 = vector.extract_strided_slice %558 {offsets = [0, 48], sizes = [16, 16], strides = [1, 1]} : vector<16x64xf32> to vector<16x16xf32>
    %588 = vector.shape_cast %587 : vector<16x16xf32> to vector<2x8x16xf32>
    %589 = arith.truncf %584 : vector<2x4x16xf32> to vector<2x4x16xbf16>
    %590 = arith.truncf %586 : vector<2x8x16xf32> to vector<2x8x16xbf16>
    "tpu.trace_start"() <{level = 10 : i32, message = "bqd,bkd->bqk"}> : () -> ()
    %cst_227 = arith.constant dense<0.000000e+00> : vector<2x4x8xf32>
    %591 = tpu.matmul %589, %590, %cst_227 {dimension_numbers = #tpu.dot_dimension_numbers<[2], [2], [1], [1], [0, 0, 0, 1, 1, 1], [0], [0]>} : vector<2x4x16xbf16>, vector<2x8x16xbf16>, vector<2x4x8xf32> -> vector<2x4x8xf32>
    "tpu.trace_stop"() : () -> ()
    %cst_228 = arith.constant 2.500000e-01 : f32
    %592 = vector.broadcast %cst_228 : f32 to vector<2x4x8xf32>
    %593 = arith.mulf %591, %592 : vector<2x4x8xf32>
    %cst_229 = arith.constant dense<0xFF800000> : vector<2x4xf32>
    %594 = vector.multi_reduction <maximumf>, %593, %cst_229 [2] : vector<2x4x8xf32> to vector<2x4xf32>
    %595 = vector.shape_cast %594 : vector<2x4xf32> to vector<2x4x1xf32>
    %596 = vector.broadcast %595 : vector<2x4x1xf32> to vector<2x4x8xf32>
    %597 = arith.subf %593, %596 : vector<2x4x8xf32>
    %598 = math.exp %597 : vector<2x4x8xf32>
    %cst_230 = arith.constant dense<0.000000e+00> : vector<2x4xf32>
    %599 = vector.multi_reduction <add>, %598, %cst_230 [2] : vector<2x4x8xf32> to vector<2x4xf32>
    %600 = vector.shape_cast %599 : vector<2x4xf32> to vector<2x4x1xf32>
    %601 = tpu.reciprocal %600 {approx = true} : vector<2x4x1xf32> -> vector<2x4x1xf32>
    %602 = vector.broadcast %601 : vector<2x4x1xf32> to vector<2x4x8xf32>
    %603 = arith.mulf %598, %602 : vector<2x4x8xf32>
    %604 = arith.truncf %603 : vector<2x4x8xf32> to vector<2x4x8xbf16>
    %605 = arith.truncf %588 : vector<2x8x16xf32> to vector<2x8x16xbf16>
    "tpu.trace_start"() <{level = 10 : i32, message = "bqk,bkd->bqd"}> : () -> ()
    %cst_231 = arith.constant dense<0.000000e+00> : vector<2x4x16xf32>
    %606 = tpu.matmul %604, %605, %cst_231 {dimension_numbers = #tpu.dot_dimension_numbers<[2], [1], [1], [2], [0, 0, 0, 1, 1, 2], [0], [0]>} : vector<2x4x8xbf16>, vector<2x8x16xbf16>, vector<2x4x16xf32> -> vector<2x4x16xf32>
    "tpu.trace_stop"() : () -> ()
    %607 = tpu.concatenate %582, %606 in 2 : vector<2x4x16xf32>, vector<2x4x16xf32> -> vector<2x4x32xf32>
    %608 = vector.shape_cast %607 : vector<2x4x32xf32> to vector<8x32xf32>
    %609 = arith.truncf %608 : vector<8x32xf32> to vector<8x32xbf16>
    %cst_232 = arith.constant dense<0.000000e+00> : vector<8x32xf32>
    %610 = tpu.matmul %609, %467, %cst_232 {dimension_numbers = #tpu.dot_dimension_numbers<[1], [0], [0], [1], [0, 0, 1, 1], [], []>} : vector<8x32xbf16>, vector<32x32xbf16>, vector<8x32xf32> -> vector<8x32xf32>
    %611 = arith.addf %610, %554 : vector<8x32xf32>
    %cst_233 = arith.constant dense<0.000000e+00> : vector<8xf32>
    %612 = vector.multi_reduction <add>, %611, %cst_233 [1] : vector<8x32xf32> to vector<8xf32>
    %613 = vector.shape_cast %612 : vector<8xf32> to vector<8x1xf32>
    %cst_234 = arith.constant 3.200000e+01 : f32
    %614 = vector.broadcast %cst_234 : f32 to vector<8x1xf32>
    %615 = arith.divf %613, %614 : vector<8x1xf32>
    %616 = vector.broadcast %615 : vector<8x1xf32> to vector<8x32xf32>
    %617 = arith.subf %611, %616 : vector<8x32xf32>
    %618 = arith.mulf %617, %617 : vector<8x32xf32>
    %cst_235 = arith.constant dense<0.000000e+00> : vector<8xf32>
    %619 = vector.multi_reduction <add>, %618, %cst_235 [1] : vector<8x32xf32> to vector<8xf32>
    %620 = vector.shape_cast %619 : vector<8xf32> to vector<8x1xf32>
    %cst_236 = arith.constant 3.200000e+01 : f32
    %621 = vector.broadcast %cst_236 : f32 to vector<8x1xf32>
    %622 = arith.divf %620, %621 : vector<8x1xf32>
    %623 = vector.broadcast %615 : vector<8x1xf32> to vector<8x32xf32>
    %624 = arith.subf %611, %623 : vector<8x32xf32>
    %cst_237 = arith.constant 9.99999997E-7 : f32
    %625 = vector.broadcast %cst_237 : f32 to vector<8x1xf32>
    %626 = arith.addf %622, %625 : vector<8x1xf32>
    %627 = math.rsqrt %626 : vector<8x1xf32>
    %628 = vector.broadcast %627 : vector<8x1xf32> to vector<8x32xf32>
    %629 = arith.mulf %624, %628 : vector<8x32xf32>
    %630 = vector.broadcast %468 : vector<1x32xf32> to vector<8x32xf32>
    %631 = arith.mulf %629, %630 : vector<8x32xf32>
    %632 = vector.broadcast %469 : vector<1x32xf32> to vector<8x32xf32>
    %633 = arith.addf %631, %632 : vector<8x32xf32>
    %634 = arith.truncf %633 : vector<8x32xf32> to vector<8x32xbf16>
    %cst_238 = arith.constant dense<0.000000e+00> : vector<8x64xf32>
    %635 = tpu.matmul %634, %470, %cst_238 {dimension_numbers = #tpu.dot_dimension_numbers<[1], [0], [0], [1], [0, 0, 1, 1], [], []>} : vector<8x32xbf16>, vector<32x64xbf16>, vector<8x64xf32> -> vector<8x64xf32>
    %636 = vector.broadcast %471 : vector<1x64xf32> to vector<8x64xf32>
    %637 = arith.addf %635, %636 : vector<8x64xf32>
    %cst_239 = arith.constant 0.000000e+00 : f32
    %638 = vector.broadcast %cst_239 : f32 to vector<8x64xf32>
    %639 = arith.maximumf %637, %638 : vector<8x64xf32>
    %640 = arith.truncf %639 : vector<8x64xf32> to vector<8x64xbf16>
    %cst_240 = arith.constant dense<0.000000e+00> : vector<8x32xf32>
    %641 = tpu.matmul %640, %472, %cst_240 {dimension_numbers = #tpu.dot_dimension_numbers<[1], [0], [0], [1], [0, 0, 1, 1], [], []>} : vector<8x64xbf16>, vector<64x32xbf16>, vector<8x32xf32> -> vector<8x32xf32>
    %642 = vector.broadcast %473 : vector<1x32xf32> to vector<8x32xf32>
    %643 = arith.addf %641, %642 : vector<8x32xf32>
    %644 = arith.addf %643, %633 : vector<8x32xf32>
    %cst_241 = arith.constant dense<0.000000e+00> : vector<8xf32>
    %645 = vector.multi_reduction <add>, %644, %cst_241 [1] : vector<8x32xf32> to vector<8xf32>
    %646 = vector.shape_cast %645 : vector<8xf32> to vector<8x1xf32>
    %cst_242 = arith.constant 3.200000e+01 : f32
    %647 = vector.broadcast %cst_242 : f32 to vector<8x1xf32>
    %648 = arith.divf %646, %647 : vector<8x1xf32>
    %649 = vector.broadcast %648 : vector<8x1xf32> to vector<8x32xf32>
    %650 = arith.subf %644, %649 : vector<8x32xf32>
    %651 = arith.mulf %650, %650 : vector<8x32xf32>
    %cst_243 = arith.constant dense<0.000000e+00> : vector<8xf32>
    %652 = vector.multi_reduction <add>, %651, %cst_243 [1] : vector<8x32xf32> to vector<8xf32>
    %653 = vector.shape_cast %652 : vector<8xf32> to vector<8x1xf32>
    %cst_244 = arith.constant 3.200000e+01 : f32
    %654 = vector.broadcast %cst_244 : f32 to vector<8x1xf32>
    %655 = arith.divf %653, %654 : vector<8x1xf32>
    %656 = vector.broadcast %648 : vector<8x1xf32> to vector<8x32xf32>
    %657 = arith.subf %644, %656 : vector<8x32xf32>
    %cst_245 = arith.constant 9.99999997E-7 : f32
    %658 = vector.broadcast %cst_245 : f32 to vector<8x1xf32>
    %659 = arith.addf %655, %658 : vector<8x1xf32>
    %660 = math.rsqrt %659 : vector<8x1xf32>
    %661 = vector.broadcast %660 : vector<8x1xf32> to vector<8x32xf32>
    %662 = arith.mulf %657, %661 : vector<8x32xf32>
    %663 = vector.broadcast %474 : vector<1x32xf32> to vector<8x32xf32>
    %664 = arith.mulf %662, %663 : vector<8x32xf32>
    %665 = vector.broadcast %475 : vector<1x32xf32> to vector<8x32xf32>
    %666 = arith.addf %664, %665 : vector<8x32xf32>
    %c0_246 = arith.constant 0 : index
    %c0_247 = arith.constant 0 : index
    %667 = vector.load %arg56[%c0_246, %c0_247] : memref<32x4xbf16, #tpu.memory_space<vmem>>, vector<32x4xbf16>
    %c0_248 = arith.constant 0 : index
    %c0_249 = arith.constant 0 : index
    %668 = vector.load %arg57[%c0_248, %c0_249] : memref<1x4xf32, #tpu.memory_space<vmem>>, vector<1x4xf32>
    %669 = arith.truncf %666 : vector<8x32xf32> to vector<8x32xbf16>
    %cst_250 = arith.constant dense<0.000000e+00> : vector<8x4xf32>
    %670 = tpu.matmul %669, %667, %cst_250 {dimension_numbers = #tpu.dot_dimension_numbers<[1], [0], [0], [1], [0, 0, 1, 1], [], []>} : vector<8x32xbf16>, vector<32x4xbf16>, vector<8x4xf32> -> vector<8x4xf32>
    %671 = vector.broadcast %668 : vector<1x4xf32> to vector<8x4xf32>
    %672 = arith.addf %670, %671 : vector<8x4xf32>
    %673 = vector.shape_cast %672 : vector<8x4xf32> to vector<2x4x4xf32>
    %c0_251 = arith.constant 0 : index
    %c0_252 = arith.constant 0 : index
    %c0_253 = arith.constant 0 : index
    %674 = vector.load %arg58[%c0_251, %c0_252, %c0_253] : memref<2x4x4xf32, #tpu.memory_space<vmem>>, vector<2x4x4xf32>
    tpu.vector_store %arg58[%c0_251, %c0_252, %c0_253], %673 {strides = array<i32>} : memref<2x4x4xf32, #tpu.memory_space<vmem>>, vector<2x4x4xf32>,
    return
  }
  func.func @transform_0(%arg0: i32) -> (i32, i32, i32) {
    %c0_i32 = arith.constant 0 : i32
    %c0_i32_0 = arith.constant 0 : i32
    %c0_i32_1 = arith.constant 0 : i32
    return %arg0, %c0_i32, %c0_i32_0 : i32, i32, i32
  }
  func.func @transform_1(%arg0: i32) -> (i32, i32) {
    %c0_i32 = arith.constant 0 : i32
    %c0_i32_0 = arith.constant 0 : i32
    %c0_i32_1 = arith.constant 0 : i32
    return %c0_i32, %c0_i32_0 : i32, i32
  }
  func.func @transform_2(%arg0: i32) -> (i32, i32) {
    %c0_i32 = arith.constant 0 : i32
    %c0_i32_0 = arith.constant 0 : i32
    %c0_i32_1 = arith.constant 0 : i32
    return %c0_i32, %c0_i32_0 : i32, i32
  }
  func.func @transform_3(%arg0: i32) -> (i32, i32) {
    %c0_i32 = arith.constant 0 : i32
    %c0_i32_0 = arith.constant 0 : i32
    %c0_i32_1 = arith.constant 0 : i32
    return %c0_i32, %c0_i32_0 : i32, i32
  }
  func.func @transform_4(%arg0: i32) -> (i32, i32) {
    %c0_i32 = arith.constant 0 : i32
    %c0_i32_0 = arith.constant 0 : i32
    %c0_i32_1 = arith.constant 0 : i32
    return %c0_i32, %c0_i32_0 : i32, i32
  }
  func.func @transform_5(%arg0: i32) -> (i32, i32) {
    %c0_i32 = arith.constant 0 : i32
    %c0_i32_0 = arith.constant 0 : i32
    %c0_i32_1 = arith.constant 0 : i32
    return %c0_i32, %c0_i32_0 : i32, i32
  }
  func.func @transform_6(%arg0: i32) -> (i32, i32) {
    %c0_i32 = arith.constant 0 : i32
    %c0_i32_0 = arith.constant 0 : i32
    %c0_i32_1 = arith.constant 0 : i32
    return %c0_i32, %c0_i32_0 : i32, i32
  }
  func.func @transform_7(%arg0: i32) -> (i32, i32) {
    %c0_i32 = arith.constant 0 : i32
    %c0_i32_0 = arith.constant 0 : i32
    %c0_i32_1 = arith.constant 0 : i32
    return %c0_i32, %c0_i32_0 : i32, i32
  }
  func.func @transform_8(%arg0: i32) -> (i32, i32) {
    %c0_i32 = arith.constant 0 : i32
    %c0_i32_0 = arith.constant 0 : i32
    %c0_i32_1 = arith.constant 0 : i32
    return %c0_i32, %c0_i32_0 : i32, i32
  }
  func.func @transform_9(%arg0: i32) -> (i32, i32) {
    %c0_i32 = arith.constant 0 : i32
    %c0_i32_0 = arith.constant 0 : i32
    %c0_i32_1 = arith.constant 0 : i32
    return %c0_i32, %c0_i32_0 : i32, i32
  }
  func.func @transform_10(%arg0: i32) -> (i32, i32) {
    %c0_i32 = arith.constant 0 : i32
    %c0_i32_0 = arith.constant 0 : i32
    %c0_i32_1 = arith.constant 0 : i32
    return %c0_i32, %c0_i32_0 : i32, i32
  }
  func.func @transform_11(%arg0: i32) -> (i32, i32) {
    %c0_i32 = arith.constant 0 : i32
    %c0_i32_0 = arith.constant 0 : i32
    %c0_i32_1 = arith.constant 0 : i32
    return %c0_i32, %c0_i32_0 : i32, i32
  }
  func.func @transform_12(%arg0: i32) -> (i32, i32) {
    %c0_i32 = arith.constant 0 : i32
    %c0_i32_0 = arith.constant 0 : i32
    %c0_i32_1 = arith.constant 0 : i32
    return %c0_i32, %c0_i32_0 : i32, i32
  }
  func.func @transform_13(%arg0: i32) -> (i32, i32) {
    %c0_i32 = arith.constant 0 : i32
    %c0_i32_0 = arith.constant 0 : i32
    %c0_i32_1 = arith.constant 0 : i32
    return %c0_i32, %c0_i32_0 : i32, i32
  }
  func.func @transform_14(%arg0: i32) -> (i32, i32) {
    %c0_i32 = arith.constant 0 : i32
    %c0_i32_0 = arith.constant 0 : i32
    %c0_i32_1 = arith.constant 0 : i32
    return %c0_i32, %c0_i32_0 : i32, i32
  }
  func.func @transform_15(%arg0: i32) -> (i32, i32) {
    %c0_i32 = arith.constant 0 : i32
    %c0_i32_0 = arith.constant 0 : i32
    %c0_i32_1 = arith.constant 0 : i32
    return %c0_i32, %c0_i32_0 : i32, i32
  }
  func.func @transform_16(%arg0: i32) -> (i32, i32) {
    %c0_i32 = arith.constant 0 : i32
    %c0_i32_0 = arith.constant 0 : i32
    %c0_i32_1 = arith.constant 0 : i32
    return %c0_i32, %c0_i32_0 : i32, i32
  }
  func.func @transform_17(%arg0: i32) -> (i32, i32) {
    %c0_i32 = arith.constant 0 : i32
    %c0_i32_0 = arith.constant 0 : i32
    %c0_i32_1 = arith.constant 0 : i32
    return %c0_i32, %c0_i32_0 : i32, i32
  }
  func.func @transform_18(%arg0: i32) -> (i32, i32) {
    %c0_i32 = arith.constant 0 : i32
    %c0_i32_0 = arith.constant 0 : i32
    %c0_i32_1 = arith.constant 0 : i32
    return %c0_i32, %c0_i32_0 : i32, i32
  }
  func.func @transform_19(%arg0: i32) -> (i32, i32) {
    %c0_i32 = arith.constant 0 : i32
    %c0_i32_0 = arith.constant 0 : i32
    %c0_i32_1 = arith.constant 0 : i32
    return %c0_i32, %c0_i32_0 : i32, i32
  }
  func.func @transform_20(%arg0: i32) -> (i32, i32) {
    %c0_i32 = arith.constant 0 : i32
    %c0_i32_0 = arith.constant 0 : i32
    %c0_i32_1 = arith.constant 0 : i32
    return %c0_i32, %c0_i32_0 : i32, i32
  }
  func.func @transform_21(%arg0: i32) -> (i32, i32) {
    %c0_i32 = arith.constant 0 : i32
    %c0_i32_0 = arith.constant 0 : i32
    %c0_i32_1 = arith.constant 0 : i32
    return %c0_i32, %c0_i32_0 : i32, i32
  }
  func.func @transform_22(%arg0: i32) -> (i32, i32) {
    %c0_i32 = arith.constant 0 : i32
    %c0_i32_0 = arith.constant 0 : i32
    %c0_i32_1 = arith.constant 0 : i32
    return %c0_i32, %c0_i32_0 : i32, i32
  }
  func.func @transform_23(%arg0: i32) -> (i32, i32) {
    %c0_i32 = arith.constant 0 : i32
    %c0_i32_0 = arith.constant 0 : i32
    %c0_i32_1 = arith.constant 0 : i32
    return %c0_i32, %c0_i32_0 : i32, i32
  }
  func.func @transform_24(%arg0: i32) -> (i32, i32) {
    %c0_i32 = arith.constant 0 : i32
    %c0_i32_0 = arith.constant 0 : i32
    %c0_i32_1 = arith.constant 0 : i32
    return %c0_i32, %c0_i32_0 : i32, i32
  }
  func.func @transform_25(%arg0: i32) -> (i32, i32) {
    %c0_i32 = arith.constant 0 : i32
    %c0_i32_0 = arith.constant 0 : i32
    %c0_i32_1 = arith.constant 0 : i32
    return %c0_i32, %c0_i32_0 : i32, i32
  }
  func.func @transform_26(%arg0: i32) -> (i32, i32) {
    %c0_i32 = arith.constant 0 : i32
    %c0_i32_0 = arith.constant 0 : i32
    %c0_i32_1 = arith.constant 0 : i32
    return %c0_i32, %c0_i32_0 : i32, i32
  }
  func.func @transform_27(%arg0: i32) -> (i32, i32) {
    %c0_i32 = arith.constant 0 : i32
    %c0_i32_0 = arith.constant 0 : i32
    %c0_i32_1 = arith.constant 0 : i32
    return %c0_i32, %c0_i32_0 : i32, i32
  }
  func.func @transform_28(%arg0: i32) -> (i32, i32) {
    %c0_i32 = arith.constant 0 : i32
    %c0_i32_0 = arith.constant 0 : i32
    %c0_i32_1 = arith.constant 0 : i32
    return %c0_i32, %c0_i32_0 : i32, i32
  }
  func.func @transform_29(%arg0: i32) -> (i32, i32) {
    %c0_i32 = arith.constant 0 : i32
    %c0_i32_0 = arith.constant 0 : i32
    %c0_i32_1 = arith.constant 0 : i32
    return %c0_i32, %c0_i32_0 : i32, i32
  }
  func.func @transform_30(%arg0: i32) -> (i32, i32) {
    %c0_i32 = arith.constant 0 : i32
    %c0_i32_0 = arith.constant 0 : i32
    %c0_i32_1 = arith.constant 0 : i32
    return %c0_i32, %c0_i32_0 : i32, i32
  }
  func.func @transform_31(%arg0: i32) -> (i32, i32) {
    %c0_i32 = arith.constant 0 : i32
    %c0_i32_0 = arith.constant 0 : i32
    %c0_i32_1 = arith.constant 0 : i32
    return %c0_i32, %c0_i32_0 : i32, i32
  }
  func.func @transform_32(%arg0: i32) -> (i32, i32) {
    %c0_i32 = arith.constant 0 : i32
    %c0_i32_0 = arith.constant 0 : i32
    %c0_i32_1 = arith.constant 0 : i32
    return %c0_i32, %c0_i32_0 : i32, i32
  }
  func.func @transform_33(%arg0: i32) -> (i32, i32) {
    %c0_i32 = arith.constant 0 : i32
    %c0_i32_0 = arith.constant 0 : i32
    %c0_i32_1 = arith.constant 0 : i32
    return %c0_i32, %c0_i32_0 : i32, i32
  }
  func.func @transform_34(%arg0: i32) -> (i32, i32) {
    %c0_i32 = arith.constant 0 : i32
    %c0_i32_0 = arith.constant 0 : i32
    %c0_i32_1 = arith.constant 0 : i32
    return %c0_i32, %c0_i32_0 : i32, i32
  }
  func.func @transform_35(%arg0: i32) -> (i32, i32) {
    %c0_i32 = arith.constant 0 : i32
    %c0_i32_0 = arith.constant 0 : i32
    %c0_i32_1 = arith.constant 0 : i32
    return %c0_i32, %c0_i32_0 : i32, i32
  }
  func.func @transform_36(%arg0: i32) -> (i32, i32) {
    %c0_i32 = arith.constant 0 : i32
    %c0_i32_0 = arith.constant 0 : i32
    %c0_i32_1 = arith.constant 0 : i32
    return %c0_i32, %c0_i32_0 : i32, i32
  }
  func.func @transform_37(%arg0: i32) -> (i32, i32) {
    %c0_i32 = arith.constant 0 : i32
    %c0_i32_0 = arith.constant 0 : i32
    %c0_i32_1 = arith.constant 0 : i32
    return %c0_i32, %c0_i32_0 : i32, i32
  }
  func.func @transform_38(%arg0: i32) -> (i32, i32) {
    %c0_i32 = arith.constant 0 : i32
    %c0_i32_0 = arith.constant 0 : i32
    %c0_i32_1 = arith.constant 0 : i32
    return %c0_i32, %c0_i32_0 : i32, i32
  }
  func.func @transform_39(%arg0: i32) -> (i32, i32) {
    %c0_i32 = arith.constant 0 : i32
    %c0_i32_0 = arith.constant 0 : i32
    %c0_i32_1 = arith.constant 0 : i32
    return %c0_i32, %c0_i32_0 : i32, i32
  }
  func.func @transform_40(%arg0: i32) -> (i32, i32) {
    %c0_i32 = arith.constant 0 : i32
    %c0_i32_0 = arith.constant 0 : i32
    %c0_i32_1 = arith.constant 0 : i32
    return %c0_i32, %c0_i32_0 : i32, i32
  }
  func.func @transform_41(%arg0: i32) -> (i32, i32) {
    %c0_i32 = arith.constant 0 : i32
    %c0_i32_0 = arith.constant 0 : i32
    %c0_i32_1 = arith.constant 0 : i32
    return %c0_i32, %c0_i32_0 : i32, i32
  }
  func.func @transform_42(%arg0: i32) -> (i32, i32) {
    %c0_i32 = arith.constant 0 : i32
    %c0_i32_0 = arith.constant 0 : i32
    %c0_i32_1 = arith.constant 0 : i32
    return %c0_i32, %c0_i32_0 : i32, i32
  }
  func.func @transform_43(%arg0: i32) -> (i32, i32) {
    %c0_i32 = arith.constant 0 : i32
    %c0_i32_0 = arith.constant 0 : i32
    %c0_i32_1 = arith.constant 0 : i32
    return %c0_i32, %c0_i32_0 : i32, i32
  }
  func.func @transform_44(%arg0: i32) -> (i32, i32) {
    %c0_i32 = arith.constant 0 : i32
    %c0_i32_0 = arith.constant 0 : i32
    %c0_i32_1 = arith.constant 0 : i32
    return %c0_i32, %c0_i32_0 : i32, i32
  }
  func.func @transform_45(%arg0: i32) -> (i32, i32) {
    %c0_i32 = arith.constant 0 : i32
    %c0_i32_0 = arith.constant 0 : i32
    %c0_i32_1 = arith.constant 0 : i32
    return %c0_i32, %c0_i32_0 : i32, i32
  }
  func.func @transform_46(%arg0: i32) -> (i32, i32) {
    %c0_i32 = arith.constant 0 : i32
    %c0_i32_0 = arith.constant 0 : i32
    %c0_i32_1 = arith.constant 0 : i32
    return %c0_i32, %c0_i32_0 : i32, i32
  }
  func.func @transform_47(%arg0: i32) -> (i32, i32) {
    %c0_i32 = arith.constant 0 : i32
    %c0_i32_0 = arith.constant 0 : i32
    %c0_i32_1 = arith.constant 0 : i32
    return %c0_i32, %c0_i32_0 : i32, i32
  }
  func.func @transform_48(%arg0: i32) -> (i32, i32) {
    %c0_i32 = arith.constant 0 : i32
    %c0_i32_0 = arith.constant 0 : i32
    %c0_i32_1 = arith.constant 0 : i32
    return %c0_i32, %c0_i32_0 : i32, i32
  }
  func.func @transform_49(%arg0: i32) -> (i32, i32) {
    %c0_i32 = arith.constant 0 : i32
    %c0_i32_0 = arith.constant 0 : i32
    %c0_i32_1 = arith.constant 0 : i32
    return %c0_i32, %c0_i32_0 : i32, i32
  }
  func.func @transform_50(%arg0: i32) -> (i32, i32) {
    %c0_i32 = arith.constant 0 : i32
    %c0_i32_0 = arith.constant 0 : i32
    %c0_i32_1 = arith.constant 0 : i32
    return %c0_i32, %c0_i32_0 : i32, i32
  }
  func.func @transform_51(%arg0: i32) -> (i32, i32) {
    %c0_i32 = arith.constant 0 : i32
    %c0_i32_0 = arith.constant 0 : i32
    %c0_i32_1 = arith.constant 0 : i32
    return %c0_i32, %c0_i32_0 : i32, i32
  }
  func.func @transform_52(%arg0: i32) -> (i32, i32) {
    %c0_i32 = arith.constant 0 : i32
    %c0_i32_0 = arith.constant 0 : i32
    %c0_i32_1 = arith.constant 0 : i32
    return %c0_i32, %c0_i32_0 : i32, i32
  }
  func.func @transform_53(%arg0: i32) -> (i32, i32) {
    %c0_i32 = arith.constant 0 : i32
    %c0_i32_0 = arith.constant 0 : i32
    %c0_i32_1 = arith.constant 0 : i32
    return %c0_i32, %c0_i32_0 : i32, i32
  }
  func.func @transform_54(%arg0: i32) -> (i32, i32) {
    %c0_i32 = arith.constant 0 : i32
    %c0_i32_0 = arith.constant 0 : i32
    %c0_i32_1 = arith.constant 0 : i32
    return %c0_i32, %c0_i32_0 : i32, i32
  }
  func.func @transform_55(%arg0: i32) -> (i32, i32) {
    %c0_i32 = arith.constant 0 : i32
    %c0_i32_0 = arith.constant 0 : i32
    %c0_i32_1 = arith.constant 0 : i32
    return %c0_i32, %c0_i32_0 : i32, i32
  }
  func.func @transform_56(%arg0: i32) -> (i32, i32) {
    %c0_i32 = arith.constant 0 : i32
    %c0_i32_0 = arith.constant 0 : i32
    %c0_i32_1 = arith.constant 0 : i32
    return %c0_i32, %c0_i32_0 : i32, i32
  }
  func.func @transform_57(%arg0: i32) -> (i32, i32, i32) {
    %c0_i32 = arith.constant 0 : i32
    %c0_i32_0 = arith.constant 0 : i32
    %c0_i32_1 = arith.constant 0 : i32
    return %arg0, %c0_i32, %c0_i32_0 : i32, i32, i32
  }
}

</mosaic_0001>

<llo_original>
// kernel: tpu_custom_call.1
$region0: #{tpu_custom_call.1}
  #allocation0 [shape = 'u32[]', space=smem, size = 0x4, offset = 0x4, fixed_abs, tag = 'smem constant byte address 0x4 - core index']
  #allocation1 [shape = 'u32[144,128]{1,0:T(1,128)}', space=vmem, size = 0x12000, scoped, tag = 'internal scratch']
  %s0 = inlined_call_operand.smem [shape: u32[58], index: -1, kind: input, shape index: {}]
  %s1 = sld [smem:[%s0]]
  %s2 = scalar_lea.smem %s0, 1
  %s3 = sld [smem:[%s2]]
  %s4 = scalar_lea.smem %s0, 2
  %s5 = sld [smem:[%s4]]
  %s6 = scalar_lea.smem %s0, 3
  %s7 = sld [smem:[%s6]]
  %s8 = scalar_lea.smem %s0, 4
  %s9 = sld [smem:[%s8]]
  %s10 = scalar_lea.smem %s0, 5
  %s11 = sld [smem:[%s10]]
  %s12 = scalar_lea.smem %s0, 6
  %s13 = sld [smem:[%s12]]
  %s14 = scalar_lea.smem %s0, 7
  %s15 = sld [smem:[%s14]]
  %s16 = scalar_lea.smem %s0, 8
  %s17 = sld [smem:[%s16]]
  %s18 = scalar_lea.smem %s0, 9
  %s19 = sld [smem:[%s18]]
  %s20 = scalar_lea.smem %s0, 10
  %s21 = sld [smem:[%s20]]
  %s22 = scalar_lea.smem %s0, 11
  %s23 = sld [smem:[%s22]]
  %s24 = scalar_lea.smem %s0, 12
  %s25 = sld [smem:[%s24]]
  %s26 = scalar_lea.smem %s0, 13
  %s27 = sld [smem:[%s26]]
  %s28 = scalar_lea.smem %s0, 14
  %s29 = sld [smem:[%s28]]
  %s30 = scalar_lea.smem %s0, 15
  %s31 = sld [smem:[%s30]]
  %s32 = scalar_lea.smem %s0, 16
  %s33 = sld [smem:[%s32]]
  %s34 = scalar_lea.smem %s0, 17
  %s35 = sld [smem:[%s34]]
  %s36 = scalar_lea.smem %s0, 18
  %s37 = sld [smem:[%s36]]
  %s38 = scalar_lea.smem %s0, 19
  %s39 = sld [smem:[%s38]]
  %s40 = scalar_lea.smem %s0, 20
  %s41 = sld [smem:[%s40]]
  %s42 = scalar_lea.smem %s0, 21
  %s43 = sld [smem:[%s42]]
  %s44 = scalar_lea.smem %s0, 22
  %s45 = sld [smem:[%s44]]
  %s46 = scalar_lea.smem %s0, 23
  %s47 = sld [smem:[%s46]]
  %s48 = scalar_lea.smem %s0, 24
  %s49 = sld [smem:[%s48]]
  %s50 = scalar_lea.smem %s0, 25
  %s51 = sld [smem:[%s50]]
  %s52 = scalar_lea.smem %s0, 26
  %s53 = sld [smem:[%s52]]
  %s54 = scalar_lea.smem %s0, 27
  %s55 = sld [smem:[%s54]]
  %s56 = scalar_lea.smem %s0, 28
  %s57 = sld [smem:[%s56]]
  %s58 = scalar_lea.smem %s0, 29
  %s59 = sld [smem:[%s58]]
  %s60 = scalar_lea.smem %s0, 30
  %s61 = sld [smem:[%s60]]
  %s62 = scalar_lea.smem %s0, 31
  %s63 = sld [smem:[%s62]]
  %s64 = scalar_lea.smem %s0, 32
  %s65 = sld [smem:[%s64]]
  %s66 = scalar_lea.smem %s0, 33
  %s67 = sld [smem:[%s66]]
  %s68 = scalar_lea.smem %s0, 34
  %s69 = sld [smem:[%s68]]
  %s70 = scalar_lea.smem %s0, 35
  %s71 = sld [smem:[%s70]]
  %s72 = scalar_lea.smem %s0, 36
  %s73 = sld [smem:[%s72]]
  %s74 = scalar_lea.smem %s0, 37
  %s75 = sld [smem:[%s74]]
  %s76 = scalar_lea.smem %s0, 38
  %s77 = sld [smem:[%s76]]
  %s78 = scalar_lea.smem %s0, 39
  %s79 = sld [smem:[%s78]]
  %s80 = scalar_lea.smem %s0, 40
  %s81 = sld [smem:[%s80]]
  %s82 = scalar_lea.smem %s0, 41
  %s83 = sld [smem:[%s82]]
  %s84 = scalar_lea.smem %s0, 42
  %s85 = sld [smem:[%s84]]
  %s86 = scalar_lea.smem %s0, 43
  %s87 = sld [smem:[%s86]]
  %s88 = scalar_lea.smem %s0, 44
  %s89 = sld [smem:[%s88]]
  %s90 = scalar_lea.smem %s0, 45
  %s91 = sld [smem:[%s90]]
  %s92 = scalar_lea.smem %s0, 46
  %s93 = sld [smem:[%s92]]
  %s94 = scalar_lea.smem %s0, 47
  %s95 = sld [smem:[%s94]]
  %s96 = scalar_lea.smem %s0, 48
  %s97 = sld [smem:[%s96]]
  %s98 = scalar_lea.smem %s0, 49
  %s99 = sld [smem:[%s98]]
  %s100 = scalar_lea.smem %s0, 50
  %s101 = sld [smem:[%s100]]
  %s102 = scalar_lea.smem %s0, 51
  %s103 = sld [smem:[%s102]]
  %s104 = scalar_lea.smem %s0, 52
  %s105 = sld [smem:[%s104]]
  %s106 = scalar_lea.smem %s0, 53
  %s107 = sld [smem:[%s106]]
  %s108 = scalar_lea.smem %s0, 54
  %s109 = sld [smem:[%s108]]
  %s110 = scalar_lea.smem %s0, 55
  %s111 = sld [smem:[%s110]]
  %s112 = scalar_lea.smem %s0, 56
  %s113 = sld [smem:[%s112]]
  %s114 = scalar_lea.smem %s0, 57
  %s115 = sld [smem:[%s114]]
  %s116 = sld [smem:[#allocation0]]
  $region362: #{tpu_custom_call.1} parent=0
    _
  %s118 = ssub.s32 1, %s116
  %s119 = scalar_select 0, %s118, %s116
  $region1: #{tpu_custom_call.1} parent=0
    #allocation2 [shape = 'u8[2048]{0}', space=vmem, size = 0x800, scoped, tag = 'input window, operand 1, single buffered']
    #allocation3 [shape = 's32[1]{0}', space=sflag, size = 0x4, scoped, tag = 'scoped memory for tpu_custom_call.1']
    #allocation4 [shape = 's32[1]{0}', space=sflag, size = 0x4, scoped, tag = 'scoped memory for tpu_custom_call.1']
    #allocation5 [shape = 'u8[512]{0}', space=vmem, size = 0x400, scoped, tag = 'input window, operand 2, single buffered']
    #allocation6 [shape = 's32[1]{0}', space=sflag, size = 0x4, scoped, tag = 'scoped memory for tpu_custom_call.1']
    #allocation7 [shape = 'u8[4096]{0}', space=vmem, size = 0x1000, scoped, tag = 'input window, operand 4, single buffered']
    #allocation8 [shape = 'u8[512]{0}', space=vmem, size = 0x400, scoped, tag = 'input window, operand 7, single buffered']
    #allocation9 [shape = 's32[1]{0}', space=sflag, size = 0x4, scoped, tag = 'scoped memory for tpu_custom_call.1']
    #allocation10 [shape = 'u8[512]{0}', space=vmem, size = 0x400, scoped, tag = 'input window, operand 8, single buffered']
    #allocation11 [shape = 'u8[512]{0}', space=vmem, size = 0x400, scoped, tag = 'input window, operand 10, single buffered']
    #allocation12 [shape = 's32[1]{0}', space=sflag, size = 0x4, scoped, tag = 'scoped memory for tpu_custom_call.1']
    #allocation13 [shape = 'u8[512]{0}', space=vmem, size = 0x400, scoped, tag = 'input window, operand 12, single buffered']
    #allocation14 [shape = 'u8[512]{0}', space=vmem, size = 0x400, scoped, tag = 'input window, operand 13, single buffered']
    #allocation15 [shape = 's32[1]{0}', space=sflag, size = 0x4, scoped, tag = 'scoped memory for tpu_custom_call.1']
    #allocation16 [shape = 'u8[512]{0}', space=vmem, size = 0x400, scoped, tag = 'input window, operand 14, single buffered']
    #allocation17 [shape = 'u8[512]{0}', space=vmem, size = 0x400, scoped, tag = 'input window, operand 17, single buffered']
    #allocation18 [shape = 's32[1]{0}', space=sflag, size = 0x4, scoped, tag = 'scoped memory for tpu_custom_call.1']
    #allocation19 [shape = 'u8[512]{0}', space=vmem, size = 0x400, scoped, tag = 'input window, operand 18, single buffered']
    #allocation20 [shape = 'u8[512]{0}', space=vmem, size = 0x400, scoped, tag = 'input window, operand 20, single buffered']
    #allocation21 [shape = 's32[1]{0}', space=sflag, size = 0x4, scoped, tag = 'scoped memory for tpu_custom_call.1']
    #allocation22 [shape = 'u8[512]{0}', space=vmem, size = 0x400, scoped, tag = 'input window, operand 22, single buffered']
    #allocation23 [shape = 'u8[512]{0}', space=vmem, size = 0x400, scoped, tag = 'input window, operand 23, single buffered']
    #allocation24 [shape = 's32[1]{0}', space=sflag, size = 0x4, scoped, tag = 'scoped memory for tpu_custom_call.1']
    #allocation25 [shape = 'u8[512]{0}', space=vmem, size = 0x400, scoped, tag = 'input window, operand 24, single buffered']
    #allocation26 [shape = 'u8[512]{0}', space=vmem, size = 0x400, scoped, tag = 'input window, operand 27, single buffered']
    #allocation27 [shape = 's32[1]{0}', space=sflag, size = 0x4, scoped, tag = 'scoped memory for tpu_custom_call.1']
    #allocation28 [shape = 'u8[512]{0}', space=vmem, size = 0x400, scoped, tag = 'input window, operand 28, single buffered']
    #allocation29 [shape = 'u8[8192]{0}', space=vmem, size = 0x2000, scoped, tag = 'input window, operand 31, single buffered']
    #allocation30 [shape = 's32[1]{0}', space=sflag, size = 0x4, scoped, tag = 'scoped memory for tpu_custom_call.1']
    #allocation31 [shape = 'u8[512]{0}', space=vmem, size = 0x400, scoped, tag = 'input window, operand 32, single buffered']
    #allocation32 [shape = 'u8[512]{0}', space=vmem, size = 0x400, scoped, tag = 'input window, operand 33, single buffered']
    #allocation33 [shape = 's32[1]{0}', space=sflag, size = 0x4, scoped, tag = 'scoped memory for tpu_custom_call.1']
    #allocation34 [shape = 'u8[512]{0}', space=vmem, size = 0x400, scoped, tag = 'input window, operand 35, single buffered']
    #allocation35 [shape = 'u8[512]{0}', space=vmem, size = 0x400, scoped, tag = 'input window, operand 37, single buffered']
    #allocation36 [shape = 's32[1]{0}', space=sflag, size = 0x4, scoped, tag = 'scoped memory for tpu_custom_call.1']
    #allocation37 [shape = 'u8[512]{0}', space=vmem, size = 0x400, scoped, tag = 'input window, operand 38, single buffered']
    #allocation38 [shape = 'u8[512]{0}', space=vmem, size = 0x400, scoped, tag = 'input window, operand 39, single buffered']
    #allocation39 [shape = 's32[1]{0}', space=sflag, size = 0x4, scoped, tag = 'scoped memory for tpu_custom_call.1']
    #allocation40 [shape = 'u8[8192]{0}', space=vmem, size = 0x2000, scoped, tag = 'input window, operand 40, single buffered']
    #allocation41 [shape = 'u8[8192]{0}', space=vmem, size = 0x2000, scoped, tag = 'input window, operand 41, single buffered']
    #allocation42 [shape = 's32[1]{0}', space=sflag, size = 0x4, scoped, tag = 'scoped memory for tpu_custom_call.1']
    #allocation43 [shape = 'u8[512]{0}', space=vmem, size = 0x400, scoped, tag = 'input window, operand 42, single buffered']
    #allocation44 [shape = 'u8[512]{0}', space=vmem, size = 0x400, scoped, tag = 'input window, operand 43, single buffered']
    #allocation45 [shape = 's32[1]{0}', space=sflag, size = 0x4, scoped, tag = 'scoped memory for tpu_custom_call.1']
    #allocation46 [shape = 'u8[8192]{0}', space=vmem, size = 0x2000, scoped, tag = 'input window, operand 45, single buffered']
    #allocation47 [shape = 'u8[8192]{0}', space=vmem, size = 0x2000, scoped, tag = 'input window, operand 46, single buffered']
    #allocation48 [shape = 's32[1]{0}', space=sflag, size = 0x4, scoped, tag = 'scoped memory for tpu_custom_call.1']
    #allocation49 [shape = 'u8[8192]{0}', space=vmem, size = 0x2000, scoped, tag = 'input window, operand 49, single buffered']
    #allocation50 [shape = 'u8[4096]{0}', space=vmem, size = 0x1000, scoped, tag = 'output window, operand 0, single buffered']
    %120 = vsyncpa [#allocation3], 0
    %121 = vsyncpa [#allocation6], 0
    %122 = vsyncpa [#allocation9], 0
    %123 = vsyncpa [#allocation12], 0
    %124 = vsyncpa [#allocation15], 0
    %125 = vsyncpa [#allocation18], 0
    %126 = vsyncpa [#allocation21], 0
    %127 = vsyncpa [#allocation24], 0
    %128 = vsyncpa [#allocation27], 0
    %129 = vsyncpa [#allocation30], 0
    %130 = vsyncpa [#allocation33], 0
    %131 = vsyncpa [#allocation36], 0
    %132 = vsyncpa [#allocation39], 0
    %133 = vsyncpa [#allocation42], 0
    %134 = vsyncpa [#allocation45], 0
    %135 = vsyncpa [#allocation48], 0
    %136 = vsyncpa [#allocation4], 0
    // Predicated region
    $region2: #{tpu_custom_call.1} parent=1 // pred_check
      _
    $region3: #{tpu_custom_call.1} parent=1 // pred_check_branch
      %138 = sbr.rel (0) target = $region5
    $region4: #{tpu_custom_call.1} parent=1 // pred_region
      _
    $region5: #{tpu_custom_call.1} parent=1 // pred_fallthru
      _
    // Predicated region
    $region6: #{tpu_custom_call.1} parent=1 // pred_check
      _
    $region7: #{tpu_custom_call.1} parent=1 // pred_check_branch
      %140 = sbr.rel (0) target = $region9
    $region8: #{tpu_custom_call.1} parent=1 // pred_region
      %s142 = ssub.s32 64, 64
      %143 = vsyncadd [#allocation3], %s142
      %s145 = sshll.u32 [#allocation2], 4
      %s146 = int_to_ptr.vmem [resolvable:$true] %s145
      %148 = dma.hbm_to_vmem [thread:$0]  %s3, 64, %s146, [#allocation3]
    $region9: #{tpu_custom_call.1} parent=1 // pred_fallthru
      _
    // Predicated region
    $region10: #{tpu_custom_call.1} parent=1 // pred_check
      _
    $region11: #{tpu_custom_call.1} parent=1 // pred_check_branch
      %150 = sbr.rel (0) target = $region13
    $region12: #{tpu_custom_call.1} parent=1 // pred_region
      %s152 = ssub.s32 16, 16
      %153 = vsyncadd [#allocation6], %s152
      %s155 = sshll.u32 [#allocation5], 4
      %s156 = int_to_ptr.vmem [resolvable:$true] %s155
      %158 = dma.hbm_to_vmem [thread:$0]  %s5, 16, %s156, [#allocation6]
    $region13: #{tpu_custom_call.1} parent=1 // pred_fallthru
      _
    // Predicated region
    $region14: #{tpu_custom_call.1} parent=1 // pred_check
      _
    $region15: #{tpu_custom_call.1} parent=1 // pred_check_branch
      %160 = sbr.rel (0) target = $region17
    $region16: #{tpu_custom_call.1} parent=1 // pred_region
      _
    $region17: #{tpu_custom_call.1} parent=1 // pred_fallthru
      _
    // Predicated region
    $region18: #{tpu_custom_call.1} parent=1 // pred_check
      _
    $region19: #{tpu_custom_call.1} parent=1 // pred_check_branch
      %162 = sbr.rel (0) target = $region21
    $region20: #{tpu_custom_call.1} parent=1 // pred_region
      %s164 = ssub.s32 128, 128
      %165 = vsyncadd [#allocation6], %s164
      %s167 = sshll.u32 [#allocation7], 4
      %s168 = int_to_ptr.vmem [resolvable:$true] %s167
      %170 = dma.hbm_to_vmem [thread:$0]  %s9, 128, %s168, [#allocation6]
    $region21: #{tpu_custom_call.1} parent=1 // pred_fallthru
      _
    // Predicated region
    $region22: #{tpu_custom_call.1} parent=1 // pred_check
      _
    $region23: #{tpu_custom_call.1} parent=1 // pred_check_branch
      %172 = sbr.rel (0) target = $region25
    $region24: #{tpu_custom_call.1} parent=1 // pred_region
      _
    $region25: #{tpu_custom_call.1} parent=1 // pred_fallthru
      _
    // Predicated region
    $region26: #{tpu_custom_call.1} parent=1 // pred_check
      _
    $region27: #{tpu_custom_call.1} parent=1 // pred_check_branch
      %174 = sbr.rel (0) target = $region29
    $region28: #{tpu_custom_call.1} parent=1 // pred_region
      _
    $region29: #{tpu_custom_call.1} parent=1 // pred_fallthru
      _
    // Predicated region
    $region30: #{tpu_custom_call.1} parent=1 // pred_check
      _
    $region31: #{tpu_custom_call.1} parent=1 // pred_check_branch
      %176 = sbr.rel (0) target = $region33
    $region32: #{tpu_custom_call.1} parent=1 // pred_region
      %s178 = ssub.s32 16, 16
      %179 = vsyncadd [#allocation9], %s178
      %s181 = sshll.u32 [#allocation8], 4
      %s182 = int_to_ptr.vmem [resolvable:$true] %s181
      %184 = dma.hbm_to_vmem [thread:$0]  %s15, 16, %s182, [#allocation9]
    $region33: #{tpu_custom_call.1} parent=1 // pred_fallthru
      _
    // Predicated region
    $region34: #{tpu_custom_call.1} parent=1 // pred_check
      _
    $region35: #{tpu_custom_call.1} parent=1 // pred_check_branch
      %186 = sbr.rel (0) target = $region37
    $region36: #{tpu_custom_call.1} parent=1 // pred_region
      %s188 = ssub.s32 16, 16
      %189 = vsyncadd [#allocation9], %s188
      %s191 = sshll.u32 [#allocation10], 4
      %s192 = int_to_ptr.vmem [resolvable:$true] %s191
      %194 = dma.hbm_to_vmem [thread:$0]  %s17, 16, %s192, [#allocation9]
    $region37: #{tpu_custom_call.1} parent=1 // pred_fallthru
      _
    // Predicated region
    $region38: #{tpu_custom_call.1} parent=1 // pred_check
      _
    $region39: #{tpu_custom_call.1} parent=1 // pred_check_branch
      %196 = sbr.rel (0) target = $region41
    $region40: #{tpu_custom_call.1} parent=1 // pred_region
      _
    $region41: #{tpu_custom_call.1} parent=1 // pred_fallthru
      _
    // Predicated region
    $region42: #{tpu_custom_call.1} parent=1 // pred_check
      _
    $region43: #{tpu_custom_call.1} parent=1 // pred_check_branch
      %198 = sbr.rel (0) target = $region45
    $region44: #{tpu_custom_call.1} parent=1 // pred_region
      %s200 = ssub.s32 16, 16
      %201 = vsyncadd [#allocation12], %s200
      %s203 = sshll.u32 [#allocation11], 4
      %s204 = int_to_ptr.vmem [resolvable:$true] %s203
      %206 = dma.hbm_to_vmem [thread:$0]  %s21, 16, %s204, [#allocation12]
    $region45: #{tpu_custom_call.1} parent=1 // pred_fallthru
      _
    // Predicated region
    $region46: #{tpu_custom_call.1} parent=1 // pred_check
      _
    $region47: #{tpu_custom_call.1} parent=1 // pred_check_branch
      %208 = sbr.rel (0) target = $region49
    $region48: #{tpu_custom_call.1} parent=1 // pred_region
      _
    $region49: #{tpu_custom_call.1} parent=1 // pred_fallthru
      _
    // Predicated region
    $region50: #{tpu_custom_call.1} parent=1 // pred_check
      _
    $region51: #{tpu_custom_call.1} parent=1 // pred_check_branch
      %210 = sbr.rel (0) target = $region53
    $region52: #{tpu_custom_call.1} parent=1 // pred_region
      %s212 = ssub.s32 16, 16
      %213 = vsyncadd [#allocation12], %s212
      %s215 = sshll.u32 [#allocation13], 4
      %s216 = int_to_ptr.vmem [resolvable:$true] %s215
      %218 = dma.hbm_to_vmem [thread:$0]  %s25, 16, %s216, [#allocation12]
    $region53: #{tpu_custom_call.1} parent=1 // pred_fallthru
      _
    // Predicated region
    $region54: #{tpu_custom_call.1} parent=1 // pred_check
      _
    $region55: #{tpu_custom_call.1} parent=1 // pred_check_branch
      %220 = sbr.rel (0) target = $region57
    $region56: #{tpu_custom_call.1} parent=1 // pred_region
      %s222 = ssub.s32 16, 16
      %223 = vsyncadd [#allocation15], %s222
      %s225 = sshll.u32 [#allocation14], 4
      %s226 = int_to_ptr.vmem [resolvable:$true] %s225
      %228 = dma.hbm_to_vmem [thread:$0]  %s27, 16, %s226, [#allocation15]
    $region57: #{tpu_custom_call.1} parent=1 // pred_fallthru
      _
    // Predicated region
    $region58: #{tpu_custom_call.1} parent=1 // pred_check
      _
    $region59: #{tpu_custom_call.1} parent=1 // pred_check_branch
      %230 = sbr.rel (0) target = $region61
    $region60: #{tpu_custom_call.1} parent=1 // pred_region
      %s232 = ssub.s32 16, 16
      %233 = vsyncadd [#allocation15], %s232
      %s235 = sshll.u32 [#allocation16], 4
      %s236 = int_to_ptr.vmem [resolvable:$true] %s235
      %238 = dma.hbm_to_vmem [thread:$0]  %s29, 16, %s236, [#allocation15]
    $region61: #{tpu_custom_call.1} parent=1 // pred_fallthru
      _
    // Predicated region
    $region62: #{tpu_custom_call.1} parent=1 // pred_check
      _
    $region63: #{tpu_custom_call.1} parent=1 // pred_check_branch
      %240 = sbr.rel (0) target = $region65
    $region64: #{tpu_custom_call.1} parent=1 // pred_region
      _
    $region65: #{tpu_custom_call.1} parent=1 // pred_fallthru
      _
    // Predicated region
    $region66: #{tpu_custom_call.1} parent=1 // pred_check
      _
    $region67: #{tpu_custom_call.1} parent=1 // pred_check_branch
      %242 = sbr.rel (0) target = $region69
    $region68: #{tpu_custom_call.1} parent=1 // pred_region
      _
    $region69: #{tpu_custom_call.1} parent=1 // pred_fallthru
      _
    // Predicated region
    $region70: #{tpu_custom_call.1} parent=1 // pred_check
      _
    $region71: #{tpu_custom_call.1} parent=1 // pred_check_branch
      %244 = sbr.rel (0) target = $region73
    $region72: #{tpu_custom_call.1} parent=1 // pred_region
      %s246 = ssub.s32 16, 16
      %247 = vsyncadd [#allocation18], %s246
      %s249 = sshll.u32 [#allocation17], 4
      %s250 = int_to_ptr.vmem [resolvable:$true] %s249
      %252 = dma.hbm_to_vmem [thread:$0]  %s35, 16, %s250, [#allocation18]
    $region73: #{tpu_custom_call.1} parent=1 // pred_fallthru
      _
    // Predicated region
    $region74: #{tpu_custom_call.1} parent=1 // pred_check
      _
    $region75: #{tpu_custom_call.1} parent=1 // pred_check_branch
      %254 = sbr.rel (0) target = $region77
    $region76: #{tpu_custom_call.1} parent=1 // pred_region
      %s256 = ssub.s32 16, 16
      %257 = vsyncadd [#allocation18], %s256
      %s259 = sshll.u32 [#allocation19], 4
      %s260 = int_to_ptr.vmem [resolvable:$true] %s259
      %262 = dma.hbm_to_vmem [thread:$0]  %s37, 16, %s260, [#allocation18]
    $region77: #{tpu_custom_call.1} parent=1 // pred_fallthru
      _
    // Predicated region
    $region78: #{tpu_custom_call.1} parent=1 // pred_check
      _
    $region79: #{tpu_custom_call.1} parent=1 // pred_check_branch
      %264 = sbr.rel (0) target = $region81
    $region80: #{tpu_custom_call.1} parent=1 // pred_region
      _
    $region81: #{tpu_custom_call.1} parent=1 // pred_fallthru
      _
    // Predicated region
    $region82: #{tpu_custom_call.1} parent=1 // pred_check
      _
    $region83: #{tpu_custom_call.1} parent=1 // pred_check_branch
      %266 = sbr.rel (0) target = $region85
    $region84: #{tpu_custom_call.1} parent=1 // pred_region
      %s268 = ssub.s32 16, 16
      %269 = vsyncadd [#allocation21], %s268
      %s271 = sshll.u32 [#allocation20], 4
      %s272 = int_to_ptr.vmem [resolvable:$true] %s271
      %274 = dma.hbm_to_vmem [thread:$0]  %s41, 16, %s272, [#allocation21]
    $region85: #{tpu_custom_call.1} parent=1 // pred_fallthru
      _
    // Predicated region
    $region86: #{tpu_custom_call.1} parent=1 // pred_check
      _
    $region87: #{tpu_custom_call.1} parent=1 // pred_check_branch
      %276 = sbr.rel (0) target = $region89
    $region88: #{tpu_custom_call.1} parent=1 // pred_region
      _
    $region89: #{tpu_custom_call.1} parent=1 // pred_fallthru
      _
    // Predicated region
    $region90: #{tpu_custom_call.1} parent=1 // pred_check
      _
    $region91: #{tpu_custom_call.1} parent=1 // pred_check_branch
      %278 = sbr.rel (0) target = $region93
    $region92: #{tpu_custom_call.1} parent=1 // pred_region
      %s280 = ssub.s32 16, 16
      %281 = vsyncadd [#allocation21], %s280
      %s283 = sshll.u32 [#allocation22], 4
      %s284 = int_to_ptr.vmem [resolvable:$true] %s283
      %286 = dma.hbm_to_vmem [thread:$0]  %s45, 16, %s284, [#allocation21]
    $region93: #{tpu_custom_call.1} parent=1 // pred_fallthru
      _
    // Predicated region
    $region94: #{tpu_custom_call.1} parent=1 // pred_check
      _
    $region95: #{tpu_custom_call.1} parent=1 // pred_check_branch
      %288 = sbr.rel (0) target = $region97
    $region96: #{tpu_custom_call.1} parent=1 // pred_region
      %s290 = ssub.s32 16, 16
      %291 = vsyncadd [#allocation24], %s290
      %s293 = sshll.u32 [#allocation23], 4
      %s294 = int_to_ptr.vmem [resolvable:$true] %s293
      %296 = dma.hbm_to_vmem [thread:$0]  %s47, 16, %s294, [#allocation24]
    $region97: #{tpu_custom_call.1} parent=1 // pred_fallthru
      _
    // Predicated region
    $region98: #{tpu_custom_call.1} parent=1 // pred_check
      _
    $region99: #{tpu_custom_call.1} parent=1 // pred_check_branch
      %298 = sbr.rel (0) target = $region101
    $region100: #{tpu_custom_call.1} parent=1 // pred_region
      %s300 = ssub.s32 16, 16
      %301 = vsyncadd [#allocation24], %s300
      %s303 = sshll.u32 [#allocation25], 4
      %s304 = int_to_ptr.vmem [resolvable:$true] %s303
      %306 = dma.hbm_to_vmem [thread:$0]  %s49, 16, %s304, [#allocation24]
    $region101: #{tpu_custom_call.1} parent=1 // pred_fallthru
      _
    // Predicated region
    $region102: #{tpu_custom_call.1} parent=1 // pred_check
      _
    $region103: #{tpu_custom_call.1} parent=1 // pred_check_branch
      %308 = sbr.rel (0) target = $region105
    $region104: #{tpu_custom_call.1} parent=1 // pred_region
      _
    $region105: #{tpu_custom_call.1} parent=1 // pred_fallthru
      _
    // Predicated region
    $region106: #{tpu_custom_call.1} parent=1 // pred_check
      _
    $region107: #{tpu_custom_call.1} parent=1 // pred_check_branch
      %310 = sbr.rel (0) target = $region109
    $region108: #{tpu_custom_call.1} parent=1 // pred_region
      _
    $region109: #{tpu_custom_call.1} parent=1 // pred_fallthru
      _
    // Predicated region
    $region110: #{tpu_custom_call.1} parent=1 // pred_check
      _
    $region111: #{tpu_custom_call.1} parent=1 // pred_check_branch
      %312 = sbr.rel (0) target = $region113
    $region112: #{tpu_custom_call.1} parent=1 // pred_region
      %s314 = ssub.s32 16, 16
      %315 = vsyncadd [#allocation27], %s314
      %s317 = sshll.u32 [#allocation26], 4
      %s318 = int_to_ptr.vmem [resolvable:$true] %s317
      %320 = dma.hbm_to_vmem [thread:$0]  %s55, 16, %s318, [#allocation27]
    $region113: #{tpu_custom_call.1} parent=1 // pred_fallthru
      _
    // Predicated region
    $region114: #{tpu_custom_call.1} parent=1 // pred_check
      _
    $region115: #{tpu_custom_call.1} parent=1 // pred_check_branch
      %322 = sbr.rel (0) target = $region117
    $region116: #{tpu_custom_call.1} parent=1 // pred_region
      %s324 = ssub.s32 16, 16
      %325 = vsyncadd [#allocation27], %s324
      %s327 = sshll.u32 [#allocation28], 4
      %s328 = int_to_ptr.vmem [resolvable:$true] %s327
      %330 = dma.hbm_to_vmem [thread:$0]  %s57, 16, %s328, [#allocation27]
    $region117: #{tpu_custom_call.1} parent=1 // pred_fallthru
      _
    // Predicated region
    $region118: #{tpu_custom_call.1} parent=1 // pred_check
      _
    $region119: #{tpu_custom_call.1} parent=1 // pred_check_branch
      %332 = sbr.rel (0) target = $region121
    $region120: #{tpu_custom_call.1} parent=1 // pred_region
      _
    $region121: #{tpu_custom_call.1} parent=1 // pred_fallthru
      _
    // Predicated region
    $region122: #{tpu_custom_call.1} parent=1 // pred_check
      _
    $region123: #{tpu_custom_call.1} parent=1 // pred_check_branch
      %334 = sbr.rel (0) target = $region125
    $region124: #{tpu_custom_call.1} parent=1 // pred_region
      _
    $region125: #{tpu_custom_call.1} parent=1 // pred_fallthru
      _
    // Predicated region
    $region126: #{tpu_custom_call.1} parent=1 // pred_check
      _
    $region127: #{tpu_custom_call.1} parent=1 // pred_check_branch
      %336 = sbr.rel (0) target = $region129
    $region128: #{tpu_custom_call.1} parent=1 // pred_region
      %s338 = ssub.s32 256, 256
      %339 = vsyncadd [#allocation30], %s338
      %s340 = sshll.u32 [#allocation29], 4
      %s341 = int_to_ptr.vmem [resolvable:$true] %s340
      %346 = dma.hbm_to_vmem [thread:$0]  %s63, 256, %s341, [#allocation30], 64, 64, 4
    $region129: #{tpu_custom_call.1} parent=1 // pred_fallthru
      _
    // Predicated region
    $region130: #{tpu_custom_call.1} parent=1 // pred_check
      _
    $region131: #{tpu_custom_call.1} parent=1 // pred_check_branch
      %348 = sbr.rel (0) target = $region133
    $region132: #{tpu_custom_call.1} parent=1 // pred_region
      %s350 = ssub.s32 16, 16
      %351 = vsyncadd [#allocation30], %s350
      %s353 = sshll.u32 [#allocation31], 4
      %s354 = int_to_ptr.vmem [resolvable:$true] %s353
      %356 = dma.hbm_to_vmem [thread:$0]  %s65, 16, %s354, [#allocation30]
    $region133: #{tpu_custom_call.1} parent=1 // pred_fallthru
      _
    // Predicated region
    $region134: #{tpu_custom_call.1} parent=1 // pred_check
      _
    $region135: #{tpu_custom_call.1} parent=1 // pred_check_branch
      %358 = sbr.rel (0) target = $region137
    $region136: #{tpu_custom_call.1} parent=1 // pred_region
      %s360 = ssub.s32 16, 16
      %361 = vsyncadd [#allocation33], %s360
      %s363 = sshll.u32 [#allocation32], 4
      %s364 = int_to_ptr.vmem [resolvable:$true] %s363
      %366 = dma.hbm_to_vmem [thread:$0]  %s67, 16, %s364, [#allocation33]
    $region137: #{tpu_custom_call.1} parent=1 // pred_fallthru
      _
    // Predicated region
    $region138: #{tpu_custom_call.1} parent=1 // pred_check
      _
    $region139: #{tpu_custom_call.1} parent=1 // pred_check_branch
      %368 = sbr.rel (0) target = $region141
    $region140: #{tpu_custom_call.1} parent=1 // pred_region
      _
    $region141: #{tpu_custom_call.1} parent=1 // pred_fallthru
      _
    // Predicated region
    $region142: #{tpu_custom_call.1} parent=1 // pred_check
      _
    $region143: #{tpu_custom_call.1} parent=1 // pred_check_branch
      %370 = sbr.rel (0) target = $region145
    $region144: #{tpu_custom_call.1} parent=1 // pred_region
      %s372 = ssub.s32 16, 16
      %373 = vsyncadd [#allocation33], %s372
      %s375 = sshll.u32 [#allocation34], 4
      %s376 = int_to_ptr.vmem [resolvable:$true] %s375
      %378 = dma.hbm_to_vmem [thread:$0]  %s71, 16, %s376, [#allocation33]
    $region145: #{tpu_custom_call.1} parent=1 // pred_fallthru
      _
    // Predicated region
    $region146: #{tpu_custom_call.1} parent=1 // pred_check
      _
    $region147: #{tpu_custom_call.1} parent=1 // pred_check_branch
      %380 = sbr.rel (0) target = $region149
    $region148: #{tpu_custom_call.1} parent=1 // pred_region
      _
    $region149: #{tpu_custom_call.1} parent=1 // pred_fallthru
      _
    // Predicated region
    $region150: #{tpu_custom_call.1} parent=1 // pred_check
      _
    $region151: #{tpu_custom_call.1} parent=1 // pred_check_branch
      %382 = sbr.rel (0) target = $region153
    $region152: #{tpu_custom_call.1} parent=1 // pred_region
      %s384 = ssub.s32 16, 16
      %385 = vsyncadd [#allocation36], %s384
      %s387 = sshll.u32 [#allocation35], 4
      %s388 = int_to_ptr.vmem [resolvable:$true] %s387
      %390 = dma.hbm_to_vmem [thread:$0]  %s75, 16, %s388, [#allocation36]
    $region153: #{tpu_custom_call.1} parent=1 // pred_fallthru
      _
    // Predicated region
    $region154: #{tpu_custom_call.1} parent=1 // pred_check
      _
    $region155: #{tpu_custom_call.1} parent=1 // pred_check_branch
      %392 = sbr.rel (0) target = $region157
    $region156: #{tpu_custom_call.1} parent=1 // pred_region
      %s394 = ssub.s32 16, 16
      %395 = vsyncadd [#allocation36], %s394
      %s397 = sshll.u32 [#allocation37], 4
      %s398 = int_to_ptr.vmem [resolvable:$true] %s397
      %400 = dma.hbm_to_vmem [thread:$0]  %s77, 16, %s398, [#allocation36]
    $region157: #{tpu_custom_call.1} parent=1 // pred_fallthru
      _
    // Predicated region
    $region158: #{tpu_custom_call.1} parent=1 // pred_check
      _
    $region159: #{tpu_custom_call.1} parent=1 // pred_check_branch
      %402 = sbr.rel (0) target = $region161
    $region160: #{tpu_custom_call.1} parent=1 // pred_region
      %s404 = ssub.s32 16, 16
      %405 = vsyncadd [#allocation39], %s404
      %s407 = sshll.u32 [#allocation38], 4
      %s408 = int_to_ptr.vmem [resolvable:$true] %s407
      %410 = dma.hbm_to_vmem [thread:$0]  %s79, 16, %s408, [#allocation39]
    $region161: #{tpu_custom_call.1} parent=1 // pred_fallthru
      _
    // Predicated region
    $region162: #{tpu_custom_call.1} parent=1 // pred_check
      _
    $region163: #{tpu_custom_call.1} parent=1 // pred_check_branch
      %412 = sbr.rel (0) target = $region165
    $region164: #{tpu_custom_call.1} parent=1 // pred_region
      %s414 = ssub.s32 256, 256
      %415 = vsyncadd [#allocation39], %s414
      %s416 = sshll.u32 [#allocation40], 4
      %s417 = int_to_ptr.vmem [resolvable:$true] %s416
      %422 = dma.hbm_to_vmem [thread:$0]  %s81, 256, %s417, [#allocation39], 64, 64, 4
    $region165: #{tpu_custom_call.1} parent=1 // pred_fallthru
      _
    // Predicated region
    $region166: #{tpu_custom_call.1} parent=1 // pred_check
      _
    $region167: #{tpu_custom_call.1} parent=1 // pred_check_branch
      %424 = sbr.rel (0) target = $region169
    $region168: #{tpu_custom_call.1} parent=1 // pred_region
      %s426 = ssub.s32 256, 256
      %427 = vsyncadd [#allocation42], %s426
      %s428 = sshll.u32 [#allocation41], 4
      %s429 = int_to_ptr.vmem [resolvable:$true] %s428
      %434 = dma.hbm_to_vmem [thread:$0]  %s83, 256, %s429, [#allocation42], 64, 64, 4
    $region169: #{tpu_custom_call.1} parent=1 // pred_fallthru
      _
    // Predicated region
    $region170: #{tpu_custom_call.1} parent=1 // pred_check
      _
    $region171: #{tpu_custom_call.1} parent=1 // pred_check_branch
      %436 = sbr.rel (0) target = $region173
    $region172: #{tpu_custom_call.1} parent=1 // pred_region
      %s438 = ssub.s32 16, 16
      %439 = vsyncadd [#allocation42], %s438
      %s441 = sshll.u32 [#allocation43], 4
      %s442 = int_to_ptr.vmem [resolvable:$true] %s441
      %444 = dma.hbm_to_vmem [thread:$0]  %s85, 16, %s442, [#allocation42]
    $region173: #{tpu_custom_call.1} parent=1 // pred_fallthru
      _
    // Predicated region
    $region174: #{tpu_custom_call.1} parent=1 // pred_check
      _
    $region175: #{tpu_custom_call.1} parent=1 // pred_check_branch
      %446 = sbr.rel (0) target = $region177
    $region176: #{tpu_custom_call.1} parent=1 // pred_region
      %s448 = ssub.s32 16, 16
      %449 = vsyncadd [#allocation45], %s448
      %s451 = sshll.u32 [#allocation44], 4
      %s452 = int_to_ptr.vmem [resolvable:$true] %s451
      %454 = dma.hbm_to_vmem [thread:$0]  %s87, 16, %s452, [#allocation45]
    $region177: #{tpu_custom_call.1} parent=1 // pred_fallthru
      _
    // Predicated region
    $region178: #{tpu_custom_call.1} parent=1 // pred_check
      _
    $region179: #{tpu_custom_call.1} parent=1 // pred_check_branch
      %456 = sbr.rel (0) target = $region181
    $region180: #{tpu_custom_call.1} parent=1 // pred_region
      _
    $region181: #{tpu_custom_call.1} parent=1 // pred_fallthru
      _
    // Predicated region
    $region182: #{tpu_custom_call.1} parent=1 // pred_check
      _
    $region183: #{tpu_custom_call.1} parent=1 // pred_check_branch
      %458 = sbr.rel (0) target = $region185
    $region184: #{tpu_custom_call.1} parent=1 // pred_region
      %s460 = ssub.s32 256, 256
      %461 = vsyncadd [#allocation45], %s460
      %s462 = sshll.u32 [#allocation46], 4
      %s463 = int_to_ptr.vmem [resolvable:$true] %s462
      %468 = dma.hbm_to_vmem [thread:$0]  %s91, 256, %s463, [#allocation45], 64, 64, 4
    $region185: #{tpu_custom_call.1} parent=1 // pred_fallthru
      _
    // Predicated region
    $region186: #{tpu_custom_call.1} parent=1 // pred_check
      _
    $region187: #{tpu_custom_call.1} parent=1 // pred_check_branch
      %470 = sbr.rel (0) target = $region189
    $region188: #{tpu_custom_call.1} parent=1 // pred_region
      %s472 = ssub.s32 256, 256
      %473 = vsyncadd [#allocation48], %s472
      %s474 = sshll.u32 [#allocation47], 4
      %s475 = int_to_ptr.vmem [resolvable:$true] %s474
      %480 = dma.hbm_to_vmem [thread:$0]  %s93, 256, %s475, [#allocation48], 64, 64, 4
    $region189: #{tpu_custom_call.1} parent=1 // pred_fallthru
      _
    // Predicated region
    $region190: #{tpu_custom_call.1} parent=1 // pred_check
      _
    $region191: #{tpu_custom_call.1} parent=1 // pred_check_branch
      %482 = sbr.rel (0) target = $region193
    $region192: #{tpu_custom_call.1} parent=1 // pred_region
      _
    $region193: #{tpu_custom_call.1} parent=1 // pred_fallthru
      _
    // Predicated region
    $region194: #{tpu_custom_call.1} parent=1 // pred_check
      _
    $region195: #{tpu_custom_call.1} parent=1 // pred_check_branch
      %484 = sbr.rel (0) target = $region197
    $region196: #{tpu_custom_call.1} parent=1 // pred_region
      _
    $region197: #{tpu_custom_call.1} parent=1 // pred_fallthru
      _
    // Predicated region
    $region198: #{tpu_custom_call.1} parent=1 // pred_check
      _
    $region199: #{tpu_custom_call.1} parent=1 // pred_check_branch
      %486 = sbr.rel (0) target = $region201
    $region200: #{tpu_custom_call.1} parent=1 // pred_region
      %s488 = ssub.s32 256, 256
      %489 = vsyncadd [#allocation48], %s488
      %s490 = sshll.u32 [#allocation49], 4
      %s491 = int_to_ptr.vmem [resolvable:$true] %s490
      %496 = dma.hbm_to_vmem [thread:$0]  %s99, 256, %s491, [#allocation48], 64, 64, 4
    $region201: #{tpu_custom_call.1} parent=1 // pred_fallthru
      _
    // Predicated region
    $region202: #{tpu_custom_call.1} parent=1 // pred_check
      _
    $region203: #{tpu_custom_call.1} parent=1 // pred_check_branch
      %498 = sbr.rel (0) target = $region205
    $region204: #{tpu_custom_call.1} parent=1 // pred_region
      _
    $region205: #{tpu_custom_call.1} parent=1 // pred_fallthru
      _
    // Predicated region
    $region206: #{tpu_custom_call.1} parent=1 // pred_check
      _
    $region207: #{tpu_custom_call.1} parent=1 // pred_check_branch
      %500 = sbr.rel (0) target = $region209
    $region208: #{tpu_custom_call.1} parent=1 // pred_region
      _
    $region209: #{tpu_custom_call.1} parent=1 // pred_fallthru
      _
    // Predicated region
    $region210: #{tpu_custom_call.1} parent=1 // pred_check
      _
    $region211: #{tpu_custom_call.1} parent=1 // pred_check_branch
      %502 = sbr.rel (0) target = $region213
    $region212: #{tpu_custom_call.1} parent=1 // pred_region
      _
    $region213: #{tpu_custom_call.1} parent=1 // pred_fallthru
      _
    // Predicated region
    $region214: #{tpu_custom_call.1} parent=1 // pred_check
      _
    $region215: #{tpu_custom_call.1} parent=1 // pred_check_branch
      %504 = sbr.rel (0) target = $region217
    $region216: #{tpu_custom_call.1} parent=1 // pred_region
      _
    $region217: #{tpu_custom_call.1} parent=1 // pred_fallthru
      _
    // Predicated region
    $region218: #{tpu_custom_call.1} parent=1 // pred_check
      _
    $region219: #{tpu_custom_call.1} parent=1 // pred_check_branch
      %506 = sbr.rel (0) target = $region221
    $region220: #{tpu_custom_call.1} parent=1 // pred_region
      _
    $region221: #{tpu_custom_call.1} parent=1 // pred_fallthru
      _
    // Predicated region
    $region222: #{tpu_custom_call.1} parent=1 // pred_check
      _
    $region223: #{tpu_custom_call.1} parent=1 // pred_check_branch
      %508 = sbr.rel (0) target = $region225
    $region224: #{tpu_custom_call.1} parent=1 // pred_region
      _
    $region225: #{tpu_custom_call.1} parent=1 // pred_fallthru
      _
    // Predicated region
    $region226: #{tpu_custom_call.1} parent=1 // pred_check
      _
    $region227: #{tpu_custom_call.1} parent=1 // pred_check_branch
      %510 = sbr.rel (0) target = $region229
    $region228: #{tpu_custom_call.1} parent=1 // pred_region
      _
    $region229: #{tpu_custom_call.1} parent=1 // pred_fallthru
      _
    // Predicated region
    $region230: #{tpu_custom_call.1} parent=1 // pred_check
      _
    $region231: #{tpu_custom_call.1} parent=1 // pred_check_branch
      %512 = sbr.rel (0) target = $region233
    $region232: #{tpu_custom_call.1} parent=1 // pred_region
      %513 = dma.done [#allocation3], 64
    $region233: #{tpu_custom_call.1} parent=1 // pred_fallthru
      _
    // Predicated region
    $region234: #{tpu_custom_call.1} parent=1 // pred_check
      _
    $region235: #{tpu_custom_call.1} parent=1 // pred_check_branch
      %515 = sbr.rel (0) target = $region237
    $region236: #{tpu_custom_call.1} parent=1 // pred_region
      %516 = dma.done [#allocation6], 16
    $region237: #{tpu_custom_call.1} parent=1 // pred_fallthru
      _
    // Predicated region
    $region238: #{tpu_custom_call.1} parent=1 // pred_check
      _
    $region239: #{tpu_custom_call.1} parent=1 // pred_check_branch
      %518 = sbr.rel (0) target = $region241
    $region240: #{tpu_custom_call.1} parent=1 // pred_region
      %519 = dma.done [#allocation6], 128
    $region241: #{tpu_custom_call.1} parent=1 // pred_fallthru
      _
    // Predicated region
    $region242: #{tpu_custom_call.1} parent=1 // pred_check
      _
    $region243: #{tpu_custom_call.1} parent=1 // pred_check_branch
      %521 = sbr.rel (0) target = $region245
    $region244: #{tpu_custom_call.1} parent=1 // pred_region
      %522 = dma.done [#allocation9], 16
    $region245: #{tpu_custom_call.1} parent=1 // pred_fallthru
      _
    // Predicated region
    $region246: #{tpu_custom_call.1} parent=1 // pred_check
      _
    $region247: #{tpu_custom_call.1} parent=1 // pred_check_branch
      %524 = sbr.rel (0) target = $region249
    $region248: #{tpu_custom_call.1} parent=1 // pred_region
      %525 = dma.done [#allocation9], 16
    $region249: #{tpu_custom_call.1} parent=1 // pred_fallthru
      _
    // Predicated region
    $region250: #{tpu_custom_call.1} parent=1 // pred_check
      _
    $region251: #{tpu_custom_call.1} parent=1 // pred_check_branch
      %527 = sbr.rel (0) target = $region253
    $region252: #{tpu_custom_call.1} parent=1 // pred_region
      %528 = dma.done [#allocation12], 16
    $region253: #{tpu_custom_call.1} parent=1 // pred_fallthru
      _
    // Predicated region
    $region254: #{tpu_custom_call.1} parent=1 // pred_check
      _
    $region255: #{tpu_custom_call.1} parent=1 // pred_check_branch
      %530 = sbr.rel (0) target = $region257
    $region256: #{tpu_custom_call.1} parent=1 // pred_region
      %531 = dma.done [#allocation12], 16
    $region257: #{tpu_custom_call.1} parent=1 // pred_fallthru
      _
    // Predicated region
    $region258: #{tpu_custom_call.1} parent=1 // pred_check
      _
    $region259: #{tpu_custom_call.1} parent=1 // pred_check_branch
      %533 = sbr.rel (0) target = $region261
    $region260: #{tpu_custom_call.1} parent=1 // pred_region
      %534 = dma.done [#allocation15], 16
    $region261: #{tpu_custom_call.1} parent=1 // pred_fallthru
      _
    // Predicated region
    $region262: #{tpu_custom_call.1} parent=1 // pred_check
      _
    $region263: #{tpu_custom_call.1} parent=1 // pred_check_branch
      %536 = sbr.rel (0) target = $region265
    $region264: #{tpu_custom_call.1} parent=1 // pred_region
      %537 = dma.done [#allocation15], 16
    $region265: #{tpu_custom_call.1} parent=1 // pred_fallthru
      _
    // Predicated region
    $region266: #{tpu_custom_call.1} parent=1 // pred_check
      _
    $region267: #{tpu_custom_call.1} parent=1 // pred_check_branch
      %539 = sbr.rel (0) target = $region269
    $region268: #{tpu_custom_call.1} parent=1 // pred_region
      %540 = dma.done [#allocation18], 16
    $region269: #{tpu_custom_call.1} parent=1 // pred_fallthru
      _
    // Predicated region
    $region270: #{tpu_custom_call.1} parent=1 // pred_check
      _
    $region271: #{tpu_custom_call.1} parent=1 // pred_check_branch
      %542 = sbr.rel (0) target = $region273
    $region272: #{tpu_custom_call.1} parent=1 // pred_region
      %543 = dma.done [#allocation18], 16
    $region273: #{tpu_custom_call.1} parent=1 // pred_fallthru
      _
    // Predicated region
    $region274: #{tpu_custom_call.1} parent=1 // pred_check
      _
    $region275: #{tpu_custom_call.1} parent=1 // pred_check_branch
      %545 = sbr.rel (0) target = $region277
    $region276: #{tpu_custom_call.1} parent=1 // pred_region
      %546 = dma.done [#allocation21], 16
    $region277: #{tpu_custom_call.1} parent=1 // pred_fallthru
      _
    // Predicated region
    $region278: #{tpu_custom_call.1} parent=1 // pred_check
      _
    $region279: #{tpu_custom_call.1} parent=1 // pred_check_branch
      %548 = sbr.rel (0) target = $region281
    $region280: #{tpu_custom_call.1} parent=1 // pred_region
      %549 = dma.done [#allocation21], 16
    $region281: #{tpu_custom_call.1} parent=1 // pred_fallthru
      _
    // Predicated region
    $region282: #{tpu_custom_call.1} parent=1 // pred_check
      _
    $region283: #{tpu_custom_call.1} parent=1 // pred_check_branch
      %551 = sbr.rel (0) target = $region285
    $region284: #{tpu_custom_call.1} parent=1 // pred_region
      %552 = dma.done [#allocation24], 16
    $region285: #{tpu_custom_call.1} parent=1 // pred_fallthru
      _
    // Predicated region
    $region286: #{tpu_custom_call.1} parent=1 // pred_check
      _
    $region287: #{tpu_custom_call.1} parent=1 // pred_check_branch
      %554 = sbr.rel (0) target = $region289
    $region288: #{tpu_custom_call.1} parent=1 // pred_region
      %555 = dma.done [#allocation24], 16
    $region289: #{tpu_custom_call.1} parent=1 // pred_fallthru
      _
    // Predicated region
    $region290: #{tpu_custom_call.1} parent=1 // pred_check
      _
    $region291: #{tpu_custom_call.1} parent=1 // pred_check_branch
      %557 = sbr.rel (0) target = $region293
    $region292: #{tpu_custom_call.1} parent=1 // pred_region
      %558 = dma.done [#allocation27], 16
    $region293: #{tpu_custom_call.1} parent=1 // pred_fallthru
      _
    // Predicated region
    $region294: #{tpu_custom_call.1} parent=1 // pred_check
      _
    $region295: #{tpu_custom_call.1} parent=1 // pred_check_branch
      %560 = sbr.rel (0) target = $region297
    $region296: #{tpu_custom_call.1} parent=1 // pred_region
      %561 = dma.done [#allocation27], 16
    $region297: #{tpu_custom_call.1} parent=1 // pred_fallthru
      _
    // Predicated region
    $region298: #{tpu_custom_call.1} parent=1 // pred_check
      _
    $region299: #{tpu_custom_call.1} parent=1 // pred_check_branch
      %563 = sbr.rel (0) target = $region301
    $region300: #{tpu_custom_call.1} parent=1 // pred_region
      %564 = dma.done [#allocation30], 256
    $region301: #{tpu_custom_call.1} parent=1 // pred_fallthru
      _
    // Predicated region
    $region302: #{tpu_custom_call.1} parent=1 // pred_check
      _
    $region303: #{tpu_custom_call.1} parent=1 // pred_check_branch
      %566 = sbr.rel (0) target = $region305
    $region304: #{tpu_custom_call.1} parent=1 // pred_region
      %567 = dma.done [#allocation30], 16
    $region305: #{tpu_custom_call.1} parent=1 // pred_fallthru
      _
    // Predicated region
    $region306: #{tpu_custom_call.1} parent=1 // pred_check
      _
    $region307: #{tpu_custom_call.1} parent=1 // pred_check_branch
      %569 = sbr.rel (0) target = $region309
    $region308: #{tpu_custom_call.1} parent=1 // pred_region
      %570 = dma.done [#allocation33], 16
    $region309: #{tpu_custom_call.1} parent=1 // pred_fallthru
      _
    // Predicated region
    $region310: #{tpu_custom_call.1} parent=1 // pred_check
      _
    $region311: #{tpu_custom_call.1} parent=1 // pred_check_branch
      %572 = sbr.rel (0) target = $region313
    $region312: #{tpu_custom_call.1} parent=1 // pred_region
      %573 = dma.done [#allocation33], 16
    $region313: #{tpu_custom_call.1} parent=1 // pred_fallthru
      _
    // Predicated region
    $region314: #{tpu_custom_call.1} parent=1 // pred_check
      _
    $region315: #{tpu_custom_call.1} parent=1 // pred_check_branch
      %575 = sbr.rel (0) target = $region317
    $region316: #{tpu_custom_call.1} parent=1 // pred_region
      %576 = dma.done [#allocation36], 16
    $region317: #{tpu_custom_call.1} parent=1 // pred_fallthru
      _
    // Predicated region
    $region318: #{tpu_custom_call.1} parent=1 // pred_check
      _
    $region319: #{tpu_custom_call.1} parent=1 // pred_check_branch
      %578 = sbr.rel (0) target = $region321
    $region320: #{tpu_custom_call.1} parent=1 // pred_region
      %579 = dma.done [#allocation36], 16
    $region321: #{tpu_custom_call.1} parent=1 // pred_fallthru
      _
    // Predicated region
    $region322: #{tpu_custom_call.1} parent=1 // pred_check
      _
    $region323: #{tpu_custom_call.1} parent=1 // pred_check_branch
      %581 = sbr.rel (0) target = $region325
    $region324: #{tpu_custom_call.1} parent=1 // pred_region
      %582 = dma.done [#allocation39], 16
    $region325: #{tpu_custom_call.1} parent=1 // pred_fallthru
      _
    // Predicated region
    $region326: #{tpu_custom_call.1} parent=1 // pred_check
      _
    $region327: #{tpu_custom_call.1} parent=1 // pred_check_branch
      %584 = sbr.rel (0) target = $region329
    $region328: #{tpu_custom_call.1} parent=1 // pred_region
      %585 = dma.done [#allocation39], 256
    $region329: #{tpu_custom_call.1} parent=1 // pred_fallthru
      _
    // Predicated region
    $region330: #{tpu_custom_call.1} parent=1 // pred_check
      _
    $region331: #{tpu_custom_call.1} parent=1 // pred_check_branch
      %587 = sbr.rel (0) target = $region333
    $region332: #{tpu_custom_call.1} parent=1 // pred_region
      %588 = dma.done [#allocation42], 256
    $region333: #{tpu_custom_call.1} parent=1 // pred_fallthru
      _
    // Predicated region
    $region334: #{tpu_custom_call.1} parent=1 // pred_check
      _
    $region335: #{tpu_custom_call.1} parent=1 // pred_check_branch
      %590 = sbr.rel (0) target = $region337
    $region336: #{tpu_custom_call.1} parent=1 // pred_region
      %591 = dma.done [#allocation42], 16
    $region337: #{tpu_custom_call.1} parent=1 // pred_fallthru
      _
    // Predicated region
    $region338: #{tpu_custom_call.1} parent=1 // pred_check
      _
    $region339: #{tpu_custom_call.1} parent=1 // pred_check_branch
      %593 = sbr.rel (0) target = $region341
    $region340: #{tpu_custom_call.1} parent=1 // pred_region
      %594 = dma.done [#allocation45], 16
    $region341: #{tpu_custom_call.1} parent=1 // pred_fallthru
      _
    // Predicated region
    $region342: #{tpu_custom_call.1} parent=1 // pred_check
      _
    $region343: #{tpu_custom_call.1} parent=1 // pred_check_branch
      %596 = sbr.rel (0) target = $region345
    $region344: #{tpu_custom_call.1} parent=1 // pred_region
      %597 = dma.done [#allocation45], 256
    $region345: #{tpu_custom_call.1} parent=1 // pred_fallthru
      _
    // Predicated region
    $region346: #{tpu_custom_call.1} parent=1 // pred_check
      _
    $region347: #{tpu_custom_call.1} parent=1 // pred_check_branch
      %599 = sbr.rel (0) target = $region349
    $region348: #{tpu_custom_call.1} parent=1 // pred_region
      %600 = dma.done [#allocation48], 256
    $region349: #{tpu_custom_call.1} parent=1 // pred_fallthru
      _
    // Predicated region
    $region350: #{tpu_custom_call.1} parent=1 // pred_check
      _
    $region351: #{tpu_custom_call.1} parent=1 // pred_check_branch
      %602 = sbr.rel (0) target = $region353
    $region352: #{tpu_custom_call.1} parent=1 // pred_region
      %603 = dma.done [#allocation48], 256
    $region353: #{tpu_custom_call.1} parent=1 // pred_fallthru
      _
    %v605 = vld [vmem:[#allocation2] sm:$0xf]
    %v606 = vld [vmem:[#allocation5] sm:$0x1]
    %v607 = vld [vmem:[%s7] sm:$0xff]
    %v608 = vld [vmem:[%s7 + $0x8] sm:$0xff]
    %v609 = vld [vmem:[#allocation7] sm:$0xff]
    %v610 = vld [vmem:[%s1] sm:$0xff]
    %v611 = vld [vmem:[%s1 + $0x8] sm:$0xff]
    %v612 = vpack.c.bf16 %v611, %v610
    %v614 = vlaneseq
    %v615 = vshrl.u32 %v614, 7
    %v616 = vsub.s32 0, %v615
    %v617 = vrot.slane %v606, %v616
    %vm619 = vcmask 64512
    %v621 = vsel %vm619, %v612, 0
    %vm623 = vcmask 1043456
    %v625 = vsel %vm623, %v605, 0
    %627 = vmatprep.subr.bf16.mxu0 0
    %628 = vmatpush1.bf16.msra.mxu0 0
    %629 = vmatprep.subr.bf16.mxu0 0
    %630 = vmatpush1.bf16.msra.mxu0 0
    %631 = vmatprep.subr.bf16.mxu0 0
    %632 = vmatpush1.bf16.msra.mxu0 0
    %633 = vmatprep.subr.bf16.mxu0 0
    %634 = vmatpush1.bf16.msra.mxu0 0
    %635 = vmatprep.subr.bf16.mxu0 0
    %636 = vmatpush1.bf16.msra.mxu0 0
    %637 = vmatprep.subr.bf16.mxu0 0
    %638 = vmatpush1.bf16.msra.mxu0 0
    %639 = vmatprep.subr.bf16.mxu0 0
    %640 = vmatpush1.bf16.msra.mxu0 0
    %641 = vmatprep.subr.bf16.mxu0 0
    %642 = vmatpush1.bf16.msra.mxu0 %v625
    %643 = vmatprep.subr.bf16.mxu0 0
    %644 = vmatpush2.bf16.msra.mxu0 0
    %645 = vmatprep.subr.bf16.mxu0 0
    %646 = vmatpush2.bf16.msra.mxu0 0
    %647 = vmatprep.subr.bf16.mxu0 0
    %648 = vmatpush2.bf16.msra.mxu0 0
    %649 = vmatprep.subr.bf16.mxu0 0
    %650 = vmatpush2.bf16.msra.mxu0 0
    %651 = vmatprep.subr.bf16.mxu0 0
    %652 = vmatpush2.bf16.msra.mxu0 0
    %653 = vmatprep.subr.bf16.mxu0 0
    %654 = vmatpush2.bf16.msra.mxu0 0
    %655 = vmatprep.subr.bf16.mxu0 0
    %656 = vmatpush2.bf16.msra.mxu0 0
    %657 = vmatprep.subr.bf16.mxu0 0
    %658 = vmatpush2.bf16.msra.mxu0 0
    %659 = vmatprep.mubr.bf16.mxu0 0
    %660 = vmatmul.mubr.bf16.gmra.mxu0 %v621
    %v661 = vpop.f32.mrf.mxu0
    %v662 = vadd.f32 %v617, %v661
    %v663 = vpop.f32.mrf.mxu0
    %v664 = vpop.f32.mrf.mxu0
    %v665 = vadd.f32 %v617, %v664
    %v666 = vpop.f32.mrf.mxu0
    %667 = vdwg.mxu0
    %v668 = vadd.f32 %v662, %v607
    %v669 = vadd.f32 %v665, %v608
    %v670 = vld [vmem:[%s11] sm:$0xf]
    %v671 = vld [vmem:[%s11 + $0x4] sm:$0xf]
    %v672 = vld [vmem:[%s11 + $0x8] sm:$0xf]
    %v673 = vld [vmem:[%s11 + $0xc] sm:$0xf]
    %v674 = vld [vmem:[%s13] sm:$0xf]
    %v675 = vld [vmem:[%s13 + $0x4] sm:$0xf]
    %v676 = vld [vmem:[%s13 + $0x8] sm:$0xf]
    %v677 = vld [vmem:[%s13 + $0xc] sm:$0xf]
    %v678 = vld [vmem:[#allocation8] sm:$0x1]
    %v679 = vld [vmem:[#allocation10] sm:$0x1]
    %v680 = vld [vmem:[%s19] sm:$0xf]
    %v681 = vld [vmem:[%s19 + $0x4] sm:$0xf]
    %v682 = vld [vmem:[%s19 + $0x8] sm:$0xf]
    %v683 = vld [vmem:[%s19 + $0xc] sm:$0xf]
    %v684 = vld [vmem:[#allocation11] sm:$0x1]
    %v685 = vld [vmem:[%s23] sm:$0xf]
    %v686 = vld [vmem:[%s23 + $0x4] sm:$0xf]
    %v687 = vld [vmem:[%s23 + $0x8] sm:$0xf]
    %v688 = vld [vmem:[%s23 + $0xc] sm:$0xf]
    %v689 = vld [vmem:[%s23 + $0x10] sm:$0xf]
    %v690 = vld [vmem:[%s23 + $0x14] sm:$0xf]
    %v691 = vld [vmem:[%s23 + $0x18] sm:$0xf]
    %v692 = vld [vmem:[%s23 + $0x1c] sm:$0xf]
    %v693 = vld [vmem:[#allocation13] sm:$0x1]
    %v694 = vld [vmem:[#allocation14] sm:$0x1]
    %v695 = vld [vmem:[#allocation16] sm:$0x1]
    %v696 = vpack.c.bf16 %v669, %v668
    %v701 = vunpack.c.l.b16 %v670
    %v702 = vunpack.c.l.b16 %v671
    %v703 = vunpack.c.l.b16 %v672
    %v704 = vunpack.c.l.b16 %v673
    %v705 = vpack.c.b16 %v702, %v701
    %v706 = vpack.c.b16 %v704, %v703
    %vm709 = vcmask 261120
    %v711 = vsel %vm709, %v696, 0
    %713 = vmatprep.subr.bf16.mxu0 0
    %714 = vmatpush1.bf16.msra.mxu0 0
    %715 = vmatprep.subr.bf16.mxu0 0
    %716 = vmatpush1.bf16.msra.mxu0 0
    %717 = vmatprep.subr.bf16.mxu0 0
    %718 = vmatpush1.bf16.msra.mxu0 0
    %719 = vmatprep.subr.bf16.mxu0 0
    %720 = vmatpush1.bf16.msra.mxu0 0
    %721 = vmatprep.subr.bf16.mxu0 0
    %722 = vmatpush1.bf16.msra.mxu0 0
    %723 = vmatprep.subr.bf16.mxu0 0
    %724 = vmatpush1.bf16.msra.mxu0 0
    %725 = vmatprep.subr.bf16.mxu0 0
    %726 = vmatpush1.bf16.msra.mxu0 %v706
    %727 = vmatprep.subr.bf16.mxu0 0
    %728 = vmatpush1.bf16.msra.mxu0 %v705
    %729 = vmatprep.subr.bf16.mxu0 0
    %730 = vmatpush2.bf16.msra.mxu0 0
    %731 = vmatprep.subr.bf16.mxu0 0
    %732 = vmatpush2.bf16.msra.mxu0 0
    %733 = vmatprep.subr.bf16.mxu0 0
    %734 = vmatpush2.bf16.msra.mxu0 0
    %735 = vmatprep.subr.bf16.mxu0 0
    %736 = vmatpush2.bf16.msra.mxu0 0
    %737 = vmatprep.subr.bf16.mxu0 0
    %738 = vmatpush2.bf16.msra.mxu0 0
    %739 = vmatprep.subr.bf16.mxu0 0
    %740 = vmatpush2.bf16.msra.mxu0 0
    %741 = vmatprep.subr.bf16.mxu0 0
    %742 = vmatpush2.bf16.msra.mxu0 0
    %743 = vmatprep.subr.bf16.mxu0 0
    %744 = vmatpush2.bf16.msra.mxu0 0
    %745 = vmatprep.mubr.bf16.mxu0 0
    %746 = vmatmul.mubr.bf16.gmra.mxu0 %v711
    %v747 = vpop.f32.mrf.mxu0
    %v748 = vadd.f32 0.0, %v747
    %v749 = vpop.f32.mrf.mxu0
    %v750 = vpop.f32.mrf.mxu0
    %v751 = vadd.f32 0.0, %v750
    %v752 = vpop.f32.mrf.mxu0
    %753 = vdwg.mxu0
    %v754 = vpack.c.bf16 %v748, %v748
    %v755 = vpack.c.bf16 %v751, %v751
    %757 = vrot.lane.b32.xlu0 %v754, 96
    %v758 = vpop.permute.xlu0 %757
    %vm759 = vcmask 130048
    %v761 = vsel %vm759, %v754, 0
    %v764 = vsel %vm759, %v758, 0
    %766 = vmatprep.subr.bf16.mxu0 0
    %767 = vmatpush1.bf16.xpose.msra.mxu0 0
    %768 = vmatprep.subr.bf16.mxu0 0
    %769 = vmatpush1.bf16.xpose.msra.mxu0 0
    %770 = vmatprep.subr.bf16.mxu0 0
    %771 = vmatpush1.bf16.xpose.msra.mxu0 0
    %772 = vmatprep.subr.bf16.mxu0 0
    %773 = vmatpush1.bf16.xpose.msra.mxu0 0
    %774 = vmatprep.subr.bf16.mxu0 0
    %775 = vmatpush1.bf16.xpose.msra.mxu0 0
    %776 = vmatprep.subr.bf16.mxu0 0
    %777 = vmatpush1.bf16.xpose.msra.mxu0 0
    %778 = vmatprep.subr.bf16.mxu0 0
    %779 = vmatpush1.bf16.xpose.msra.mxu0 0
    %780 = vmatprep.subr.bf16.mxu0 0
    %781 = vmatpush1.bf16.xpose.msra.mxu0 %v764
    %782 = vmatprep.subr.bf16.mxu0 0
    %783 = vmatpush2.bf16.xpose.msra.mxu0 0
    %784 = vmatprep.subr.bf16.mxu0 0
    %785 = vmatpush2.bf16.xpose.msra.mxu0 0
    %786 = vmatprep.subr.bf16.mxu0 0
    %787 = vmatpush2.bf16.xpose.msra.mxu0 0
    %788 = vmatprep.subr.bf16.mxu0 0
    %789 = vmatpush2.bf16.xpose.msra.mxu0 0
    %790 = vmatprep.subr.bf16.mxu0 0
    %791 = vmatpush2.bf16.xpose.msra.mxu0 0
    %792 = vmatprep.subr.bf16.mxu0 0
    %793 = vmatpush2.bf16.xpose.msra.mxu0 0
    %794 = vmatprep.subr.bf16.mxu0 0
    %795 = vmatpush2.bf16.xpose.msra.mxu0 0
    %796 = vmatprep.subr.bf16.mxu0 0
    %797 = vmatpush2.bf16.xpose.msra.mxu0 0
    %798 = vmatprep.mubr.bf16.mxu0 0
    %799 = vmatmul.mubr.bf16.gmra.mxu0 %v761
    %v800 = vpop.f32.mrf.mxu0
    %v801 = vadd.f32 0.0, %v800
    %v802 = vpop.f32.mrf.mxu0
    %v803 = vpop.f32.mrf.mxu0
    %v804 = vpop.f32.mrf.mxu0
    %805 = vdwg.mxu0
    %807 = vrot.lane.b32.xlu0 %v755, 96
    %v808 = vpop.permute.xlu0 %807
    %v810 = vsel %vm759, %v755, 0
    %v813 = vsel %vm759, %v808, 0
    %815 = vmatprep.subr.bf16.mxu0 0
    %816 = vmatpush1.bf16.xpose.msra.mxu0 0
    %817 = vmatprep.subr.bf16.mxu0 0
    %818 = vmatpush1.bf16.xpose.msra.mxu0 0
    %819 = vmatprep.subr.bf16.mxu0 0
    %820 = vmatpush1.bf16.xpose.msra.mxu0 0
    %821 = vmatprep.subr.bf16.mxu0 0
    %822 = vmatpush1.bf16.xpose.msra.mxu0 0
    %823 = vmatprep.subr.bf16.mxu0 0
    %824 = vmatpush1.bf16.xpose.msra.mxu0 0
    %825 = vmatprep.subr.bf16.mxu0 0
    %826 = vmatpush1.bf16.xpose.msra.mxu0 0
    %827 = vmatprep.subr.bf16.mxu0 0
    %828 = vmatpush1.bf16.xpose.msra.mxu0 0
    %829 = vmatprep.subr.bf16.mxu0 0
    %830 = vmatpush1.bf16.xpose.msra.mxu0 %v813
    %831 = vmatprep.subr.bf16.mxu0 0
    %832 = vmatpush2.bf16.xpose.msra.mxu0 0
    %833 = vmatprep.subr.bf16.mxu0 0
    %834 = vmatpush2.bf16.xpose.msra.mxu0 0
    %835 = vmatprep.subr.bf16.mxu0 0
    %836 = vmatpush2.bf16.xpose.msra.mxu0 0
    %837 = vmatprep.subr.bf16.mxu0 0
    %838 = vmatpush2.bf16.xpose.msra.mxu0 0
    %839 = vmatprep.subr.bf16.mxu0 0
    %840 = vmatpush2.bf16.xpose.msra.mxu0 0
    %841 = vmatprep.subr.bf16.mxu0 0
    %842 = vmatpush2.bf16.xpose.msra.mxu0 0
    %843 = vmatprep.subr.bf16.mxu0 0
    %844 = vmatpush2.bf16.xpose.msra.mxu0 0
    %845 = vmatprep.subr.bf16.mxu0 0
    %846 = vmatpush2.bf16.xpose.msra.mxu0 0
    %847 = vmatprep.mubr.bf16.mxu0 0
    %848 = vmatmul.mubr.bf16.gmra.mxu0 %v810
    %v849 = vpop.f32.mrf.mxu0
    %v850 = vadd.f32 0.0, %v849
    %v851 = vpop.f32.mrf.mxu0
    %v852 = vpop.f32.mrf.mxu0
    %v853 = vpop.f32.mrf.mxu0
    %854 = vdwg.mxu0
    %v855 = vmul.f32 %v801, 0.25
    %v856 = vmul.f32 %v850, 0.25
    %v857 = vsel %vm619, %v855, -inf
    %858 = vmax.xlane.f32.xlu0 %v857
    %v859 = vpop.xlane.xlu0 %858
    %v860 = vsel %vm619, %v856, -inf
    %861 = vmax.xlane.f32.xlu0 %v860
    %v862 = vpop.xlane.xlu0 %861
    %v863 = vsub.f32 %v855, %v859
    %v864 = vsub.f32 %v856, %v862
    %v865 = vmul.f32 %v863, 1.442695
    %v866 = vpow.pop %v865
    %v867 = vmul.f32 %v864, 1.442695
    %v868 = vpow.pop %v867
    %v869 = vsel %vm619, %v866, 0.0
    %870 = vadd.xlane.f32.xlu0 %v869
    %v871 = vpop.xlane.xlu0 %870
    %v872 = vsel %vm619, %v868, 0.0
    %873 = vadd.xlane.f32.xlu0 %v872
    %v874 = vpop.xlane.xlu0 %873
    %v875 = vrcp.pop %v871
    %v876 = vrcp.pop %v874
    %v877 = vmul.f32 %v866, %v875
    %v878 = vmul.f32 %v868, %v876
    %v879 = vpack.c.bf16 %v877, %v877
    %v880 = vpack.c.bf16 %v878, %v878
    %881 = vrot.lane.b32.xlu0 %v754, 64
    %v882 = vpop.permute.xlu0 %881
    %v884 = vsel %vm619, %v879, 0
    %v887 = vsel %vm623, %v882, 0
    %889 = vmatprep.subr.bf16.mxu0 0
    %890 = vmatpush1.bf16.msra.mxu0 0
    %891 = vmatprep.subr.bf16.mxu0 0
    %892 = vmatpush1.bf16.msra.mxu0 0
    %893 = vmatprep.subr.bf16.mxu0 0
    %894 = vmatpush1.bf16.msra.mxu0 0
    %895 = vmatprep.subr.bf16.mxu0 0
    %896 = vmatpush1.bf16.msra.mxu0 0
    %897 = vmatprep.subr.bf16.mxu0 0
    %898 = vmatpush1.bf16.msra.mxu0 0
    %899 = vmatprep.subr.bf16.mxu0 0
    %900 = vmatpush1.bf16.msra.mxu0 0
    %901 = vmatprep.subr.bf16.mxu0 0
    %902 = vmatpush1.bf16.msra.mxu0 0
    %903 = vmatprep.subr.bf16.mxu0 0
    %904 = vmatpush1.bf16.msra.mxu0 %v887
    %905 = vmatprep.subr.bf16.mxu0 0
    %906 = vmatpush2.bf16.msra.mxu0 0
    %907 = vmatprep.subr.bf16.mxu0 0
    %908 = vmatpush2.bf16.msra.mxu0 0
    %909 = vmatprep.subr.bf16.mxu0 0
    %910 = vmatpush2.bf16.msra.mxu0 0
    %911 = vmatprep.subr.bf16.mxu0 0
    %912 = vmatpush2.bf16.msra.mxu0 0
    %913 = vmatprep.subr.bf16.mxu0 0
    %914 = vmatpush2.bf16.msra.mxu0 0
    %915 = vmatprep.subr.bf16.mxu0 0
    %916 = vmatpush2.bf16.msra.mxu0 0
    %917 = vmatprep.subr.bf16.mxu0 0
    %918 = vmatpush2.bf16.msra.mxu0 0
    %919 = vmatprep.subr.bf16.mxu0 0
    %920 = vmatpush2.bf16.msra.mxu0 0
    %921 = vmatprep.mubr.bf16.mxu0 0
    %922 = vmatmul.mubr.bf16.gmra.mxu0 %v884
    %v923 = vpop.f32.mrf.mxu0
    %v924 = vadd.f32 0.0, %v923
    %v925 = vpop.f32.mrf.mxu0
    %v926 = vpop.f32.mrf.mxu0
    %v927 = vpop.f32.mrf.mxu0
    %928 = vdwg.mxu0
    %929 = vrot.lane.b32.xlu0 %v755, 64
    %v930 = vpop.permute.xlu0 %929
    %v932 = vsel %vm619, %v880, 0
    %v935 = vsel %vm623, %v930, 0
    %937 = vmatprep.subr.bf16.mxu0 0
    %938 = vmatpush1.bf16.msra.mxu0 0
    %939 = vmatprep.subr.bf16.mxu0 0
    %940 = vmatpush1.bf16.msra.mxu0 0
    %941 = vmatprep.subr.bf16.mxu0 0
    %942 = vmatpush1.bf16.msra.mxu0 0
    %943 = vmatprep.subr.bf16.mxu0 0
    %944 = vmatpush1.bf16.msra.mxu0 0
    %945 = vmatprep.subr.bf16.mxu0 0
    %946 = vmatpush1.bf16.msra.mxu0 0
    %947 = vmatprep.subr.bf16.mxu0 0
    %948 = vmatpush1.bf16.msra.mxu0 0
    %949 = vmatprep.subr.bf16.mxu0 0
    %950 = vmatpush1.bf16.msra.mxu0 0
    %951 = vmatprep.subr.bf16.mxu0 0
    %952 = vmatpush1.bf16.msra.mxu0 %v935
    %953 = vmatprep.subr.bf16.mxu0 0
    %954 = vmatpush2.bf16.msra.mxu0 0
    %955 = vmatprep.subr.bf16.mxu0 0
    %956 = vmatpush2.bf16.msra.mxu0 0
    %957 = vmatprep.subr.bf16.mxu0 0
    %958 = vmatpush2.bf16.msra.mxu0 0
    %959 = vmatprep.subr.bf16.mxu0 0
    %960 = vmatpush2.bf16.msra.mxu0 0
    %961 = vmatprep.subr.bf16.mxu0 0
    %962 = vmatpush2.bf16.msra.mxu0 0
    %963 = vmatprep.subr.bf16.mxu0 0
    %964 = vmatpush2.bf16.msra.mxu0 0
    %965 = vmatprep.subr.bf16.mxu0 0
    %966 = vmatpush2.bf16.msra.mxu0 0
    %967 = vmatprep.subr.bf16.mxu0 0
    %968 = vmatpush2.bf16.msra.mxu0 0
    %969 = vmatprep.mubr.bf16.mxu0 0
    %970 = vmatmul.mubr.bf16.gmra.mxu0 %v932
    %v971 = vpop.f32.mrf.mxu0
    %v972 = vadd.f32 0.0, %v971
    %v973 = vpop.f32.mrf.mxu0
    %v974 = vpop.f32.mrf.mxu0
    %v975 = vpop.f32.mrf.mxu0
    %976 = vdwg.mxu0
    %977 = vrot.lane.b32.xlu0 %v754, 112
    %v978 = vpop.permute.xlu0 %977
    %979 = vrot.lane.b32.xlu0 %v754, 80
    %v980 = vpop.permute.xlu0 %979
    %v982 = vsel %vm759, %v978, 0
    %v985 = vsel %vm759, %v980, 0
    %987 = vmatprep.subr.bf16.mxu0 0
    %988 = vmatpush1.bf16.xpose.msra.mxu0 0
    %989 = vmatprep.subr.bf16.mxu0 0
    %990 = vmatpush1.bf16.xpose.msra.mxu0 0
    %991 = vmatprep.subr.bf16.mxu0 0
    %992 = vmatpush1.bf16.xpose.msra.mxu0 0
    %993 = vmatprep.subr.bf16.mxu0 0
    %994 = vmatpush1.bf16.xpose.msra.mxu0 0
    %995 = vmatprep.subr.bf16.mxu0 0
    %996 = vmatpush1.bf16.xpose.msra.mxu0 0
    %997 = vmatprep.subr.bf16.mxu0 0
    %998 = vmatpush1.bf16.xpose.msra.mxu0 0
    %999 = vmatprep.subr.bf16.mxu0 0
    %1000 = vmatpush1.bf16.xpose.msra.mxu0 0
    %1001 = vmatprep.subr.bf16.mxu0 0
    %1002 = vmatpush1.bf16.xpose.msra.mxu0 %v985
    %1003 = vmatprep.subr.bf16.mxu0 0
    %1004 = vmatpush2.bf16.xpose.msra.mxu0 0
    %1005 = vmatprep.subr.bf16.mxu0 0
    %1006 = vmatpush2.bf16.xpose.msra.mxu0 0
    %1007 = vmatprep.subr.bf16.mxu0 0
    %1008 = vmatpush2.bf16.xpose.msra.mxu0 0
    %1009 = vmatprep.subr.bf16.mxu0 0
    %1010 = vmatpush2.bf16.xpose.msra.mxu0 0
    %1011 = vmatprep.subr.bf16.mxu0 0
    %1012 = vmatpush2.bf16.xpose.msra.mxu0 0
    %1013 = vmatprep.subr.bf16.mxu0 0
    %1014 = vmatpush2.bf16.xpose.msra.mxu0 0
    %1015 = vmatprep.subr.bf16.mxu0 0
    %1016 = vmatpush2.bf16.xpose.msra.mxu0 0
    %1017 = vmatprep.subr.bf16.mxu0 0
    %1018 = vmatpush2.bf16.xpose.msra.mxu0 0
    %1019 = vmatprep.mubr.bf16.mxu0 0
    %1020 = vmatmul.mubr.bf16.gmra.mxu0 %v982
    %v1021 = vpop.f32.mrf.mxu0
    %v1022 = vadd.f32 0.0, %v1021
    %v1023 = vpop.f32.mrf.mxu0
    %v1024 = vpop.f32.mrf.mxu0
    %v1025 = vpop.f32.mrf.mxu0
    %1026 = vdwg.mxu0
    %1027 = vrot.lane.b32.xlu0 %v755, 112
    %v1028 = vpop.permute.xlu0 %1027
    %1029 = vrot.lane.b32.xlu0 %v755, 80
    %v1030 = vpop.permute.xlu0 %1029
    %v1032 = vsel %vm759, %v1028, 0
    %v1035 = vsel %vm759, %v1030, 0
    %1037 = vmatprep.subr.bf16.mxu0 0
    %1038 = vmatpush1.bf16.xpose.msra.mxu0 0
    %1039 = vmatprep.subr.bf16.mxu0 0
    %1040 = vmatpush1.bf16.xpose.msra.mxu0 0
    %1041 = vmatprep.subr.bf16.mxu0 0
    %1042 = vmatpush1.bf16.xpose.msra.mxu0 0
    %1043 = vmatprep.subr.bf16.mxu0 0
    %1044 = vmatpush1.bf16.xpose.msra.mxu0 0
    %1045 = vmatprep.subr.bf16.mxu0 0
    %1046 = vmatpush1.bf16.xpose.msra.mxu0 0
    %1047 = vmatprep.subr.bf16.mxu0 0
    %1048 = vmatpush1.bf16.xpose.msra.mxu0 0
    %1049 = vmatprep.subr.bf16.mxu0 0
    %1050 = vmatpush1.bf16.xpose.msra.mxu0 0
    %1051 = vmatprep.subr.bf16.mxu0 0
    %1052 = vmatpush1.bf16.xpose.msra.mxu0 %v1035
    %1053 = vmatprep.subr.bf16.mxu0 0
    %1054 = vmatpush2.bf16.xpose.msra.mxu0 0
    %1055 = vmatprep.subr.bf16.mxu0 0
    %1056 = vmatpush2.bf16.xpose.msra.mxu0 0
    %1057 = vmatprep.subr.bf16.mxu0 0
    %1058 = vmatpush2.bf16.xpose.msra.mxu0 0
    %1059 = vmatprep.subr.bf16.mxu0 0
    %1060 = vmatpush2.bf16.xpose.msra.mxu0 0
    %1061 = vmatprep.subr.bf16.mxu0 0
    %1062 = vmatpush2.bf16.xpose.msra.mxu0 0
    %1063 = vmatprep.subr.bf16.mxu0 0
    %1064 = vmatpush2.bf16.xpose.msra.mxu0 0
    %1065 = vmatprep.subr.bf16.mxu0 0
    %1066 = vmatpush2.bf16.xpose.msra.mxu0 0
    %1067 = vmatprep.subr.bf16.mxu0 0
    %1068 = vmatpush2.bf16.xpose.msra.mxu0 0
    %1069 = vmatprep.mubr.bf16.mxu0 0
    %1070 = vmatmul.mubr.bf16.gmra.mxu0 %v1032
    %v1071 = vpop.f32.mrf.mxu0
    %v1072 = vadd.f32 0.0, %v1071
    %v1073 = vpop.f32.mrf.mxu0
    %v1074 = vpop.f32.mrf.mxu0
    %v1075 = vpop.f32.mrf.mxu0
    %1076 = vdwg.mxu0
    %v1077 = vmul.f32 %v1022, 0.25
    %v1078 = vmul.f32 %v1072, 0.25
    %v1079 = vsel %vm619, %v1077, -inf
    %1080 = vmax.xlane.f32.xlu0 %v1079
    %v1081 = vpop.xlane.xlu0 %1080
    %v1082 = vsel %vm619, %v1078, -inf
    %1083 = vmax.xlane.f32.xlu0 %v1082
    %v1084 = vpop.xlane.xlu0 %1083
    %v1085 = vsub.f32 %v1077, %v1081
    %v1086 = vsub.f32 %v1078, %v1084
    %v1087 = vmul.f32 %v1085, 1.442695
    %v1088 = vpow.pop %v1087
    %v1089 = vmul.f32 %v1086, 1.442695
    %v1090 = vpow.pop %v1089
    %v1091 = vsel %vm619, %v1088, 0.0
    %1092 = vadd.xlane.f32.xlu0 %v1091
    %v1093 = vpop.xlane.xlu0 %1092
    %v1094 = vsel %vm619, %v1090, 0.0
    %1095 = vadd.xlane.f32.xlu0 %v1094
    %v1096 = vpop.xlane.xlu0 %1095
    %v1097 = vrcp.pop %v1093
    %v1098 = vrcp.pop %v1096
    %v1099 = vmul.f32 %v1088, %v1097
    %v1100 = vmul.f32 %v1090, %v1098
    %v1101 = vpack.c.bf16 %v1099, %v1099
    %v1102 = vpack.c.bf16 %v1100, %v1100
    %1103 = vrot.lane.b32.xlu0 %v754, 48
    %v1104 = vpop.permute.xlu0 %1103
    %v1106 = vsel %vm619, %v1101, 0
    %v1109 = vsel %vm623, %v1104, 0
    %1111 = vmatprep.subr.bf16.mxu0 0
    %1112 = vmatpush1.bf16.msra.mxu0 0
    %1113 = vmatprep.subr.bf16.mxu0 0
    %1114 = vmatpush1.bf16.msra.mxu0 0
    %1115 = vmatprep.subr.bf16.mxu0 0
    %1116 = vmatpush1.bf16.msra.mxu0 0
    %1117 = vmatprep.subr.bf16.mxu0 0
    %1118 = vmatpush1.bf16.msra.mxu0 0
    %1119 = vmatprep.subr.bf16.mxu0 0
    %1120 = vmatpush1.bf16.msra.mxu0 0
    %1121 = vmatprep.subr.bf16.mxu0 0
    %1122 = vmatpush1.bf16.msra.mxu0 0
    %1123 = vmatprep.subr.bf16.mxu0 0
    %1124 = vmatpush1.bf16.msra.mxu0 0
    %1125 = vmatprep.subr.bf16.mxu0 0
    %1126 = vmatpush1.bf16.msra.mxu0 %v1109
    %1127 = vmatprep.subr.bf16.mxu0 0
    %1128 = vmatpush2.bf16.msra.mxu0 0
    %1129 = vmatprep.subr.bf16.mxu0 0
    %1130 = vmatpush2.bf16.msra.mxu0 0
    %1131 = vmatprep.subr.bf16.mxu0 0
    %1132 = vmatpush2.bf16.msra.mxu0 0
    %1133 = vmatprep.subr.bf16.mxu0 0
    %1134 = vmatpush2.bf16.msra.mxu0 0
    %1135 = vmatprep.subr.bf16.mxu0 0
    %1136 = vmatpush2.bf16.msra.mxu0 0
    %1137 = vmatprep.subr.bf16.mxu0 0
    %1138 = vmatpush2.bf16.msra.mxu0 0
    %1139 = vmatprep.subr.bf16.mxu0 0
    %1140 = vmatpush2.bf16.msra.mxu0 0
    %1141 = vmatprep.subr.bf16.mxu0 0
    %1142 = vmatpush2.bf16.msra.mxu0 0
    %1143 = vmatprep.mubr.bf16.mxu0 0
    %1144 = vmatmul.mubr.bf16.gmra.mxu0 %v1106
    %v1145 = vpop.f32.mrf.mxu0
    %v1146 = vadd.f32 0.0, %v1145
    %v1147 = vpop.f32.mrf.mxu0
    %v1148 = vpop.f32.mrf.mxu0
    %v1149 = vpop.f32.mrf.mxu0
    %1150 = vdwg.mxu0
    %1151 = vrot.lane.b32.xlu0 %v755, 48
    %v1152 = vpop.permute.xlu0 %1151
    %v1154 = vsel %vm619, %v1102, 0
    %v1157 = vsel %vm623, %v1152, 0
    %1159 = vmatprep.subr.bf16.mxu0 0
    %1160 = vmatpush1.bf16.msra.mxu0 0
    %1161 = vmatprep.subr.bf16.mxu0 0
    %1162 = vmatpush1.bf16.msra.mxu0 0
    %1163 = vmatprep.subr.bf16.mxu0 0
    %1164 = vmatpush1.bf16.msra.mxu0 0
    %1165 = vmatprep.subr.bf16.mxu0 0
    %1166 = vmatpush1.bf16.msra.mxu0 0
    %1167 = vmatprep.subr.bf16.mxu0 0
    %1168 = vmatpush1.bf16.msra.mxu0 0
    %1169 = vmatprep.subr.bf16.mxu0 0
    %1170 = vmatpush1.bf16.msra.mxu0 0
    %1171 = vmatprep.subr.bf16.mxu0 0
    %1172 = vmatpush1.bf16.msra.mxu0 0
    %1173 = vmatprep.subr.bf16.mxu0 0
    %1174 = vmatpush1.bf16.msra.mxu0 %v1157
    %1175 = vmatprep.subr.bf16.mxu0 0
    %1176 = vmatpush2.bf16.msra.mxu0 0
    %1177 = vmatprep.subr.bf16.mxu0 0
    %1178 = vmatpush2.bf16.msra.mxu0 0
    %1179 = vmatprep.subr.bf16.mxu0 0
    %1180 = vmatpush2.bf16.msra.mxu0 0
    %1181 = vmatprep.subr.bf16.mxu0 0
    %1182 = vmatpush2.bf16.msra.mxu0 0
    %1183 = vmatprep.subr.bf16.mxu0 0
    %1184 = vmatpush2.bf16.msra.mxu0 0
    %1185 = vmatprep.subr.bf16.mxu0 0
    %1186 = vmatpush2.bf16.msra.mxu0 0
    %1187 = vmatprep.subr.bf16.mxu0 0
    %1188 = vmatpush2.bf16.msra.mxu0 0
    %1189 = vmatprep.subr.bf16.mxu0 0
    %1190 = vmatpush2.bf16.msra.mxu0 0
    %1191 = vmatprep.mubr.bf16.mxu0 0
    %1192 = vmatmul.mubr.bf16.gmra.mxu0 %v1154
    %v1193 = vpop.f32.mrf.mxu0
    %v1194 = vadd.f32 0.0, %v1193
    %v1195 = vpop.f32.mrf.mxu0
    %v1196 = vpop.f32.mrf.mxu0
    %v1197 = vpop.f32.mrf.mxu0
    %1198 = vdwg.mxu0
    %1201 = vrot.lane.b32.xlu0 %v1146, 16
    %v1202 = vpop.permute.xlu0 %1201
    %1203 = vrot.lane.b32.xlu0 %v1194, 16
    %v1204 = vpop.permute.xlu0 %1203
    %v1207 = vsel %vm759, %v924, %v1202
    %v1208 = vsel %vm759, %v972, %v1204
    %v1209 = vpack.c.bf16 %v1208, %v1207
    %v1214 = vunpack.c.l.b16 %v674
    %v1215 = vunpack.c.l.b16 %v675
    %v1216 = vunpack.c.l.b16 %v676
    %v1217 = vunpack.c.l.b16 %v677
    %v1218 = vpack.c.b16 %v1215, %v1214
    %v1219 = vpack.c.b16 %v1217, %v1216
    %v1223 = vsel %vm709, %v1209, 0
    %1225 = vmatprep.subr.bf16.mxu0 0
    %1226 = vmatpush1.bf16.msra.mxu0 0
    %1227 = vmatprep.subr.bf16.mxu0 0
    %1228 = vmatpush1.bf16.msra.mxu0 0
    %1229 = vmatprep.subr.bf16.mxu0 0
    %1230 = vmatpush1.bf16.msra.mxu0 0
    %1231 = vmatprep.subr.bf16.mxu0 0
    %1232 = vmatpush1.bf16.msra.mxu0 0
    %1233 = vmatprep.subr.bf16.mxu0 0
    %1234 = vmatpush1.bf16.msra.mxu0 0
    %1235 = vmatprep.subr.bf16.mxu0 0
    %1236 = vmatpush1.bf16.msra.mxu0 0
    %1237 = vmatprep.subr.bf16.mxu0 0
    %1238 = vmatpush1.bf16.msra.mxu0 %v1219
    %1239 = vmatprep.subr.bf16.mxu0 0
    %1240 = vmatpush1.bf16.msra.mxu0 %v1218
    %1241 = vmatprep.subr.bf16.mxu0 0
    %1242 = vmatpush2.bf16.msra.mxu0 0
    %1243 = vmatprep.subr.bf16.mxu0 0
    %1244 = vmatpush2.bf16.msra.mxu0 0
    %1245 = vmatprep.subr.bf16.mxu0 0
    %1246 = vmatpush2.bf16.msra.mxu0 0
    %1247 = vmatprep.subr.bf16.mxu0 0
    %1248 = vmatpush2.bf16.msra.mxu0 0
    %1249 = vmatprep.subr.bf16.mxu0 0
    %1250 = vmatpush2.bf16.msra.mxu0 0
    %1251 = vmatprep.subr.bf16.mxu0 0
    %1252 = vmatpush2.bf16.msra.mxu0 0
    %1253 = vmatprep.subr.bf16.mxu0 0
    %1254 = vmatpush2.bf16.msra.mxu0 0
    %1255 = vmatprep.subr.bf16.mxu0 0
    %1256 = vmatpush2.bf16.msra.mxu0 0
    %1257 = vmatprep.mubr.bf16.mxu0 0
    %1258 = vmatmul.mubr.bf16.gmra.mxu0 %v1223
    %v1259 = vpop.f32.mrf.mxu0
    %v1260 = vadd.f32 %v668, %v1259
    %v1261 = vpop.f32.mrf.mxu0
    %v1262 = vpop.f32.mrf.mxu0
    %v1263 = vadd.f32 %v669, %v1262
    %v1264 = vpop.f32.mrf.mxu0
    %1265 = vdwg.mxu0
    %v1266 = vsel %vm709, %v1260, 0.0
    %1267 = vadd.xlane.f32.xlu0 %v1266
    %v1268 = vpop.xlane.xlu0 %1267
    %v1269 = vsel %vm709, %v1263, 0.0
    %1270 = vadd.xlane.f32.xlu0 %v1269
    %v1271 = vpop.xlane.xlu0 %1270
    %v1272 = vrcp.pop 32.0
    %v1273 = vmul.f32 %v1268, %v1272
    %v1274 = vmul.f32 %v1271, %v1272
    %v1275 = vsub.f32 %v1260, %v1273
    %v1276 = vsub.f32 %v1263, %v1274
    %v1277 = vmul.f32 %v1275, %v1275
    %v1278 = vmul.f32 %v1276, %v1276
    %v1279 = vsel %vm709, %v1277, 0.0
    %1280 = vadd.xlane.f32.xlu0 %v1279
    %v1281 = vpop.xlane.xlu0 %1280
    %v1282 = vsel %vm709, %v1278, 0.0
    %1283 = vadd.xlane.f32.xlu0 %v1282
    %v1284 = vpop.xlane.xlu0 %1283
    %v1285 = vmul.f32 %v1281, %v1272
    %v1286 = vmul.f32 %v1284, %v1272
    %v1287 = vadd.f32 %v1285, 1e-06
    %v1288 = vadd.f32 %v1286, 1e-06
    %v1289 = vrsqrt.pop %v1287
    %v1290 = vrsqrt.pop %v1288
    %v1291 = vmul.f32 %v1275, %v1289
    %v1292 = vmul.f32 %v1276, %v1290
    %v1294 = vlaneseq
    %v1295 = vshrl.u32 %v1294, 7
    %v1296 = vsub.s32 0, %v1295
    %v1297 = vrot.slane %v678, %v1296
    %v1299 = vmul.f32 %v1291, %v1297
    %v1300 = vmul.f32 %v1292, %v1297
    %v1302 = vlaneseq
    %v1303 = vshrl.u32 %v1302, 7
    %v1304 = vsub.s32 0, %v1303
    %v1305 = vrot.slane %v679, %v1304
    %v1307 = vadd.f32 %v1299, %v1305
    %v1308 = vadd.f32 %v1300, %v1305
    %v1309 = vpack.c.bf16 %v1308, %v1307
    %v1311 = vlaneseq
    %v1312 = vshrl.u32 %v1311, 7
    %v1313 = vsub.s32 0, %v1312
    %v1314 = vrot.slane %v684, %v1313
    %v1320 = vunpack.c.l.b16 %v680
    %v1321 = vunpack.c.l.b16 %v681
    %v1322 = vunpack.c.l.b16 %v682
    %v1323 = vunpack.c.l.b16 %v683
    %v1324 = vpack.c.b16 %v1321, %v1320
    %v1325 = vpack.c.b16 %v1323, %v1322
    %v1329 = vsel %vm709, %v1309, 0
    %1331 = vmatprep.subr.bf16.mxu0 0
    %1332 = vmatpush1.bf16.msra.mxu0 0
    %1333 = vmatprep.subr.bf16.mxu0 0
    %1334 = vmatpush1.bf16.msra.mxu0 0
    %1335 = vmatprep.subr.bf16.mxu0 0
    %1336 = vmatpush1.bf16.msra.mxu0 0
    %1337 = vmatprep.subr.bf16.mxu0 0
    %1338 = vmatpush1.bf16.msra.mxu0 0
    %1339 = vmatprep.subr.bf16.mxu0 0
    %1340 = vmatpush1.bf16.msra.mxu0 0
    %1341 = vmatprep.subr.bf16.mxu0 0
    %1342 = vmatpush1.bf16.msra.mxu0 0
    %1343 = vmatprep.subr.bf16.mxu0 0
    %1344 = vmatpush1.bf16.msra.mxu0 %v1325
    %1345 = vmatprep.subr.bf16.mxu0 0
    %1346 = vmatpush1.bf16.msra.mxu0 %v1324
    %1347 = vmatprep.subr.bf16.mxu0 0
    %1348 = vmatpush2.bf16.msra.mxu0 0
    %1349 = vmatprep.subr.bf16.mxu0 0
    %1350 = vmatpush2.bf16.msra.mxu0 0
    %1351 = vmatprep.subr.bf16.mxu0 0
    %1352 = vmatpush2.bf16.msra.mxu0 0
    %1353 = vmatprep.subr.bf16.mxu0 0
    %1354 = vmatpush2.bf16.msra.mxu0 0
    %1355 = vmatprep.subr.bf16.mxu0 0
    %1356 = vmatpush2.bf16.msra.mxu0 0
    %1357 = vmatprep.subr.bf16.mxu0 0
    %1358 = vmatpush2.bf16.msra.mxu0 0
    %1359 = vmatprep.subr.bf16.mxu0 0
    %1360 = vmatpush2.bf16.msra.mxu0 0
    %1361 = vmatprep.subr.bf16.mxu0 0
    %1362 = vmatpush2.bf16.msra.mxu0 0
    %1363 = vmatprep.mubr.bf16.mxu0 0
    %1364 = vmatmul.mubr.bf16.gmra.mxu0 %v1329
    %v1365 = vpop.f32.mrf.mxu0
    %v1366 = vadd.f32 %v1314, %v1365
    %v1367 = vpop.f32.mrf.mxu0
    %v1368 = vpop.f32.mrf.mxu0
    %v1369 = vadd.f32 %v1314, %v1368
    %v1370 = vpop.f32.mrf.mxu0
    %1371 = vdwg.mxu0
    %v1372 = vmax.f32 %v1366, 0.0
    %v1373 = vmax.f32 %v1369, 0.0
    %v1374 = vpack.c.bf16 %v1373, %v1372
    %v1376 = vlaneseq
    %v1377 = vshrl.u32 %v1376, 7
    %v1378 = vsub.s32 0, %v1377
    %v1379 = vrot.slane %v693, %v1378
    %v1389 = vunpack.c.l.b16 %v685
    %v1390 = vunpack.c.l.b16 %v686
    %v1391 = vunpack.c.l.b16 %v687
    %v1392 = vunpack.c.l.b16 %v688
    %v1393 = vunpack.c.l.b16 %v689
    %v1394 = vunpack.c.l.b16 %v690
    %v1395 = vunpack.c.l.b16 %v691
    %v1396 = vunpack.c.l.b16 %v692
    %v1397 = vpack.c.b16 %v1390, %v1389
    %v1398 = vpack.c.b16 %v1392, %v1391
    %v1399 = vpack.c.b16 %v1394, %v1393
    %v1400 = vpack.c.b16 %v1396, %v1395
    %vm1405 = vcmask 523264
    %v1407 = vsel %vm1405, %v1374, 0
    %1409 = vmatprep.subr.bf16.mxu0 0
    %1410 = vmatpush1.bf16.msra.mxu0 0
    %1411 = vmatprep.subr.bf16.mxu0 0
    %1412 = vmatpush1.bf16.msra.mxu0 0
    %1413 = vmatprep.subr.bf16.mxu0 0
    %1414 = vmatpush1.bf16.msra.mxu0 0
    %1415 = vmatprep.subr.bf16.mxu0 0
    %1416 = vmatpush1.bf16.msra.mxu0 0
    %1417 = vmatprep.subr.bf16.mxu0 0
    %1418 = vmatpush1.bf16.msra.mxu0 %v1400
    %1419 = vmatprep.subr.bf16.mxu0 0
    %1420 = vmatpush1.bf16.msra.mxu0 %v1399
    %1421 = vmatprep.subr.bf16.mxu0 0
    %1422 = vmatpush1.bf16.msra.mxu0 %v1398
    %1423 = vmatprep.subr.bf16.mxu0 0
    %1424 = vmatpush1.bf16.msra.mxu0 %v1397
    %1425 = vmatprep.subr.bf16.mxu0 0
    %1426 = vmatpush2.bf16.msra.mxu0 0
    %1427 = vmatprep.subr.bf16.mxu0 0
    %1428 = vmatpush2.bf16.msra.mxu0 0
    %1429 = vmatprep.subr.bf16.mxu0 0
    %1430 = vmatpush2.bf16.msra.mxu0 0
    %1431 = vmatprep.subr.bf16.mxu0 0
    %1432 = vmatpush2.bf16.msra.mxu0 0
    %1433 = vmatprep.subr.bf16.mxu0 0
    %1434 = vmatpush2.bf16.msra.mxu0 0
    %1435 = vmatprep.subr.bf16.mxu0 0
    %1436 = vmatpush2.bf16.msra.mxu0 0
    %1437 = vmatprep.subr.bf16.mxu0 0
    %1438 = vmatpush2.bf16.msra.mxu0 0
    %1439 = vmatprep.subr.bf16.mxu0 0
    %1440 = vmatpush2.bf16.msra.mxu0 0
    %1441 = vmatprep.mubr.bf16.mxu0 0
    %1442 = vmatmul.mubr.bf16.gmra.mxu0 %v1407
    %v1443 = vpop.f32.mrf.mxu0
    %v1444 = vadd.f32 %v1379, %v1443
    %v1445 = vpop.f32.mrf.mxu0
    %v1446 = vpop.f32.mrf.mxu0
    %v1447 = vadd.f32 %v1379, %v1446
    %v1448 = vpop.f32.mrf.mxu0
    %1449 = vdwg.mxu0
    %v1450 = vadd.f32 %v1444, %v1307
    %v1451 = vadd.f32 %v1447, %v1308
    %v1452 = vsel %vm709, %v1450, 0.0
    %1453 = vadd.xlane.f32.xlu0 %v1452
    %v1454 = vpop.xlane.xlu0 %1453
    %v1455 = vsel %vm709, %v1451, 0.0
    %1456 = vadd.xlane.f32.xlu0 %v1455
    %v1457 = vpop.xlane.xlu0 %1456
    %v1458 = vmul.f32 %v1454, %v1272
    %v1459 = vmul.f32 %v1457, %v1272
    %v1460 = vsub.f32 %v1450, %v1458
    %v1461 = vsub.f32 %v1451, %v1459
    %v1462 = vmul.f32 %v1460, %v1460
    %v1463 = vmul.f32 %v1461, %v1461
    %v1464 = vsel %vm709, %v1462, 0.0
    %1465 = vadd.xlane.f32.xlu0 %v1464
    %v1466 = vpop.xlane.xlu0 %1465
    %v1467 = vsel %vm709, %v1463, 0.0
    %1468 = vadd.xlane.f32.xlu0 %v1467
    %v1469 = vpop.xlane.xlu0 %1468
    %v1470 = vmul.f32 %v1466, %v1272
    %v1471 = vmul.f32 %v1469, %v1272
    %v1472 = vadd.f32 %v1470, 1e-06
    %v1473 = vadd.f32 %v1471, 1e-06
    %v1474 = vrsqrt.pop %v1472
    %v1475 = vrsqrt.pop %v1473
    %v1476 = vmul.f32 %v1460, %v1474
    %v1477 = vmul.f32 %v1461, %v1475
    %v1479 = vlaneseq
    %v1480 = vshrl.u32 %v1479, 7
    %v1481 = vsub.s32 0, %v1480
    %v1482 = vrot.slane %v694, %v1481
    %v1484 = vmul.f32 %v1476, %v1482
    %v1485 = vmul.f32 %v1477, %v1482
    %v1487 = vlaneseq
    %v1488 = vshrl.u32 %v1487, 7
    %v1489 = vsub.s32 0, %v1488
    %v1490 = vrot.slane %v695, %v1489
    %v1492 = vadd.f32 %v1484, %v1490
    %v1493 = vadd.f32 %v1485, %v1490
    %v1494 = vld [vmem:[%s31] sm:$0xf]
    %v1495 = vld [vmem:[%s31 + $0x4] sm:$0xf]
    %v1496 = vld [vmem:[%s31 + $0x8] sm:$0xf]
    %v1497 = vld [vmem:[%s31 + $0xc] sm:$0xf]
    %v1498 = vld [vmem:[%s33] sm:$0xf]
    %v1499 = vld [vmem:[%s33 + $0x4] sm:$0xf]
    %v1500 = vld [vmem:[%s33 + $0x8] sm:$0xf]
    %v1501 = vld [vmem:[%s33 + $0xc] sm:$0xf]
    %v1502 = vld [vmem:[#allocation17] sm:$0x1]
    %v1503 = vld [vmem:[#allocation19] sm:$0x1]
    %v1504 = vld [vmem:[%s39] sm:$0xf]
    %v1505 = vld [vmem:[%s39 + $0x4] sm:$0xf]
    %v1506 = vld [vmem:[%s39 + $0x8] sm:$0xf]
    %v1507 = vld [vmem:[%s39 + $0xc] sm:$0xf]
    %v1508 = vld [vmem:[#allocation20] sm:$0x1]
    %v1509 = vld [vmem:[%s43] sm:$0xf]
    %v1510 = vld [vmem:[%s43 + $0x4] sm:$0xf]
    %v1511 = vld [vmem:[%s43 + $0x8] sm:$0xf]
    %v1512 = vld [vmem:[%s43 + $0xc] sm:$0xf]
    %v1513 = vld [vmem:[%s43 + $0x10] sm:$0xf]
    %v1514 = vld [vmem:[%s43 + $0x14] sm:$0xf]
    %v1515 = vld [vmem:[%s43 + $0x18] sm:$0xf]
    %v1516 = vld [vmem:[%s43 + $0x1c] sm:$0xf]
    %v1517 = vld [vmem:[#allocation22] sm:$0x1]
    %v1518 = vld [vmem:[#allocation23] sm:$0x1]
    %v1519 = vld [vmem:[#allocation25] sm:$0x1]
    %v1520 = vpack.c.bf16 %v1493, %v1492
    %v1525 = vunpack.c.l.b16 %v1494
    %v1526 = vunpack.c.l.b16 %v1495
    %v1527 = vunpack.c.l.b16 %v1496
    %v1528 = vunpack.c.l.b16 %v1497
    %v1529 = vpack.c.b16 %v1526, %v1525
    %v1530 = vpack.c.b16 %v1528, %v1527
    %v1534 = vsel %vm709, %v1520, 0
    %1536 = vmatprep.subr.bf16.mxu0 0
    %1537 = vmatpush1.bf16.msra.mxu0 0
    %1538 = vmatprep.subr.bf16.mxu0 0
    %1539 = vmatpush1.bf16.msra.mxu0 0
    %1540 = vmatprep.subr.bf16.mxu0 0
    %1541 = vmatpush1.bf16.msra.mxu0 0
    %1542 = vmatprep.subr.bf16.mxu0 0
    %1543 = vmatpush1.bf16.msra.mxu0 0
    %1544 = vmatprep.subr.bf16.mxu0 0
    %1545 = vmatpush1.bf16.msra.mxu0 0
    %1546 = vmatprep.subr.bf16.mxu0 0
    %1547 = vmatpush1.bf16.msra.mxu0 0
    %1548 = vmatprep.subr.bf16.mxu0 0
    %1549 = vmatpush1.bf16.msra.mxu0 %v1530
    %1550 = vmatprep.subr.bf16.mxu0 0
    %1551 = vmatpush1.bf16.msra.mxu0 %v1529
    %1552 = vmatprep.subr.bf16.mxu0 0
    %1553 = vmatpush2.bf16.msra.mxu0 0
    %1554 = vmatprep.subr.bf16.mxu0 0
    %1555 = vmatpush2.bf16.msra.mxu0 0
    %1556 = vmatprep.subr.bf16.mxu0 0
    %1557 = vmatpush2.bf16.msra.mxu0 0
    %1558 = vmatprep.subr.bf16.mxu0 0
    %1559 = vmatpush2.bf16.msra.mxu0 0
    %1560 = vmatprep.subr.bf16.mxu0 0
    %1561 = vmatpush2.bf16.msra.mxu0 0
    %1562 = vmatprep.subr.bf16.mxu0 0
    %1563 = vmatpush2.bf16.msra.mxu0 0
    %1564 = vmatprep.subr.bf16.mxu0 0
    %1565 = vmatpush2.bf16.msra.mxu0 0
    %1566 = vmatprep.subr.bf16.mxu0 0
    %1567 = vmatpush2.bf16.msra.mxu0 0
    %1568 = vmatprep.mubr.bf16.mxu0 0
    %1569 = vmatmul.mubr.bf16.gmra.mxu0 %v1534
    %v1570 = vpop.f32.mrf.mxu0
    %v1571 = vadd.f32 0.0, %v1570
    %v1572 = vpop.f32.mrf.mxu0
    %v1573 = vpop.f32.mrf.mxu0
    %v1574 = vadd.f32 0.0, %v1573
    %v1575 = vpop.f32.mrf.mxu0
    %1576 = vdwg.mxu0
    %v1577 = vpack.c.bf16 %v1571, %v1571
    %v1578 = vpack.c.bf16 %v1574, %v1574
    %1580 = vrot.lane.b32.xlu0 %v1577, 96
    %v1581 = vpop.permute.xlu0 %1580
    %v1583 = vsel %vm759, %v1577, 0
    %v1586 = vsel %vm759, %v1581, 0
    %1588 = vmatprep.subr.bf16.mxu0 0
    %1589 = vmatpush1.bf16.xpose.msra.mxu0 0
    %1590 = vmatprep.subr.bf16.mxu0 0
    %1591 = vmatpush1.bf16.xpose.msra.mxu0 0
    %1592 = vmatprep.subr.bf16.mxu0 0
    %1593 = vmatpush1.bf16.xpose.msra.mxu0 0
    %1594 = vmatprep.subr.bf16.mxu0 0
    %1595 = vmatpush1.bf16.xpose.msra.mxu0 0
    %1596 = vmatprep.subr.bf16.mxu0 0
    %1597 = vmatpush1.bf16.xpose.msra.mxu0 0
    %1598 = vmatprep.subr.bf16.mxu0 0
    %1599 = vmatpush1.bf16.xpose.msra.mxu0 0
    %1600 = vmatprep.subr.bf16.mxu0 0
    %1601 = vmatpush1.bf16.xpose.msra.mxu0 0
    %1602 = vmatprep.subr.bf16.mxu0 0
    %1603 = vmatpush1.bf16.xpose.msra.mxu0 %v1586
    %1604 = vmatprep.subr.bf16.mxu0 0
    %1605 = vmatpush2.bf16.xpose.msra.mxu0 0
    %1606 = vmatprep.subr.bf16.mxu0 0
    %1607 = vmatpush2.bf16.xpose.msra.mxu0 0
    %1608 = vmatprep.subr.bf16.mxu0 0
    %1609 = vmatpush2.bf16.xpose.msra.mxu0 0
    %1610 = vmatprep.subr.bf16.mxu0 0
    %1611 = vmatpush2.bf16.xpose.msra.mxu0 0
    %1612 = vmatprep.subr.bf16.mxu0 0
    %1613 = vmatpush2.bf16.xpose.msra.mxu0 0
    %1614 = vmatprep.subr.bf16.mxu0 0
    %1615 = vmatpush2.bf16.xpose.msra.mxu0 0
    %1616 = vmatprep.subr.bf16.mxu0 0
    %1617 = vmatpush2.bf16.xpose.msra.mxu0 0
    %1618 = vmatprep.subr.bf16.mxu0 0
    %1619 = vmatpush2.bf16.xpose.msra.mxu0 0
    %1620 = vmatprep.mubr.bf16.mxu0 0
    %1621 = vmatmul.mubr.bf16.gmra.mxu0 %v1583
    %v1622 = vpop.f32.mrf.mxu0
    %v1623 = vadd.f32 0.0, %v1622
    %v1624 = vpop.f32.mrf.mxu0
    %v1625 = vpop.f32.mrf.mxu0
    %v1626 = vpop.f32.mrf.mxu0
    %1627 = vdwg.mxu0
    %1629 = vrot.lane.b32.xlu0 %v1578, 96
    %v1630 = vpop.permute.xlu0 %1629
    %v1632 = vsel %vm759, %v1578, 0
    %v1635 = vsel %vm759, %v1630, 0
    %1637 = vmatprep.subr.bf16.mxu0 0
    %1638 = vmatpush1.bf16.xpose.msra.mxu0 0
    %1639 = vmatprep.subr.bf16.mxu0 0
    %1640 = vmatpush1.bf16.xpose.msra.mxu0 0
    %1641 = vmatprep.subr.bf16.mxu0 0
    %1642 = vmatpush1.bf16.xpose.msra.mxu0 0
    %1643 = vmatprep.subr.bf16.mxu0 0
    %1644 = vmatpush1.bf16.xpose.msra.mxu0 0
    %1645 = vmatprep.subr.bf16.mxu0 0
    %1646 = vmatpush1.bf16.xpose.msra.mxu0 0
    %1647 = vmatprep.subr.bf16.mxu0 0
    %1648 = vmatpush1.bf16.xpose.msra.mxu0 0
    %1649 = vmatprep.subr.bf16.mxu0 0
    %1650 = vmatpush1.bf16.xpose.msra.mxu0 0
    %1651 = vmatprep.subr.bf16.mxu0 0
    %1652 = vmatpush1.bf16.xpose.msra.mxu0 %v1635
    %1653 = vmatprep.subr.bf16.mxu0 0
    %1654 = vmatpush2.bf16.xpose.msra.mxu0 0
    %1655 = vmatprep.subr.bf16.mxu0 0
    %1656 = vmatpush2.bf16.xpose.msra.mxu0 0
    %1657 = vmatprep.subr.bf16.mxu0 0
    %1658 = vmatpush2.bf16.xpose.msra.mxu0 0
    %1659 = vmatprep.subr.bf16.mxu0 0
    %1660 = vmatpush2.bf16.xpose.msra.mxu0 0
    %1661 = vmatprep.subr.bf16.mxu0 0
    %1662 = vmatpush2.bf16.xpose.msra.mxu0 0
    %1663 = vmatprep.subr.bf16.mxu0 0
    %1664 = vmatpush2.bf16.xpose.msra.mxu0 0
    %1665 = vmatprep.subr.bf16.mxu0 0
    %1666 = vmatpush2.bf16.xpose.msra.mxu0 0
    %1667 = vmatprep.subr.bf16.mxu0 0
    %1668 = vmatpush2.bf16.xpose.msra.mxu0 0
    %1669 = vmatprep.mubr.bf16.mxu0 0
    %1670 = vmatmul.mubr.bf16.gmra.mxu0 %v1632
    %v1671 = vpop.f32.mrf.mxu0
    %v1672 = vadd.f32 0.0, %v1671
    %v1673 = vpop.f32.mrf.mxu0
    %v1674 = vpop.f32.mrf.mxu0
    %v1675 = vpop.f32.mrf.mxu0
    %1676 = vdwg.mxu0
    %v1677 = vmul.f32 %v1623, 0.25
    %v1678 = vmul.f32 %v1672, 0.25
    %v1679 = vsel %vm619, %v1677, -inf
    %1680 = vmax.xlane.f32.xlu0 %v1679
    %v1681 = vpop.xlane.xlu0 %1680
    %v1682 = vsel %vm619, %v1678, -inf
    %1683 = vmax.xlane.f32.xlu0 %v1682
    %v1684 = vpop.xlane.xlu0 %1683
    %v1685 = vsub.f32 %v1677, %v1681
    %v1686 = vsub.f32 %v1678, %v1684
    %v1687 = vmul.f32 %v1685, 1.442695
    %v1688 = vpow.pop %v1687
    %v1689 = vmul.f32 %v1686, 1.442695
    %v1690 = vpow.pop %v1689
    %v1691 = vsel %vm619, %v1688, 0.0
    %1692 = vadd.xlane.f32.xlu0 %v1691
    %v1693 = vpop.xlane.xlu0 %1692
    %v1694 = vsel %vm619, %v1690, 0.0
    %1695 = vadd.xlane.f32.xlu0 %v1694
    %v1696 = vpop.xlane.xlu0 %1695
    %v1697 = vrcp.pop %v1693
    %v1698 = vrcp.pop %v1696
    %v1699 = vmul.f32 %v1688, %v1697
    %v1700 = vmul.f32 %v1690, %v1698
    %v1701 = vpack.c.bf16 %v1699, %v1699
    %v1702 = vpack.c.bf16 %v1700, %v1700
    %1703 = vrot.lane.b32.xlu0 %v1577, 64
    %v1704 = vpop.permute.xlu0 %1703
    %v1706 = vsel %vm619, %v1701, 0
    %v1709 = vsel %vm623, %v1704, 0
    %1711 = vmatprep.subr.bf16.mxu0 0
    %1712 = vmatpush1.bf16.msra.mxu0 0
    %1713 = vmatprep.subr.bf16.mxu0 0
    %1714 = vmatpush1.bf16.msra.mxu0 0
    %1715 = vmatprep.subr.bf16.mxu0 0
    %1716 = vmatpush1.bf16.msra.mxu0 0
    %1717 = vmatprep.subr.bf16.mxu0 0
    %1718 = vmatpush1.bf16.msra.mxu0 0
    %1719 = vmatprep.subr.bf16.mxu0 0
    %1720 = vmatpush1.bf16.msra.mxu0 0
    %1721 = vmatprep.subr.bf16.mxu0 0
    %1722 = vmatpush1.bf16.msra.mxu0 0
    %1723 = vmatprep.subr.bf16.mxu0 0
    %1724 = vmatpush1.bf16.msra.mxu0 0
    %1725 = vmatprep.subr.bf16.mxu0 0
    %1726 = vmatpush1.bf16.msra.mxu0 %v1709
    %1727 = vmatprep.subr.bf16.mxu0 0
    %1728 = vmatpush2.bf16.msra.mxu0 0
    %1729 = vmatprep.subr.bf16.mxu0 0
    %1730 = vmatpush2.bf16.msra.mxu0 0
    %1731 = vmatprep.subr.bf16.mxu0 0
    %1732 = vmatpush2.bf16.msra.mxu0 0
    %1733 = vmatprep.subr.bf16.mxu0 0
    %1734 = vmatpush2.bf16.msra.mxu0 0
    %1735 = vmatprep.subr.bf16.mxu0 0
    %1736 = vmatpush2.bf16.msra.mxu0 0
    %1737 = vmatprep.subr.bf16.mxu0 0
    %1738 = vmatpush2.bf16.msra.mxu0 0
    %1739 = vmatprep.subr.bf16.mxu0 0
    %1740 = vmatpush2.bf16.msra.mxu0 0
    %1741 = vmatprep.subr.bf16.mxu0 0
    %1742 = vmatpush2.bf16.msra.mxu0 0
    %1743 = vmatprep.mubr.bf16.mxu0 0
    %1744 = vmatmul.mubr.bf16.gmra.mxu0 %v1706
    %v1745 = vpop.f32.mrf.mxu0
    %v1746 = vadd.f32 0.0, %v1745
    %v1747 = vpop.f32.mrf.mxu0
    %v1748 = vpop.f32.mrf.mxu0
    %v1749 = vpop.f32.mrf.mxu0
    %1750 = vdwg.mxu0
    %1751 = vrot.lane.b32.xlu0 %v1578, 64
    %v1752 = vpop.permute.xlu0 %1751
    %v1754 = vsel %vm619, %v1702, 0
    %v1757 = vsel %vm623, %v1752, 0
    %1759 = vmatprep.subr.bf16.mxu0 0
    %1760 = vmatpush1.bf16.msra.mxu0 0
    %1761 = vmatprep.subr.bf16.mxu0 0
    %1762 = vmatpush1.bf16.msra.mxu0 0
    %1763 = vmatprep.subr.bf16.mxu0 0
    %1764 = vmatpush1.bf16.msra.mxu0 0
    %1765 = vmatprep.subr.bf16.mxu0 0
    %1766 = vmatpush1.bf16.msra.mxu0 0
    %1767 = vmatprep.subr.bf16.mxu0 0
    %1768 = vmatpush1.bf16.msra.mxu0 0
    %1769 = vmatprep.subr.bf16.mxu0 0
    %1770 = vmatpush1.bf16.msra.mxu0 0
    %1771 = vmatprep.subr.bf16.mxu0 0
    %1772 = vmatpush1.bf16.msra.mxu0 0
    %1773 = vmatprep.subr.bf16.mxu0 0
    %1774 = vmatpush1.bf16.msra.mxu0 %v1757
    %1775 = vmatprep.subr.bf16.mxu0 0
    %1776 = vmatpush2.bf16.msra.mxu0 0
    %1777 = vmatprep.subr.bf16.mxu0 0
    %1778 = vmatpush2.bf16.msra.mxu0 0
    %1779 = vmatprep.subr.bf16.mxu0 0
    %1780 = vmatpush2.bf16.msra.mxu0 0
    %1781 = vmatprep.subr.bf16.mxu0 0
    %1782 = vmatpush2.bf16.msra.mxu0 0
    %1783 = vmatprep.subr.bf16.mxu0 0
    %1784 = vmatpush2.bf16.msra.mxu0 0
    %1785 = vmatprep.subr.bf16.mxu0 0
    %1786 = vmatpush2.bf16.msra.mxu0 0
    %1787 = vmatprep.subr.bf16.mxu0 0
    %1788 = vmatpush2.bf16.msra.mxu0 0
    %1789 = vmatprep.subr.bf16.mxu0 0
    %1790 = vmatpush2.bf16.msra.mxu0 0
    %1791 = vmatprep.mubr.bf16.mxu0 0
    %1792 = vmatmul.mubr.bf16.gmra.mxu0 %v1754
    %v1793 = vpop.f32.mrf.mxu0
    %v1794 = vadd.f32 0.0, %v1793
    %v1795 = vpop.f32.mrf.mxu0
    %v1796 = vpop.f32.mrf.mxu0
    %v1797 = vpop.f32.mrf.mxu0
    %1798 = vdwg.mxu0
    %1799 = vrot.lane.b32.xlu0 %v1577, 112
    %v1800 = vpop.permute.xlu0 %1799
    %1801 = vrot.lane.b32.xlu0 %v1577, 80
    %v1802 = vpop.permute.xlu0 %1801
    %v1804 = vsel %vm759, %v1800, 0
    %v1807 = vsel %vm759, %v1802, 0
    %1809 = vmatprep.subr.bf16.mxu0 0
    %1810 = vmatpush1.bf16.xpose.msra.mxu0 0
    %1811 = vmatprep.subr.bf16.mxu0 0
    %1812 = vmatpush1.bf16.xpose.msra.mxu0 0
    %1813 = vmatprep.subr.bf16.mxu0 0
    %1814 = vmatpush1.bf16.xpose.msra.mxu0 0
    %1815 = vmatprep.subr.bf16.mxu0 0
    %1816 = vmatpush1.bf16.xpose.msra.mxu0 0
    %1817 = vmatprep.subr.bf16.mxu0 0
    %1818 = vmatpush1.bf16.xpose.msra.mxu0 0
    %1819 = vmatprep.subr.bf16.mxu0 0
    %1820 = vmatpush1.bf16.xpose.msra.mxu0 0
    %1821 = vmatprep.subr.bf16.mxu0 0
    %1822 = vmatpush1.bf16.xpose.msra.mxu0 0
    %1823 = vmatprep.subr.bf16.mxu0 0
    %1824 = vmatpush1.bf16.xpose.msra.mxu0 %v1807
    %1825 = vmatprep.subr.bf16.mxu0 0
    %1826 = vmatpush2.bf16.xpose.msra.mxu0 0
    %1827 = vmatprep.subr.bf16.mxu0 0
    %1828 = vmatpush2.bf16.xpose.msra.mxu0 0
    %1829 = vmatprep.subr.bf16.mxu0 0
    %1830 = vmatpush2.bf16.xpose.msra.mxu0 0
    %1831 = vmatprep.subr.bf16.mxu0 0
    %1832 = vmatpush2.bf16.xpose.msra.mxu0 0
    %1833 = vmatprep.subr.bf16.mxu0 0
    %1834 = vmatpush2.bf16.xpose.msra.mxu0 0
    %1835 = vmatprep.subr.bf16.mxu0 0
    %1836 = vmatpush2.bf16.xpose.msra.mxu0 0
    %1837 = vmatprep.subr.bf16.mxu0 0
    %1838 = vmatpush2.bf16.xpose.msra.mxu0 0
    %1839 = vmatprep.subr.bf16.mxu0 0
    %1840 = vmatpush2.bf16.xpose.msra.mxu0 0
    %1841 = vmatprep.mubr.bf16.mxu0 0
    %1842 = vmatmul.mubr.bf16.gmra.mxu0 %v1804
    %v1843 = vpop.f32.mrf.mxu0
    %v1844 = vadd.f32 0.0, %v1843
    %v1845 = vpop.f32.mrf.mxu0
    %v1846 = vpop.f32.mrf.mxu0
    %v1847 = vpop.f32.mrf.mxu0
    %1848 = vdwg.mxu0
    %1849 = vrot.lane.b32.xlu0 %v1578, 112
    %v1850 = vpop.permute.xlu0 %1849
    %1851 = vrot.lane.b32.xlu0 %v1578, 80
    %v1852 = vpop.permute.xlu0 %1851
    %v1854 = vsel %vm759, %v1850, 0
    %v1857 = vsel %vm759, %v1852, 0
    %1859 = vmatprep.subr.bf16.mxu0 0
    %1860 = vmatpush1.bf16.xpose.msra.mxu0 0
    %1861 = vmatprep.subr.bf16.mxu0 0
    %1862 = vmatpush1.bf16.xpose.msra.mxu0 0
    %1863 = vmatprep.subr.bf16.mxu0 0
    %1864 = vmatpush1.bf16.xpose.msra.mxu0 0
    %1865 = vmatprep.subr.bf16.mxu0 0
    %1866 = vmatpush1.bf16.xpose.msra.mxu0 0
    %1867 = vmatprep.subr.bf16.mxu0 0
    %1868 = vmatpush1.bf16.xpose.msra.mxu0 0
    %1869 = vmatprep.subr.bf16.mxu0 0
    %1870 = vmatpush1.bf16.xpose.msra.mxu0 0
    %1871 = vmatprep.subr.bf16.mxu0 0
    %1872 = vmatpush1.bf16.xpose.msra.mxu0 0
    %1873 = vmatprep.subr.bf16.mxu0 0
    %1874 = vmatpush1.bf16.xpose.msra.mxu0 %v1857
    %1875 = vmatprep.subr.bf16.mxu0 0
    %1876 = vmatpush2.bf16.xpose.msra.mxu0 0
    %1877 = vmatprep.subr.bf16.mxu0 0
    %1878 = vmatpush2.bf16.xpose.msra.mxu0 0
    %1879 = vmatprep.subr.bf16.mxu0 0
    %1880 = vmatpush2.bf16.xpose.msra.mxu0 0
    %1881 = vmatprep.subr.bf16.mxu0 0
    %1882 = vmatpush2.bf16.xpose.msra.mxu0 0
    %1883 = vmatprep.subr.bf16.mxu0 0
    %1884 = vmatpush2.bf16.xpose.msra.mxu0 0
    %1885 = vmatprep.subr.bf16.mxu0 0
    %1886 = vmatpush2.bf16.xpose.msra.mxu0 0
    %1887 = vmatprep.subr.bf16.mxu0 0
    %1888 = vmatpush2.bf16.xpose.msra.mxu0 0
    %1889 = vmatprep.subr.bf16.mxu0 0
    %1890 = vmatpush2.bf16.xpose.msra.mxu0 0
    %1891 = vmatprep.mubr.bf16.mxu0 0
    %1892 = vmatmul.mubr.bf16.gmra.mxu0 %v1854
    %v1893 = vpop.f32.mrf.mxu0
    %v1894 = vadd.f32 0.0, %v1893
    %v1895 = vpop.f32.mrf.mxu0
    %v1896 = vpop.f32.mrf.mxu0
    %v1897 = vpop.f32.mrf.mxu0
    %1898 = vdwg.mxu0
    %v1899 = vmul.f32 %v1844, 0.25
    %v1900 = vmul.f32 %v1894, 0.25
    %v1901 = vsel %vm619, %v1899, -inf
    %1902 = vmax.xlane.f32.xlu0 %v1901
    %v1903 = vpop.xlane.xlu0 %1902
    %v1904 = vsel %vm619, %v1900, -inf
    %1905 = vmax.xlane.f32.xlu0 %v1904
    %v1906 = vpop.xlane.xlu0 %1905
    %v1907 = vsub.f32 %v1899, %v1903
    %v1908 = vsub.f32 %v1900, %v1906
    %v1909 = vmul.f32 %v1907, 1.442695
    %v1910 = vpow.pop %v1909
    %v1911 = vmul.f32 %v1908, 1.442695
    %v1912 = vpow.pop %v1911
    %v1913 = vsel %vm619, %v1910, 0.0
    %1914 = vadd.xlane.f32.xlu0 %v1913
    %v1915 = vpop.xlane.xlu0 %1914
    %v1916 = vsel %vm619, %v1912, 0.0
    %1917 = vadd.xlane.f32.xlu0 %v1916
    %v1918 = vpop.xlane.xlu0 %1917
    %v1919 = vrcp.pop %v1915
    %v1920 = vrcp.pop %v1918
    %v1921 = vmul.f32 %v1910, %v1919
    %v1922 = vmul.f32 %v1912, %v1920
    %v1923 = vpack.c.bf16 %v1921, %v1921
    %v1924 = vpack.c.bf16 %v1922, %v1922
    %1925 = vrot.lane.b32.xlu0 %v1577, 48
    %v1926 = vpop.permute.xlu0 %1925
    %v1928 = vsel %vm619, %v1923, 0
    %v1931 = vsel %vm623, %v1926, 0
    %1933 = vmatprep.subr.bf16.mxu0 0
    %1934 = vmatpush1.bf16.msra.mxu0 0
    %1935 = vmatprep.subr.bf16.mxu0 0
    %1936 = vmatpush1.bf16.msra.mxu0 0
    %1937 = vmatprep.subr.bf16.mxu0 0
    %1938 = vmatpush1.bf16.msra.mxu0 0
    %1939 = vmatprep.subr.bf16.mxu0 0
    %1940 = vmatpush1.bf16.msra.mxu0 0
    %1941 = vmatprep.subr.bf16.mxu0 0
    %1942 = vmatpush1.bf16.msra.mxu0 0
    %1943 = vmatprep.subr.bf16.mxu0 0
    %1944 = vmatpush1.bf16.msra.mxu0 0
    %1945 = vmatprep.subr.bf16.mxu0 0
    %1946 = vmatpush1.bf16.msra.mxu0 0
    %1947 = vmatprep.subr.bf16.mxu0 0
    %1948 = vmatpush1.bf16.msra.mxu0 %v1931
    %1949 = vmatprep.subr.bf16.mxu0 0
    %1950 = vmatpush2.bf16.msra.mxu0 0
    %1951 = vmatprep.subr.bf16.mxu0 0
    %1952 = vmatpush2.bf16.msra.mxu0 0
    %1953 = vmatprep.subr.bf16.mxu0 0
    %1954 = vmatpush2.bf16.msra.mxu0 0
    %1955 = vmatprep.subr.bf16.mxu0 0
    %1956 = vmatpush2.bf16.msra.mxu0 0
    %1957 = vmatprep.subr.bf16.mxu0 0
    %1958 = vmatpush2.bf16.msra.mxu0 0
    %1959 = vmatprep.subr.bf16.mxu0 0
    %1960 = vmatpush2.bf16.msra.mxu0 0
    %1961 = vmatprep.subr.bf16.mxu0 0
    %1962 = vmatpush2.bf16.msra.mxu0 0
    %1963 = vmatprep.subr.bf16.mxu0 0
    %1964 = vmatpush2.bf16.msra.mxu0 0
    %1965 = vmatprep.mubr.bf16.mxu0 0
    %1966 = vmatmul.mubr.bf16.gmra.mxu0 %v1928
    %v1967 = vpop.f32.mrf.mxu0
    %v1968 = vadd.f32 0.0, %v1967
    %v1969 = vpop.f32.mrf.mxu0
    %v1970 = vpop.f32.mrf.mxu0
    %v1971 = vpop.f32.mrf.mxu0
    %1972 = vdwg.mxu0
    %1973 = vrot.lane.b32.xlu0 %v1578, 48
    %v1974 = vpop.permute.xlu0 %1973
    %v1976 = vsel %vm619, %v1924, 0
    %v1979 = vsel %vm623, %v1974, 0
    %1981 = vmatprep.subr.bf16.mxu0 0
    %1982 = vmatpush1.bf16.msra.mxu0 0
    %1983 = vmatprep.subr.bf16.mxu0 0
    %1984 = vmatpush1.bf16.msra.mxu0 0
    %1985 = vmatprep.subr.bf16.mxu0 0
    %1986 = vmatpush1.bf16.msra.mxu0 0
    %1987 = vmatprep.subr.bf16.mxu0 0
    %1988 = vmatpush1.bf16.msra.mxu0 0
    %1989 = vmatprep.subr.bf16.mxu0 0
    %1990 = vmatpush1.bf16.msra.mxu0 0
    %1991 = vmatprep.subr.bf16.mxu0 0
    %1992 = vmatpush1.bf16.msra.mxu0 0
    %1993 = vmatprep.subr.bf16.mxu0 0
    %1994 = vmatpush1.bf16.msra.mxu0 0
    %1995 = vmatprep.subr.bf16.mxu0 0
    %1996 = vmatpush1.bf16.msra.mxu0 %v1979
    %1997 = vmatprep.subr.bf16.mxu0 0
    %1998 = vmatpush2.bf16.msra.mxu0 0
    %1999 = vmatprep.subr.bf16.mxu0 0
    %2000 = vmatpush2.bf16.msra.mxu0 0
    %2001 = vmatprep.subr.bf16.mxu0 0
    %2002 = vmatpush2.bf16.msra.mxu0 0
    %2003 = vmatprep.subr.bf16.mxu0 0
    %2004 = vmatpush2.bf16.msra.mxu0 0
    %2005 = vmatprep.subr.bf16.mxu0 0
    %2006 = vmatpush2.bf16.msra.mxu0 0
    %2007 = vmatprep.subr.bf16.mxu0 0
    %2008 = vmatpush2.bf16.msra.mxu0 0
    %2009 = vmatprep.subr.bf16.mxu0 0
    %2010 = vmatpush2.bf16.msra.mxu0 0
    %2011 = vmatprep.subr.bf16.mxu0 0
    %2012 = vmatpush2.bf16.msra.mxu0 0
    %2013 = vmatprep.mubr.bf16.mxu0 0
    %2014 = vmatmul.mubr.bf16.gmra.mxu0 %v1976
    %v2015 = vpop.f32.mrf.mxu0
    %v2016 = vadd.f32 0.0, %v2015
    %v2017 = vpop.f32.mrf.mxu0
    %v2018 = vpop.f32.mrf.mxu0
    %v2019 = vpop.f32.mrf.mxu0
    %2020 = vdwg.mxu0
    %2023 = vrot.lane.b32.xlu0 %v1968, 16
    %v2024 = vpop.permute.xlu0 %2023
    %2025 = vrot.lane.b32.xlu0 %v2016, 16
    %v2026 = vpop.permute.xlu0 %2025
    %v2029 = vsel %vm759, %v1746, %v2024
    %v2030 = vsel %vm759, %v1794, %v2026
    %v2031 = vpack.c.bf16 %v2030, %v2029
    %v2036 = vunpack.c.l.b16 %v1498
    %v2037 = vunpack.c.l.b16 %v1499
    %v2038 = vunpack.c.l.b16 %v1500
    %v2039 = vunpack.c.l.b16 %v1501
    %v2040 = vpack.c.b16 %v2037, %v2036
    %v2041 = vpack.c.b16 %v2039, %v2038
    %v2045 = vsel %vm709, %v2031, 0
    %2047 = vmatprep.subr.bf16.mxu0 0
    %2048 = vmatpush1.bf16.msra.mxu0 0
    %2049 = vmatprep.subr.bf16.mxu0 0
    %2050 = vmatpush1.bf16.msra.mxu0 0
    %2051 = vmatprep.subr.bf16.mxu0 0
    %2052 = vmatpush1.bf16.msra.mxu0 0
    %2053 = vmatprep.subr.bf16.mxu0 0
    %2054 = vmatpush1.bf16.msra.mxu0 0
    %2055 = vmatprep.subr.bf16.mxu0 0
    %2056 = vmatpush1.bf16.msra.mxu0 0
    %2057 = vmatprep.subr.bf16.mxu0 0
    %2058 = vmatpush1.bf16.msra.mxu0 0
    %2059 = vmatprep.subr.bf16.mxu0 0
    %2060 = vmatpush1.bf16.msra.mxu0 %v2041
    %2061 = vmatprep.subr.bf16.mxu0 0
    %2062 = vmatpush1.bf16.msra.mxu0 %v2040
    %2063 = vmatprep.subr.bf16.mxu0 0
    %2064 = vmatpush2.bf16.msra.mxu0 0
    %2065 = vmatprep.subr.bf16.mxu0 0
    %2066 = vmatpush2.bf16.msra.mxu0 0
    %2067 = vmatprep.subr.bf16.mxu0 0
    %2068 = vmatpush2.bf16.msra.mxu0 0
    %2069 = vmatprep.subr.bf16.mxu0 0
    %2070 = vmatpush2.bf16.msra.mxu0 0
    %2071 = vmatprep.subr.bf16.mxu0 0
    %2072 = vmatpush2.bf16.msra.mxu0 0
    %2073 = vmatprep.subr.bf16.mxu0 0
    %2074 = vmatpush2.bf16.msra.mxu0 0
    %2075 = vmatprep.subr.bf16.mxu0 0
    %2076 = vmatpush2.bf16.msra.mxu0 0
    %2077 = vmatprep.subr.bf16.mxu0 0
    %2078 = vmatpush2.bf16.msra.mxu0 0
    %2079 = vmatprep.mubr.bf16.mxu0 0
    %2080 = vmatmul.mubr.bf16.gmra.mxu0 %v2045
    %v2081 = vpop.f32.mrf.mxu0
    %v2082 = vadd.f32 %v1492, %v2081
    %v2083 = vpop.f32.mrf.mxu0
    %v2084 = vpop.f32.mrf.mxu0
    %v2085 = vadd.f32 %v1493, %v2084
    %v2086 = vpop.f32.mrf.mxu0
    %2087 = vdwg.mxu0
    %v2088 = vsel %vm709, %v2082, 0.0
    %2089 = vadd.xlane.f32.xlu0 %v2088
    %v2090 = vpop.xlane.xlu0 %2089
    %v2091 = vsel %vm709, %v2085, 0.0
    %2092 = vadd.xlane.f32.xlu0 %v2091
    %v2093 = vpop.xlane.xlu0 %2092
    %v2094 = vmul.f32 %v2090, %v1272
    %v2095 = vmul.f32 %v2093, %v1272
    %v2096 = vsub.f32 %v2082, %v2094
    %v2097 = vsub.f32 %v2085, %v2095
    %v2098 = vmul.f32 %v2096, %v2096
    %v2099 = vmul.f32 %v2097, %v2097
    %v2100 = vsel %vm709, %v2098, 0.0
    %2101 = vadd.xlane.f32.xlu0 %v2100
    %v2102 = vpop.xlane.xlu0 %2101
    %v2103 = vsel %vm709, %v2099, 0.0
    %2104 = vadd.xlane.f32.xlu0 %v2103
    %v2105 = vpop.xlane.xlu0 %2104
    %v2106 = vmul.f32 %v2102, %v1272
    %v2107 = vmul.f32 %v2105, %v1272
    %v2108 = vadd.f32 %v2106, 1e-06
    %v2109 = vadd.f32 %v2107, 1e-06
    %v2110 = vrsqrt.pop %v2108
    %v2111 = vrsqrt.pop %v2109
    %v2112 = vmul.f32 %v2096, %v2110
    %v2113 = vmul.f32 %v2097, %v2111
    %v2115 = vlaneseq
    %v2116 = vshrl.u32 %v2115, 7
    %v2117 = vsub.s32 0, %v2116
    %v2118 = vrot.slane %v1502, %v2117
    %v2120 = vmul.f32 %v2112, %v2118
    %v2121 = vmul.f32 %v2113, %v2118
    %v2123 = vlaneseq
    %v2124 = vshrl.u32 %v2123, 7
    %v2125 = vsub.s32 0, %v2124
    %v2126 = vrot.slane %v1503, %v2125
    %v2128 = vadd.f32 %v2120, %v2126
    %v2129 = vadd.f32 %v2121, %v2126
    %v2130 = vpack.c.bf16 %v2129, %v2128
    %v2132 = vlaneseq
    %v2133 = vshrl.u32 %v2132, 7
    %v2134 = vsub.s32 0, %v2133
    %v2135 = vrot.slane %v1508, %v2134
    %v2141 = vunpack.c.l.b16 %v1504
    %v2142 = vunpack.c.l.b16 %v1505
    %v2143 = vunpack.c.l.b16 %v1506
    %v2144 = vunpack.c.l.b16 %v1507
    %v2145 = vpack.c.b16 %v2142, %v2141
    %v2146 = vpack.c.b16 %v2144, %v2143
    %v2150 = vsel %vm709, %v2130, 0
    %2152 = vmatprep.subr.bf16.mxu0 0
    %2153 = vmatpush1.bf16.msra.mxu0 0
    %2154 = vmatprep.subr.bf16.mxu0 0
    %2155 = vmatpush1.bf16.msra.mxu0 0
    %2156 = vmatprep.subr.bf16.mxu0 0
    %2157 = vmatpush1.bf16.msra.mxu0 0
    %2158 = vmatprep.subr.bf16.mxu0 0
    %2159 = vmatpush1.bf16.msra.mxu0 0
    %2160 = vmatprep.subr.bf16.mxu0 0
    %2161 = vmatpush1.bf16.msra.mxu0 0
    %2162 = vmatprep.subr.bf16.mxu0 0
    %2163 = vmatpush1.bf16.msra.mxu0 0
    %2164 = vmatprep.subr.bf16.mxu0 0
    %2165 = vmatpush1.bf16.msra.mxu0 %v2146
    %2166 = vmatprep.subr.bf16.mxu0 0
    %2167 = vmatpush1.bf16.msra.mxu0 %v2145
    %2168 = vmatprep.subr.bf16.mxu0 0
    %2169 = vmatpush2.bf16.msra.mxu0 0
    %2170 = vmatprep.subr.bf16.mxu0 0
    %2171 = vmatpush2.bf16.msra.mxu0 0
    %2172 = vmatprep.subr.bf16.mxu0 0
    %2173 = vmatpush2.bf16.msra.mxu0 0
    %2174 = vmatprep.subr.bf16.mxu0 0
    %2175 = vmatpush2.bf16.msra.mxu0 0
    %2176 = vmatprep.subr.bf16.mxu0 0
    %2177 = vmatpush2.bf16.msra.mxu0 0
    %2178 = vmatprep.subr.bf16.mxu0 0
    %2179 = vmatpush2.bf16.msra.mxu0 0
    %2180 = vmatprep.subr.bf16.mxu0 0
    %2181 = vmatpush2.bf16.msra.mxu0 0
    %2182 = vmatprep.subr.bf16.mxu0 0
    %2183 = vmatpush2.bf16.msra.mxu0 0
    %2184 = vmatprep.mubr.bf16.mxu0 0
    %2185 = vmatmul.mubr.bf16.gmra.mxu0 %v2150
    %v2186 = vpop.f32.mrf.mxu0
    %v2187 = vadd.f32 %v2135, %v2186
    %v2188 = vpop.f32.mrf.mxu0
    %v2189 = vpop.f32.mrf.mxu0
    %v2190 = vadd.f32 %v2135, %v2189
    %v2191 = vpop.f32.mrf.mxu0
    %2192 = vdwg.mxu0
    %v2193 = vmax.f32 %v2187, 0.0
    %v2194 = vmax.f32 %v2190, 0.0
    %v2195 = vpack.c.bf16 %v2194, %v2193
    %v2197 = vlaneseq
    %v2198 = vshrl.u32 %v2197, 7
    %v2199 = vsub.s32 0, %v2198
    %v2200 = vrot.slane %v1517, %v2199
    %v2210 = vunpack.c.l.b16 %v1509
    %v2211 = vunpack.c.l.b16 %v1510
    %v2212 = vunpack.c.l.b16 %v1511
    %v2213 = vunpack.c.l.b16 %v1512
    %v2214 = vunpack.c.l.b16 %v1513
    %v2215 = vunpack.c.l.b16 %v1514
    %v2216 = vunpack.c.l.b16 %v1515
    %v2217 = vunpack.c.l.b16 %v1516
    %v2218 = vpack.c.b16 %v2211, %v2210
    %v2219 = vpack.c.b16 %v2213, %v2212
    %v2220 = vpack.c.b16 %v2215, %v2214
    %v2221 = vpack.c.b16 %v2217, %v2216
    %v2227 = vsel %vm1405, %v2195, 0
    %2229 = vmatprep.subr.bf16.mxu0 0
    %2230 = vmatpush1.bf16.msra.mxu0 0
    %2231 = vmatprep.subr.bf16.mxu0 0
    %2232 = vmatpush1.bf16.msra.mxu0 0
    %2233 = vmatprep.subr.bf16.mxu0 0
    %2234 = vmatpush1.bf16.msra.mxu0 0
    %2235 = vmatprep.subr.bf16.mxu0 0
    %2236 = vmatpush1.bf16.msra.mxu0 0
    %2237 = vmatprep.subr.bf16.mxu0 0
    %2238 = vmatpush1.bf16.msra.mxu0 %v2221
    %2239 = vmatprep.subr.bf16.mxu0 0
    %2240 = vmatpush1.bf16.msra.mxu0 %v2220
    %2241 = vmatprep.subr.bf16.mxu0 0
    %2242 = vmatpush1.bf16.msra.mxu0 %v2219
    %2243 = vmatprep.subr.bf16.mxu0 0
    %2244 = vmatpush1.bf16.msra.mxu0 %v2218
    %2245 = vmatprep.subr.bf16.mxu0 0
    %2246 = vmatpush2.bf16.msra.mxu0 0
    %2247 = vmatprep.subr.bf16.mxu0 0
    %2248 = vmatpush2.bf16.msra.mxu0 0
    %2249 = vmatprep.subr.bf16.mxu0 0
    %2250 = vmatpush2.bf16.msra.mxu0 0
    %2251 = vmatprep.subr.bf16.mxu0 0
    %2252 = vmatpush2.bf16.msra.mxu0 0
    %2253 = vmatprep.subr.bf16.mxu0 0
    %2254 = vmatpush2.bf16.msra.mxu0 0
    %2255 = vmatprep.subr.bf16.mxu0 0
    %2256 = vmatpush2.bf16.msra.mxu0 0
    %2257 = vmatprep.subr.bf16.mxu0 0
    %2258 = vmatpush2.bf16.msra.mxu0 0
    %2259 = vmatprep.subr.bf16.mxu0 0
    %2260 = vmatpush2.bf16.msra.mxu0 0
    %2261 = vmatprep.mubr.bf16.mxu0 0
    %2262 = vmatmul.mubr.bf16.gmra.mxu0 %v2227
    %v2263 = vpop.f32.mrf.mxu0
    %v2264 = vadd.f32 %v2200, %v2263
    %v2265 = vpop.f32.mrf.mxu0
    %v2266 = vpop.f32.mrf.mxu0
    %v2267 = vadd.f32 %v2200, %v2266
    %v2268 = vpop.f32.mrf.mxu0
    %2269 = vdwg.mxu0
    %v2270 = vadd.f32 %v2264, %v2128
    %v2271 = vadd.f32 %v2267, %v2129
    %v2272 = vsel %vm709, %v2270, 0.0
    %2273 = vadd.xlane.f32.xlu0 %v2272
    %v2274 = vpop.xlane.xlu0 %2273
    %v2275 = vsel %vm709, %v2271, 0.0
    %2276 = vadd.xlane.f32.xlu0 %v2275
    %v2277 = vpop.xlane.xlu0 %2276
    %v2278 = vmul.f32 %v2274, %v1272
    %v2279 = vmul.f32 %v2277, %v1272
    %v2280 = vsub.f32 %v2270, %v2278
    %v2281 = vsub.f32 %v2271, %v2279
    %v2282 = vmul.f32 %v2280, %v2280
    %v2283 = vmul.f32 %v2281, %v2281
    %v2284 = vsel %vm709, %v2282, 0.0
    %2285 = vadd.xlane.f32.xlu0 %v2284
    %v2286 = vpop.xlane.xlu0 %2285
    %v2287 = vsel %vm709, %v2283, 0.0
    %2288 = vadd.xlane.f32.xlu0 %v2287
    %v2289 = vpop.xlane.xlu0 %2288
    %v2290 = vmul.f32 %v2286, %v1272
    %v2291 = vmul.f32 %v2289, %v1272
    %v2292 = vadd.f32 %v2290, 1e-06
    %v2293 = vadd.f32 %v2291, 1e-06
    %v2294 = vrsqrt.pop %v2292
    %v2295 = vrsqrt.pop %v2293
    %v2296 = vmul.f32 %v2280, %v2294
    %v2297 = vmul.f32 %v2281, %v2295
    %v2299 = vlaneseq
    %v2300 = vshrl.u32 %v2299, 7
    %v2301 = vsub.s32 0, %v2300
    %v2302 = vrot.slane %v1518, %v2301
    %v2304 = vmul.f32 %v2296, %v2302
    %v2305 = vmul.f32 %v2297, %v2302
    %v2307 = vlaneseq
    %v2308 = vshrl.u32 %v2307, 7
    %v2309 = vsub.s32 0, %v2308
    %v2310 = vrot.slane %v1519, %v2309
    %v2312 = vadd.f32 %v2304, %v2310
    %v2313 = vadd.f32 %v2305, %v2310
    %v2314 = vld [vmem:[%s51] sm:$0xf]
    %v2315 = vld [vmem:[%s51 + $0x4] sm:$0xf]
    %v2316 = vld [vmem:[%s51 + $0x8] sm:$0xf]
    %v2317 = vld [vmem:[%s51 + $0xc] sm:$0xf]
    %v2318 = vld [vmem:[%s53] sm:$0xf]
    %v2319 = vld [vmem:[%s53 + $0x4] sm:$0xf]
    %v2320 = vld [vmem:[%s53 + $0x8] sm:$0xf]
    %v2321 = vld [vmem:[%s53 + $0xc] sm:$0xf]
    %v2322 = vld [vmem:[#allocation26] sm:$0x1]
    %v2323 = vld [vmem:[#allocation28] sm:$0x1]
    %v2324 = vld [vmem:[%s59] sm:$0xf]
    %v2325 = vld [vmem:[%s59 + $0x4] sm:$0xf]
    %v2326 = vld [vmem:[%s59 + $0x8] sm:$0xf]
    %v2327 = vld [vmem:[%s59 + $0xc] sm:$0xf]
    %v2328 = vld [vmem:[%s61] sm:$0xf]
    %v2329 = vld [vmem:[%s61 + $0x4] sm:$0xf]
    %v2330 = vld [vmem:[%s61 + $0x8] sm:$0xf]
    %v2331 = vld [vmem:[%s61 + $0xc] sm:$0xf]
    %v2332 = vld [vmem:[#allocation29] sm:$0xf]
    %v2333 = vld [vmem:[#allocation29 + $0x4] sm:$0xf]
    %v2334 = vld [vmem:[#allocation29 + $0x8] sm:$0xf]
    %v2335 = vld [vmem:[#allocation29 + $0xc] sm:$0xf]
    %v2336 = vld [vmem:[#allocation31] sm:$0x1]
    %v2337 = vld [vmem:[#allocation32] sm:$0x1]
    %v2338 = vld [vmem:[%s69] sm:$0xf]
    %v2339 = vld [vmem:[%s69 + $0x4] sm:$0xf]
    %v2340 = vld [vmem:[%s69 + $0x8] sm:$0xf]
    %v2341 = vld [vmem:[%s69 + $0xc] sm:$0xf]
    %v2342 = vld [vmem:[#allocation34] sm:$0x1]
    %v2343 = vld [vmem:[%s73] sm:$0xf]
    %v2344 = vld [vmem:[%s73 + $0x4] sm:$0xf]
    %v2345 = vld [vmem:[%s73 + $0x8] sm:$0xf]
    %v2346 = vld [vmem:[%s73 + $0xc] sm:$0xf]
    %v2347 = vld [vmem:[%s73 + $0x10] sm:$0xf]
    %v2348 = vld [vmem:[%s73 + $0x14] sm:$0xf]
    %v2349 = vld [vmem:[%s73 + $0x18] sm:$0xf]
    %v2350 = vld [vmem:[%s73 + $0x1c] sm:$0xf]
    %v2351 = vld [vmem:[#allocation35] sm:$0x1]
    %v2352 = vld [vmem:[#allocation37] sm:$0x1]
    %v2353 = vld [vmem:[#allocation38] sm:$0x1]
    %v2354 = vpack.c.bf16 %v609, %v609
    %v2359 = vunpack.c.l.b16 %v2314
    %v2360 = vunpack.c.l.b16 %v2315
    %v2361 = vunpack.c.l.b16 %v2316
    %v2362 = vunpack.c.l.b16 %v2317
    %v2363 = vpack.c.b16 %v2360, %v2359
    %v2364 = vpack.c.b16 %v2362, %v2361
    %v2368 = vsel %vm709, %v2354, 0
    %2370 = vmatprep.subr.bf16.mxu0 0
    %2371 = vmatpush1.bf16.msra.mxu0 0
    %2372 = vmatprep.subr.bf16.mxu0 0
    %2373 = vmatpush1.bf16.msra.mxu0 0
    %2374 = vmatprep.subr.bf16.mxu0 0
    %2375 = vmatpush1.bf16.msra.mxu0 0
    %2376 = vmatprep.subr.bf16.mxu0 0
    %2377 = vmatpush1.bf16.msra.mxu0 0
    %2378 = vmatprep.subr.bf16.mxu0 0
    %2379 = vmatpush1.bf16.msra.mxu0 0
    %2380 = vmatprep.subr.bf16.mxu0 0
    %2381 = vmatpush1.bf16.msra.mxu0 0
    %2382 = vmatprep.subr.bf16.mxu0 0
    %2383 = vmatpush1.bf16.msra.mxu0 %v2364
    %2384 = vmatprep.subr.bf16.mxu0 0
    %2385 = vmatpush1.bf16.msra.mxu0 %v2363
    %2386 = vmatprep.subr.bf16.mxu0 0
    %2387 = vmatpush2.bf16.msra.mxu0 0
    %2388 = vmatprep.subr.bf16.mxu0 0
    %2389 = vmatpush2.bf16.msra.mxu0 0
    %2390 = vmatprep.subr.bf16.mxu0 0
    %2391 = vmatpush2.bf16.msra.mxu0 0
    %2392 = vmatprep.subr.bf16.mxu0 0
    %2393 = vmatpush2.bf16.msra.mxu0 0
    %2394 = vmatprep.subr.bf16.mxu0 0
    %2395 = vmatpush2.bf16.msra.mxu0 0
    %2396 = vmatprep.subr.bf16.mxu0 0
    %2397 = vmatpush2.bf16.msra.mxu0 0
    %2398 = vmatprep.subr.bf16.mxu0 0
    %2399 = vmatpush2.bf16.msra.mxu0 0
    %2400 = vmatprep.subr.bf16.mxu0 0
    %2401 = vmatpush2.bf16.msra.mxu0 0
    %2402 = vmatprep.mubr.bf16.mxu0 0
    %2403 = vmatmul.mubr.bf16.gmra.mxu0 %v2368
    %v2404 = vpop.f32.mrf.mxu0
    %v2405 = vadd.f32 0.0, %v2404
    %v2406 = vpop.f32.mrf.mxu0
    %v2407 = vpop.f32.mrf.mxu0
    %v2408 = vpop.f32.mrf.mxu0
    %2409 = vdwg.mxu0
    %v2411 = vcombine.high %v2405, %v2405
    %v2413 = vpack.c.bf16 %v2405, %v2405
    %v2414 = vpack.c.bf16 %v2411, %v2411
    %2416 = vrot.lane.b32.xlu0 %v2413, 96
    %v2417 = vpop.permute.xlu0 %2416
    %v2419 = vsel %vm759, %v2413, 0
    %v2422 = vsel %vm759, %v2417, 0
    %2424 = vmatprep.subr.bf16.mxu0 0
    %2425 = vmatpush1.bf16.xpose.msra.mxu0 0
    %2426 = vmatprep.subr.bf16.mxu0 0
    %2427 = vmatpush1.bf16.xpose.msra.mxu0 0
    %2428 = vmatprep.subr.bf16.mxu0 0
    %2429 = vmatpush1.bf16.xpose.msra.mxu0 0
    %2430 = vmatprep.subr.bf16.mxu0 0
    %2431 = vmatpush1.bf16.xpose.msra.mxu0 0
    %2432 = vmatprep.subr.bf16.mxu0 0
    %2433 = vmatpush1.bf16.xpose.msra.mxu0 0
    %2434 = vmatprep.subr.bf16.mxu0 0
    %2435 = vmatpush1.bf16.xpose.msra.mxu0 0
    %2436 = vmatprep.subr.bf16.mxu0 0
    %2437 = vmatpush1.bf16.xpose.msra.mxu0 0
    %2438 = vmatprep.subr.bf16.mxu0 0
    %2439 = vmatpush1.bf16.xpose.msra.mxu0 %v2422
    %2440 = vmatprep.subr.bf16.mxu0 0
    %2441 = vmatpush2.bf16.xpose.msra.mxu0 0
    %2442 = vmatprep.subr.bf16.mxu0 0
    %2443 = vmatpush2.bf16.xpose.msra.mxu0 0
    %2444 = vmatprep.subr.bf16.mxu0 0
    %2445 = vmatpush2.bf16.xpose.msra.mxu0 0
    %2446 = vmatprep.subr.bf16.mxu0 0
    %2447 = vmatpush2.bf16.xpose.msra.mxu0 0
    %2448 = vmatprep.subr.bf16.mxu0 0
    %2449 = vmatpush2.bf16.xpose.msra.mxu0 0
    %2450 = vmatprep.subr.bf16.mxu0 0
    %2451 = vmatpush2.bf16.xpose.msra.mxu0 0
    %2452 = vmatprep.subr.bf16.mxu0 0
    %2453 = vmatpush2.bf16.xpose.msra.mxu0 0
    %2454 = vmatprep.subr.bf16.mxu0 0
    %2455 = vmatpush2.bf16.xpose.msra.mxu0 0
    %2456 = vmatprep.mubr.bf16.mxu0 0
    %2457 = vmatmul.mubr.bf16.gmra.mxu0 %v2419
    %v2458 = vpop.f32.mrf.mxu0
    %v2459 = vadd.f32 0.0, %v2458
    %v2460 = vpop.f32.mrf.mxu0
    %v2461 = vpop.f32.mrf.mxu0
    %v2462 = vpop.f32.mrf.mxu0
    %2463 = vdwg.mxu0
    %2465 = vrot.lane.b32.xlu0 %v2414, 96
    %v2466 = vpop.permute.xlu0 %2465
    %v2468 = vsel %vm759, %v2414, 0
    %v2471 = vsel %vm759, %v2466, 0
    %2473 = vmatprep.subr.bf16.mxu0 0
    %2474 = vmatpush1.bf16.xpose.msra.mxu0 0
    %2475 = vmatprep.subr.bf16.mxu0 0
    %2476 = vmatpush1.bf16.xpose.msra.mxu0 0
    %2477 = vmatprep.subr.bf16.mxu0 0
    %2478 = vmatpush1.bf16.xpose.msra.mxu0 0
    %2479 = vmatprep.subr.bf16.mxu0 0
    %2480 = vmatpush1.bf16.xpose.msra.mxu0 0
    %2481 = vmatprep.subr.bf16.mxu0 0
    %2482 = vmatpush1.bf16.xpose.msra.mxu0 0
    %2483 = vmatprep.subr.bf16.mxu0 0
    %2484 = vmatpush1.bf16.xpose.msra.mxu0 0
    %2485 = vmatprep.subr.bf16.mxu0 0
    %2486 = vmatpush1.bf16.xpose.msra.mxu0 0
    %2487 = vmatprep.subr.bf16.mxu0 0
    %2488 = vmatpush1.bf16.xpose.msra.mxu0 %v2471
    %2489 = vmatprep.subr.bf16.mxu0 0
    %2490 = vmatpush2.bf16.xpose.msra.mxu0 0
    %2491 = vmatprep.subr.bf16.mxu0 0
    %2492 = vmatpush2.bf16.xpose.msra.mxu0 0
    %2493 = vmatprep.subr.bf16.mxu0 0
    %2494 = vmatpush2.bf16.xpose.msra.mxu0 0
    %2495 = vmatprep.subr.bf16.mxu0 0
    %2496 = vmatpush2.bf16.xpose.msra.mxu0 0
    %2497 = vmatprep.subr.bf16.mxu0 0
    %2498 = vmatpush2.bf16.xpose.msra.mxu0 0
    %2499 = vmatprep.subr.bf16.mxu0 0
    %2500 = vmatpush2.bf16.xpose.msra.mxu0 0
    %2501 = vmatprep.subr.bf16.mxu0 0
    %2502 = vmatpush2.bf16.xpose.msra.mxu0 0
    %2503 = vmatprep.subr.bf16.mxu0 0
    %2504 = vmatpush2.bf16.xpose.msra.mxu0 0
    %2505 = vmatprep.mubr.bf16.mxu0 0
    %2506 = vmatmul.mubr.bf16.gmra.mxu0 %v2468
    %v2507 = vpop.f32.mrf.mxu0
    %v2508 = vadd.f32 0.0, %v2507
    %v2509 = vpop.f32.mrf.mxu0
    %v2510 = vpop.f32.mrf.mxu0
    %v2511 = vpop.f32.mrf.mxu0
    %2512 = vdwg.mxu0
    %v2513 = vmul.f32 %v2459, 0.25
    %v2514 = vmul.f32 %v2508, 0.25
    %vm2515 = vcmask 27648
    %v2516 = vsel %vm2515, %v2513, -inf
    %2517 = vmax.xlane.f32.xlu0 %v2516
    %v2518 = vpop.xlane.xlu0 %2517
    %v2519 = vsel %vm2515, %v2514, -inf
    %2520 = vmax.xlane.f32.xlu0 %v2519
    %v2521 = vpop.xlane.xlu0 %2520
    %v2522 = vsub.f32 %v2513, %v2518
    %v2523 = vsub.f32 %v2514, %v2521
    %v2524 = vmul.f32 %v2522, 1.442695
    %v2525 = vpow.pop %v2524
    %v2526 = vmul.f32 %v2523, 1.442695
    %v2527 = vpow.pop %v2526
    %v2528 = vsel %vm2515, %v2525, 0.0
    %2529 = vadd.xlane.f32.xlu0 %v2528
    %v2530 = vpop.xlane.xlu0 %2529
    %v2531 = vsel %vm2515, %v2527, 0.0
    %2532 = vadd.xlane.f32.xlu0 %v2531
    %v2533 = vpop.xlane.xlu0 %2532
    %v2534 = vrcp.pop %v2530
    %v2535 = vrcp.pop %v2533
    %v2536 = vmul.f32 %v2525, %v2534
    %v2537 = vmul.f32 %v2527, %v2535
    %v2538 = vpack.c.bf16 %v2536, %v2536
    %v2539 = vpack.c.bf16 %v2537, %v2537
    %2540 = vrot.lane.b32.xlu0 %v2413, 64
    %v2541 = vpop.permute.xlu0 %2540
    %vm2542 = vcmask 31744
    %v2544 = vsel %vm2542, %v2538, 0
    %vm2546 = vcmask 1041408
    %v2548 = vsel %vm2546, %v2541, 0
    %2550 = vmatprep.subr.bf16.mxu0 0
    %2551 = vmatpush1.bf16.msra.mxu0 0
    %2552 = vmatprep.subr.bf16.mxu0 0
    %2553 = vmatpush1.bf16.msra.mxu0 0
    %2554 = vmatprep.subr.bf16.mxu0 0
    %2555 = vmatpush1.bf16.msra.mxu0 0
    %2556 = vmatprep.subr.bf16.mxu0 0
    %2557 = vmatpush1.bf16.msra.mxu0 0
    %2558 = vmatprep.subr.bf16.mxu0 0
    %2559 = vmatpush1.bf16.msra.mxu0 0
    %2560 = vmatprep.subr.bf16.mxu0 0
    %2561 = vmatpush1.bf16.msra.mxu0 0
    %2562 = vmatprep.subr.bf16.mxu0 0
    %2563 = vmatpush1.bf16.msra.mxu0 0
    %2564 = vmatprep.subr.bf16.mxu0 0
    %2565 = vmatpush1.bf16.msra.mxu0 %v2548
    %2566 = vmatprep.subr.bf16.mxu0 0
    %2567 = vmatpush2.bf16.msra.mxu0 0
    %2568 = vmatprep.subr.bf16.mxu0 0
    %2569 = vmatpush2.bf16.msra.mxu0 0
    %2570 = vmatprep.subr.bf16.mxu0 0
    %2571 = vmatpush2.bf16.msra.mxu0 0
    %2572 = vmatprep.subr.bf16.mxu0 0
    %2573 = vmatpush2.bf16.msra.mxu0 0
    %2574 = vmatprep.subr.bf16.mxu0 0
    %2575 = vmatpush2.bf16.msra.mxu0 0
    %2576 = vmatprep.subr.bf16.mxu0 0
    %2577 = vmatpush2.bf16.msra.mxu0 0
    %2578 = vmatprep.subr.bf16.mxu0 0
    %2579 = vmatpush2.bf16.msra.mxu0 0
    %2580 = vmatprep.subr.bf16.mxu0 0
    %2581 = vmatpush2.bf16.msra.mxu0 0
    %2582 = vmatprep.mubr.bf16.mxu0 0
    %2583 = vmatmul.mubr.bf16.gmra.mxu0 %v2544
    %v2584 = vpop.f32.mrf.mxu0
    %v2585 = vadd.f32 0.0, %v2584
    %v2586 = vpop.f32.mrf.mxu0
    %v2587 = vpop.f32.mrf.mxu0
    %v2588 = vpop.f32.mrf.mxu0
    %2589 = vdwg.mxu0
    %2590 = vrot.lane.b32.xlu0 %v2414, 64
    %v2591 = vpop.permute.xlu0 %2590
    %v2593 = vsel %vm2542, %v2539, 0
    %v2596 = vsel %vm2546, %v2591, 0
    %2598 = vmatprep.subr.bf16.mxu0 0
    %2599 = vmatpush1.bf16.msra.mxu0 0
    %2600 = vmatprep.subr.bf16.mxu0 0
    %2601 = vmatpush1.bf16.msra.mxu0 0
    %2602 = vmatprep.subr.bf16.mxu0 0
    %2603 = vmatpush1.bf16.msra.mxu0 0
    %2604 = vmatprep.subr.bf16.mxu0 0
    %2605 = vmatpush1.bf16.msra.mxu0 0
    %2606 = vmatprep.subr.bf16.mxu0 0
    %2607 = vmatpush1.bf16.msra.mxu0 0
    %2608 = vmatprep.subr.bf16.mxu0 0
    %2609 = vmatpush1.bf16.msra.mxu0 0
    %2610 = vmatprep.subr.bf16.mxu0 0
    %2611 = vmatpush1.bf16.msra.mxu0 0
    %2612 = vmatprep.subr.bf16.mxu0 0
    %2613 = vmatpush1.bf16.msra.mxu0 %v2596
    %2614 = vmatprep.subr.bf16.mxu0 0
    %2615 = vmatpush2.bf16.msra.mxu0 0
    %2616 = vmatprep.subr.bf16.mxu0 0
    %2617 = vmatpush2.bf16.msra.mxu0 0
    %2618 = vmatprep.subr.bf16.mxu0 0
    %2619 = vmatpush2.bf16.msra.mxu0 0
    %2620 = vmatprep.subr.bf16.mxu0 0
    %2621 = vmatpush2.bf16.msra.mxu0 0
    %2622 = vmatprep.subr.bf16.mxu0 0
    %2623 = vmatpush2.bf16.msra.mxu0 0
    %2624 = vmatprep.subr.bf16.mxu0 0
    %2625 = vmatpush2.bf16.msra.mxu0 0
    %2626 = vmatprep.subr.bf16.mxu0 0
    %2627 = vmatpush2.bf16.msra.mxu0 0
    %2628 = vmatprep.subr.bf16.mxu0 0
    %2629 = vmatpush2.bf16.msra.mxu0 0
    %2630 = vmatprep.mubr.bf16.mxu0 0
    %2631 = vmatmul.mubr.bf16.gmra.mxu0 %v2593
    %v2632 = vpop.f32.mrf.mxu0
    %v2633 = vadd.f32 0.0, %v2632
    %v2634 = vpop.f32.mrf.mxu0
    %v2635 = vpop.f32.mrf.mxu0
    %v2636 = vpop.f32.mrf.mxu0
    %2637 = vdwg.mxu0
    %2638 = vrot.lane.b32.xlu0 %v2413, 112
    %v2639 = vpop.permute.xlu0 %2638
    %2640 = vrot.lane.b32.xlu0 %v2413, 80
    %v2641 = vpop.permute.xlu0 %2640
    %v2643 = vsel %vm759, %v2639, 0
    %v2646 = vsel %vm759, %v2641, 0
    %2648 = vmatprep.subr.bf16.mxu0 0
    %2649 = vmatpush1.bf16.xpose.msra.mxu0 0
    %2650 = vmatprep.subr.bf16.mxu0 0
    %2651 = vmatpush1.bf16.xpose.msra.mxu0 0
    %2652 = vmatprep.subr.bf16.mxu0 0
    %2653 = vmatpush1.bf16.xpose.msra.mxu0 0
    %2654 = vmatprep.subr.bf16.mxu0 0
    %2655 = vmatpush1.bf16.xpose.msra.mxu0 0
    %2656 = vmatprep.subr.bf16.mxu0 0
    %2657 = vmatpush1.bf16.xpose.msra.mxu0 0
    %2658 = vmatprep.subr.bf16.mxu0 0
    %2659 = vmatpush1.bf16.xpose.msra.mxu0 0
    %2660 = vmatprep.subr.bf16.mxu0 0
    %2661 = vmatpush1.bf16.xpose.msra.mxu0 0
    %2662 = vmatprep.subr.bf16.mxu0 0
    %2663 = vmatpush1.bf16.xpose.msra.mxu0 %v2646
    %2664 = vmatprep.subr.bf16.mxu0 0
    %2665 = vmatpush2.bf16.xpose.msra.mxu0 0
    %2666 = vmatprep.subr.bf16.mxu0 0
    %2667 = vmatpush2.bf16.xpose.msra.mxu0 0
    %2668 = vmatprep.subr.bf16.mxu0 0
    %2669 = vmatpush2.bf16.xpose.msra.mxu0 0
    %2670 = vmatprep.subr.bf16.mxu0 0
    %2671 = vmatpush2.bf16.xpose.msra.mxu0 0
    %2672 = vmatprep.subr.bf16.mxu0 0
    %2673 = vmatpush2.bf16.xpose.msra.mxu0 0
    %2674 = vmatprep.subr.bf16.mxu0 0
    %2675 = vmatpush2.bf16.xpose.msra.mxu0 0
    %2676 = vmatprep.subr.bf16.mxu0 0
    %2677 = vmatpush2.bf16.xpose.msra.mxu0 0
    %2678 = vmatprep.subr.bf16.mxu0 0
    %2679 = vmatpush2.bf16.xpose.msra.mxu0 0
    %2680 = vmatprep.mubr.bf16.mxu0 0
    %2681 = vmatmul.mubr.bf16.gmra.mxu0 %v2643
    %v2682 = vpop.f32.mrf.mxu0
    %v2683 = vadd.f32 0.0, %v2682
    %v2684 = vpop.f32.mrf.mxu0
    %v2685 = vpop.f32.mrf.mxu0
    %v2686 = vpop.f32.mrf.mxu0
    %2687 = vdwg.mxu0
    %2688 = vrot.lane.b32.xlu0 %v2414, 112
    %v2689 = vpop.permute.xlu0 %2688
    %2690 = vrot.lane.b32.xlu0 %v2414, 80
    %v2691 = vpop.permute.xlu0 %2690
    %v2693 = vsel %vm759, %v2689, 0
    %v2696 = vsel %vm759, %v2691, 0
    %2698 = vmatprep.subr.bf16.mxu0 0
    %2699 = vmatpush1.bf16.xpose.msra.mxu0 0
    %2700 = vmatprep.subr.bf16.mxu0 0
    %2701 = vmatpush1.bf16.xpose.msra.mxu0 0
    %2702 = vmatprep.subr.bf16.mxu0 0
    %2703 = vmatpush1.bf16.xpose.msra.mxu0 0
    %2704 = vmatprep.subr.bf16.mxu0 0
    %2705 = vmatpush1.bf16.xpose.msra.mxu0 0
    %2706 = vmatprep.subr.bf16.mxu0 0
    %2707 = vmatpush1.bf16.xpose.msra.mxu0 0
    %2708 = vmatprep.subr.bf16.mxu0 0
    %2709 = vmatpush1.bf16.xpose.msra.mxu0 0
    %2710 = vmatprep.subr.bf16.mxu0 0
    %2711 = vmatpush1.bf16.xpose.msra.mxu0 0
    %2712 = vmatprep.subr.bf16.mxu0 0
    %2713 = vmatpush1.bf16.xpose.msra.mxu0 %v2696
    %2714 = vmatprep.subr.bf16.mxu0 0
    %2715 = vmatpush2.bf16.xpose.msra.mxu0 0
    %2716 = vmatprep.subr.bf16.mxu0 0
    %2717 = vmatpush2.bf16.xpose.msra.mxu0 0
    %2718 = vmatprep.subr.bf16.mxu0 0
    %2719 = vmatpush2.bf16.xpose.msra.mxu0 0
    %2720 = vmatprep.subr.bf16.mxu0 0
    %2721 = vmatpush2.bf16.xpose.msra.mxu0 0
    %2722 = vmatprep.subr.bf16.mxu0 0
    %2723 = vmatpush2.bf16.xpose.msra.mxu0 0
    %2724 = vmatprep.subr.bf16.mxu0 0
    %2725 = vmatpush2.bf16.xpose.msra.mxu0 0
    %2726 = vmatprep.subr.bf16.mxu0 0
    %2727 = vmatpush2.bf16.xpose.msra.mxu0 0
    %2728 = vmatprep.subr.bf16.mxu0 0
    %2729 = vmatpush2.bf16.xpose.msra.mxu0 0
    %2730 = vmatprep.mubr.bf16.mxu0 0
    %2731 = vmatmul.mubr.bf16.gmra.mxu0 %v2693
    %v2732 = vpop.f32.mrf.mxu0
    %v2733 = vadd.f32 0.0, %v2732
    %v2734 = vpop.f32.mrf.mxu0
    %v2735 = vpop.f32.mrf.mxu0
    %v2736 = vpop.f32.mrf.mxu0
    %2737 = vdwg.mxu0
    %v2738 = vmul.f32 %v2683, 0.25
    %v2739 = vmul.f32 %v2733, 0.25
    %v2740 = vsel %vm2515, %v2738, -inf
    %2741 = vmax.xlane.f32.xlu0 %v2740
    %v2742 = vpop.xlane.xlu0 %2741
    %v2743 = vsel %vm2515, %v2739, -inf
    %2744 = vmax.xlane.f32.xlu0 %v2743
    %v2745 = vpop.xlane.xlu0 %2744
    %v2746 = vsub.f32 %v2738, %v2742
    %v2747 = vsub.f32 %v2739, %v2745
    %v2748 = vmul.f32 %v2746, 1.442695
    %v2749 = vpow.pop %v2748
    %v2750 = vmul.f32 %v2747, 1.442695
    %v2751 = vpow.pop %v2750
    %v2752 = vsel %vm2515, %v2749, 0.0
    %2753 = vadd.xlane.f32.xlu0 %v2752
    %v2754 = vpop.xlane.xlu0 %2753
    %v2755 = vsel %vm2515, %v2751, 0.0
    %2756 = vadd.xlane.f32.xlu0 %v2755
    %v2757 = vpop.xlane.xlu0 %2756
    %v2758 = vrcp.pop %v2754
    %v2759 = vrcp.pop %v2757
    %v2760 = vmul.f32 %v2749, %v2758
    %v2761 = vmul.f32 %v2751, %v2759
    %v2762 = vpack.c.bf16 %v2760, %v2760
    %v2763 = vpack.c.bf16 %v2761, %v2761
    %2764 = vrot.lane.b32.xlu0 %v2413, 48
    %v2765 = vpop.permute.xlu0 %2764
    %v2767 = vsel %vm2542, %v2762, 0
    %v2770 = vsel %vm2546, %v2765, 0
    %2772 = vmatprep.subr.bf16.mxu0 0
    %2773 = vmatpush1.bf16.msra.mxu0 0
    %2774 = vmatprep.subr.bf16.mxu0 0
    %2775 = vmatpush1.bf16.msra.mxu0 0
    %2776 = vmatprep.subr.bf16.mxu0 0
    %2777 = vmatpush1.bf16.msra.mxu0 0
    %2778 = vmatprep.subr.bf16.mxu0 0
    %2779 = vmatpush1.bf16.msra.mxu0 0
    %2780 = vmatprep.subr.bf16.mxu0 0
    %2781 = vmatpush1.bf16.msra.mxu0 0
    %2782 = vmatprep.subr.bf16.mxu0 0
    %2783 = vmatpush1.bf16.msra.mxu0 0
    %2784 = vmatprep.subr.bf16.mxu0 0
    %2785 = vmatpush1.bf16.msra.mxu0 0
    %2786 = vmatprep.subr.bf16.mxu0 0
    %2787 = vmatpush1.bf16.msra.mxu0 %v2770
    %2788 = vmatprep.subr.bf16.mxu0 0
    %2789 = vmatpush2.bf16.msra.mxu0 0
    %2790 = vmatprep.subr.bf16.mxu0 0
    %2791 = vmatpush2.bf16.msra.mxu0 0
    %2792 = vmatprep.subr.bf16.mxu0 0
    %2793 = vmatpush2.bf16.msra.mxu0 0
    %2794 = vmatprep.subr.bf16.mxu0 0
    %2795 = vmatpush2.bf16.msra.mxu0 0
    %2796 = vmatprep.subr.bf16.mxu0 0
    %2797 = vmatpush2.bf16.msra.mxu0 0
    %2798 = vmatprep.subr.bf16.mxu0 0
    %2799 = vmatpush2.bf16.msra.mxu0 0
    %2800 = vmatprep.subr.bf16.mxu0 0
    %2801 = vmatpush2.bf16.msra.mxu0 0
    %2802 = vmatprep.subr.bf16.mxu0 0
    %2803 = vmatpush2.bf16.msra.mxu0 0
    %2804 = vmatprep.mubr.bf16.mxu0 0
    %2805 = vmatmul.mubr.bf16.gmra.mxu0 %v2767
    %v2806 = vpop.f32.mrf.mxu0
    %v2807 = vadd.f32 0.0, %v2806
    %v2808 = vpop.f32.mrf.mxu0
    %v2809 = vpop.f32.mrf.mxu0
    %v2810 = vpop.f32.mrf.mxu0
    %2811 = vdwg.mxu0
    %2812 = vrot.lane.b32.xlu0 %v2414, 48
    %v2813 = vpop.permute.xlu0 %2812
    %v2815 = vsel %vm2542, %v2763, 0
    %v2818 = vsel %vm2546, %v2813, 0
    %2820 = vmatprep.subr.bf16.mxu0 0
    %2821 = vmatpush1.bf16.msra.mxu0 0
    %2822 = vmatprep.subr.bf16.mxu0 0
    %2823 = vmatpush1.bf16.msra.mxu0 0
    %2824 = vmatprep.subr.bf16.mxu0 0
    %2825 = vmatpush1.bf16.msra.mxu0 0
    %2826 = vmatprep.subr.bf16.mxu0 0
    %2827 = vmatpush1.bf16.msra.mxu0 0
    %2828 = vmatprep.subr.bf16.mxu0 0
    %2829 = vmatpush1.bf16.msra.mxu0 0
    %2830 = vmatprep.subr.bf16.mxu0 0
    %2831 = vmatpush1.bf16.msra.mxu0 0
    %2832 = vmatprep.subr.bf16.mxu0 0
    %2833 = vmatpush1.bf16.msra.mxu0 0
    %2834 = vmatprep.subr.bf16.mxu0 0
    %2835 = vmatpush1.bf16.msra.mxu0 %v2818
    %2836 = vmatprep.subr.bf16.mxu0 0
    %2837 = vmatpush2.bf16.msra.mxu0 0
    %2838 = vmatprep.subr.bf16.mxu0 0
    %2839 = vmatpush2.bf16.msra.mxu0 0
    %2840 = vmatprep.subr.bf16.mxu0 0
    %2841 = vmatpush2.bf16.msra.mxu0 0
    %2842 = vmatprep.subr.bf16.mxu0 0
    %2843 = vmatpush2.bf16.msra.mxu0 0
    %2844 = vmatprep.subr.bf16.mxu0 0
    %2845 = vmatpush2.bf16.msra.mxu0 0
    %2846 = vmatprep.subr.bf16.mxu0 0
    %2847 = vmatpush2.bf16.msra.mxu0 0
    %2848 = vmatprep.subr.bf16.mxu0 0
    %2849 = vmatpush2.bf16.msra.mxu0 0
    %2850 = vmatprep.subr.bf16.mxu0 0
    %2851 = vmatpush2.bf16.msra.mxu0 0
    %2852 = vmatprep.mubr.bf16.mxu0 0
    %2853 = vmatmul.mubr.bf16.gmra.mxu0 %v2815
    %v2854 = vpop.f32.mrf.mxu0
    %v2855 = vadd.f32 0.0, %v2854
    %v2856 = vpop.f32.mrf.mxu0
    %v2857 = vpop.f32.mrf.mxu0
    %v2858 = vpop.f32.mrf.mxu0
    %2859 = vdwg.mxu0
    %2862 = vrot.lane.b32.xlu0 %v2807, 16
    %v2863 = vpop.permute.xlu0 %2862
    %2864 = vrot.lane.b32.xlu0 %v2855, 16
    %v2865 = vpop.permute.xlu0 %2864
    %v2868 = vsel %vm759, %v2585, %v2863
    %v2869 = vsel %vm759, %v2633, %v2865
    %v2872 = vcombine.low %v2868, %v2869
    %v2874 = vpack.c.bf16 %v2872, %v2872
    %v2879 = vunpack.c.l.b16 %v2318
    %v2880 = vunpack.c.l.b16 %v2319
    %v2881 = vunpack.c.l.b16 %v2320
    %v2882 = vunpack.c.l.b16 %v2321
    %v2883 = vpack.c.b16 %v2880, %v2879
    %v2884 = vpack.c.b16 %v2882, %v2881
    %v2888 = vsel %vm709, %v2874, 0
    %2890 = vmatprep.subr.bf16.mxu0 0
    %2891 = vmatpush1.bf16.msra.mxu0 0
    %2892 = vmatprep.subr.bf16.mxu0 0
    %2893 = vmatpush1.bf16.msra.mxu0 0
    %2894 = vmatprep.subr.bf16.mxu0 0
    %2895 = vmatpush1.bf16.msra.mxu0 0
    %2896 = vmatprep.subr.bf16.mxu0 0
    %2897 = vmatpush1.bf16.msra.mxu0 0
    %2898 = vmatprep.subr.bf16.mxu0 0
    %2899 = vmatpush1.bf16.msra.mxu0 0
    %2900 = vmatprep.subr.bf16.mxu0 0
    %2901 = vmatpush1.bf16.msra.mxu0 0
    %2902 = vmatprep.subr.bf16.mxu0 0
    %2903 = vmatpush1.bf16.msra.mxu0 %v2884
    %2904 = vmatprep.subr.bf16.mxu0 0
    %2905 = vmatpush1.bf16.msra.mxu0 %v2883
    %2906 = vmatprep.subr.bf16.mxu0 0
    %2907 = vmatpush2.bf16.msra.mxu0 0
    %2908 = vmatprep.subr.bf16.mxu0 0
    %2909 = vmatpush2.bf16.msra.mxu0 0
    %2910 = vmatprep.subr.bf16.mxu0 0
    %2911 = vmatpush2.bf16.msra.mxu0 0
    %2912 = vmatprep.subr.bf16.mxu0 0
    %2913 = vmatpush2.bf16.msra.mxu0 0
    %2914 = vmatprep.subr.bf16.mxu0 0
    %2915 = vmatpush2.bf16.msra.mxu0 0
    %2916 = vmatprep.subr.bf16.mxu0 0
    %2917 = vmatpush2.bf16.msra.mxu0 0
    %2918 = vmatprep.subr.bf16.mxu0 0
    %2919 = vmatpush2.bf16.msra.mxu0 0
    %2920 = vmatprep.subr.bf16.mxu0 0
    %2921 = vmatpush2.bf16.msra.mxu0 0
    %2922 = vmatprep.mubr.bf16.mxu0 0
    %2923 = vmatmul.mubr.bf16.gmra.mxu0 %v2888
    %v2924 = vpop.f32.mrf.mxu0
    %v2925 = vadd.f32 %v609, %v2924
    %v2926 = vpop.f32.mrf.mxu0
    %v2927 = vpop.f32.mrf.mxu0
    %v2928 = vpop.f32.mrf.mxu0
    %2929 = vdwg.mxu0
    %v2930 = vsel %vm709, %v2925, 0.0
    %2931 = vadd.xlane.f32.xlu0 %v2930
    %v2932 = vpop.xlane.xlu0 %2931
    %v2933 = vmul.f32 %v2932, %v1272
    %v2934 = vsub.f32 %v2925, %v2933
    %v2935 = vmul.f32 %v2934, %v2934
    %v2936 = vsel %vm709, %v2935, 0.0
    %2937 = vadd.xlane.f32.xlu0 %v2936
    %v2938 = vpop.xlane.xlu0 %2937
    %v2939 = vmul.f32 %v2938, %v1272
    %v2940 = vadd.f32 %v2939, 1e-06
    %v2941 = vrsqrt.pop %v2940
    %v2942 = vmul.f32 %v2934, %v2941
    %v2944 = vlaneseq
    %v2945 = vshrl.u32 %v2944, 7
    %v2946 = vsub.s32 0, %v2945
    %v2947 = vrot.slane %v2322, %v2946
    %v2949 = vmul.f32 %v2942, %v2947
    %v2951 = vlaneseq
    %v2952 = vshrl.u32 %v2951, 7
    %v2953 = vsub.s32 0, %v2952
    %v2954 = vrot.slane %v2323, %v2953
    %v2956 = vadd.f32 %v2949, %v2954
    %v2957 = vpack.c.bf16 %v2956, %v2956
    %v2962 = vunpack.c.l.b16 %v2324
    %v2963 = vunpack.c.l.b16 %v2325
    %v2964 = vunpack.c.l.b16 %v2326
    %v2965 = vunpack.c.l.b16 %v2327
    %v2966 = vpack.c.b16 %v2963, %v2962
    %v2967 = vpack.c.b16 %v2965, %v2964
    %v2971 = vsel %vm709, %v2957, 0
    %2973 = vmatprep.subr.bf16.mxu0 0
    %2974 = vmatpush1.bf16.msra.mxu0 0
    %2975 = vmatprep.subr.bf16.mxu0 0
    %2976 = vmatpush1.bf16.msra.mxu0 0
    %2977 = vmatprep.subr.bf16.mxu0 0
    %2978 = vmatpush1.bf16.msra.mxu0 0
    %2979 = vmatprep.subr.bf16.mxu0 0
    %2980 = vmatpush1.bf16.msra.mxu0 0
    %2981 = vmatprep.subr.bf16.mxu0 0
    %2982 = vmatpush1.bf16.msra.mxu0 0
    %2983 = vmatprep.subr.bf16.mxu0 0
    %2984 = vmatpush1.bf16.msra.mxu0 0
    %2985 = vmatprep.subr.bf16.mxu0 0
    %2986 = vmatpush1.bf16.msra.mxu0 %v2967
    %2987 = vmatprep.subr.bf16.mxu0 0
    %2988 = vmatpush1.bf16.msra.mxu0 %v2966
    %2989 = vmatprep.subr.bf16.mxu0 0
    %2990 = vmatpush2.bf16.msra.mxu0 0
    %2991 = vmatprep.subr.bf16.mxu0 0
    %2992 = vmatpush2.bf16.msra.mxu0 0
    %2993 = vmatprep.subr.bf16.mxu0 0
    %2994 = vmatpush2.bf16.msra.mxu0 0
    %2995 = vmatprep.subr.bf16.mxu0 0
    %2996 = vmatpush2.bf16.msra.mxu0 0
    %2997 = vmatprep.subr.bf16.mxu0 0
    %2998 = vmatpush2.bf16.msra.mxu0 0
    %2999 = vmatprep.subr.bf16.mxu0 0
    %3000 = vmatpush2.bf16.msra.mxu0 0
    %3001 = vmatprep.subr.bf16.mxu0 0
    %3002 = vmatpush2.bf16.msra.mxu0 0
    %3003 = vmatprep.subr.bf16.mxu0 0
    %3004 = vmatpush2.bf16.msra.mxu0 0
    %3005 = vmatprep.mubr.bf16.mxu0 0
    %3006 = vmatmul.mubr.bf16.gmra.mxu0 %v2971
    %v3007 = vpop.f32.mrf.mxu0
    %v3008 = vadd.f32 0.0, %v3007
    %v3009 = vpop.f32.mrf.mxu0
    %v3010 = vpop.f32.mrf.mxu0
    %v3011 = vpop.f32.mrf.mxu0
    %3012 = vdwg.mxu0
    %v3013 = vpack.c.bf16 %v2313, %v2312
    %v3018 = vunpack.c.l.b16 %v2328
    %v3019 = vunpack.c.l.b16 %v2329
    %v3020 = vunpack.c.l.b16 %v2330
    %v3021 = vunpack.c.l.b16 %v2331
    %v3022 = vpack.c.b16 %v3019, %v3018
    %v3023 = vpack.c.b16 %v3021, %v3020
    %v3027 = vsel %vm709, %v3013, 0
    %3029 = vmatprep.subr.bf16.mxu0 0
    %3030 = vmatpush1.bf16.msra.mxu0 0
    %3031 = vmatprep.subr.bf16.mxu0 0
    %3032 = vmatpush1.bf16.msra.mxu0 0
    %3033 = vmatprep.subr.bf16.mxu0 0
    %3034 = vmatpush1.bf16.msra.mxu0 0
    %3035 = vmatprep.subr.bf16.mxu0 0
    %3036 = vmatpush1.bf16.msra.mxu0 0
    %3037 = vmatprep.subr.bf16.mxu0 0
    %3038 = vmatpush1.bf16.msra.mxu0 0
    %3039 = vmatprep.subr.bf16.mxu0 0
    %3040 = vmatpush1.bf16.msra.mxu0 0
    %3041 = vmatprep.subr.bf16.mxu0 0
    %3042 = vmatpush1.bf16.msra.mxu0 %v3023
    %3043 = vmatprep.subr.bf16.mxu0 0
    %3044 = vmatpush1.bf16.msra.mxu0 %v3022
    %3045 = vmatprep.subr.bf16.mxu0 0
    %3046 = vmatpush2.bf16.msra.mxu0 0
    %3047 = vmatprep.subr.bf16.mxu0 0
    %3048 = vmatpush2.bf16.msra.mxu0 0
    %3049 = vmatprep.subr.bf16.mxu0 0
    %3050 = vmatpush2.bf16.msra.mxu0 0
    %3051 = vmatprep.subr.bf16.mxu0 0
    %3052 = vmatpush2.bf16.msra.mxu0 0
    %3053 = vmatprep.subr.bf16.mxu0 0
    %3054 = vmatpush2.bf16.msra.mxu0 0
    %3055 = vmatprep.subr.bf16.mxu0 0
    %3056 = vmatpush2.bf16.msra.mxu0 0
    %3057 = vmatprep.subr.bf16.mxu0 0
    %3058 = vmatpush2.bf16.msra.mxu0 0
    %3059 = vmatprep.subr.bf16.mxu0 0
    %3060 = vmatpush2.bf16.msra.mxu0 0
    %3061 = vmatprep.mubr.bf16.mxu0 0
    %3062 = vmatmul.mubr.bf16.gmra.mxu0 %v3027
    %v3063 = vpop.f32.mrf.mxu0
    %v3064 = vadd.f32 0.0, %v3063
    %v3065 = vpop.f32.mrf.mxu0
    %v3066 = vpop.f32.mrf.mxu0
    %v3067 = vadd.f32 0.0, %v3066
    %v3068 = vpop.f32.mrf.mxu0
    %3069 = vdwg.mxu0
    %v3071 = vcombine.high %v3008, %v3008
    %v3073 = vpack.c.bf16 %v3008, %v3008
    %v3074 = vpack.c.bf16 %v3071, %v3071
    %v3075 = vpack.c.bf16 %v3064, %v3064
    %v3076 = vpack.c.bf16 %v3067, %v3067
    %v3078 = vsel %vm759, %v3073, 0
    %v3081 = vsel %vm759, %v3075, 0
    %3083 = vmatprep.subr.bf16.mxu0 0
    %3084 = vmatpush1.bf16.xpose.msra.mxu0 0
    %3085 = vmatprep.subr.bf16.mxu0 0
    %3086 = vmatpush1.bf16.xpose.msra.mxu0 0
    %3087 = vmatprep.subr.bf16.mxu0 0
    %3088 = vmatpush1.bf16.xpose.msra.mxu0 0
    %3089 = vmatprep.subr.bf16.mxu0 0
    %3090 = vmatpush1.bf16.xpose.msra.mxu0 0
    %3091 = vmatprep.subr.bf16.mxu0 0
    %3092 = vmatpush1.bf16.xpose.msra.mxu0 0
    %3093 = vmatprep.subr.bf16.mxu0 0
    %3094 = vmatpush1.bf16.xpose.msra.mxu0 0
    %3095 = vmatprep.subr.bf16.mxu0 0
    %3096 = vmatpush1.bf16.xpose.msra.mxu0 0
    %3097 = vmatprep.subr.bf16.mxu0 0
    %3098 = vmatpush1.bf16.xpose.msra.mxu0 %v3081
    %3099 = vmatprep.subr.bf16.mxu0 0
    %3100 = vmatpush2.bf16.xpose.msra.mxu0 0
    %3101 = vmatprep.subr.bf16.mxu0 0
    %3102 = vmatpush2.bf16.xpose.msra.mxu0 0
    %3103 = vmatprep.subr.bf16.mxu0 0
    %3104 = vmatpush2.bf16.xpose.msra.mxu0 0
    %3105 = vmatprep.subr.bf16.mxu0 0
    %3106 = vmatpush2.bf16.xpose.msra.mxu0 0
    %3107 = vmatprep.subr.bf16.mxu0 0
    %3108 = vmatpush2.bf16.xpose.msra.mxu0 0
    %3109 = vmatprep.subr.bf16.mxu0 0
    %3110 = vmatpush2.bf16.xpose.msra.mxu0 0
    %3111 = vmatprep.subr.bf16.mxu0 0
    %3112 = vmatpush2.bf16.xpose.msra.mxu0 0
    %3113 = vmatprep.subr.bf16.mxu0 0
    %3114 = vmatpush2.bf16.xpose.msra.mxu0 0
    %3115 = vmatprep.mubr.bf16.mxu0 0
    %3116 = vmatmul.mubr.bf16.gmra.mxu0 %v3078
    %v3117 = vpop.f32.mrf.mxu0
    %v3118 = vadd.f32 0.0, %v3117
    %v3119 = vpop.f32.mrf.mxu0
    %v3120 = vpop.f32.mrf.mxu0
    %v3121 = vpop.f32.mrf.mxu0
    %3122 = vdwg.mxu0
    %v3124 = vsel %vm759, %v3074, 0
    %v3127 = vsel %vm759, %v3076, 0
    %3129 = vmatprep.subr.bf16.mxu0 0
    %3130 = vmatpush1.bf16.xpose.msra.mxu0 0
    %3131 = vmatprep.subr.bf16.mxu0 0
    %3132 = vmatpush1.bf16.xpose.msra.mxu0 0
    %3133 = vmatprep.subr.bf16.mxu0 0
    %3134 = vmatpush1.bf16.xpose.msra.mxu0 0
    %3135 = vmatprep.subr.bf16.mxu0 0
    %3136 = vmatpush1.bf16.xpose.msra.mxu0 0
    %3137 = vmatprep.subr.bf16.mxu0 0
    %3138 = vmatpush1.bf16.xpose.msra.mxu0 0
    %3139 = vmatprep.subr.bf16.mxu0 0
    %3140 = vmatpush1.bf16.xpose.msra.mxu0 0
    %3141 = vmatprep.subr.bf16.mxu0 0
    %3142 = vmatpush1.bf16.xpose.msra.mxu0 0
    %3143 = vmatprep.subr.bf16.mxu0 0
    %3144 = vmatpush1.bf16.xpose.msra.mxu0 %v3127
    %3145 = vmatprep.subr.bf16.mxu0 0
    %3146 = vmatpush2.bf16.xpose.msra.mxu0 0
    %3147 = vmatprep.subr.bf16.mxu0 0
    %3148 = vmatpush2.bf16.xpose.msra.mxu0 0
    %3149 = vmatprep.subr.bf16.mxu0 0
    %3150 = vmatpush2.bf16.xpose.msra.mxu0 0
    %3151 = vmatprep.subr.bf16.mxu0 0
    %3152 = vmatpush2.bf16.xpose.msra.mxu0 0
    %3153 = vmatprep.subr.bf16.mxu0 0
    %3154 = vmatpush2.bf16.xpose.msra.mxu0 0
    %3155 = vmatprep.subr.bf16.mxu0 0
    %3156 = vmatpush2.bf16.xpose.msra.mxu0 0
    %3157 = vmatprep.subr.bf16.mxu0 0
    %3158 = vmatpush2.bf16.xpose.msra.mxu0 0
    %3159 = vmatprep.subr.bf16.mxu0 0
    %3160 = vmatpush2.bf16.xpose.msra.mxu0 0
    %3161 = vmatprep.mubr.bf16.mxu0 0
    %3162 = vmatmul.mubr.bf16.gmra.mxu0 %v3124
    %v3163 = vpop.f32.mrf.mxu0
    %v3164 = vadd.f32 0.0, %v3163
    %v3165 = vpop.f32.mrf.mxu0
    %v3166 = vpop.f32.mrf.mxu0
    %v3167 = vpop.f32.mrf.mxu0
    %3168 = vdwg.mxu0
    %v3169 = vmul.f32 %v3118, 0.25
    %v3170 = vmul.f32 %v3164, 0.25
    %vm3171 = vcmask 60416
    %v3172 = vsel %vm3171, %v3169, -inf
    %3173 = vmax.xlane.f32.xlu0 %v3172
    %v3174 = vpop.xlane.xlu0 %3173
    %v3175 = vsel %vm3171, %v3170, -inf
    %3176 = vmax.xlane.f32.xlu0 %v3175
    %v3177 = vpop.xlane.xlu0 %3176
    %v3178 = vsub.f32 %v3169, %v3174
    %v3179 = vsub.f32 %v3170, %v3177
    %v3180 = vmul.f32 %v3178, 1.442695
    %v3181 = vpow.pop %v3180
    %v3182 = vmul.f32 %v3179, 1.442695
    %v3183 = vpow.pop %v3182
    %v3184 = vsel %vm3171, %v3181, 0.0
    %3185 = vadd.xlane.f32.xlu0 %v3184
    %v3186 = vpop.xlane.xlu0 %3185
    %v3187 = vsel %vm3171, %v3183, 0.0
    %3188 = vadd.xlane.f32.xlu0 %v3187
    %v3189 = vpop.xlane.xlu0 %3188
    %v3190 = vrcp.pop %v3186
    %v3191 = vrcp.pop %v3189
    %v3192 = vmul.f32 %v3181, %v3190
    %v3193 = vmul.f32 %v3183, %v3191
    %v3194 = vpack.c.bf16 %v3192, %v3192
    %v3195 = vpack.c.bf16 %v3193, %v3193
    %3197 = vrot.lane.b32.xlu0 %v3075, 96
    %v3198 = vpop.permute.xlu0 %3197
    %v3200 = vsel %vm619, %v3194, 0
    %v3203 = vsel %vm623, %v3198, 0
    %3205 = vmatprep.subr.bf16.mxu0 0
    %3206 = vmatpush1.bf16.msra.mxu0 0
    %3207 = vmatprep.subr.bf16.mxu0 0
    %3208 = vmatpush1.bf16.msra.mxu0 0
    %3209 = vmatprep.subr.bf16.mxu0 0
    %3210 = vmatpush1.bf16.msra.mxu0 0
    %3211 = vmatprep.subr.bf16.mxu0 0
    %3212 = vmatpush1.bf16.msra.mxu0 0
    %3213 = vmatprep.subr.bf16.mxu0 0
    %3214 = vmatpush1.bf16.msra.mxu0 0
    %3215 = vmatprep.subr.bf16.mxu0 0
    %3216 = vmatpush1.bf16.msra.mxu0 0
    %3217 = vmatprep.subr.bf16.mxu0 0
    %3218 = vmatpush1.bf16.msra.mxu0 0
    %3219 = vmatprep.subr.bf16.mxu0 0
    %3220 = vmatpush1.bf16.msra.mxu0 %v3203
    %3221 = vmatprep.subr.bf16.mxu0 0
    %3222 = vmatpush2.bf16.msra.mxu0 0
    %3223 = vmatprep.subr.bf16.mxu0 0
    %3224 = vmatpush2.bf16.msra.mxu0 0
    %3225 = vmatprep.subr.bf16.mxu0 0
    %3226 = vmatpush2.bf16.msra.mxu0 0
    %3227 = vmatprep.subr.bf16.mxu0 0
    %3228 = vmatpush2.bf16.msra.mxu0 0
    %3229 = vmatprep.subr.bf16.mxu0 0
    %3230 = vmatpush2.bf16.msra.mxu0 0
    %3231 = vmatprep.subr.bf16.mxu0 0
    %3232 = vmatpush2.bf16.msra.mxu0 0
    %3233 = vmatprep.subr.bf16.mxu0 0
    %3234 = vmatpush2.bf16.msra.mxu0 0
    %3235 = vmatprep.subr.bf16.mxu0 0
    %3236 = vmatpush2.bf16.msra.mxu0 0
    %3237 = vmatprep.mubr.bf16.mxu0 0
    %3238 = vmatmul.mubr.bf16.gmra.mxu0 %v3200
    %v3239 = vpop.f32.mrf.mxu0
    %v3240 = vadd.f32 0.0, %v3239
    %v3241 = vpop.f32.mrf.mxu0
    %v3242 = vpop.f32.mrf.mxu0
    %v3243 = vpop.f32.mrf.mxu0
    %3244 = vdwg.mxu0
    %3246 = vrot.lane.b32.xlu0 %v3076, 96
    %v3247 = vpop.permute.xlu0 %3246
    %v3249 = vsel %vm619, %v3195, 0
    %v3252 = vsel %vm623, %v3247, 0
    %3254 = vmatprep.subr.bf16.mxu0 0
    %3255 = vmatpush1.bf16.msra.mxu0 0
    %3256 = vmatprep.subr.bf16.mxu0 0
    %3257 = vmatpush1.bf16.msra.mxu0 0
    %3258 = vmatprep.subr.bf16.mxu0 0
    %3259 = vmatpush1.bf16.msra.mxu0 0
    %3260 = vmatprep.subr.bf16.mxu0 0
    %3261 = vmatpush1.bf16.msra.mxu0 0
    %3262 = vmatprep.subr.bf16.mxu0 0
    %3263 = vmatpush1.bf16.msra.mxu0 0
    %3264 = vmatprep.subr.bf16.mxu0 0
    %3265 = vmatpush1.bf16.msra.mxu0 0
    %3266 = vmatprep.subr.bf16.mxu0 0
    %3267 = vmatpush1.bf16.msra.mxu0 0
    %3268 = vmatprep.subr.bf16.mxu0 0
    %3269 = vmatpush1.bf16.msra.mxu0 %v3252
    %3270 = vmatprep.subr.bf16.mxu0 0
    %3271 = vmatpush2.bf16.msra.mxu0 0
    %3272 = vmatprep.subr.bf16.mxu0 0
    %3273 = vmatpush2.bf16.msra.mxu0 0
    %3274 = vmatprep.subr.bf16.mxu0 0
    %3275 = vmatpush2.bf16.msra.mxu0 0
    %3276 = vmatprep.subr.bf16.mxu0 0
    %3277 = vmatpush2.bf16.msra.mxu0 0
    %3278 = vmatprep.subr.bf16.mxu0 0
    %3279 = vmatpush2.bf16.msra.mxu0 0
    %3280 = vmatprep.subr.bf16.mxu0 0
    %3281 = vmatpush2.bf16.msra.mxu0 0
    %3282 = vmatprep.subr.bf16.mxu0 0
    %3283 = vmatpush2.bf16.msra.mxu0 0
    %3284 = vmatprep.subr.bf16.mxu0 0
    %3285 = vmatpush2.bf16.msra.mxu0 0
    %3286 = vmatprep.mubr.bf16.mxu0 0
    %3287 = vmatmul.mubr.bf16.gmra.mxu0 %v3249
    %v3288 = vpop.f32.mrf.mxu0
    %v3289 = vadd.f32 0.0, %v3288
    %v3290 = vpop.f32.mrf.mxu0
    %v3291 = vpop.f32.mrf.mxu0
    %v3292 = vpop.f32.mrf.mxu0
    %3293 = vdwg.mxu0
    %3295 = vrot.lane.b32.xlu0 %v3073, 112
    %v3296 = vpop.permute.xlu0 %3295
    %3297 = vrot.lane.b32.xlu0 %v3075, 112
    %v3298 = vpop.permute.xlu0 %3297
    %v3300 = vsel %vm759, %v3296, 0
    %v3303 = vsel %vm759, %v3298, 0
    %3305 = vmatprep.subr.bf16.mxu0 0
    %3306 = vmatpush1.bf16.xpose.msra.mxu0 0
    %3307 = vmatprep.subr.bf16.mxu0 0
    %3308 = vmatpush1.bf16.xpose.msra.mxu0 0
    %3309 = vmatprep.subr.bf16.mxu0 0
    %3310 = vmatpush1.bf16.xpose.msra.mxu0 0
    %3311 = vmatprep.subr.bf16.mxu0 0
    %3312 = vmatpush1.bf16.xpose.msra.mxu0 0
    %3313 = vmatprep.subr.bf16.mxu0 0
    %3314 = vmatpush1.bf16.xpose.msra.mxu0 0
    %3315 = vmatprep.subr.bf16.mxu0 0
    %3316 = vmatpush1.bf16.xpose.msra.mxu0 0
    %3317 = vmatprep.subr.bf16.mxu0 0
    %3318 = vmatpush1.bf16.xpose.msra.mxu0 0
    %3319 = vmatprep.subr.bf16.mxu0 0
    %3320 = vmatpush1.bf16.xpose.msra.mxu0 %v3303
    %3321 = vmatprep.subr.bf16.mxu0 0
    %3322 = vmatpush2.bf16.xpose.msra.mxu0 0
    %3323 = vmatprep.subr.bf16.mxu0 0
    %3324 = vmatpush2.bf16.xpose.msra.mxu0 0
    %3325 = vmatprep.subr.bf16.mxu0 0
    %3326 = vmatpush2.bf16.xpose.msra.mxu0 0
    %3327 = vmatprep.subr.bf16.mxu0 0
    %3328 = vmatpush2.bf16.xpose.msra.mxu0 0
    %3329 = vmatprep.subr.bf16.mxu0 0
    %3330 = vmatpush2.bf16.xpose.msra.mxu0 0
    %3331 = vmatprep.subr.bf16.mxu0 0
    %3332 = vmatpush2.bf16.xpose.msra.mxu0 0
    %3333 = vmatprep.subr.bf16.mxu0 0
    %3334 = vmatpush2.bf16.xpose.msra.mxu0 0
    %3335 = vmatprep.subr.bf16.mxu0 0
    %3336 = vmatpush2.bf16.xpose.msra.mxu0 0
    %3337 = vmatprep.mubr.bf16.mxu0 0
    %3338 = vmatmul.mubr.bf16.gmra.mxu0 %v3300
    %v3339 = vpop.f32.mrf.mxu0
    %v3340 = vadd.f32 0.0, %v3339
    %v3341 = vpop.f32.mrf.mxu0
    %v3342 = vpop.f32.mrf.mxu0
    %v3343 = vpop.f32.mrf.mxu0
    %3344 = vdwg.mxu0
    %3346 = vrot.lane.b32.xlu0 %v3074, 112
    %v3347 = vpop.permute.xlu0 %3346
    %3348 = vrot.lane.b32.xlu0 %v3076, 112
    %v3349 = vpop.permute.xlu0 %3348
    %v3351 = vsel %vm759, %v3347, 0
    %v3354 = vsel %vm759, %v3349, 0
    %3356 = vmatprep.subr.bf16.mxu0 0
    %3357 = vmatpush1.bf16.xpose.msra.mxu0 0
    %3358 = vmatprep.subr.bf16.mxu0 0
    %3359 = vmatpush1.bf16.xpose.msra.mxu0 0
    %3360 = vmatprep.subr.bf16.mxu0 0
    %3361 = vmatpush1.bf16.xpose.msra.mxu0 0
    %3362 = vmatprep.subr.bf16.mxu0 0
    %3363 = vmatpush1.bf16.xpose.msra.mxu0 0
    %3364 = vmatprep.subr.bf16.mxu0 0
    %3365 = vmatpush1.bf16.xpose.msra.mxu0 0
    %3366 = vmatprep.subr.bf16.mxu0 0
    %3367 = vmatpush1.bf16.xpose.msra.mxu0 0
    %3368 = vmatprep.subr.bf16.mxu0 0
    %3369 = vmatpush1.bf16.xpose.msra.mxu0 0
    %3370 = vmatprep.subr.bf16.mxu0 0
    %3371 = vmatpush1.bf16.xpose.msra.mxu0 %v3354
    %3372 = vmatprep.subr.bf16.mxu0 0
    %3373 = vmatpush2.bf16.xpose.msra.mxu0 0
    %3374 = vmatprep.subr.bf16.mxu0 0
    %3375 = vmatpush2.bf16.xpose.msra.mxu0 0
    %3376 = vmatprep.subr.bf16.mxu0 0
    %3377 = vmatpush2.bf16.xpose.msra.mxu0 0
    %3378 = vmatprep.subr.bf16.mxu0 0
    %3379 = vmatpush2.bf16.xpose.msra.mxu0 0
    %3380 = vmatprep.subr.bf16.mxu0 0
    %3381 = vmatpush2.bf16.xpose.msra.mxu0 0
    %3382 = vmatprep.subr.bf16.mxu0 0
    %3383 = vmatpush2.bf16.xpose.msra.mxu0 0
    %3384 = vmatprep.subr.bf16.mxu0 0
    %3385 = vmatpush2.bf16.xpose.msra.mxu0 0
    %3386 = vmatprep.subr.bf16.mxu0 0
    %3387 = vmatpush2.bf16.xpose.msra.mxu0 0
    %3388 = vmatprep.mubr.bf16.mxu0 0
    %3389 = vmatmul.mubr.bf16.gmra.mxu0 %v3351
    %v3390 = vpop.f32.mrf.mxu0
    %v3391 = vadd.f32 0.0, %v3390
    %v3392 = vpop.f32.mrf.mxu0
    %v3393 = vpop.f32.mrf.mxu0
    %v3394 = vpop.f32.mrf.mxu0
    %3395 = vdwg.mxu0
    %v3396 = vmul.f32 %v3340, 0.25
    %v3397 = vmul.f32 %v3391, 0.25
    %v3398 = vsel %vm3171, %v3396, -inf
    %3399 = vmax.xlane.f32.xlu0 %v3398
    %v3400 = vpop.xlane.xlu0 %3399
    %v3401 = vsel %vm3171, %v3397, -inf
    %3402 = vmax.xlane.f32.xlu0 %v3401
    %v3403 = vpop.xlane.xlu0 %3402
    %v3404 = vsub.f32 %v3396, %v3400
    %v3405 = vsub.f32 %v3397, %v3403
    %v3406 = vmul.f32 %v3404, 1.442695
    %v3407 = vpow.pop %v3406
    %v3408 = vmul.f32 %v3405, 1.442695
    %v3409 = vpow.pop %v3408
    %v3410 = vsel %vm3171, %v3407, 0.0
    %3411 = vadd.xlane.f32.xlu0 %v3410
    %v3412 = vpop.xlane.xlu0 %3411
    %v3413 = vsel %vm3171, %v3409, 0.0
    %3414 = vadd.xlane.f32.xlu0 %v3413
    %v3415 = vpop.xlane.xlu0 %3414
    %v3416 = vrcp.pop %v3412
    %v3417 = vrcp.pop %v3415
    %v3418 = vmul.f32 %v3407, %v3416
    %v3419 = vmul.f32 %v3409, %v3417
    %v3420 = vpack.c.bf16 %v3418, %v3418
    %v3421 = vpack.c.bf16 %v3419, %v3419
    %3422 = vrot.lane.b32.xlu0 %v3075, 80
    %v3423 = vpop.permute.xlu0 %3422
    %v3425 = vsel %vm619, %v3420, 0
    %v3428 = vsel %vm623, %v3423, 0
    %3430 = vmatprep.subr.bf16.mxu0 0
    %3431 = vmatpush1.bf16.msra.mxu0 0
    %3432 = vmatprep.subr.bf16.mxu0 0
    %3433 = vmatpush1.bf16.msra.mxu0 0
    %3434 = vmatprep.subr.bf16.mxu0 0
    %3435 = vmatpush1.bf16.msra.mxu0 0
    %3436 = vmatprep.subr.bf16.mxu0 0
    %3437 = vmatpush1.bf16.msra.mxu0 0
    %3438 = vmatprep.subr.bf16.mxu0 0
    %3439 = vmatpush1.bf16.msra.mxu0 0
    %3440 = vmatprep.subr.bf16.mxu0 0
    %3441 = vmatpush1.bf16.msra.mxu0 0
    %3442 = vmatprep.subr.bf16.mxu0 0
    %3443 = vmatpush1.bf16.msra.mxu0 0
    %3444 = vmatprep.subr.bf16.mxu0 0
    %3445 = vmatpush1.bf16.msra.mxu0 %v3428
    %3446 = vmatprep.subr.bf16.mxu0 0
    %3447 = vmatpush2.bf16.msra.mxu0 0
    %3448 = vmatprep.subr.bf16.mxu0 0
    %3449 = vmatpush2.bf16.msra.mxu0 0
    %3450 = vmatprep.subr.bf16.mxu0 0
    %3451 = vmatpush2.bf16.msra.mxu0 0
    %3452 = vmatprep.subr.bf16.mxu0 0
    %3453 = vmatpush2.bf16.msra.mxu0 0
    %3454 = vmatprep.subr.bf16.mxu0 0
    %3455 = vmatpush2.bf16.msra.mxu0 0
    %3456 = vmatprep.subr.bf16.mxu0 0
    %3457 = vmatpush2.bf16.msra.mxu0 0
    %3458 = vmatprep.subr.bf16.mxu0 0
    %3459 = vmatpush2.bf16.msra.mxu0 0
    %3460 = vmatprep.subr.bf16.mxu0 0
    %3461 = vmatpush2.bf16.msra.mxu0 0
    %3462 = vmatprep.mubr.bf16.mxu0 0
    %3463 = vmatmul.mubr.bf16.gmra.mxu0 %v3425
    %v3464 = vpop.f32.mrf.mxu0
    %v3465 = vadd.f32 0.0, %v3464
    %v3466 = vpop.f32.mrf.mxu0
    %v3467 = vpop.f32.mrf.mxu0
    %v3468 = vpop.f32.mrf.mxu0
    %3469 = vdwg.mxu0
    %3470 = vrot.lane.b32.xlu0 %v3076, 80
    %v3471 = vpop.permute.xlu0 %3470
    %v3473 = vsel %vm619, %v3421, 0
    %v3476 = vsel %vm623, %v3471, 0
    %3478 = vmatprep.subr.bf16.mxu0 0
    %3479 = vmatpush1.bf16.msra.mxu0 0
    %3480 = vmatprep.subr.bf16.mxu0 0
    %3481 = vmatpush1.bf16.msra.mxu0 0
    %3482 = vmatprep.subr.bf16.mxu0 0
    %3483 = vmatpush1.bf16.msra.mxu0 0
    %3484 = vmatprep.subr.bf16.mxu0 0
    %3485 = vmatpush1.bf16.msra.mxu0 0
    %3486 = vmatprep.subr.bf16.mxu0 0
    %3487 = vmatpush1.bf16.msra.mxu0 0
    %3488 = vmatprep.subr.bf16.mxu0 0
    %3489 = vmatpush1.bf16.msra.mxu0 0
    %3490 = vmatprep.subr.bf16.mxu0 0
    %3491 = vmatpush1.bf16.msra.mxu0 0
    %3492 = vmatprep.subr.bf16.mxu0 0
    %3493 = vmatpush1.bf16.msra.mxu0 %v3476
    %3494 = vmatprep.subr.bf16.mxu0 0
    %3495 = vmatpush2.bf16.msra.mxu0 0
    %3496 = vmatprep.subr.bf16.mxu0 0
    %3497 = vmatpush2.bf16.msra.mxu0 0
    %3498 = vmatprep.subr.bf16.mxu0 0
    %3499 = vmatpush2.bf16.msra.mxu0 0
    %3500 = vmatprep.subr.bf16.mxu0 0
    %3501 = vmatpush2.bf16.msra.mxu0 0
    %3502 = vmatprep.subr.bf16.mxu0 0
    %3503 = vmatpush2.bf16.msra.mxu0 0
    %3504 = vmatprep.subr.bf16.mxu0 0
    %3505 = vmatpush2.bf16.msra.mxu0 0
    %3506 = vmatprep.subr.bf16.mxu0 0
    %3507 = vmatpush2.bf16.msra.mxu0 0
    %3508 = vmatprep.subr.bf16.mxu0 0
    %3509 = vmatpush2.bf16.msra.mxu0 0
    %3510 = vmatprep.mubr.bf16.mxu0 0
    %3511 = vmatmul.mubr.bf16.gmra.mxu0 %v3473
    %v3512 = vpop.f32.mrf.mxu0
    %v3513 = vadd.f32 0.0, %v3512
    %v3514 = vpop.f32.mrf.mxu0
    %v3515 = vpop.f32.mrf.mxu0
    %v3516 = vpop.f32.mrf.mxu0
    %3517 = vdwg.mxu0
    %3520 = vrot.lane.b32.xlu0 %v3465, 16
    %v3521 = vpop.permute.xlu0 %3520
    %3522 = vrot.lane.b32.xlu0 %v3513, 16
    %v3523 = vpop.permute.xlu0 %3522
    %v3526 = vsel %vm759, %v3240, %v3521
    %v3527 = vsel %vm759, %v3289, %v3523
    %v3530 = vcombine.low %v3526, %v3527
    %v3532 = vpack.c.bf16 %v3530, %v3530
    %v3537 = vunpack.c.l.b16 %v2332
    %v3538 = vunpack.c.l.b16 %v2333
    %v3539 = vunpack.c.l.b16 %v2334
    %v3540 = vunpack.c.l.b16 %v2335
    %v3541 = vpack.c.b16 %v3538, %v3537
    %v3542 = vpack.c.b16 %v3540, %v3539
    %v3546 = vsel %vm709, %v3532, 0
    %3548 = vmatprep.subr.bf16.mxu0 0
    %3549 = vmatpush1.bf16.msra.mxu0 0
    %3550 = vmatprep.subr.bf16.mxu0 0
    %3551 = vmatpush1.bf16.msra.mxu0 0
    %3552 = vmatprep.subr.bf16.mxu0 0
    %3553 = vmatpush1.bf16.msra.mxu0 0
    %3554 = vmatprep.subr.bf16.mxu0 0
    %3555 = vmatpush1.bf16.msra.mxu0 0
    %3556 = vmatprep.subr.bf16.mxu0 0
    %3557 = vmatpush1.bf16.msra.mxu0 0
    %3558 = vmatprep.subr.bf16.mxu0 0
    %3559 = vmatpush1.bf16.msra.mxu0 0
    %3560 = vmatprep.subr.bf16.mxu0 0
    %3561 = vmatpush1.bf16.msra.mxu0 %v3542
    %3562 = vmatprep.subr.bf16.mxu0 0
    %3563 = vmatpush1.bf16.msra.mxu0 %v3541
    %3564 = vmatprep.subr.bf16.mxu0 0
    %3565 = vmatpush2.bf16.msra.mxu0 0
    %3566 = vmatprep.subr.bf16.mxu0 0
    %3567 = vmatpush2.bf16.msra.mxu0 0
    %3568 = vmatprep.subr.bf16.mxu0 0
    %3569 = vmatpush2.bf16.msra.mxu0 0
    %3570 = vmatprep.subr.bf16.mxu0 0
    %3571 = vmatpush2.bf16.msra.mxu0 0
    %3572 = vmatprep.subr.bf16.mxu0 0
    %3573 = vmatpush2.bf16.msra.mxu0 0
    %3574 = vmatprep.subr.bf16.mxu0 0
    %3575 = vmatpush2.bf16.msra.mxu0 0
    %3576 = vmatprep.subr.bf16.mxu0 0
    %3577 = vmatpush2.bf16.msra.mxu0 0
    %3578 = vmatprep.subr.bf16.mxu0 0
    %3579 = vmatpush2.bf16.msra.mxu0 0
    %3580 = vmatprep.mubr.bf16.mxu0 0
    %3581 = vmatmul.mubr.bf16.gmra.mxu0 %v3546
    %v3582 = vpop.f32.mrf.mxu0
    %v3583 = vadd.f32 %v2956, %v3582
    %v3584 = vpop.f32.mrf.mxu0
    %v3585 = vpop.f32.mrf.mxu0
    %v3586 = vpop.f32.mrf.mxu0
    %3587 = vdwg.mxu0
    %v3588 = vsel %vm709, %v3583, 0.0
    %3589 = vadd.xlane.f32.xlu0 %v3588
    %v3590 = vpop.xlane.xlu0 %3589
    %v3591 = vmul.f32 %v3590, %v1272
    %v3592 = vsub.f32 %v3583, %v3591
    %v3593 = vmul.f32 %v3592, %v3592
    %v3594 = vsel %vm709, %v3593, 0.0
    %3595 = vadd.xlane.f32.xlu0 %v3594
    %v3596 = vpop.xlane.xlu0 %3595
    %v3597 = vmul.f32 %v3596, %v1272
    %v3598 = vadd.f32 %v3597, 1e-06
    %v3599 = vrsqrt.pop %v3598
    %v3600 = vmul.f32 %v3592, %v3599
    %v3602 = vlaneseq
    %v3603 = vshrl.u32 %v3602, 7
    %v3604 = vsub.s32 0, %v3603
    %v3605 = vrot.slane %v2336, %v3604
    %v3607 = vmul.f32 %v3600, %v3605
    %v3609 = vlaneseq
    %v3610 = vshrl.u32 %v3609, 7
    %v3611 = vsub.s32 0, %v3610
    %v3612 = vrot.slane %v2337, %v3611
    %v3614 = vadd.f32 %v3607, %v3612
    %v3615 = vpack.c.bf16 %v3614, %v3614
    %v3617 = vlaneseq
    %v3618 = vshrl.u32 %v3617, 7
    %v3619 = vsub.s32 0, %v3618
    %v3620 = vrot.slane %v2342, %v3619
    %v3626 = vunpack.c.l.b16 %v2338
    %v3627 = vunpack.c.l.b16 %v2339
    %v3628 = vunpack.c.l.b16 %v2340
    %v3629 = vunpack.c.l.b16 %v2341
    %v3630 = vpack.c.b16 %v3627, %v3626
    %v3631 = vpack.c.b16 %v3629, %v3628
    %v3635 = vsel %vm709, %v3615, 0
    %3637 = vmatprep.subr.bf16.mxu0 0
    %3638 = vmatpush1.bf16.msra.mxu0 0
    %3639 = vmatprep.subr.bf16.mxu0 0
    %3640 = vmatpush1.bf16.msra.mxu0 0
    %3641 = vmatprep.subr.bf16.mxu0 0
    %3642 = vmatpush1.bf16.msra.mxu0 0
    %3643 = vmatprep.subr.bf16.mxu0 0
    %3644 = vmatpush1.bf16.msra.mxu0 0
    %3645 = vmatprep.subr.bf16.mxu0 0
    %3646 = vmatpush1.bf16.msra.mxu0 0
    %3647 = vmatprep.subr.bf16.mxu0 0
    %3648 = vmatpush1.bf16.msra.mxu0 0
    %3649 = vmatprep.subr.bf16.mxu0 0
    %3650 = vmatpush1.bf16.msra.mxu0 %v3631
    %3651 = vmatprep.subr.bf16.mxu0 0
    %3652 = vmatpush1.bf16.msra.mxu0 %v3630
    %3653 = vmatprep.subr.bf16.mxu0 0
    %3654 = vmatpush2.bf16.msra.mxu0 0
    %3655 = vmatprep.subr.bf16.mxu0 0
    %3656 = vmatpush2.bf16.msra.mxu0 0
    %3657 = vmatprep.subr.bf16.mxu0 0
    %3658 = vmatpush2.bf16.msra.mxu0 0
    %3659 = vmatprep.subr.bf16.mxu0 0
    %3660 = vmatpush2.bf16.msra.mxu0 0
    %3661 = vmatprep.subr.bf16.mxu0 0
    %3662 = vmatpush2.bf16.msra.mxu0 0
    %3663 = vmatprep.subr.bf16.mxu0 0
    %3664 = vmatpush2.bf16.msra.mxu0 0
    %3665 = vmatprep.subr.bf16.mxu0 0
    %3666 = vmatpush2.bf16.msra.mxu0 0
    %3667 = vmatprep.subr.bf16.mxu0 0
    %3668 = vmatpush2.bf16.msra.mxu0 0
    %3669 = vmatprep.mubr.bf16.mxu0 0
    %3670 = vmatmul.mubr.bf16.gmra.mxu0 %v3635
    %v3671 = vpop.f32.mrf.mxu0
    %v3672 = vadd.f32 %v3620, %v3671
    %v3673 = vpop.f32.mrf.mxu0
    %v3674 = vpop.f32.mrf.mxu0
    %v3675 = vpop.f32.mrf.mxu0
    %3676 = vdwg.mxu0
    %v3677 = vmax.f32 %v3672, 0.0
    %v3678 = vpack.c.bf16 %v3677, %v3677
    %v3680 = vlaneseq
    %v3681 = vshrl.u32 %v3680, 7
    %v3682 = vsub.s32 0, %v3681
    %v3683 = vrot.slane %v2351, %v3682
    %v3693 = vunpack.c.l.b16 %v2343
    %v3694 = vunpack.c.l.b16 %v2344
    %v3695 = vunpack.c.l.b16 %v2345
    %v3696 = vunpack.c.l.b16 %v2346
    %v3697 = vunpack.c.l.b16 %v2347
    %v3698 = vunpack.c.l.b16 %v2348
    %v3699 = vunpack.c.l.b16 %v2349
    %v3700 = vunpack.c.l.b16 %v2350
    %v3701 = vpack.c.b16 %v3694, %v3693
    %v3702 = vpack.c.b16 %v3696, %v3695
    %v3703 = vpack.c.b16 %v3698, %v3697
    %v3704 = vpack.c.b16 %v3700, %v3699
    %v3710 = vsel %vm1405, %v3678, 0
    %3712 = vmatprep.subr.bf16.mxu0 0
    %3713 = vmatpush1.bf16.msra.mxu0 0
    %3714 = vmatprep.subr.bf16.mxu0 0
    %3715 = vmatpush1.bf16.msra.mxu0 0
    %3716 = vmatprep.subr.bf16.mxu0 0
    %3717 = vmatpush1.bf16.msra.mxu0 0
    %3718 = vmatprep.subr.bf16.mxu0 0
    %3719 = vmatpush1.bf16.msra.mxu0 0
    %3720 = vmatprep.subr.bf16.mxu0 0
    %3721 = vmatpush1.bf16.msra.mxu0 %v3704
    %3722 = vmatprep.subr.bf16.mxu0 0
    %3723 = vmatpush1.bf16.msra.mxu0 %v3703
    %3724 = vmatprep.subr.bf16.mxu0 0
    %3725 = vmatpush1.bf16.msra.mxu0 %v3702
    %3726 = vmatprep.subr.bf16.mxu0 0
    %3727 = vmatpush1.bf16.msra.mxu0 %v3701
    %3728 = vmatprep.subr.bf16.mxu0 0
    %3729 = vmatpush2.bf16.msra.mxu0 0
    %3730 = vmatprep.subr.bf16.mxu0 0
    %3731 = vmatpush2.bf16.msra.mxu0 0
    %3732 = vmatprep.subr.bf16.mxu0 0
    %3733 = vmatpush2.bf16.msra.mxu0 0
    %3734 = vmatprep.subr.bf16.mxu0 0
    %3735 = vmatpush2.bf16.msra.mxu0 0
    %3736 = vmatprep.subr.bf16.mxu0 0
    %3737 = vmatpush2.bf16.msra.mxu0 0
    %3738 = vmatprep.subr.bf16.mxu0 0
    %3739 = vmatpush2.bf16.msra.mxu0 0
    %3740 = vmatprep.subr.bf16.mxu0 0
    %3741 = vmatpush2.bf16.msra.mxu0 0
    %3742 = vmatprep.subr.bf16.mxu0 0
    %3743 = vmatpush2.bf16.msra.mxu0 0
    %3744 = vmatprep.mubr.bf16.mxu0 0
    %3745 = vmatmul.mubr.bf16.gmra.mxu0 %v3710
    %v3746 = vpop.f32.mrf.mxu0
    %v3747 = vadd.f32 %v3683, %v3746
    %v3748 = vpop.f32.mrf.mxu0
    %v3749 = vpop.f32.mrf.mxu0
    %v3750 = vpop.f32.mrf.mxu0
    %3751 = vdwg.mxu0
    %v3752 = vadd.f32 %v3747, %v3614
    %v3753 = vsel %vm709, %v3752, 0.0
    %3754 = vadd.xlane.f32.xlu0 %v3753
    %v3755 = vpop.xlane.xlu0 %3754
    %v3756 = vmul.f32 %v3755, %v1272
    %v3757 = vsub.f32 %v3752, %v3756
    %v3758 = vmul.f32 %v3757, %v3757
    %v3759 = vsel %vm709, %v3758, 0.0
    %3760 = vadd.xlane.f32.xlu0 %v3759
    %v3761 = vpop.xlane.xlu0 %3760
    %v3762 = vmul.f32 %v3761, %v1272
    %v3763 = vadd.f32 %v3762, 1e-06
    %v3764 = vrsqrt.pop %v3763
    %v3765 = vmul.f32 %v3757, %v3764
    %v3767 = vlaneseq
    %v3768 = vshrl.u32 %v3767, 7
    %v3769 = vsub.s32 0, %v3768
    %v3770 = vrot.slane %v2352, %v3769
    %v3772 = vmul.f32 %v3765, %v3770
    %v3774 = vlaneseq
    %v3775 = vshrl.u32 %v3774, 7
    %v3776 = vsub.s32 0, %v3775
    %v3777 = vrot.slane %v2353, %v3776
    %v3779 = vadd.f32 %v3772, %v3777
    %v3780 = vld [vmem:[#allocation40] sm:$0xf]
    %v3781 = vld [vmem:[#allocation40 + $0x4] sm:$0xf]
    %v3782 = vld [vmem:[#allocation40 + $0x8] sm:$0xf]
    %v3783 = vld [vmem:[#allocation40 + $0xc] sm:$0xf]
    %v3784 = vld [vmem:[#allocation41] sm:$0xf]
    %v3785 = vld [vmem:[#allocation41 + $0x4] sm:$0xf]
    %v3786 = vld [vmem:[#allocation41 + $0x8] sm:$0xf]
    %v3787 = vld [vmem:[#allocation41 + $0xc] sm:$0xf]
    %v3788 = vld [vmem:[#allocation43] sm:$0x1]
    %v3789 = vld [vmem:[#allocation44] sm:$0x1]
    %v3790 = vld [vmem:[%s89] sm:$0xf]
    %v3791 = vld [vmem:[%s89 + $0x4] sm:$0xf]
    %v3792 = vld [vmem:[%s89 + $0x8] sm:$0xf]
    %v3793 = vld [vmem:[%s89 + $0xc] sm:$0xf]
    %v3794 = vld [vmem:[#allocation46] sm:$0xf]
    %v3795 = vld [vmem:[#allocation46 + $0x4] sm:$0xf]
    %v3796 = vld [vmem:[#allocation46 + $0x8] sm:$0xf]
    %v3797 = vld [vmem:[#allocation46 + $0xc] sm:$0xf]
    %v3798 = vld [vmem:[#allocation47] sm:$0xf]
    %v3799 = vld [vmem:[#allocation47 + $0x4] sm:$0xf]
    %v3800 = vld [vmem:[#allocation47 + $0x8] sm:$0xf]
    %v3801 = vld [vmem:[#allocation47 + $0xc] sm:$0xf]
    %v3802 = vld [vmem:[%s95] sm:$0x1]
    %v3803 = vld [vmem:[%s97] sm:$0x1]
    %v3804 = vld [vmem:[#allocation49] sm:$0xf]
    %v3805 = vld [vmem:[#allocation49 + $0x4] sm:$0xf]
    %v3806 = vld [vmem:[#allocation49 + $0x8] sm:$0xf]
    %v3807 = vld [vmem:[#allocation49 + $0xc] sm:$0xf]
    %v3808 = vld [vmem:[%s101] sm:$0x1]
    %v3809 = vld [vmem:[%s103] sm:$0xf]
    %v3810 = vld [vmem:[%s103 + $0x4] sm:$0xf]
    %v3811 = vld [vmem:[%s103 + $0x8] sm:$0xf]
    %v3812 = vld [vmem:[%s103 + $0xc] sm:$0xf]
    %v3813 = vld [vmem:[%s103 + $0x10] sm:$0xf]
    %v3814 = vld [vmem:[%s103 + $0x14] sm:$0xf]
    %v3815 = vld [vmem:[%s103 + $0x18] sm:$0xf]
    %v3816 = vld [vmem:[%s103 + $0x1c] sm:$0xf]
    %v3817 = vld [vmem:[%s105] sm:$0x1]
    %v3818 = vld [vmem:[%s107] sm:$0x1]
    %v3819 = vld [vmem:[%s109] sm:$0x1]
    %v3820 = vpack.c.bf16 %v3779, %v3779
    %v3825 = vunpack.c.l.b16 %v3780
    %v3826 = vunpack.c.l.b16 %v3781
    %v3827 = vunpack.c.l.b16 %v3782
    %v3828 = vunpack.c.l.b16 %v3783
    %v3829 = vpack.c.b16 %v3826, %v3825
    %v3830 = vpack.c.b16 %v3828, %v3827
    %v3834 = vsel %vm709, %v3820, 0
    %3836 = vmatprep.subr.bf16.mxu0 0
    %3837 = vmatpush1.bf16.msra.mxu0 0
    %3838 = vmatprep.subr.bf16.mxu0 0
    %3839 = vmatpush1.bf16.msra.mxu0 0
    %3840 = vmatprep.subr.bf16.mxu0 0
    %3841 = vmatpush1.bf16.msra.mxu0 0
    %3842 = vmatprep.subr.bf16.mxu0 0
    %3843 = vmatpush1.bf16.msra.mxu0 0
    %3844 = vmatprep.subr.bf16.mxu0 0
    %3845 = vmatpush1.bf16.msra.mxu0 0
    %3846 = vmatprep.subr.bf16.mxu0 0
    %3847 = vmatpush1.bf16.msra.mxu0 0
    %3848 = vmatprep.subr.bf16.mxu0 0
    %3849 = vmatpush1.bf16.msra.mxu0 %v3830
    %3850 = vmatprep.subr.bf16.mxu0 0
    %3851 = vmatpush1.bf16.msra.mxu0 %v3829
    %3852 = vmatprep.subr.bf16.mxu0 0
    %3853 = vmatpush2.bf16.msra.mxu0 0
    %3854 = vmatprep.subr.bf16.mxu0 0
    %3855 = vmatpush2.bf16.msra.mxu0 0
    %3856 = vmatprep.subr.bf16.mxu0 0
    %3857 = vmatpush2.bf16.msra.mxu0 0
    %3858 = vmatprep.subr.bf16.mxu0 0
    %3859 = vmatpush2.bf16.msra.mxu0 0
    %3860 = vmatprep.subr.bf16.mxu0 0
    %3861 = vmatpush2.bf16.msra.mxu0 0
    %3862 = vmatprep.subr.bf16.mxu0 0
    %3863 = vmatpush2.bf16.msra.mxu0 0
    %3864 = vmatprep.subr.bf16.mxu0 0
    %3865 = vmatpush2.bf16.msra.mxu0 0
    %3866 = vmatprep.subr.bf16.mxu0 0
    %3867 = vmatpush2.bf16.msra.mxu0 0
    %3868 = vmatprep.mubr.bf16.mxu0 0
    %3869 = vmatmul.mubr.bf16.gmra.mxu0 %v3834
    %v3870 = vpop.f32.mrf.mxu0
    %v3871 = vadd.f32 0.0, %v3870
    %v3872 = vpop.f32.mrf.mxu0
    %v3873 = vpop.f32.mrf.mxu0
    %v3874 = vpop.f32.mrf.mxu0
    %3875 = vdwg.mxu0
    %v3877 = vcombine.high %v3871, %v3871
    %v3879 = vpack.c.bf16 %v3871, %v3871
    %v3880 = vpack.c.bf16 %v3877, %v3877
    %3882 = vrot.lane.b32.xlu0 %v3879, 96
    %v3883 = vpop.permute.xlu0 %3882
    %v3885 = vsel %vm759, %v3879, 0
    %v3888 = vsel %vm759, %v3883, 0
    %3890 = vmatprep.subr.bf16.mxu0 0
    %3891 = vmatpush1.bf16.xpose.msra.mxu0 0
    %3892 = vmatprep.subr.bf16.mxu0 0
    %3893 = vmatpush1.bf16.xpose.msra.mxu0 0
    %3894 = vmatprep.subr.bf16.mxu0 0
    %3895 = vmatpush1.bf16.xpose.msra.mxu0 0
    %3896 = vmatprep.subr.bf16.mxu0 0
    %3897 = vmatpush1.bf16.xpose.msra.mxu0 0
    %3898 = vmatprep.subr.bf16.mxu0 0
    %3899 = vmatpush1.bf16.xpose.msra.mxu0 0
    %3900 = vmatprep.subr.bf16.mxu0 0
    %3901 = vmatpush1.bf16.xpose.msra.mxu0 0
    %3902 = vmatprep.subr.bf16.mxu0 0
    %3903 = vmatpush1.bf16.xpose.msra.mxu0 0
    %3904 = vmatprep.subr.bf16.mxu0 0
    %3905 = vmatpush1.bf16.xpose.msra.mxu0 %v3888
    %3906 = vmatprep.subr.bf16.mxu0 0
    %3907 = vmatpush2.bf16.xpose.msra.mxu0 0
    %3908 = vmatprep.subr.bf16.mxu0 0
    %3909 = vmatpush2.bf16.xpose.msra.mxu0 0
    %3910 = vmatprep.subr.bf16.mxu0 0
    %3911 = vmatpush2.bf16.xpose.msra.mxu0 0
    %3912 = vmatprep.subr.bf16.mxu0 0
    %3913 = vmatpush2.bf16.xpose.msra.mxu0 0
    %3914 = vmatprep.subr.bf16.mxu0 0
    %3915 = vmatpush2.bf16.xpose.msra.mxu0 0
    %3916 = vmatprep.subr.bf16.mxu0 0
    %3917 = vmatpush2.bf16.xpose.msra.mxu0 0
    %3918 = vmatprep.subr.bf16.mxu0 0
    %3919 = vmatpush2.bf16.xpose.msra.mxu0 0
    %3920 = vmatprep.subr.bf16.mxu0 0
    %3921 = vmatpush2.bf16.xpose.msra.mxu0 0
    %3922 = vmatprep.mubr.bf16.mxu0 0
    %3923 = vmatmul.mubr.bf16.gmra.mxu0 %v3885
    %v3924 = vpop.f32.mrf.mxu0
    %v3925 = vadd.f32 0.0, %v3924
    %v3926 = vpop.f32.mrf.mxu0
    %v3927 = vpop.f32.mrf.mxu0
    %v3928 = vpop.f32.mrf.mxu0
    %3929 = vdwg.mxu0
    %3931 = vrot.lane.b32.xlu0 %v3880, 96
    %v3932 = vpop.permute.xlu0 %3931
    %v3934 = vsel %vm759, %v3880, 0
    %v3937 = vsel %vm759, %v3932, 0
    %3939 = vmatprep.subr.bf16.mxu0 0
    %3940 = vmatpush1.bf16.xpose.msra.mxu0 0
    %3941 = vmatprep.subr.bf16.mxu0 0
    %3942 = vmatpush1.bf16.xpose.msra.mxu0 0
    %3943 = vmatprep.subr.bf16.mxu0 0
    %3944 = vmatpush1.bf16.xpose.msra.mxu0 0
    %3945 = vmatprep.subr.bf16.mxu0 0
    %3946 = vmatpush1.bf16.xpose.msra.mxu0 0
    %3947 = vmatprep.subr.bf16.mxu0 0
    %3948 = vmatpush1.bf16.xpose.msra.mxu0 0
    %3949 = vmatprep.subr.bf16.mxu0 0
    %3950 = vmatpush1.bf16.xpose.msra.mxu0 0
    %3951 = vmatprep.subr.bf16.mxu0 0
    %3952 = vmatpush1.bf16.xpose.msra.mxu0 0
    %3953 = vmatprep.subr.bf16.mxu0 0
    %3954 = vmatpush1.bf16.xpose.msra.mxu0 %v3937
    %3955 = vmatprep.subr.bf16.mxu0 0
    %3956 = vmatpush2.bf16.xpose.msra.mxu0 0
    %3957 = vmatprep.subr.bf16.mxu0 0
    %3958 = vmatpush2.bf16.xpose.msra.mxu0 0
    %3959 = vmatprep.subr.bf16.mxu0 0
    %3960 = vmatpush2.bf16.xpose.msra.mxu0 0
    %3961 = vmatprep.subr.bf16.mxu0 0
    %3962 = vmatpush2.bf16.xpose.msra.mxu0 0
    %3963 = vmatprep.subr.bf16.mxu0 0
    %3964 = vmatpush2.bf16.xpose.msra.mxu0 0
    %3965 = vmatprep.subr.bf16.mxu0 0
    %3966 = vmatpush2.bf16.xpose.msra.mxu0 0
    %3967 = vmatprep.subr.bf16.mxu0 0
    %3968 = vmatpush2.bf16.xpose.msra.mxu0 0
    %3969 = vmatprep.subr.bf16.mxu0 0
    %3970 = vmatpush2.bf16.xpose.msra.mxu0 0
    %3971 = vmatprep.mubr.bf16.mxu0 0
    %3972 = vmatmul.mubr.bf16.gmra.mxu0 %v3934
    %v3973 = vpop.f32.mrf.mxu0
    %v3974 = vadd.f32 0.0, %v3973
    %v3975 = vpop.f32.mrf.mxu0
    %v3976 = vpop.f32.mrf.mxu0
    %v3977 = vpop.f32.mrf.mxu0
    %3978 = vdwg.mxu0
    %v3979 = vmul.f32 %v3925, 0.25
    %v3980 = vmul.f32 %v3974, 0.25
    %v3981 = vsel %vm2515, %v3979, -inf
    %3982 = vmax.xlane.f32.xlu0 %v3981
    %v3983 = vpop.xlane.xlu0 %3982
    %v3984 = vsel %vm2515, %v3980, -inf
    %3985 = vmax.xlane.f32.xlu0 %v3984
    %v3986 = vpop.xlane.xlu0 %3985
    %v3987 = vsub.f32 %v3979, %v3983
    %v3988 = vsub.f32 %v3980, %v3986
    %v3989 = vmul.f32 %v3987, 1.442695
    %v3990 = vpow.pop %v3989
    %v3991 = vmul.f32 %v3988, 1.442695
    %v3992 = vpow.pop %v3991
    %v3993 = vsel %vm2515, %v3990, 0.0
    %3994 = vadd.xlane.f32.xlu0 %v3993
    %v3995 = vpop.xlane.xlu0 %3994
    %v3996 = vsel %vm2515, %v3992, 0.0
    %3997 = vadd.xlane.f32.xlu0 %v3996
    %v3998 = vpop.xlane.xlu0 %3997
    %v3999 = vrcp.pop %v3995
    %v4000 = vrcp.pop %v3998
    %v4001 = vmul.f32 %v3990, %v3999
    %v4002 = vmul.f32 %v3992, %v4000
    %v4003 = vpack.c.bf16 %v4001, %v4001
    %v4004 = vpack.c.bf16 %v4002, %v4002
    %4005 = vrot.lane.b32.xlu0 %v3879, 64
    %v4006 = vpop.permute.xlu0 %4005
    %v4008 = vsel %vm2542, %v4003, 0
    %v4011 = vsel %vm2546, %v4006, 0
    %4013 = vmatprep.subr.bf16.mxu0 0
    %4014 = vmatpush1.bf16.msra.mxu0 0
    %4015 = vmatprep.subr.bf16.mxu0 0
    %4016 = vmatpush1.bf16.msra.mxu0 0
    %4017 = vmatprep.subr.bf16.mxu0 0
    %4018 = vmatpush1.bf16.msra.mxu0 0
    %4019 = vmatprep.subr.bf16.mxu0 0
    %4020 = vmatpush1.bf16.msra.mxu0 0
    %4021 = vmatprep.subr.bf16.mxu0 0
    %4022 = vmatpush1.bf16.msra.mxu0 0
    %4023 = vmatprep.subr.bf16.mxu0 0
    %4024 = vmatpush1.bf16.msra.mxu0 0
    %4025 = vmatprep.subr.bf16.mxu0 0
    %4026 = vmatpush1.bf16.msra.mxu0 0
    %4027 = vmatprep.subr.bf16.mxu0 0
    %4028 = vmatpush1.bf16.msra.mxu0 %v4011
    %4029 = vmatprep.subr.bf16.mxu0 0
    %4030 = vmatpush2.bf16.msra.mxu0 0
    %4031 = vmatprep.subr.bf16.mxu0 0
    %4032 = vmatpush2.bf16.msra.mxu0 0
    %4033 = vmatprep.subr.bf16.mxu0 0
    %4034 = vmatpush2.bf16.msra.mxu0 0
    %4035 = vmatprep.subr.bf16.mxu0 0
    %4036 = vmatpush2.bf16.msra.mxu0 0
    %4037 = vmatprep.subr.bf16.mxu0 0
    %4038 = vmatpush2.bf16.msra.mxu0 0
    %4039 = vmatprep.subr.bf16.mxu0 0
    %4040 = vmatpush2.bf16.msra.mxu0 0
    %4041 = vmatprep.subr.bf16.mxu0 0
    %4042 = vmatpush2.bf16.msra.mxu0 0
    %4043 = vmatprep.subr.bf16.mxu0 0
    %4044 = vmatpush2.bf16.msra.mxu0 0
    %4045 = vmatprep.mubr.bf16.mxu0 0
    %4046 = vmatmul.mubr.bf16.gmra.mxu0 %v4008
    %v4047 = vpop.f32.mrf.mxu0
    %v4048 = vadd.f32 0.0, %v4047
    %v4049 = vpop.f32.mrf.mxu0
    %v4050 = vpop.f32.mrf.mxu0
    %v4051 = vpop.f32.mrf.mxu0
    %4052 = vdwg.mxu0
    %4053 = vrot.lane.b32.xlu0 %v3880, 64
    %v4054 = vpop.permute.xlu0 %4053
    %v4056 = vsel %vm2542, %v4004, 0
    %v4059 = vsel %vm2546, %v4054, 0
    %4061 = vmatprep.subr.bf16.mxu0 0
    %4062 = vmatpush1.bf16.msra.mxu0 0
    %4063 = vmatprep.subr.bf16.mxu0 0
    %4064 = vmatpush1.bf16.msra.mxu0 0
    %4065 = vmatprep.subr.bf16.mxu0 0
    %4066 = vmatpush1.bf16.msra.mxu0 0
    %4067 = vmatprep.subr.bf16.mxu0 0
    %4068 = vmatpush1.bf16.msra.mxu0 0
    %4069 = vmatprep.subr.bf16.mxu0 0
    %4070 = vmatpush1.bf16.msra.mxu0 0
    %4071 = vmatprep.subr.bf16.mxu0 0
    %4072 = vmatpush1.bf16.msra.mxu0 0
    %4073 = vmatprep.subr.bf16.mxu0 0
    %4074 = vmatpush1.bf16.msra.mxu0 0
    %4075 = vmatprep.subr.bf16.mxu0 0
    %4076 = vmatpush1.bf16.msra.mxu0 %v4059
    %4077 = vmatprep.subr.bf16.mxu0 0
    %4078 = vmatpush2.bf16.msra.mxu0 0
    %4079 = vmatprep.subr.bf16.mxu0 0
    %4080 = vmatpush2.bf16.msra.mxu0 0
    %4081 = vmatprep.subr.bf16.mxu0 0
    %4082 = vmatpush2.bf16.msra.mxu0 0
    %4083 = vmatprep.subr.bf16.mxu0 0
    %4084 = vmatpush2.bf16.msra.mxu0 0
    %4085 = vmatprep.subr.bf16.mxu0 0
    %4086 = vmatpush2.bf16.msra.mxu0 0
    %4087 = vmatprep.subr.bf16.mxu0 0
    %4088 = vmatpush2.bf16.msra.mxu0 0
    %4089 = vmatprep.subr.bf16.mxu0 0
    %4090 = vmatpush2.bf16.msra.mxu0 0
    %4091 = vmatprep.subr.bf16.mxu0 0
    %4092 = vmatpush2.bf16.msra.mxu0 0
    %4093 = vmatprep.mubr.bf16.mxu0 0
    %4094 = vmatmul.mubr.bf16.gmra.mxu0 %v4056
    %v4095 = vpop.f32.mrf.mxu0
    %v4096 = vadd.f32 0.0, %v4095
    %v4097 = vpop.f32.mrf.mxu0
    %v4098 = vpop.f32.mrf.mxu0
    %v4099 = vpop.f32.mrf.mxu0
    %4100 = vdwg.mxu0
    %4101 = vrot.lane.b32.xlu0 %v3879, 112
    %v4102 = vpop.permute.xlu0 %4101
    %4103 = vrot.lane.b32.xlu0 %v3879, 80
    %v4104 = vpop.permute.xlu0 %4103
    %v4106 = vsel %vm759, %v4102, 0
    %v4109 = vsel %vm759, %v4104, 0
    %4111 = vmatprep.subr.bf16.mxu0 0
    %4112 = vmatpush1.bf16.xpose.msra.mxu0 0
    %4113 = vmatprep.subr.bf16.mxu0 0
    %4114 = vmatpush1.bf16.xpose.msra.mxu0 0
    %4115 = vmatprep.subr.bf16.mxu0 0
    %4116 = vmatpush1.bf16.xpose.msra.mxu0 0
    %4117 = vmatprep.subr.bf16.mxu0 0
    %4118 = vmatpush1.bf16.xpose.msra.mxu0 0
    %4119 = vmatprep.subr.bf16.mxu0 0
    %4120 = vmatpush1.bf16.xpose.msra.mxu0 0
    %4121 = vmatprep.subr.bf16.mxu0 0
    %4122 = vmatpush1.bf16.xpose.msra.mxu0 0
    %4123 = vmatprep.subr.bf16.mxu0 0
    %4124 = vmatpush1.bf16.xpose.msra.mxu0 0
    %4125 = vmatprep.subr.bf16.mxu0 0
    %4126 = vmatpush1.bf16.xpose.msra.mxu0 %v4109
    %4127 = vmatprep.subr.bf16.mxu0 0
    %4128 = vmatpush2.bf16.xpose.msra.mxu0 0
    %4129 = vmatprep.subr.bf16.mxu0 0
    %4130 = vmatpush2.bf16.xpose.msra.mxu0 0
    %4131 = vmatprep.subr.bf16.mxu0 0
    %4132 = vmatpush2.bf16.xpose.msra.mxu0 0
    %4133 = vmatprep.subr.bf16.mxu0 0
    %4134 = vmatpush2.bf16.xpose.msra.mxu0 0
    %4135 = vmatprep.subr.bf16.mxu0 0
    %4136 = vmatpush2.bf16.xpose.msra.mxu0 0
    %4137 = vmatprep.subr.bf16.mxu0 0
    %4138 = vmatpush2.bf16.xpose.msra.mxu0 0
    %4139 = vmatprep.subr.bf16.mxu0 0
    %4140 = vmatpush2.bf16.xpose.msra.mxu0 0
    %4141 = vmatprep.subr.bf16.mxu0 0
    %4142 = vmatpush2.bf16.xpose.msra.mxu0 0
    %4143 = vmatprep.mubr.bf16.mxu0 0
    %4144 = vmatmul.mubr.bf16.gmra.mxu0 %v4106
    %v4145 = vpop.f32.mrf.mxu0
    %v4146 = vadd.f32 0.0, %v4145
    %v4147 = vpop.f32.mrf.mxu0
    %v4148 = vpop.f32.mrf.mxu0
    %v4149 = vpop.f32.mrf.mxu0
    %4150 = vdwg.mxu0
    %4151 = vrot.lane.b32.xlu0 %v3880, 112
    %v4152 = vpop.permute.xlu0 %4151
    %4153 = vrot.lane.b32.xlu0 %v3880, 80
    %v4154 = vpop.permute.xlu0 %4153
    %v4156 = vsel %vm759, %v4152, 0
    %v4159 = vsel %vm759, %v4154, 0
    %4161 = vmatprep.subr.bf16.mxu0 0
    %4162 = vmatpush1.bf16.xpose.msra.mxu0 0
    %4163 = vmatprep.subr.bf16.mxu0 0
    %4164 = vmatpush1.bf16.xpose.msra.mxu0 0
    %4165 = vmatprep.subr.bf16.mxu0 0
    %4166 = vmatpush1.bf16.xpose.msra.mxu0 0
    %4167 = vmatprep.subr.bf16.mxu0 0
    %4168 = vmatpush1.bf16.xpose.msra.mxu0 0
    %4169 = vmatprep.subr.bf16.mxu0 0
    %4170 = vmatpush1.bf16.xpose.msra.mxu0 0
    %4171 = vmatprep.subr.bf16.mxu0 0
    %4172 = vmatpush1.bf16.xpose.msra.mxu0 0
    %4173 = vmatprep.subr.bf16.mxu0 0
    %4174 = vmatpush1.bf16.xpose.msra.mxu0 0
    %4175 = vmatprep.subr.bf16.mxu0 0
    %4176 = vmatpush1.bf16.xpose.msra.mxu0 %v4159
    %4177 = vmatprep.subr.bf16.mxu0 0
    %4178 = vmatpush2.bf16.xpose.msra.mxu0 0
    %4179 = vmatprep.subr.bf16.mxu0 0
    %4180 = vmatpush2.bf16.xpose.msra.mxu0 0
    %4181 = vmatprep.subr.bf16.mxu0 0
    %4182 = vmatpush2.bf16.xpose.msra.mxu0 0
    %4183 = vmatprep.subr.bf16.mxu0 0
    %4184 = vmatpush2.bf16.xpose.msra.mxu0 0
    %4185 = vmatprep.subr.bf16.mxu0 0
    %4186 = vmatpush2.bf16.xpose.msra.mxu0 0
    %4187 = vmatprep.subr.bf16.mxu0 0
    %4188 = vmatpush2.bf16.xpose.msra.mxu0 0
    %4189 = vmatprep.subr.bf16.mxu0 0
    %4190 = vmatpush2.bf16.xpose.msra.mxu0 0
    %4191 = vmatprep.subr.bf16.mxu0 0
    %4192 = vmatpush2.bf16.xpose.msra.mxu0 0
    %4193 = vmatprep.mubr.bf16.mxu0 0
    %4194 = vmatmul.mubr.bf16.gmra.mxu0 %v4156
    %v4195 = vpop.f32.mrf.mxu0
    %v4196 = vadd.f32 0.0, %v4195
    %v4197 = vpop.f32.mrf.mxu0
    %v4198 = vpop.f32.mrf.mxu0
    %v4199 = vpop.f32.mrf.mxu0
    %4200 = vdwg.mxu0
    %v4201 = vmul.f32 %v4146, 0.25
    %v4202 = vmul.f32 %v4196, 0.25
    %v4203 = vsel %vm2515, %v4201, -inf
    %4204 = vmax.xlane.f32.xlu0 %v4203
    %v4205 = vpop.xlane.xlu0 %4204
    %v4206 = vsel %vm2515, %v4202, -inf
    %4207 = vmax.xlane.f32.xlu0 %v4206
    %v4208 = vpop.xlane.xlu0 %4207
    %v4209 = vsub.f32 %v4201, %v4205
    %v4210 = vsub.f32 %v4202, %v4208
    %v4211 = vmul.f32 %v4209, 1.442695
    %v4212 = vpow.pop %v4211
    %v4213 = vmul.f32 %v4210, 1.442695
    %v4214 = vpow.pop %v4213
    %v4215 = vsel %vm2515, %v4212, 0.0
    %4216 = vadd.xlane.f32.xlu0 %v4215
    %v4217 = vpop.xlane.xlu0 %4216
    %v4218 = vsel %vm2515, %v4214, 0.0
    %4219 = vadd.xlane.f32.xlu0 %v4218
    %v4220 = vpop.xlane.xlu0 %4219
    %v4221 = vrcp.pop %v4217
    %v4222 = vrcp.pop %v4220
    %v4223 = vmul.f32 %v4212, %v4221
    %v4224 = vmul.f32 %v4214, %v4222
    %v4225 = vpack.c.bf16 %v4223, %v4223
    %v4226 = vpack.c.bf16 %v4224, %v4224
    %4227 = vrot.lane.b32.xlu0 %v3879, 48
    %v4228 = vpop.permute.xlu0 %4227
    %v4230 = vsel %vm2542, %v4225, 0
    %v4233 = vsel %vm2546, %v4228, 0
    %4235 = vmatprep.subr.bf16.mxu0 0
    %4236 = vmatpush1.bf16.msra.mxu0 0
    %4237 = vmatprep.subr.bf16.mxu0 0
    %4238 = vmatpush1.bf16.msra.mxu0 0
    %4239 = vmatprep.subr.bf16.mxu0 0
    %4240 = vmatpush1.bf16.msra.mxu0 0
    %4241 = vmatprep.subr.bf16.mxu0 0
    %4242 = vmatpush1.bf16.msra.mxu0 0
    %4243 = vmatprep.subr.bf16.mxu0 0
    %4244 = vmatpush1.bf16.msra.mxu0 0
    %4245 = vmatprep.subr.bf16.mxu0 0
    %4246 = vmatpush1.bf16.msra.mxu0 0
    %4247 = vmatprep.subr.bf16.mxu0 0
    %4248 = vmatpush1.bf16.msra.mxu0 0
    %4249 = vmatprep.subr.bf16.mxu0 0
    %4250 = vmatpush1.bf16.msra.mxu0 %v4233
    %4251 = vmatprep.subr.bf16.mxu0 0
    %4252 = vmatpush2.bf16.msra.mxu0 0
    %4253 = vmatprep.subr.bf16.mxu0 0
    %4254 = vmatpush2.bf16.msra.mxu0 0
    %4255 = vmatprep.subr.bf16.mxu0 0
    %4256 = vmatpush2.bf16.msra.mxu0 0
    %4257 = vmatprep.subr.bf16.mxu0 0
    %4258 = vmatpush2.bf16.msra.mxu0 0
    %4259 = vmatprep.subr.bf16.mxu0 0
    %4260 = vmatpush2.bf16.msra.mxu0 0
    %4261 = vmatprep.subr.bf16.mxu0 0
    %4262 = vmatpush2.bf16.msra.mxu0 0
    %4263 = vmatprep.subr.bf16.mxu0 0
    %4264 = vmatpush2.bf16.msra.mxu0 0
    %4265 = vmatprep.subr.bf16.mxu0 0
    %4266 = vmatpush2.bf16.msra.mxu0 0
    %4267 = vmatprep.mubr.bf16.mxu0 0
    %4268 = vmatmul.mubr.bf16.gmra.mxu0 %v4230
    %v4269 = vpop.f32.mrf.mxu0
    %v4270 = vadd.f32 0.0, %v4269
    %v4271 = vpop.f32.mrf.mxu0
    %v4272 = vpop.f32.mrf.mxu0
    %v4273 = vpop.f32.mrf.mxu0
    %4274 = vdwg.mxu0
    %4275 = vrot.lane.b32.xlu0 %v3880, 48
    %v4276 = vpop.permute.xlu0 %4275
    %v4278 = vsel %vm2542, %v4226, 0
    %v4281 = vsel %vm2546, %v4276, 0
    %4283 = vmatprep.subr.bf16.mxu0 0
    %4284 = vmatpush1.bf16.msra.mxu0 0
    %4285 = vmatprep.subr.bf16.mxu0 0
    %4286 = vmatpush1.bf16.msra.mxu0 0
    %4287 = vmatprep.subr.bf16.mxu0 0
    %4288 = vmatpush1.bf16.msra.mxu0 0
    %4289 = vmatprep.subr.bf16.mxu0 0
    %4290 = vmatpush1.bf16.msra.mxu0 0
    %4291 = vmatprep.subr.bf16.mxu0 0
    %4292 = vmatpush1.bf16.msra.mxu0 0
    %4293 = vmatprep.subr.bf16.mxu0 0
    %4294 = vmatpush1.bf16.msra.mxu0 0
    %4295 = vmatprep.subr.bf16.mxu0 0
    %4296 = vmatpush1.bf16.msra.mxu0 0
    %4297 = vmatprep.subr.bf16.mxu0 0
    %4298 = vmatpush1.bf16.msra.mxu0 %v4281
    %4299 = vmatprep.subr.bf16.mxu0 0
    %4300 = vmatpush2.bf16.msra.mxu0 0
    %4301 = vmatprep.subr.bf16.mxu0 0
    %4302 = vmatpush2.bf16.msra.mxu0 0
    %4303 = vmatprep.subr.bf16.mxu0 0
    %4304 = vmatpush2.bf16.msra.mxu0 0
    %4305 = vmatprep.subr.bf16.mxu0 0
    %4306 = vmatpush2.bf16.msra.mxu0 0
    %4307 = vmatprep.subr.bf16.mxu0 0
    %4308 = vmatpush2.bf16.msra.mxu0 0
    %4309 = vmatprep.subr.bf16.mxu0 0
    %4310 = vmatpush2.bf16.msra.mxu0 0
    %4311 = vmatprep.subr.bf16.mxu0 0
    %4312 = vmatpush2.bf16.msra.mxu0 0
    %4313 = vmatprep.subr.bf16.mxu0 0
    %4314 = vmatpush2.bf16.msra.mxu0 0
    %4315 = vmatprep.mubr.bf16.mxu0 0
    %4316 = vmatmul.mubr.bf16.gmra.mxu0 %v4278
    %v4317 = vpop.f32.mrf.mxu0
    %v4318 = vadd.f32 0.0, %v4317
    %v4319 = vpop.f32.mrf.mxu0
    %v4320 = vpop.f32.mrf.mxu0
    %v4321 = vpop.f32.mrf.mxu0
    %4322 = vdwg.mxu0
    %4325 = vrot.lane.b32.xlu0 %v4270, 16
    %v4326 = vpop.permute.xlu0 %4325
    %4327 = vrot.lane.b32.xlu0 %v4318, 16
    %v4328 = vpop.permute.xlu0 %4327
    %v4331 = vsel %vm759, %v4048, %v4326
    %v4332 = vsel %vm759, %v4096, %v4328
    %v4335 = vcombine.low %v4331, %v4332
    %v4337 = vpack.c.bf16 %v4335, %v4335
    %v4342 = vunpack.c.l.b16 %v3784
    %v4343 = vunpack.c.l.b16 %v3785
    %v4344 = vunpack.c.l.b16 %v3786
    %v4345 = vunpack.c.l.b16 %v3787
    %v4346 = vpack.c.b16 %v4343, %v4342
    %v4347 = vpack.c.b16 %v4345, %v4344
    %v4351 = vsel %vm709, %v4337, 0
    %4353 = vmatprep.subr.bf16.mxu0 0
    %4354 = vmatpush1.bf16.msra.mxu0 0
    %4355 = vmatprep.subr.bf16.mxu0 0
    %4356 = vmatpush1.bf16.msra.mxu0 0
    %4357 = vmatprep.subr.bf16.mxu0 0
    %4358 = vmatpush1.bf16.msra.mxu0 0
    %4359 = vmatprep.subr.bf16.mxu0 0
    %4360 = vmatpush1.bf16.msra.mxu0 0
    %4361 = vmatprep.subr.bf16.mxu0 0
    %4362 = vmatpush1.bf16.msra.mxu0 0
    %4363 = vmatprep.subr.bf16.mxu0 0
    %4364 = vmatpush1.bf16.msra.mxu0 0
    %4365 = vmatprep.subr.bf16.mxu0 0
    %4366 = vmatpush1.bf16.msra.mxu0 %v4347
    %4367 = vmatprep.subr.bf16.mxu0 0
    %4368 = vmatpush1.bf16.msra.mxu0 %v4346
    %4369 = vmatprep.subr.bf16.mxu0 0
    %4370 = vmatpush2.bf16.msra.mxu0 0
    %4371 = vmatprep.subr.bf16.mxu0 0
    %4372 = vmatpush2.bf16.msra.mxu0 0
    %4373 = vmatprep.subr.bf16.mxu0 0
    %4374 = vmatpush2.bf16.msra.mxu0 0
    %4375 = vmatprep.subr.bf16.mxu0 0
    %4376 = vmatpush2.bf16.msra.mxu0 0
    %4377 = vmatprep.subr.bf16.mxu0 0
    %4378 = vmatpush2.bf16.msra.mxu0 0
    %4379 = vmatprep.subr.bf16.mxu0 0
    %4380 = vmatpush2.bf16.msra.mxu0 0
    %4381 = vmatprep.subr.bf16.mxu0 0
    %4382 = vmatpush2.bf16.msra.mxu0 0
    %4383 = vmatprep.subr.bf16.mxu0 0
    %4384 = vmatpush2.bf16.msra.mxu0 0
    %4385 = vmatprep.mubr.bf16.mxu0 0
    %4386 = vmatmul.mubr.bf16.gmra.mxu0 %v4351
    %v4387 = vpop.f32.mrf.mxu0
    %v4388 = vadd.f32 %v3779, %v4387
    %v4389 = vpop.f32.mrf.mxu0
    %v4390 = vpop.f32.mrf.mxu0
    %v4391 = vpop.f32.mrf.mxu0
    %4392 = vdwg.mxu0
    %v4393 = vsel %vm709, %v4388, 0.0
    %4394 = vadd.xlane.f32.xlu0 %v4393
    %v4395 = vpop.xlane.xlu0 %4394
    %v4396 = vmul.f32 %v4395, %v1272
    %v4397 = vsub.f32 %v4388, %v4396
    %v4398 = vmul.f32 %v4397, %v4397
    %v4399 = vsel %vm709, %v4398, 0.0
    %4400 = vadd.xlane.f32.xlu0 %v4399
    %v4401 = vpop.xlane.xlu0 %4400
    %v4402 = vmul.f32 %v4401, %v1272
    %v4403 = vadd.f32 %v4402, 1e-06
    %v4404 = vrsqrt.pop %v4403
    %v4405 = vmul.f32 %v4397, %v4404
    %v4407 = vlaneseq
    %v4408 = vshrl.u32 %v4407, 7
    %v4409 = vsub.s32 0, %v4408
    %v4410 = vrot.slane %v3788, %v4409
    %v4412 = vmul.f32 %v4405, %v4410
    %v4414 = vlaneseq
    %v4415 = vshrl.u32 %v4414, 7
    %v4416 = vsub.s32 0, %v4415
    %v4417 = vrot.slane %v3789, %v4416
    %v4419 = vadd.f32 %v4412, %v4417
    %v4420 = vpack.c.bf16 %v4419, %v4419
    %v4425 = vunpack.c.l.b16 %v3790
    %v4426 = vunpack.c.l.b16 %v3791
    %v4427 = vunpack.c.l.b16 %v3792
    %v4428 = vunpack.c.l.b16 %v3793
    %v4429 = vpack.c.b16 %v4426, %v4425
    %v4430 = vpack.c.b16 %v4428, %v4427
    %v4434 = vsel %vm709, %v4420, 0
    %4436 = vmatprep.subr.bf16.mxu0 0
    %4437 = vmatpush1.bf16.msra.mxu0 0
    %4438 = vmatprep.subr.bf16.mxu0 0
    %4439 = vmatpush1.bf16.msra.mxu0 0
    %4440 = vmatprep.subr.bf16.mxu0 0
    %4441 = vmatpush1.bf16.msra.mxu0 0
    %4442 = vmatprep.subr.bf16.mxu0 0
    %4443 = vmatpush1.bf16.msra.mxu0 0
    %4444 = vmatprep.subr.bf16.mxu0 0
    %4445 = vmatpush1.bf16.msra.mxu0 0
    %4446 = vmatprep.subr.bf16.mxu0 0
    %4447 = vmatpush1.bf16.msra.mxu0 0
    %4448 = vmatprep.subr.bf16.mxu0 0
    %4449 = vmatpush1.bf16.msra.mxu0 %v4430
    %4450 = vmatprep.subr.bf16.mxu0 0
    %4451 = vmatpush1.bf16.msra.mxu0 %v4429
    %4452 = vmatprep.subr.bf16.mxu0 0
    %4453 = vmatpush2.bf16.msra.mxu0 0
    %4454 = vmatprep.subr.bf16.mxu0 0
    %4455 = vmatpush2.bf16.msra.mxu0 0
    %4456 = vmatprep.subr.bf16.mxu0 0
    %4457 = vmatpush2.bf16.msra.mxu0 0
    %4458 = vmatprep.subr.bf16.mxu0 0
    %4459 = vmatpush2.bf16.msra.mxu0 0
    %4460 = vmatprep.subr.bf16.mxu0 0
    %4461 = vmatpush2.bf16.msra.mxu0 0
    %4462 = vmatprep.subr.bf16.mxu0 0
    %4463 = vmatpush2.bf16.msra.mxu0 0
    %4464 = vmatprep.subr.bf16.mxu0 0
    %4465 = vmatpush2.bf16.msra.mxu0 0
    %4466 = vmatprep.subr.bf16.mxu0 0
    %4467 = vmatpush2.bf16.msra.mxu0 0
    %4468 = vmatprep.mubr.bf16.mxu0 0
    %4469 = vmatmul.mubr.bf16.gmra.mxu0 %v4434
    %v4470 = vpop.f32.mrf.mxu0
    %v4471 = vadd.f32 0.0, %v4470
    %v4472 = vpop.f32.mrf.mxu0
    %v4473 = vpop.f32.mrf.mxu0
    %v4474 = vpop.f32.mrf.mxu0
    %4475 = vdwg.mxu0
    %v4480 = vunpack.c.l.b16 %v3794
    %v4481 = vunpack.c.l.b16 %v3795
    %v4482 = vunpack.c.l.b16 %v3796
    %v4483 = vunpack.c.l.b16 %v3797
    %v4484 = vpack.c.b16 %v4481, %v4480
    %v4485 = vpack.c.b16 %v4483, %v4482
    %4488 = vmatprep.subr.bf16.mxu0 0
    %4489 = vmatpush1.bf16.msra.mxu0 0
    %4490 = vmatprep.subr.bf16.mxu0 0
    %4491 = vmatpush1.bf16.msra.mxu0 0
    %4492 = vmatprep.subr.bf16.mxu0 0
    %4493 = vmatpush1.bf16.msra.mxu0 0
    %4494 = vmatprep.subr.bf16.mxu0 0
    %4495 = vmatpush1.bf16.msra.mxu0 0
    %4496 = vmatprep.subr.bf16.mxu0 0
    %4497 = vmatpush1.bf16.msra.mxu0 0
    %4498 = vmatprep.subr.bf16.mxu0 0
    %4499 = vmatpush1.bf16.msra.mxu0 0
    %4500 = vmatprep.subr.bf16.mxu0 0
    %4501 = vmatpush1.bf16.msra.mxu0 %v4485
    %4502 = vmatprep.subr.bf16.mxu0 0
    %4503 = vmatpush1.bf16.msra.mxu0 %v4484
    %4504 = vmatprep.subr.bf16.mxu0 0
    %4505 = vmatpush2.bf16.msra.mxu0 0
    %4506 = vmatprep.subr.bf16.mxu0 0
    %4507 = vmatpush2.bf16.msra.mxu0 0
    %4508 = vmatprep.subr.bf16.mxu0 0
    %4509 = vmatpush2.bf16.msra.mxu0 0
    %4510 = vmatprep.subr.bf16.mxu0 0
    %4511 = vmatpush2.bf16.msra.mxu0 0
    %4512 = vmatprep.subr.bf16.mxu0 0
    %4513 = vmatpush2.bf16.msra.mxu0 0
    %4514 = vmatprep.subr.bf16.mxu0 0
    %4515 = vmatpush2.bf16.msra.mxu0 0
    %4516 = vmatprep.subr.bf16.mxu0 0
    %4517 = vmatpush2.bf16.msra.mxu0 0
    %4518 = vmatprep.subr.bf16.mxu0 0
    %4519 = vmatpush2.bf16.msra.mxu0 0
    %4520 = vmatprep.mubr.bf16.mxu0 0
    %4521 = vmatmul.mubr.bf16.gmra.mxu0 %v3027
    %v4522 = vpop.f32.mrf.mxu0
    %v4523 = vadd.f32 0.0, %v4522
    %v4524 = vpop.f32.mrf.mxu0
    %v4525 = vpop.f32.mrf.mxu0
    %v4526 = vadd.f32 0.0, %v4525
    %v4527 = vpop.f32.mrf.mxu0
    %4528 = vdwg.mxu0
    %v4530 = vcombine.high %v4471, %v4471
    %v4532 = vpack.c.bf16 %v4471, %v4471
    %v4533 = vpack.c.bf16 %v4530, %v4530
    %v4534 = vpack.c.bf16 %v4523, %v4523
    %v4535 = vpack.c.bf16 %v4526, %v4526
    %v4537 = vsel %vm759, %v4532, 0
    %v4540 = vsel %vm759, %v4534, 0
    %4542 = vmatprep.subr.bf16.mxu0 0
    %4543 = vmatpush1.bf16.xpose.msra.mxu0 0
    %4544 = vmatprep.subr.bf16.mxu0 0
    %4545 = vmatpush1.bf16.xpose.msra.mxu0 0
    %4546 = vmatprep.subr.bf16.mxu0 0
    %4547 = vmatpush1.bf16.xpose.msra.mxu0 0
    %4548 = vmatprep.subr.bf16.mxu0 0
    %4549 = vmatpush1.bf16.xpose.msra.mxu0 0
    %4550 = vmatprep.subr.bf16.mxu0 0
    %4551 = vmatpush1.bf16.xpose.msra.mxu0 0
    %4552 = vmatprep.subr.bf16.mxu0 0
    %4553 = vmatpush1.bf16.xpose.msra.mxu0 0
    %4554 = vmatprep.subr.bf16.mxu0 0
    %4555 = vmatpush1.bf16.xpose.msra.mxu0 0
    %4556 = vmatprep.subr.bf16.mxu0 0
    %4557 = vmatpush1.bf16.xpose.msra.mxu0 %v4540
    %4558 = vmatprep.subr.bf16.mxu0 0
    %4559 = vmatpush2.bf16.xpose.msra.mxu0 0
    %4560 = vmatprep.subr.bf16.mxu0 0
    %4561 = vmatpush2.bf16.xpose.msra.mxu0 0
    %4562 = vmatprep.subr.bf16.mxu0 0
    %4563 = vmatpush2.bf16.xpose.msra.mxu0 0
    %4564 = vmatprep.subr.bf16.mxu0 0
    %4565 = vmatpush2.bf16.xpose.msra.mxu0 0
    %4566 = vmatprep.subr.bf16.mxu0 0
    %4567 = vmatpush2.bf16.xpose.msra.mxu0 0
    %4568 = vmatprep.subr.bf16.mxu0 0
    %4569 = vmatpush2.bf16.xpose.msra.mxu0 0
    %4570 = vmatprep.subr.bf16.mxu0 0
    %4571 = vmatpush2.bf16.xpose.msra.mxu0 0
    %4572 = vmatprep.subr.bf16.mxu0 0
    %4573 = vmatpush2.bf16.xpose.msra.mxu0 0
    %4574 = vmatprep.mubr.bf16.mxu0 0
    %4575 = vmatmul.mubr.bf16.gmra.mxu0 %v4537
    %v4576 = vpop.f32.mrf.mxu0
    %v4577 = vadd.f32 0.0, %v4576
    %v4578 = vpop.f32.mrf.mxu0
    %v4579 = vpop.f32.mrf.mxu0
    %v4580 = vpop.f32.mrf.mxu0
    %4581 = vdwg.mxu0
    %v4583 = vsel %vm759, %v4533, 0
    %v4586 = vsel %vm759, %v4535, 0
    %4588 = vmatprep.subr.bf16.mxu0 0
    %4589 = vmatpush1.bf16.xpose.msra.mxu0 0
    %4590 = vmatprep.subr.bf16.mxu0 0
    %4591 = vmatpush1.bf16.xpose.msra.mxu0 0
    %4592 = vmatprep.subr.bf16.mxu0 0
    %4593 = vmatpush1.bf16.xpose.msra.mxu0 0
    %4594 = vmatprep.subr.bf16.mxu0 0
    %4595 = vmatpush1.bf16.xpose.msra.mxu0 0
    %4596 = vmatprep.subr.bf16.mxu0 0
    %4597 = vmatpush1.bf16.xpose.msra.mxu0 0
    %4598 = vmatprep.subr.bf16.mxu0 0
    %4599 = vmatpush1.bf16.xpose.msra.mxu0 0
    %4600 = vmatprep.subr.bf16.mxu0 0
    %4601 = vmatpush1.bf16.xpose.msra.mxu0 0
    %4602 = vmatprep.subr.bf16.mxu0 0
    %4603 = vmatpush1.bf16.xpose.msra.mxu0 %v4586
    %4604 = vmatprep.subr.bf16.mxu0 0
    %4605 = vmatpush2.bf16.xpose.msra.mxu0 0
    %4606 = vmatprep.subr.bf16.mxu0 0
    %4607 = vmatpush2.bf16.xpose.msra.mxu0 0
    %4608 = vmatprep.subr.bf16.mxu0 0
    %4609 = vmatpush2.bf16.xpose.msra.mxu0 0
    %4610 = vmatprep.subr.bf16.mxu0 0
    %4611 = vmatpush2.bf16.xpose.msra.mxu0 0
    %4612 = vmatprep.subr.bf16.mxu0 0
    %4613 = vmatpush2.bf16.xpose.msra.mxu0 0
    %4614 = vmatprep.subr.bf16.mxu0 0
    %4615 = vmatpush2.bf16.xpose.msra.mxu0 0
    %4616 = vmatprep.subr.bf16.mxu0 0
    %4617 = vmatpush2.bf16.xpose.msra.mxu0 0
    %4618 = vmatprep.subr.bf16.mxu0 0
    %4619 = vmatpush2.bf16.xpose.msra.mxu0 0
    %4620 = vmatprep.mubr.bf16.mxu0 0
    %4621 = vmatmul.mubr.bf16.gmra.mxu0 %v4583
    %v4622 = vpop.f32.mrf.mxu0
    %v4623 = vadd.f32 0.0, %v4622
    %v4624 = vpop.f32.mrf.mxu0
    %v4625 = vpop.f32.mrf.mxu0
    %v4626 = vpop.f32.mrf.mxu0
    %4627 = vdwg.mxu0
    %v4628 = vmul.f32 %v4577, 0.25
    %v4629 = vmul.f32 %v4623, 0.25
    %v4630 = vsel %vm3171, %v4628, -inf
    %4631 = vmax.xlane.f32.xlu0 %v4630
    %v4632 = vpop.xlane.xlu0 %4631
    %v4633 = vsel %vm3171, %v4629, -inf
    %4634 = vmax.xlane.f32.xlu0 %v4633
    %v4635 = vpop.xlane.xlu0 %4634
    %v4636 = vsub.f32 %v4628, %v4632
    %v4637 = vsub.f32 %v4629, %v4635
    %v4638 = vmul.f32 %v4636, 1.442695
    %v4639 = vpow.pop %v4638
    %v4640 = vmul.f32 %v4637, 1.442695
    %v4641 = vpow.pop %v4640
    %v4642 = vsel %vm3171, %v4639, 0.0
    %4643 = vadd.xlane.f32.xlu0 %v4642
    %v4644 = vpop.xlane.xlu0 %4643
    %v4645 = vsel %vm3171, %v4641, 0.0
    %4646 = vadd.xlane.f32.xlu0 %v4645
    %v4647 = vpop.xlane.xlu0 %4646
    %v4648 = vrcp.pop %v4644
    %v4649 = vrcp.pop %v4647
    %v4650 = vmul.f32 %v4639, %v4648
    %v4651 = vmul.f32 %v4641, %v4649
    %v4652 = vpack.c.bf16 %v4650, %v4650
    %v4653 = vpack.c.bf16 %v4651, %v4651
    %4655 = vrot.lane.b32.xlu0 %v4534, 96
    %v4656 = vpop.permute.xlu0 %4655
    %v4658 = vsel %vm619, %v4652, 0
    %v4661 = vsel %vm623, %v4656, 0
    %4663 = vmatprep.subr.bf16.mxu0 0
    %4664 = vmatpush1.bf16.msra.mxu0 0
    %4665 = vmatprep.subr.bf16.mxu0 0
    %4666 = vmatpush1.bf16.msra.mxu0 0
    %4667 = vmatprep.subr.bf16.mxu0 0
    %4668 = vmatpush1.bf16.msra.mxu0 0
    %4669 = vmatprep.subr.bf16.mxu0 0
    %4670 = vmatpush1.bf16.msra.mxu0 0
    %4671 = vmatprep.subr.bf16.mxu0 0
    %4672 = vmatpush1.bf16.msra.mxu0 0
    %4673 = vmatprep.subr.bf16.mxu0 0
    %4674 = vmatpush1.bf16.msra.mxu0 0
    %4675 = vmatprep.subr.bf16.mxu0 0
    %4676 = vmatpush1.bf16.msra.mxu0 0
    %4677 = vmatprep.subr.bf16.mxu0 0
    %4678 = vmatpush1.bf16.msra.mxu0 %v4661
    %4679 = vmatprep.subr.bf16.mxu0 0
    %4680 = vmatpush2.bf16.msra.mxu0 0
    %4681 = vmatprep.subr.bf16.mxu0 0
    %4682 = vmatpush2.bf16.msra.mxu0 0
    %4683 = vmatprep.subr.bf16.mxu0 0
    %4684 = vmatpush2.bf16.msra.mxu0 0
    %4685 = vmatprep.subr.bf16.mxu0 0
    %4686 = vmatpush2.bf16.msra.mxu0 0
    %4687 = vmatprep.subr.bf16.mxu0 0
    %4688 = vmatpush2.bf16.msra.mxu0 0
    %4689 = vmatprep.subr.bf16.mxu0 0
    %4690 = vmatpush2.bf16.msra.mxu0 0
    %4691 = vmatprep.subr.bf16.mxu0 0
    %4692 = vmatpush2.bf16.msra.mxu0 0
    %4693 = vmatprep.subr.bf16.mxu0 0
    %4694 = vmatpush2.bf16.msra.mxu0 0
    %4695 = vmatprep.mubr.bf16.mxu0 0
    %4696 = vmatmul.mubr.bf16.gmra.mxu0 %v4658
    %v4697 = vpop.f32.mrf.mxu0
    %v4698 = vadd.f32 0.0, %v4697
    %v4699 = vpop.f32.mrf.mxu0
    %v4700 = vpop.f32.mrf.mxu0
    %v4701 = vpop.f32.mrf.mxu0
    %4702 = vdwg.mxu0
    %4704 = vrot.lane.b32.xlu0 %v4535, 96
    %v4705 = vpop.permute.xlu0 %4704
    %v4707 = vsel %vm619, %v4653, 0
    %v4710 = vsel %vm623, %v4705, 0
    %4712 = vmatprep.subr.bf16.mxu0 0
    %4713 = vmatpush1.bf16.msra.mxu0 0
    %4714 = vmatprep.subr.bf16.mxu0 0
    %4715 = vmatpush1.bf16.msra.mxu0 0
    %4716 = vmatprep.subr.bf16.mxu0 0
    %4717 = vmatpush1.bf16.msra.mxu0 0
    %4718 = vmatprep.subr.bf16.mxu0 0
    %4719 = vmatpush1.bf16.msra.mxu0 0
    %4720 = vmatprep.subr.bf16.mxu0 0
    %4721 = vmatpush1.bf16.msra.mxu0 0
    %4722 = vmatprep.subr.bf16.mxu0 0
    %4723 = vmatpush1.bf16.msra.mxu0 0
    %4724 = vmatprep.subr.bf16.mxu0 0
    %4725 = vmatpush1.bf16.msra.mxu0 0
    %4726 = vmatprep.subr.bf16.mxu0 0
    %4727 = vmatpush1.bf16.msra.mxu0 %v4710
    %4728 = vmatprep.subr.bf16.mxu0 0
    %4729 = vmatpush2.bf16.msra.mxu0 0
    %4730 = vmatprep.subr.bf16.mxu0 0
    %4731 = vmatpush2.bf16.msra.mxu0 0
    %4732 = vmatprep.subr.bf16.mxu0 0
    %4733 = vmatpush2.bf16.msra.mxu0 0
    %4734 = vmatprep.subr.bf16.mxu0 0
    %4735 = vmatpush2.bf16.msra.mxu0 0
    %4736 = vmatprep.subr.bf16.mxu0 0
    %4737 = vmatpush2.bf16.msra.mxu0 0
    %4738 = vmatprep.subr.bf16.mxu0 0
    %4739 = vmatpush2.bf16.msra.mxu0 0
    %4740 = vmatprep.subr.bf16.mxu0 0
    %4741 = vmatpush2.bf16.msra.mxu0 0
    %4742 = vmatprep.subr.bf16.mxu0 0
    %4743 = vmatpush2.bf16.msra.mxu0 0
    %4744 = vmatprep.mubr.bf16.mxu0 0
    %4745 = vmatmul.mubr.bf16.gmra.mxu0 %v4707
    %v4746 = vpop.f32.mrf.mxu0
    %v4747 = vadd.f32 0.0, %v4746
    %v4748 = vpop.f32.mrf.mxu0
    %v4749 = vpop.f32.mrf.mxu0
    %v4750 = vpop.f32.mrf.mxu0
    %4751 = vdwg.mxu0
    %4753 = vrot.lane.b32.xlu0 %v4532, 112
    %v4754 = vpop.permute.xlu0 %4753
    %4755 = vrot.lane.b32.xlu0 %v4534, 112
    %v4756 = vpop.permute.xlu0 %4755
    %v4758 = vsel %vm759, %v4754, 0
    %v4761 = vsel %vm759, %v4756, 0
    %4763 = vmatprep.subr.bf16.mxu0 0
    %4764 = vmatpush1.bf16.xpose.msra.mxu0 0
    %4765 = vmatprep.subr.bf16.mxu0 0
    %4766 = vmatpush1.bf16.xpose.msra.mxu0 0
    %4767 = vmatprep.subr.bf16.mxu0 0
    %4768 = vmatpush1.bf16.xpose.msra.mxu0 0
    %4769 = vmatprep.subr.bf16.mxu0 0
    %4770 = vmatpush1.bf16.xpose.msra.mxu0 0
    %4771 = vmatprep.subr.bf16.mxu0 0
    %4772 = vmatpush1.bf16.xpose.msra.mxu0 0
    %4773 = vmatprep.subr.bf16.mxu0 0
    %4774 = vmatpush1.bf16.xpose.msra.mxu0 0
    %4775 = vmatprep.subr.bf16.mxu0 0
    %4776 = vmatpush1.bf16.xpose.msra.mxu0 0
    %4777 = vmatprep.subr.bf16.mxu0 0
    %4778 = vmatpush1.bf16.xpose.msra.mxu0 %v4761
    %4779 = vmatprep.subr.bf16.mxu0 0
    %4780 = vmatpush2.bf16.xpose.msra.mxu0 0
    %4781 = vmatprep.subr.bf16.mxu0 0
    %4782 = vmatpush2.bf16.xpose.msra.mxu0 0
    %4783 = vmatprep.subr.bf16.mxu0 0
    %4784 = vmatpush2.bf16.xpose.msra.mxu0 0
    %4785 = vmatprep.subr.bf16.mxu0 0
    %4786 = vmatpush2.bf16.xpose.msra.mxu0 0
    %4787 = vmatprep.subr.bf16.mxu0 0
    %4788 = vmatpush2.bf16.xpose.msra.mxu0 0
    %4789 = vmatprep.subr.bf16.mxu0 0
    %4790 = vmatpush2.bf16.xpose.msra.mxu0 0
    %4791 = vmatprep.subr.bf16.mxu0 0
    %4792 = vmatpush2.bf16.xpose.msra.mxu0 0
    %4793 = vmatprep.subr.bf16.mxu0 0
    %4794 = vmatpush2.bf16.xpose.msra.mxu0 0
    %4795 = vmatprep.mubr.bf16.mxu0 0
    %4796 = vmatmul.mubr.bf16.gmra.mxu0 %v4758
    %v4797 = vpop.f32.mrf.mxu0
    %v4798 = vadd.f32 0.0, %v4797
    %v4799 = vpop.f32.mrf.mxu0
    %v4800 = vpop.f32.mrf.mxu0
    %v4801 = vpop.f32.mrf.mxu0
    %4802 = vdwg.mxu0
    %4804 = vrot.lane.b32.xlu0 %v4533, 112
    %v4805 = vpop.permute.xlu0 %4804
    %4806 = vrot.lane.b32.xlu0 %v4535, 112
    %v4807 = vpop.permute.xlu0 %4806
    %v4809 = vsel %vm759, %v4805, 0
    %v4812 = vsel %vm759, %v4807, 0
    %4814 = vmatprep.subr.bf16.mxu0 0
    %4815 = vmatpush1.bf16.xpose.msra.mxu0 0
    %4816 = vmatprep.subr.bf16.mxu0 0
    %4817 = vmatpush1.bf16.xpose.msra.mxu0 0
    %4818 = vmatprep.subr.bf16.mxu0 0
    %4819 = vmatpush1.bf16.xpose.msra.mxu0 0
    %4820 = vmatprep.subr.bf16.mxu0 0
    %4821 = vmatpush1.bf16.xpose.msra.mxu0 0
    %4822 = vmatprep.subr.bf16.mxu0 0
    %4823 = vmatpush1.bf16.xpose.msra.mxu0 0
    %4824 = vmatprep.subr.bf16.mxu0 0
    %4825 = vmatpush1.bf16.xpose.msra.mxu0 0
    %4826 = vmatprep.subr.bf16.mxu0 0
    %4827 = vmatpush1.bf16.xpose.msra.mxu0 0
    %4828 = vmatprep.subr.bf16.mxu0 0
    %4829 = vmatpush1.bf16.xpose.msra.mxu0 %v4812
    %4830 = vmatprep.subr.bf16.mxu0 0
    %4831 = vmatpush2.bf16.xpose.msra.mxu0 0
    %4832 = vmatprep.subr.bf16.mxu0 0
    %4833 = vmatpush2.bf16.xpose.msra.mxu0 0
    %4834 = vmatprep.subr.bf16.mxu0 0
    %4835 = vmatpush2.bf16.xpose.msra.mxu0 0
    %4836 = vmatprep.subr.bf16.mxu0 0
    %4837 = vmatpush2.bf16.xpose.msra.mxu0 0
    %4838 = vmatprep.subr.bf16.mxu0 0
    %4839 = vmatpush2.bf16.xpose.msra.mxu0 0
    %4840 = vmatprep.subr.bf16.mxu0 0
    %4841 = vmatpush2.bf16.xpose.msra.mxu0 0
    %4842 = vmatprep.subr.bf16.mxu0 0
    %4843 = vmatpush2.bf16.xpose.msra.mxu0 0
    %4844 = vmatprep.subr.bf16.mxu0 0
    %4845 = vmatpush2.bf16.xpose.msra.mxu0 0
    %4846 = vmatprep.mubr.bf16.mxu0 0
    %4847 = vmatmul.mubr.bf16.gmra.mxu0 %v4809
    %v4848 = vpop.f32.mrf.mxu0
    %v4849 = vadd.f32 0.0, %v4848
    %v4850 = vpop.f32.mrf.mxu0
    %v4851 = vpop.f32.mrf.mxu0
    %v4852 = vpop.f32.mrf.mxu0
    %4853 = vdwg.mxu0
    %v4854 = vmul.f32 %v4798, 0.25
    %v4855 = vmul.f32 %v4849, 0.25
    %v4856 = vsel %vm3171, %v4854, -inf
    %4857 = vmax.xlane.f32.xlu0 %v4856
    %v4858 = vpop.xlane.xlu0 %4857
    %v4859 = vsel %vm3171, %v4855, -inf
    %4860 = vmax.xlane.f32.xlu0 %v4859
    %v4861 = vpop.xlane.xlu0 %4860
    %v4862 = vsub.f32 %v4854, %v4858
    %v4863 = vsub.f32 %v4855, %v4861
    %v4864 = vmul.f32 %v4862, 1.442695
    %v4865 = vpow.pop %v4864
    %v4866 = vmul.f32 %v4863, 1.442695
    %v4867 = vpow.pop %v4866
    %v4868 = vsel %vm3171, %v4865, 0.0
    %4869 = vadd.xlane.f32.xlu0 %v4868
    %v4870 = vpop.xlane.xlu0 %4869
    %v4871 = vsel %vm3171, %v4867, 0.0
    %4872 = vadd.xlane.f32.xlu0 %v4871
    %v4873 = vpop.xlane.xlu0 %4872
    %v4874 = vrcp.pop %v4870
    %v4875 = vrcp.pop %v4873
    %v4876 = vmul.f32 %v4865, %v4874
    %v4877 = vmul.f32 %v4867, %v4875
    %v4878 = vpack.c.bf16 %v4876, %v4876
    %v4879 = vpack.c.bf16 %v4877, %v4877
    %4880 = vrot.lane.b32.xlu0 %v4534, 80
    %v4881 = vpop.permute.xlu0 %4880
    %v4883 = vsel %vm619, %v4878, 0
    %v4886 = vsel %vm623, %v4881, 0
    %4888 = vmatprep.subr.bf16.mxu0 0
    %4889 = vmatpush1.bf16.msra.mxu0 0
    %4890 = vmatprep.subr.bf16.mxu0 0
    %4891 = vmatpush1.bf16.msra.mxu0 0
    %4892 = vmatprep.subr.bf16.mxu0 0
    %4893 = vmatpush1.bf16.msra.mxu0 0
    %4894 = vmatprep.subr.bf16.mxu0 0
    %4895 = vmatpush1.bf16.msra.mxu0 0
    %4896 = vmatprep.subr.bf16.mxu0 0
    %4897 = vmatpush1.bf16.msra.mxu0 0
    %4898 = vmatprep.subr.bf16.mxu0 0
    %4899 = vmatpush1.bf16.msra.mxu0 0
    %4900 = vmatprep.subr.bf16.mxu0 0
    %4901 = vmatpush1.bf16.msra.mxu0 0
    %4902 = vmatprep.subr.bf16.mxu0 0
    %4903 = vmatpush1.bf16.msra.mxu0 %v4886
    %4904 = vmatprep.subr.bf16.mxu0 0
    %4905 = vmatpush2.bf16.msra.mxu0 0
    %4906 = vmatprep.subr.bf16.mxu0 0
    %4907 = vmatpush2.bf16.msra.mxu0 0
    %4908 = vmatprep.subr.bf16.mxu0 0
    %4909 = vmatpush2.bf16.msra.mxu0 0
    %4910 = vmatprep.subr.bf16.mxu0 0
    %4911 = vmatpush2.bf16.msra.mxu0 0
    %4912 = vmatprep.subr.bf16.mxu0 0
    %4913 = vmatpush2.bf16.msra.mxu0 0
    %4914 = vmatprep.subr.bf16.mxu0 0
    %4915 = vmatpush2.bf16.msra.mxu0 0
    %4916 = vmatprep.subr.bf16.mxu0 0
    %4917 = vmatpush2.bf16.msra.mxu0 0
    %4918 = vmatprep.subr.bf16.mxu0 0
    %4919 = vmatpush2.bf16.msra.mxu0 0
    %4920 = vmatprep.mubr.bf16.mxu0 0
    %4921 = vmatmul.mubr.bf16.gmra.mxu0 %v4883
    %v4922 = vpop.f32.mrf.mxu0
    %v4923 = vadd.f32 0.0, %v4922
    %v4924 = vpop.f32.mrf.mxu0
    %v4925 = vpop.f32.mrf.mxu0
    %v4926 = vpop.f32.mrf.mxu0
    %4927 = vdwg.mxu0
    %4928 = vrot.lane.b32.xlu0 %v4535, 80
    %v4929 = vpop.permute.xlu0 %4928
    %v4931 = vsel %vm619, %v4879, 0
    %v4934 = vsel %vm623, %v4929, 0
    %4936 = vmatprep.subr.bf16.mxu0 0
    %4937 = vmatpush1.bf16.msra.mxu0 0
    %4938 = vmatprep.subr.bf16.mxu0 0
    %4939 = vmatpush1.bf16.msra.mxu0 0
    %4940 = vmatprep.subr.bf16.mxu0 0
    %4941 = vmatpush1.bf16.msra.mxu0 0
    %4942 = vmatprep.subr.bf16.mxu0 0
    %4943 = vmatpush1.bf16.msra.mxu0 0
    %4944 = vmatprep.subr.bf16.mxu0 0
    %4945 = vmatpush1.bf16.msra.mxu0 0
    %4946 = vmatprep.subr.bf16.mxu0 0
    %4947 = vmatpush1.bf16.msra.mxu0 0
    %4948 = vmatprep.subr.bf16.mxu0 0
    %4949 = vmatpush1.bf16.msra.mxu0 0
    %4950 = vmatprep.subr.bf16.mxu0 0
    %4951 = vmatpush1.bf16.msra.mxu0 %v4934
    %4952 = vmatprep.subr.bf16.mxu0 0
    %4953 = vmatpush2.bf16.msra.mxu0 0
    %4954 = vmatprep.subr.bf16.mxu0 0
    %4955 = vmatpush2.bf16.msra.mxu0 0
    %4956 = vmatprep.subr.bf16.mxu0 0
    %4957 = vmatpush2.bf16.msra.mxu0 0
    %4958 = vmatprep.subr.bf16.mxu0 0
    %4959 = vmatpush2.bf16.msra.mxu0 0
    %4960 = vmatprep.subr.bf16.mxu0 0
    %4961 = vmatpush2.bf16.msra.mxu0 0
    %4962 = vmatprep.subr.bf16.mxu0 0
    %4963 = vmatpush2.bf16.msra.mxu0 0
    %4964 = vmatprep.subr.bf16.mxu0 0
    %4965 = vmatpush2.bf16.msra.mxu0 0
    %4966 = vmatprep.subr.bf16.mxu0 0
    %4967 = vmatpush2.bf16.msra.mxu0 0
    %4968 = vmatprep.mubr.bf16.mxu0 0
    %4969 = vmatmul.mubr.bf16.gmra.mxu0 %v4931
    %v4970 = vpop.f32.mrf.mxu0
    %v4971 = vadd.f32 0.0, %v4970
    %v4972 = vpop.f32.mrf.mxu0
    %v4973 = vpop.f32.mrf.mxu0
    %v4974 = vpop.f32.mrf.mxu0
    %4975 = vdwg.mxu0
    %4978 = vrot.lane.b32.xlu0 %v4923, 16
    %v4979 = vpop.permute.xlu0 %4978
    %4980 = vrot.lane.b32.xlu0 %v4971, 16
    %v4981 = vpop.permute.xlu0 %4980
    %v4984 = vsel %vm759, %v4698, %v4979
    %v4985 = vsel %vm759, %v4747, %v4981
    %v4988 = vcombine.low %v4984, %v4985
    %v4990 = vpack.c.bf16 %v4988, %v4988
    %v4995 = vunpack.c.l.b16 %v3798
    %v4996 = vunpack.c.l.b16 %v3799
    %v4997 = vunpack.c.l.b16 %v3800
    %v4998 = vunpack.c.l.b16 %v3801
    %v4999 = vpack.c.b16 %v4996, %v4995
    %v5000 = vpack.c.b16 %v4998, %v4997
    %v5004 = vsel %vm709, %v4990, 0
    %5006 = vmatprep.subr.bf16.mxu0 0
    %5007 = vmatpush1.bf16.msra.mxu0 0
    %5008 = vmatprep.subr.bf16.mxu0 0
    %5009 = vmatpush1.bf16.msra.mxu0 0
    %5010 = vmatprep.subr.bf16.mxu0 0
    %5011 = vmatpush1.bf16.msra.mxu0 0
    %5012 = vmatprep.subr.bf16.mxu0 0
    %5013 = vmatpush1.bf16.msra.mxu0 0
    %5014 = vmatprep.subr.bf16.mxu0 0
    %5015 = vmatpush1.bf16.msra.mxu0 0
    %5016 = vmatprep.subr.bf16.mxu0 0
    %5017 = vmatpush1.bf16.msra.mxu0 0
    %5018 = vmatprep.subr.bf16.mxu0 0
    %5019 = vmatpush1.bf16.msra.mxu0 %v5000
    %5020 = vmatprep.subr.bf16.mxu0 0
    %5021 = vmatpush1.bf16.msra.mxu0 %v4999
    %5022 = vmatprep.subr.bf16.mxu0 0
    %5023 = vmatpush2.bf16.msra.mxu0 0
    %5024 = vmatprep.subr.bf16.mxu0 0
    %5025 = vmatpush2.bf16.msra.mxu0 0
    %5026 = vmatprep.subr.bf16.mxu0 0
    %5027 = vmatpush2.bf16.msra.mxu0 0
    %5028 = vmatprep.subr.bf16.mxu0 0
    %5029 = vmatpush2.bf16.msra.mxu0 0
    %5030 = vmatprep.subr.bf16.mxu0 0
    %5031 = vmatpush2.bf16.msra.mxu0 0
    %5032 = vmatprep.subr.bf16.mxu0 0
    %5033 = vmatpush2.bf16.msra.mxu0 0
    %5034 = vmatprep.subr.bf16.mxu0 0
    %5035 = vmatpush2.bf16.msra.mxu0 0
    %5036 = vmatprep.subr.bf16.mxu0 0
    %5037 = vmatpush2.bf16.msra.mxu0 0
    %5038 = vmatprep.mubr.bf16.mxu0 0
    %5039 = vmatmul.mubr.bf16.gmra.mxu0 %v5004
    %v5040 = vpop.f32.mrf.mxu0
    %v5041 = vadd.f32 %v4419, %v5040
    %v5042 = vpop.f32.mrf.mxu0
    %v5043 = vpop.f32.mrf.mxu0
    %v5044 = vpop.f32.mrf.mxu0
    %5045 = vdwg.mxu0
    %v5046 = vsel %vm709, %v5041, 0.0
    %5047 = vadd.xlane.f32.xlu0 %v5046
    %v5048 = vpop.xlane.xlu0 %5047
    %v5049 = vmul.f32 %v5048, %v1272
    %v5050 = vsub.f32 %v5041, %v5049
    %v5051 = vmul.f32 %v5050, %v5050
    %v5052 = vsel %vm709, %v5051, 0.0
    %5053 = vadd.xlane.f32.xlu0 %v5052
    %v5054 = vpop.xlane.xlu0 %5053
    %v5055 = vmul.f32 %v5054, %v1272
    %v5056 = vadd.f32 %v5055, 1e-06
    %v5057 = vrsqrt.pop %v5056
    %v5058 = vmul.f32 %v5050, %v5057
    %v5060 = vlaneseq
    %v5061 = vshrl.u32 %v5060, 7
    %v5062 = vsub.s32 0, %v5061
    %v5063 = vrot.slane %v3802, %v5062
    %v5065 = vmul.f32 %v5058, %v5063
    %v5067 = vlaneseq
    %v5068 = vshrl.u32 %v5067, 7
    %v5069 = vsub.s32 0, %v5068
    %v5070 = vrot.slane %v3803, %v5069
    %v5072 = vadd.f32 %v5065, %v5070
    %v5073 = vpack.c.bf16 %v5072, %v5072
    %v5075 = vlaneseq
    %v5076 = vshrl.u32 %v5075, 7
    %v5077 = vsub.s32 0, %v5076
    %v5078 = vrot.slane %v3808, %v5077
    %v5084 = vunpack.c.l.b16 %v3804
    %v5085 = vunpack.c.l.b16 %v3805
    %v5086 = vunpack.c.l.b16 %v3806
    %v5087 = vunpack.c.l.b16 %v3807
    %v5088 = vpack.c.b16 %v5085, %v5084
    %v5089 = vpack.c.b16 %v5087, %v5086
    %v5093 = vsel %vm709, %v5073, 0
    %5095 = vmatprep.subr.bf16.mxu0 0
    %5096 = vmatpush1.bf16.msra.mxu0 0
    %5097 = vmatprep.subr.bf16.mxu0 0
    %5098 = vmatpush1.bf16.msra.mxu0 0
    %5099 = vmatprep.subr.bf16.mxu0 0
    %5100 = vmatpush1.bf16.msra.mxu0 0
    %5101 = vmatprep.subr.bf16.mxu0 0
    %5102 = vmatpush1.bf16.msra.mxu0 0
    %5103 = vmatprep.subr.bf16.mxu0 0
    %5104 = vmatpush1.bf16.msra.mxu0 0
    %5105 = vmatprep.subr.bf16.mxu0 0
    %5106 = vmatpush1.bf16.msra.mxu0 0
    %5107 = vmatprep.subr.bf16.mxu0 0
    %5108 = vmatpush1.bf16.msra.mxu0 %v5089
    %5109 = vmatprep.subr.bf16.mxu0 0
    %5110 = vmatpush1.bf16.msra.mxu0 %v5088
    %5111 = vmatprep.subr.bf16.mxu0 0
    %5112 = vmatpush2.bf16.msra.mxu0 0
    %5113 = vmatprep.subr.bf16.mxu0 0
    %5114 = vmatpush2.bf16.msra.mxu0 0
    %5115 = vmatprep.subr.bf16.mxu0 0
    %5116 = vmatpush2.bf16.msra.mxu0 0
    %5117 = vmatprep.subr.bf16.mxu0 0
    %5118 = vmatpush2.bf16.msra.mxu0 0
    %5119 = vmatprep.subr.bf16.mxu0 0
    %5120 = vmatpush2.bf16.msra.mxu0 0
    %5121 = vmatprep.subr.bf16.mxu0 0
    %5122 = vmatpush2.bf16.msra.mxu0 0
    %5123 = vmatprep.subr.bf16.mxu0 0
    %5124 = vmatpush2.bf16.msra.mxu0 0
    %5125 = vmatprep.subr.bf16.mxu0 0
    %5126 = vmatpush2.bf16.msra.mxu0 0
    %5127 = vmatprep.mubr.bf16.mxu0 0
    %5128 = vmatmul.mubr.bf16.gmra.mxu0 %v5093
    %v5129 = vpop.f32.mrf.mxu0
    %v5130 = vadd.f32 %v5078, %v5129
    %v5131 = vpop.f32.mrf.mxu0
    %v5132 = vpop.f32.mrf.mxu0
    %v5133 = vpop.f32.mrf.mxu0
    %5134 = vdwg.mxu0
    %v5135 = vmax.f32 %v5130, 0.0
    %v5136 = vpack.c.bf16 %v5135, %v5135
    %v5138 = vlaneseq
    %v5139 = vshrl.u32 %v5138, 7
    %v5140 = vsub.s32 0, %v5139
    %v5141 = vrot.slane %v3817, %v5140
    %v5151 = vunpack.c.l.b16 %v3809
    %v5152 = vunpack.c.l.b16 %v3810
    %v5153 = vunpack.c.l.b16 %v3811
    %v5154 = vunpack.c.l.b16 %v3812
    %v5155 = vunpack.c.l.b16 %v3813
    %v5156 = vunpack.c.l.b16 %v3814
    %v5157 = vunpack.c.l.b16 %v3815
    %v5158 = vunpack.c.l.b16 %v3816
    %v5159 = vpack.c.b16 %v5152, %v5151
    %v5160 = vpack.c.b16 %v5154, %v5153
    %v5161 = vpack.c.b16 %v5156, %v5155
    %v5162 = vpack.c.b16 %v5158, %v5157
    %v5168 = vsel %vm1405, %v5136, 0
    %5170 = vmatprep.subr.bf16.mxu0 0
    %5171 = vmatpush1.bf16.msra.mxu0 0
    %5172 = vmatprep.subr.bf16.mxu0 0
    %5173 = vmatpush1.bf16.msra.mxu0 0
    %5174 = vmatprep.subr.bf16.mxu0 0
    %5175 = vmatpush1.bf16.msra.mxu0 0
    %5176 = vmatprep.subr.bf16.mxu0 0
    %5177 = vmatpush1.bf16.msra.mxu0 0
    %5178 = vmatprep.subr.bf16.mxu0 0
    %5179 = vmatpush1.bf16.msra.mxu0 %v5162
    %5180 = vmatprep.subr.bf16.mxu0 0
    %5181 = vmatpush1.bf16.msra.mxu0 %v5161
    %5182 = vmatprep.subr.bf16.mxu0 0
    %5183 = vmatpush1.bf16.msra.mxu0 %v5160
    %5184 = vmatprep.subr.bf16.mxu0 0
    %5185 = vmatpush1.bf16.msra.mxu0 %v5159
    %5186 = vmatprep.subr.bf16.mxu0 0
    %5187 = vmatpush2.bf16.msra.mxu0 0
    %5188 = vmatprep.subr.bf16.mxu0 0
    %5189 = vmatpush2.bf16.msra.mxu0 0
    %5190 = vmatprep.subr.bf16.mxu0 0
    %5191 = vmatpush2.bf16.msra.mxu0 0
    %5192 = vmatprep.subr.bf16.mxu0 0
    %5193 = vmatpush2.bf16.msra.mxu0 0
    %5194 = vmatprep.subr.bf16.mxu0 0
    %5195 = vmatpush2.bf16.msra.mxu0 0
    %5196 = vmatprep.subr.bf16.mxu0 0
    %5197 = vmatpush2.bf16.msra.mxu0 0
    %5198 = vmatprep.subr.bf16.mxu0 0
    %5199 = vmatpush2.bf16.msra.mxu0 0
    %5200 = vmatprep.subr.bf16.mxu0 0
    %5201 = vmatpush2.bf16.msra.mxu0 0
    %5202 = vmatprep.mubr.bf16.mxu0 0
    %5203 = vmatmul.mubr.bf16.gmra.mxu0 %v5168
    %v5204 = vpop.f32.mrf.mxu0
    %v5205 = vadd.f32 %v5141, %v5204
    %v5206 = vpop.f32.mrf.mxu0
    %v5207 = vpop.f32.mrf.mxu0
    %v5208 = vpop.f32.mrf.mxu0
    %5209 = vdwg.mxu0
    %v5210 = vadd.f32 %v5205, %v5072
    %v5211 = vsel %vm709, %v5210, 0.0
    %5212 = vadd.xlane.f32.xlu0 %v5211
    %v5213 = vpop.xlane.xlu0 %5212
    %v5214 = vmul.f32 %v5213, %v1272
    %v5215 = vsub.f32 %v5210, %v5214
    %v5216 = vmul.f32 %v5215, %v5215
    %v5217 = vsel %vm709, %v5216, 0.0
    %5218 = vadd.xlane.f32.xlu0 %v5217
    %v5219 = vpop.xlane.xlu0 %5218
    %v5220 = vmul.f32 %v5219, %v1272
    %v5221 = vadd.f32 %v5220, 1e-06
    %v5222 = vrsqrt.pop %v5221
    %v5223 = vmul.f32 %v5215, %v5222
    %v5225 = vlaneseq
    %v5226 = vshrl.u32 %v5225, 7
    %v5227 = vsub.s32 0, %v5226
    %v5228 = vrot.slane %v3818, %v5227
    %v5230 = vmul.f32 %v5223, %v5228
    %v5232 = vlaneseq
    %v5233 = vshrl.u32 %v5232, 7
    %v5234 = vsub.s32 0, %v5233
    %v5235 = vrot.slane %v3819, %v5234
    %v5237 = vadd.f32 %v5230, %v5235
    %v5238 = vld [vmem:[%s111] sm:$0xf]
    %v5239 = vld [vmem:[%s111 + $0x4] sm:$0xf]
    %v5240 = vld [vmem:[%s111 + $0x8] sm:$0xf]
    %v5241 = vld [vmem:[%s111 + $0xc] sm:$0xf]
    %v5242 = vld [vmem:[%s113] sm:$0x1]
    %v5243 = vpack.c.bf16 %v5237, %v5237
    %v5245 = vlaneseq
    %v5246 = vshrl.u32 %v5245, 7
    %v5247 = vsub.s32 0, %v5246
    %v5248 = vrot.slane %v5242, %v5247
    %v5254 = vunpack.c.l.b16 %v5238
    %v5255 = vunpack.c.l.b16 %v5239
    %v5256 = vunpack.c.l.b16 %v5240
    %v5257 = vunpack.c.l.b16 %v5241
    %v5258 = vpack.c.b16 %v5255, %v5254
    %v5259 = vpack.c.b16 %v5257, %v5256
    %v5263 = vsel %vm709, %v5243, 0
    %5265 = vmatprep.subr.bf16.mxu0 0
    %5266 = vmatpush1.bf16.msra.mxu0 0
    %5267 = vmatprep.subr.bf16.mxu0 0
    %5268 = vmatpush1.bf16.msra.mxu0 0
    %5269 = vmatprep.subr.bf16.mxu0 0
    %5270 = vmatpush1.bf16.msra.mxu0 0
    %5271 = vmatprep.subr.bf16.mxu0 0
    %5272 = vmatpush1.bf16.msra.mxu0 0
    %5273 = vmatprep.subr.bf16.mxu0 0
    %5274 = vmatpush1.bf16.msra.mxu0 0
    %5275 = vmatprep.subr.bf16.mxu0 0
    %5276 = vmatpush1.bf16.msra.mxu0 0
    %5277 = vmatprep.subr.bf16.mxu0 0
    %5278 = vmatpush1.bf16.msra.mxu0 %v5259
    %5279 = vmatprep.subr.bf16.mxu0 0
    %5280 = vmatpush1.bf16.msra.mxu0 %v5258
    %5281 = vmatprep.subr.bf16.mxu0 0
    %5282 = vmatpush2.bf16.msra.mxu0 0
    %5283 = vmatprep.subr.bf16.mxu0 0
    %5284 = vmatpush2.bf16.msra.mxu0 0
    %5285 = vmatprep.subr.bf16.mxu0 0
    %5286 = vmatpush2.bf16.msra.mxu0 0
    %5287 = vmatprep.subr.bf16.mxu0 0
    %5288 = vmatpush2.bf16.msra.mxu0 0
    %5289 = vmatprep.subr.bf16.mxu0 0
    %5290 = vmatpush2.bf16.msra.mxu0 0
    %5291 = vmatprep.subr.bf16.mxu0 0
    %5292 = vmatpush2.bf16.msra.mxu0 0
    %5293 = vmatprep.subr.bf16.mxu0 0
    %5294 = vmatpush2.bf16.msra.mxu0 0
    %5295 = vmatprep.subr.bf16.mxu0 0
    %5296 = vmatpush2.bf16.msra.mxu0 0
    %5297 = vmatprep.mubr.bf16.mxu0 0
    %5298 = vmatmul.mubr.bf16.gmra.mxu0 %v5263
    %v5299 = vpop.f32.mrf.mxu0
    %v5300 = vadd.f32 %v5248, %v5299
    %v5301 = vpop.f32.mrf.mxu0
    %v5302 = vpop.f32.mrf.mxu0
    %v5303 = vpop.f32.mrf.mxu0
    %5304 = vdwg.mxu0
    %v5306 = vcombine.high %v5300, %v5300
    %5308 = vst.msk [vmem:[#allocation50] sm:$0xf] %vm2515, %v5300
    %5309 = vst.msk [vmem:[#allocation50 + $0x4] sm:$0xf] %vm2515, %v5306
    // Predicated region
    $region354: #{tpu_custom_call.1} parent=1 // pred_check
      _
    $region355: #{tpu_custom_call.1} parent=1 // pred_check_branch
      %5311 = sbr.rel (0) target = $region357
    $region356: #{tpu_custom_call.1} parent=1 // pred_region
      %s5313 = ssub.s32 128, 128
      %5314 = vsyncadd [#allocation4], %s5313
      %s5315 = sshll.u32 [#allocation50], 4
      %s5316 = int_to_ptr.vmem [resolvable:$true] %s5315
      %5321 = dma.vmem_to_hbm [thread:$0]  %s5316, 128, %s115, [#allocation4], 64, 64, 4
    $region357: #{tpu_custom_call.1} parent=1 // pred_fallthru
      _
    // Predicated region
    $region358: #{tpu_custom_call.1} parent=1 // pred_check
      _
    $region359: #{tpu_custom_call.1} parent=1 // pred_check_branch
      %5323 = sbr.rel (0) target = $region361
    $region360: #{tpu_custom_call.1} parent=1 // pred_region
      %5324 = dma.done [#allocation4], 128
    $region361: #{tpu_custom_call.1} parent=1 // pred_fallthru
      _
    %5325 = vsyncpa [#allocation3], 1
    %5326 = vsyncpa [#allocation6], 1
    %5327 = vsyncpa [#allocation9], 1
    %5328 = vsyncpa [#allocation12], 1
    %5329 = vsyncpa [#allocation15], 1
    %5330 = vsyncpa [#allocation18], 1
    %5331 = vsyncpa [#allocation21], 1
    %5332 = vsyncpa [#allocation24], 1
    %5333 = vsyncpa [#allocation27], 1
    %5334 = vsyncpa [#allocation30], 1
    %5335 = vsyncpa [#allocation33], 1
    %5336 = vsyncpa [#allocation36], 1
    %5337 = vsyncpa [#allocation39], 1
    %5338 = vsyncpa [#allocation42], 1
    %5339 = vsyncpa [#allocation45], 1
    %5340 = vsyncpa [#allocation48], 1
    %5341 = vsyncpa [#allocation4], 1

</llo_original>
